<compile_context>
chip_gen: v5e
topology: v5e:2x2
jax: 0.10.0
libtpu: 0.0.40
codegen_flags: <defaults>
</compile_context>

<pallas_src>
import numpy as np
import jax
import jax.numpy as jnp
from jax.experimental import pallas as pl
from jax.experimental.pallas import tpu as pltpu


# ----------------------------------------------------------------------------
# Glue: conv1 im2col with pooling-parity + output-parity packing
# ----------------------------------------------------------------------------
# Row layout (per sample, 224 rows):  m = ((ri*2+rj)*7 + i2)*8 + j2
#   pooled output position (i, j) = (2*i2 + ri, 2*j2 + rj)   [j2 == 7 is padding]
# Leading axis p = ph*2+pw enumerates the four conv positions inside one pooling
# window; lane k = (di*5+dj)*3 + cin is the full 5x5x3 conv1 patch (75 -> 128).
_POOL_H = np.array([0, 0, 1, 1], np.int32)
_POOL_W = np.array([0, 1, 0, 1], np.int32)
_PAR_H = np.array([0, 0, 1, 1], np.int32)
_PAR_W = np.array([0, 1, 0, 1], np.int32)


def _conv1_indices():
    p, g, i2, j2, di, dj = np.meshgrid(
        np.arange(4), np.arange(4), np.arange(7), np.arange(8),
        np.arange(5), np.arange(5), indexing="ij")
    h = 4 * i2 + 2 * _PAR_H[g] + _POOL_H[p] + di
    w = 4 * j2 + 2 * _PAR_W[g] + _POOL_W[p] + dj
    pad = j2 >= 7                          # j2 == 7 is row padding -> read zeros
    h = np.where(pad, 32, h)
    w = np.where(pad, 32, w)
    return h.astype(np.int32), w.astype(np.int32)


_IM2COL_H, _IM2COL_W = _conv1_indices()    # (4,4,7,8,5,5) static index tables


def _pack_input(x_nchw):
    """(B,3,32,32) f32 -> (B, 4, 224, 128) bf16 parity-packed conv1 im2col."""
    B = x_nchw.shape[0]
    x = jnp.transpose(x_nchw, (0, 2, 3, 1)).astype(jnp.float32)   # (B,32,32,3)
    x = jnp.pad(x, ((0, 0), (0, 1), (0, 1), (0, 0)))              # zero border (idx 32)
    cols = x[:, _IM2COL_H, _IM2COL_W, :]                          # (B,4,4,7,8,5,5,3)
    cols = cols.reshape(B, 4, 224, 75)
    cols = jnp.pad(cols, ((0, 0), (0, 0), (0, 0), (0, 53)))       # K: 75 -> 128
    return cols.astype(jnp.bfloat16)


# ----------------------------------------------------------------------------
# Fused forward kernel (one batch tile per grid step)
# ----------------------------------------------------------------------------
def _fused_kernel(x_ref, w1_ref, b1_ref, w2_ref, b2_ref,
                  wf1_ref, bf1_ref, wf2_ref, bf2_ref, wf3_ref, bf3_ref,
                  o_ref):
    f32, bf16 = jnp.float32, jnp.bfloat16
    TB = x_ref.shape[0]

    # ---- conv1 + ReLU + 2x2 max-pool (fused) ---------------------------------
    # 4 dots of (TB*224, 128) x (128, 128); pooling = elementwise max of parities.
    w1 = w1_ref[...]
    s = None
    for p in range(4):                                   # static 4-way unroll
        lhs = x_ref[:, p:p + 1].reshape(TB * 224, 128)   # contiguous ref slice
        d = jnp.dot(lhs, w1, preferred_element_type=f32)
        s = d if s is None else jnp.maximum(s, d)
    p1 = jnp.maximum(s + b1_ref[...], 0.0)               # (TB*224, 128) f32
    # parity-split spatial layout: [b, ri*2+rj, i2, j2, cin]  (6 live channels)
    p1 = p1[:, 0:8].astype(bf16).reshape(TB, 4, 7, 8, 8)

    # ---- conv2 + ReLU + 2x2 max-pool (fused) ---------------------------------
    # Because p1 is parity-split, every conv2 tap is a CONTIGUOUS slice; the
    # patches are lane-packed to K = 25*8 = 200 and all four pooling parities are
    # stacked so conv2 is ONE dot, followed by an elementwise max.
    per_parity = []
    for qh in range(2):
        for qw in range(2):
            taps = []
            for di in range(5):
                for dj in range(5):
                    grp = ((qh + di) % 2) * 2 + ((qw + dj) % 2)
                    ar = (qh + di) // 2
                    ac = (qw + dj) // 2
                    taps.append(p1[:, grp, ar:ar + 5, ac:ac + 5, :])   # (TB,5,5,8)
            patch = jnp.concatenate(taps, axis=-1)                     # (TB,5,5,200)
            patch = jnp.concatenate(                                   # pad v: 5 -> 8
                [patch, jnp.zeros((TB, 5, 3, 200), bf16)], axis=2)
            per_parity.append(patch)
    c2 = jnp.stack(per_parity, axis=1)                                 # (TB,4,5,8,200)
    s2 = jnp.dot(c2.reshape(TB * 160, 200), w2_ref[...],
                 preferred_element_type=f32).reshape(TB, 4, 5, 8, 128)
    s2 = jnp.max(s2, axis=1)                                           # pool2
    p2 = jnp.maximum(s2 + b2_ref[...], 0.0).astype(bf16)               # (TB,5,8,128)

    # ---- fc1 as a single K=400 dot, then fc2 / fc3 ---------------------------
    fc_in = jnp.concatenate(
        [p2[:, u, v, 0:16] for u in range(5) for v in range(5)], axis=-1)  # (TB,400)
    y = jnp.dot(fc_in, wf1_ref[...], preferred_element_type=f32) + bf1_ref[...]
    y = jnp.maximum(y, 0.0)
    y = jnp.dot(y.astype(bf16), wf2_ref[...], preferred_element_type=f32) + bf2_ref[...]
    y = jnp.maximum(y, 0.0)
    y = jnp.dot(y.astype(bf16), wf3_ref[...], preferred_element_type=f32) + bf3_ref[...]
    o_ref[...] = y[None]                                               # (1, TB, 128)


def cnn_cifar1_forward(kp, x_nchw, tb=None):
    """Fused Pallas forward.  kp = prepare_params(torch-layout params)."""
    B = x_nchw.shape[0]
    assert x_nchw.shape[1:] == (3, 32, 32), "CNNCifar1 requires (3,32,32) inputs"
    if tb is None:
        # Batch tile: <= ~32 on v7x (64 MiB VMEM), 64+ fine on v5e/v6e (128 MiB).
        tb = min(B, 16)
    g = pl.cdiv(B, tb)
    b_pad = g * tb

    xcol = _pack_input(x_nchw)                             # (B, 4, 224, 128) bf16
    if b_pad != B:
        xcol = jnp.pad(xcol, ((0, b_pad - B), (0, 0), (0, 0), (0, 0)))

    weights = (kp["w1"], kp["b1"], kp["w2"], kp["b2"], kp["wf1"], kp["bf1"],
               kp["wf2"], kp["bf2"], kp["wf3"], kp["bf3"])
    in_specs = [pl.BlockSpec((tb, 4, 224, 128), lambda i: (i, 0, 0, 0))]
    in_specs += [pl.BlockSpec(w.shape, lambda i, nd=w.ndim: (0,) * nd)
                 for w in weights]                         # weights stay resident

    out = pl.pallas_call(
        _fused_kernel,
        out_shape=jax.ShapeDtypeStruct((g, tb, 128), jnp.float32),
        grid=(g,),
        in_specs=in_specs,
        out_specs=pl.BlockSpec((1, tb, 128), lambda i: (i, 0, 0)),
        compiler_params=pltpu.CompilerParams(
            dimension_semantics=("parallel",),             # batch tiles across TCs
            vmem_limit_bytes=48 * 1024 * 1024),
    )(xcol, *weights)
    return out.reshape(b_pad, 128)[:B, :10]                # drop batch/lane padding


# ----------------------------------------------------------------------------
# One-time host-side weight preparation (outside the jitted forward)
# ----------------------------------------------------------------------------
def prepare_params(p):
    f32, bf16 = jnp.float32, jnp.bfloat16
    # conv1: torch (6,3,5,5) -> rows k=(di*5+dj)*3+cin, cols cout; pad -> (128,128)
    w1 = jnp.transpose(p["w_conv1"], (2, 3, 1, 0)).reshape(75, 6)
    w1 = jnp.pad(w1, ((0, 53), (0, 122))).astype(bf16)
    b1 = jnp.pad(p["b_conv1"], (0, 122)).reshape(1, 128).astype(f32)
    # conv2: torch (16,6,5,5) -> rows k=(di*5+dj)*8+cin (cin padded 6->8) -> (200,128)
    w2 = jnp.transpose(p["w_conv2"], (2, 3, 1, 0))                     # (5,5,6,16)
    w2 = jnp.pad(w2, ((0, 0), (0, 0), (0, 2), (0, 0))).reshape(200, 16)
    w2 = jnp.pad(w2, ((0, 0), (0, 112))).astype(bf16)
    b2 = jnp.pad(p["b_conv2"], (0, 112)).reshape(1, 128).astype(f32)
    # fc1: torch (120,400) with input idx c*25+u*5+v; rows reordered to (u*5+v)*16+c
    wf1 = p["w_fc1"].reshape(120, 16, 5, 5)                            # (n,c,u,v)
    wf1 = jnp.transpose(wf1, (2, 3, 1, 0)).reshape(400, 120)
    wf1 = jnp.pad(wf1, ((0, 0), (0, 8))).astype(bf16)
    bf1 = jnp.pad(p["b_fc1"], (0, 8)).reshape(1, 128).astype(f32)
    # fc2 / fc3: pre-transposed + zero-padded to (128,128)
    wf2 = jnp.pad(p["w_fc2"].T, ((0, 8), (0, 44))).astype(bf16)
    bf2 = jnp.pad(p["b_fc2"], (0, 44)).reshape(1, 128).astype(f32)
    wf3 = jnp.pad(p["w_fc3"].T, ((0, 44), (0, 118))).astype(bf16)
    bf3 = jnp.pad(p["b_fc3"], (0, 118)).reshape(1, 128).astype(f32)
    return dict(w1=w1, b1=b1, w2=w2, b2=b2, wf1=wf1, bf1=bf1,
                wf2=wf2, bf2=bf2, wf3=wf3, bf3=bf3)


# ----------------------------------------------------------------------------
# Torch-like parameter init (deterministic)
# ----------------------------------------------------------------------------
def init_params(key):
    def uni(k, shape, fan_in):
        bound = 1.0 / jnp.sqrt(jnp.float32(fan_in))
        return jax.random.uniform(k, shape, jnp.float32, -bound, bound)

    ks = jax.random.split(key, 10)
    return {
        "w_conv1": uni(ks[0], (6, 3, 5, 5), 3 * 5 * 5),
        "b_conv1": uni(ks[1], (6,), 3 * 5 * 5),
        "w_conv2": uni(ks[2], (16, 6, 5, 5), 6 * 5 * 5),
        "b_conv2": uni(ks[3], (16,), 6 * 5 * 5),
        "w_fc1": uni(ks[4], (120, 400), 400),
        "b_fc1": uni(ks[5], (120,), 400),
        "w_fc2": uni(ks[6], (84, 120), 120),
        "b_fc2": uni(ks[7], (84,), 120),
        "w_fc3": uni(ks[8], (10, 84), 84),
        "b_fc3": uni(ks[9], (10,), 84),
    }


# ----------------------------------------------------------------------------
# Pure-jnp reference mirroring the PyTorch forward (same bf16 matmul-input
# quantization as the kernel; accumulation in f32) for a correctness check.
# ----------------------------------------------------------------------------
def reference_forward(params, x_nchw):
    bf16, f32 = jnp.bfloat16, jnp.float32
    x = jnp.transpose(x_nchw, (0, 2, 3, 1))

    def conv(x, w, b):
        B, H, W, C = x.shape
        OH, OW = H - 4, W - 4
        cols = [x[:, di:di + OH, dj:dj + OW, :] for di in range(5) for dj in range(5)]
        cols = jnp.concatenate(cols, axis=-1).reshape(B * OH * OW, 25 * C)
        wm = jnp.transpose(w, (2, 3, 1, 0)).reshape(25 * C, w.shape[0])
        out = jnp.dot(cols.astype(bf16), wm.astype(bf16),
                      preferred_element_type=f32) + b
        return jnp.maximum(out, 0.0).reshape(B, OH, OW, w.shape[0])

    def pool(x):
        return jnp.maximum(
            jnp.maximum(x[:, 0::2, 0::2, :], x[:, 0::2, 1::2, :]),
            jnp.maximum(x[:, 1::2, 0::2, :], x[:, 1::2, 1::2, :]))

    x = pool(conv(x, params["w_conv1"], params["b_conv1"]))
    x = pool(conv(x, params["w_conv2"], params["b_conv2"]))
    B = x.shape[0]
    x = jnp.transpose(x, (0, 3, 1, 2)).reshape(B, 400)   # torch x.view(B,-1) order

    def fc(x, w, b, relu):
        y = jnp.dot(x.astype(bf16), w.T.astype(bf16), preferred_element_type=f32) + b
        return jnp.maximum(y, 0.0) if relu else y

    x = fc(x, params["w_fc1"], params["b_fc1"], True)
    x = fc(x, params["w_fc2"], params["b_fc2"], True)
    return fc(x, params["w_fc3"], params["b_fc3"], False)


if __name__ == "__main__":
    key = jax.random.PRNGKey(0)
    k_x, k_p = jax.random.split(key)

    # CIFAR-shaped input (the 16*5*5 flatten requires 32x32 spatial input).
    # B=4 with tb=2 exercises a 2-step, software-pipelined batch grid.
    x = jax.random.normal(k_x, (4, 3, 32, 32), dtype=jnp.float32)
    params = init_params(k_p)
    kparams = prepare_params(params)          # one-time weight transform (host)

    fwd = jax.jit(cnn_cifar1_forward, static_argnames=("tb",))
    out = jax.block_until_ready(fwd(kparams, x, tb=2))
    assert out.shape == (4, 10), out.shape

    ref = reference_forward(params, x)
    max_err = jnp.max(jnp.abs(out - ref))
    assert jnp.allclose(out, ref, atol=2e-2, rtol=2e-2), f"mismatch, max err {max_err}"

    print("KERNEL_OK")
</pallas_src>

<mosaic_0001>
module attributes {stable_mosaic.version = 11 : i64} {
  func.func @_fused_kernel(%arg0: i32, %arg1: memref<2x4x224x128xbf16, #tpu.memory_space<vmem>>, %arg2: memref<128x128xbf16, #tpu.memory_space<vmem>>, %arg3: memref<1x128xf32, #tpu.memory_space<vmem>>, %arg4: memref<200x128xbf16, #tpu.memory_space<vmem>>, %arg5: memref<1x128xf32, #tpu.memory_space<vmem>>, %arg6: memref<400x128xbf16, #tpu.memory_space<vmem>>, %arg7: memref<1x128xf32, #tpu.memory_space<vmem>>, %arg8: memref<128x128xbf16, #tpu.memory_space<vmem>>, %arg9: memref<1x128xf32, #tpu.memory_space<vmem>>, %arg10: memref<128x128xbf16, #tpu.memory_space<vmem>>, %arg11: memref<1x128xf32, #tpu.memory_space<vmem>>, %arg12: memref<1x2x128xf32, #tpu.memory_space<vmem>>) attributes {dimension_semantics = [#tpu.dimension_semantics<parallel>], iteration_bounds = array<i64: 2>, scalar_prefetch = 0 : i64, scratch_operands = 0 : i64, tpu.core_type = #tpu.core_type<tc>, window_params = [{transform_indices = @transform_0, window_bounds = array<i64: 2, 4, 224, 128>}, {pipeline_mode = #tpu.pipeline_mode<synchronous>, transform_indices = @transform_1, window_bounds = array<i64: 128, 128>}, {pipeline_mode = #tpu.pipeline_mode<synchronous>, transform_indices = @transform_2, window_bounds = array<i64: 1, 128>}, {pipeline_mode = #tpu.pipeline_mode<synchronous>, transform_indices = @transform_3, window_bounds = array<i64: 200, 128>}, {pipeline_mode = #tpu.pipeline_mode<synchronous>, transform_indices = @transform_4, window_bounds = array<i64: 1, 128>}, {pipeline_mode = #tpu.pipeline_mode<synchronous>, transform_indices = @transform_5, window_bounds = array<i64: 400, 128>}, {pipeline_mode = #tpu.pipeline_mode<synchronous>, transform_indices = @transform_6, window_bounds = array<i64: 1, 128>}, {pipeline_mode = #tpu.pipeline_mode<synchronous>, transform_indices = @transform_7, window_bounds = array<i64: 128, 128>}, {pipeline_mode = #tpu.pipeline_mode<synchronous>, transform_indices = @transform_8, window_bounds = array<i64: 1, 128>}, {pipeline_mode = #tpu.pipeline_mode<synchronous>, transform_indices = @transform_9, window_bounds = array<i64: 128, 128>}, {pipeline_mode = #tpu.pipeline_mode<synchronous>, transform_indices = @transform_10, window_bounds = array<i64: 1, 128>}, {transform_indices = @transform_11, window_bounds = array<i64: 1, 2, 128>}]} {
    %c0 = arith.constant 0 : index
    %c0_0 = arith.constant 0 : index
    %0 = vector.load %arg2[%c0, %c0_0] : memref<128x128xbf16, #tpu.memory_space<vmem>>, vector<128x128xbf16>
    %c0_1 = arith.constant 0 : index
    %c0_2 = arith.constant 0 : index
    %c0_3 = arith.constant 0 : index
    %c0_4 = arith.constant 0 : index
    %1 = vector.load %arg1[%c0_1, %c0_2, %c0_3, %c0_4] : memref<2x4x224x128xbf16, #tpu.memory_space<vmem>>, vector<2x1x224x128xbf16>
    %2 = vector.shape_cast %1 : vector<2x1x224x128xbf16> to vector<448x128xbf16>
    %cst = arith.constant dense<0.000000e+00> : vector<448x128xf32>
    %3 = tpu.matmul %2, %0, %cst {dimension_numbers = #tpu.dot_dimension_numbers<[1], [0], [0], [1], [0, 0, 1, 1], [], []>} : vector<448x128xbf16>, vector<128x128xbf16>, vector<448x128xf32> -> vector<448x128xf32>
    %c0_5 = arith.constant 0 : index
    %c1 = arith.constant 1 : index
    %c0_6 = arith.constant 0 : index
    %c0_7 = arith.constant 0 : index
    %4 = vector.load %arg1[%c0_5, %c1, %c0_6, %c0_7] : memref<2x4x224x128xbf16, #tpu.memory_space<vmem>>, vector<2x1x224x128xbf16>
    %5 = vector.shape_cast %4 : vector<2x1x224x128xbf16> to vector<448x128xbf16>
    %cst_8 = arith.constant dense<0.000000e+00> : vector<448x128xf32>
    %6 = tpu.matmul %5, %0, %cst_8 {dimension_numbers = #tpu.dot_dimension_numbers<[1], [0], [0], [1], [0, 0, 1, 1], [], []>} : vector<448x128xbf16>, vector<128x128xbf16>, vector<448x128xf32> -> vector<448x128xf32>
    %7 = arith.maximumf %3, %6 : vector<448x128xf32>
    %c0_9 = arith.constant 0 : index
    %c2 = arith.constant 2 : index
    %c0_10 = arith.constant 0 : index
    %c0_11 = arith.constant 0 : index
    %8 = vector.load %arg1[%c0_9, %c2, %c0_10, %c0_11] : memref<2x4x224x128xbf16, #tpu.memory_space<vmem>>, vector<2x1x224x128xbf16>
    %9 = vector.shape_cast %8 : vector<2x1x224x128xbf16> to vector<448x128xbf16>
    %cst_12 = arith.constant dense<0.000000e+00> : vector<448x128xf32>
    %10 = tpu.matmul %9, %0, %cst_12 {dimension_numbers = #tpu.dot_dimension_numbers<[1], [0], [0], [1], [0, 0, 1, 1], [], []>} : vector<448x128xbf16>, vector<128x128xbf16>, vector<448x128xf32> -> vector<448x128xf32>
    %11 = arith.maximumf %7, %10 : vector<448x128xf32>
    %c0_13 = arith.constant 0 : index
    %c3 = arith.constant 3 : index
    %c0_14 = arith.constant 0 : index
    %c0_15 = arith.constant 0 : index
    %12 = vector.load %arg1[%c0_13, %c3, %c0_14, %c0_15] : memref<2x4x224x128xbf16, #tpu.memory_space<vmem>>, vector<2x1x224x128xbf16>
    %13 = vector.shape_cast %12 : vector<2x1x224x128xbf16> to vector<448x128xbf16>
    %cst_16 = arith.constant dense<0.000000e+00> : vector<448x128xf32>
    %14 = tpu.matmul %13, %0, %cst_16 {dimension_numbers = #tpu.dot_dimension_numbers<[1], [0], [0], [1], [0, 0, 1, 1], [], []>} : vector<448x128xbf16>, vector<128x128xbf16>, vector<448x128xf32> -> vector<448x128xf32>
    %15 = arith.maximumf %11, %14 : vector<448x128xf32>
    %c0_17 = arith.constant 0 : index
    %c0_18 = arith.constant 0 : index
    %16 = vector.load %arg3[%c0_17, %c0_18] : memref<1x128xf32, #tpu.memory_space<vmem>>, vector<1x128xf32>
    %17 = vector.broadcast %16 : vector<1x128xf32> to vector<448x128xf32>
    %18 = arith.addf %15, %17 : vector<448x128xf32>
    %cst_19 = arith.constant 0.000000e+00 : f32
    %19 = vector.broadcast %cst_19 : f32 to vector<448x128xf32>
    %20 = arith.maximumf %18, %19 : vector<448x128xf32>
    %21 = vector.extract_strided_slice %20 {offsets = [0, 0], sizes = [448, 8], strides = [1, 1]} : vector<448x128xf32> to vector<448x8xf32>
    %22 = arith.truncf %21 : vector<448x8xf32> to vector<448x8xbf16>
    %23 = vector.shape_cast %22 : vector<448x8xbf16> to vector<2x4x7x8x8xbf16>
    %24 = vector.extract_strided_slice %23 {offsets = [0, 0, 0, 0, 0], sizes = [2, 1, 5, 5, 8], strides = [1, 1, 1, 1, 1]} : vector<2x4x7x8x8xbf16> to vector<2x1x5x5x8xbf16>
    %25 = vector.shape_cast %24 : vector<2x1x5x5x8xbf16> to vector<2x5x5x8xbf16>
    %26 = vector.extract_strided_slice %23 {offsets = [0, 1, 0, 0, 0], sizes = [2, 1, 5, 5, 8], strides = [1, 1, 1, 1, 1]} : vector<2x4x7x8x8xbf16> to vector<2x1x5x5x8xbf16>
    %27 = vector.shape_cast %26 : vector<2x1x5x5x8xbf16> to vector<2x5x5x8xbf16>
    %28 = vector.extract_strided_slice %23 {offsets = [0, 0, 0, 1, 0], sizes = [2, 1, 5, 5, 8], strides = [1, 1, 1, 1, 1]} : vector<2x4x7x8x8xbf16> to vector<2x1x5x5x8xbf16>
    %29 = vector.shape_cast %28 : vector<2x1x5x5x8xbf16> to vector<2x5x5x8xbf16>
    %30 = vector.extract_strided_slice %23 {offsets = [0, 1, 0, 1, 0], sizes = [2, 1, 5, 5, 8], strides = [1, 1, 1, 1, 1]} : vector<2x4x7x8x8xbf16> to vector<2x1x5x5x8xbf16>
    %31 = vector.shape_cast %30 : vector<2x1x5x5x8xbf16> to vector<2x5x5x8xbf16>
    %32 = vector.extract_strided_slice %23 {offsets = [0, 0, 0, 2, 0], sizes = [2, 1, 5, 5, 8], strides = [1, 1, 1, 1, 1]} : vector<2x4x7x8x8xbf16> to vector<2x1x5x5x8xbf16>
    %33 = vector.shape_cast %32 : vector<2x1x5x5x8xbf16> to vector<2x5x5x8xbf16>
    %34 = vector.extract_strided_slice %23 {offsets = [0, 2, 0, 0, 0], sizes = [2, 1, 5, 5, 8], strides = [1, 1, 1, 1, 1]} : vector<2x4x7x8x8xbf16> to vector<2x1x5x5x8xbf16>
    %35 = vector.shape_cast %34 : vector<2x1x5x5x8xbf16> to vector<2x5x5x8xbf16>
    %36 = vector.extract_strided_slice %23 {offsets = [0, 3, 0, 0, 0], sizes = [2, 1, 5, 5, 8], strides = [1, 1, 1, 1, 1]} : vector<2x4x7x8x8xbf16> to vector<2x1x5x5x8xbf16>
    %37 = vector.shape_cast %36 : vector<2x1x5x5x8xbf16> to vector<2x5x5x8xbf16>
    %38 = vector.extract_strided_slice %23 {offsets = [0, 2, 0, 1, 0], sizes = [2, 1, 5, 5, 8], strides = [1, 1, 1, 1, 1]} : vector<2x4x7x8x8xbf16> to vector<2x1x5x5x8xbf16>
    %39 = vector.shape_cast %38 : vector<2x1x5x5x8xbf16> to vector<2x5x5x8xbf16>
    %40 = vector.extract_strided_slice %23 {offsets = [0, 3, 0, 1, 0], sizes = [2, 1, 5, 5, 8], strides = [1, 1, 1, 1, 1]} : vector<2x4x7x8x8xbf16> to vector<2x1x5x5x8xbf16>
    %41 = vector.shape_cast %40 : vector<2x1x5x5x8xbf16> to vector<2x5x5x8xbf16>
    %42 = vector.extract_strided_slice %23 {offsets = [0, 2, 0, 2, 0], sizes = [2, 1, 5, 5, 8], strides = [1, 1, 1, 1, 1]} : vector<2x4x7x8x8xbf16> to vector<2x1x5x5x8xbf16>
    %43 = vector.shape_cast %42 : vector<2x1x5x5x8xbf16> to vector<2x5x5x8xbf16>
    %44 = vector.extract_strided_slice %23 {offsets = [0, 0, 1, 0, 0], sizes = [2, 1, 5, 5, 8], strides = [1, 1, 1, 1, 1]} : vector<2x4x7x8x8xbf16> to vector<2x1x5x5x8xbf16>
    %45 = vector.shape_cast %44 : vector<2x1x5x5x8xbf16> to vector<2x5x5x8xbf16>
    %46 = vector.extract_strided_slice %23 {offsets = [0, 1, 1, 0, 0], sizes = [2, 1, 5, 5, 8], strides = [1, 1, 1, 1, 1]} : vector<2x4x7x8x8xbf16> to vector<2x1x5x5x8xbf16>
    %47 = vector.shape_cast %46 : vector<2x1x5x5x8xbf16> to vector<2x5x5x8xbf16>
    %48 = vector.extract_strided_slice %23 {offsets = [0, 0, 1, 1, 0], sizes = [2, 1, 5, 5, 8], strides = [1, 1, 1, 1, 1]} : vector<2x4x7x8x8xbf16> to vector<2x1x5x5x8xbf16>
    %49 = vector.shape_cast %48 : vector<2x1x5x5x8xbf16> to vector<2x5x5x8xbf16>
    %50 = vector.extract_strided_slice %23 {offsets = [0, 1, 1, 1, 0], sizes = [2, 1, 5, 5, 8], strides = [1, 1, 1, 1, 1]} : vector<2x4x7x8x8xbf16> to vector<2x1x5x5x8xbf16>
    %51 = vector.shape_cast %50 : vector<2x1x5x5x8xbf16> to vector<2x5x5x8xbf16>
    %52 = vector.extract_strided_slice %23 {offsets = [0, 0, 1, 2, 0], sizes = [2, 1, 5, 5, 8], strides = [1, 1, 1, 1, 1]} : vector<2x4x7x8x8xbf16> to vector<2x1x5x5x8xbf16>
    %53 = vector.shape_cast %52 : vector<2x1x5x5x8xbf16> to vector<2x5x5x8xbf16>
    %54 = vector.extract_strided_slice %23 {offsets = [0, 2, 1, 0, 0], sizes = [2, 1, 5, 5, 8], strides = [1, 1, 1, 1, 1]} : vector<2x4x7x8x8xbf16> to vector<2x1x5x5x8xbf16>
    %55 = vector.shape_cast %54 : vector<2x1x5x5x8xbf16> to vector<2x5x5x8xbf16>
    %56 = vector.extract_strided_slice %23 {offsets = [0, 3, 1, 0, 0], sizes = [2, 1, 5, 5, 8], strides = [1, 1, 1, 1, 1]} : vector<2x4x7x8x8xbf16> to vector<2x1x5x5x8xbf16>
    %57 = vector.shape_cast %56 : vector<2x1x5x5x8xbf16> to vector<2x5x5x8xbf16>
    %58 = vector.extract_strided_slice %23 {offsets = [0, 2, 1, 1, 0], sizes = [2, 1, 5, 5, 8], strides = [1, 1, 1, 1, 1]} : vector<2x4x7x8x8xbf16> to vector<2x1x5x5x8xbf16>
    %59 = vector.shape_cast %58 : vector<2x1x5x5x8xbf16> to vector<2x5x5x8xbf16>
    %60 = vector.extract_strided_slice %23 {offsets = [0, 3, 1, 1, 0], sizes = [2, 1, 5, 5, 8], strides = [1, 1, 1, 1, 1]} : vector<2x4x7x8x8xbf16> to vector<2x1x5x5x8xbf16>
    %61 = vector.shape_cast %60 : vector<2x1x5x5x8xbf16> to vector<2x5x5x8xbf16>
    %62 = vector.extract_strided_slice %23 {offsets = [0, 2, 1, 2, 0], sizes = [2, 1, 5, 5, 8], strides = [1, 1, 1, 1, 1]} : vector<2x4x7x8x8xbf16> to vector<2x1x5x5x8xbf16>
    %63 = vector.shape_cast %62 : vector<2x1x5x5x8xbf16> to vector<2x5x5x8xbf16>
    %64 = vector.extract_strided_slice %23 {offsets = [0, 0, 2, 0, 0], sizes = [2, 1, 5, 5, 8], strides = [1, 1, 1, 1, 1]} : vector<2x4x7x8x8xbf16> to vector<2x1x5x5x8xbf16>
    %65 = vector.shape_cast %64 : vector<2x1x5x5x8xbf16> to vector<2x5x5x8xbf16>
    %66 = vector.extract_strided_slice %23 {offsets = [0, 1, 2, 0, 0], sizes = [2, 1, 5, 5, 8], strides = [1, 1, 1, 1, 1]} : vector<2x4x7x8x8xbf16> to vector<2x1x5x5x8xbf16>
    %67 = vector.shape_cast %66 : vector<2x1x5x5x8xbf16> to vector<2x5x5x8xbf16>
    %68 = vector.extract_strided_slice %23 {offsets = [0, 0, 2, 1, 0], sizes = [2, 1, 5, 5, 8], strides = [1, 1, 1, 1, 1]} : vector<2x4x7x8x8xbf16> to vector<2x1x5x5x8xbf16>
    %69 = vector.shape_cast %68 : vector<2x1x5x5x8xbf16> to vector<2x5x5x8xbf16>
    %70 = vector.extract_strided_slice %23 {offsets = [0, 1, 2, 1, 0], sizes = [2, 1, 5, 5, 8], strides = [1, 1, 1, 1, 1]} : vector<2x4x7x8x8xbf16> to vector<2x1x5x5x8xbf16>
    %71 = vector.shape_cast %70 : vector<2x1x5x5x8xbf16> to vector<2x5x5x8xbf16>
    %72 = vector.extract_strided_slice %23 {offsets = [0, 0, 2, 2, 0], sizes = [2, 1, 5, 5, 8], strides = [1, 1, 1, 1, 1]} : vector<2x4x7x8x8xbf16> to vector<2x1x5x5x8xbf16>
    %73 = vector.shape_cast %72 : vector<2x1x5x5x8xbf16> to vector<2x5x5x8xbf16>
    %74 = tpu.concatenate %25, %27, %29, %31, %33, %35, %37, %39, %41, %43, %45, %47, %49, %51, %53, %55 in 3 : vector<2x5x5x8xbf16>, vector<2x5x5x8xbf16>, vector<2x5x5x8xbf16>, vector<2x5x5x8xbf16>, vector<2x5x5x8xbf16>, vector<2x5x5x8xbf16>, vector<2x5x5x8xbf16>, vector<2x5x5x8xbf16>, vector<2x5x5x8xbf16>, vector<2x5x5x8xbf16>, vector<2x5x5x8xbf16>, vector<2x5x5x8xbf16>, vector<2x5x5x8xbf16>, vector<2x5x5x8xbf16>, vector<2x5x5x8xbf16>, vector<2x5x5x8xbf16> -> vector<2x5x5x128xbf16>
    %75 = tpu.concatenate %57, %59, %61, %63, %65, %67, %69, %71, %73 in 3 : vector<2x5x5x8xbf16>, vector<2x5x5x8xbf16>, vector<2x5x5x8xbf16>, vector<2x5x5x8xbf16>, vector<2x5x5x8xbf16>, vector<2x5x5x8xbf16>, vector<2x5x5x8xbf16>, vector<2x5x5x8xbf16>, vector<2x5x5x8xbf16> -> vector<2x5x5x72xbf16>
    %76 = tpu.concatenate %74, %75 in 3 : vector<2x5x5x128xbf16>, vector<2x5x5x72xbf16> -> vector<2x5x5x200xbf16>
    %cst_20 = arith.constant 0.000000e+00 : bf16
    %77 = vector.broadcast %cst_20 : bf16 to vector<2x5x3x200xbf16>
    %78 = tpu.concatenate %76, %77 in 2 : vector<2x5x5x200xbf16>, vector<2x5x3x200xbf16> -> vector<2x5x8x200xbf16>
    %79 = vector.extract_strided_slice %23 {offsets = [0, 1, 0, 0, 0], sizes = [2, 1, 5, 5, 8], strides = [1, 1, 1, 1, 1]} : vector<2x4x7x8x8xbf16> to vector<2x1x5x5x8xbf16>
    %80 = vector.shape_cast %79 : vector<2x1x5x5x8xbf16> to vector<2x5x5x8xbf16>
    %81 = vector.extract_strided_slice %23 {offsets = [0, 0, 0, 1, 0], sizes = [2, 1, 5, 5, 8], strides = [1, 1, 1, 1, 1]} : vector<2x4x7x8x8xbf16> to vector<2x1x5x5x8xbf16>
    %82 = vector.shape_cast %81 : vector<2x1x5x5x8xbf16> to vector<2x5x5x8xbf16>
    %83 = vector.extract_strided_slice %23 {offsets = [0, 1, 0, 1, 0], sizes = [2, 1, 5, 5, 8], strides = [1, 1, 1, 1, 1]} : vector<2x4x7x8x8xbf16> to vector<2x1x5x5x8xbf16>
    %84 = vector.shape_cast %83 : vector<2x1x5x5x8xbf16> to vector<2x5x5x8xbf16>
    %85 = vector.extract_strided_slice %23 {offsets = [0, 0, 0, 2, 0], sizes = [2, 1, 5, 5, 8], strides = [1, 1, 1, 1, 1]} : vector<2x4x7x8x8xbf16> to vector<2x1x5x5x8xbf16>
    %86 = vector.shape_cast %85 : vector<2x1x5x5x8xbf16> to vector<2x5x5x8xbf16>
    %87 = vector.extract_strided_slice %23 {offsets = [0, 1, 0, 2, 0], sizes = [2, 1, 5, 5, 8], strides = [1, 1, 1, 1, 1]} : vector<2x4x7x8x8xbf16> to vector<2x1x5x5x8xbf16>
    %88 = vector.shape_cast %87 : vector<2x1x5x5x8xbf16> to vector<2x5x5x8xbf16>
    %89 = vector.extract_strided_slice %23 {offsets = [0, 3, 0, 0, 0], sizes = [2, 1, 5, 5, 8], strides = [1, 1, 1, 1, 1]} : vector<2x4x7x8x8xbf16> to vector<2x1x5x5x8xbf16>
    %90 = vector.shape_cast %89 : vector<2x1x5x5x8xbf16> to vector<2x5x5x8xbf16>
    %91 = vector.extract_strided_slice %23 {offsets = [0, 2, 0, 1, 0], sizes = [2, 1, 5, 5, 8], strides = [1, 1, 1, 1, 1]} : vector<2x4x7x8x8xbf16> to vector<2x1x5x5x8xbf16>
    %92 = vector.shape_cast %91 : vector<2x1x5x5x8xbf16> to vector<2x5x5x8xbf16>
    %93 = vector.extract_strided_slice %23 {offsets = [0, 3, 0, 1, 0], sizes = [2, 1, 5, 5, 8], strides = [1, 1, 1, 1, 1]} : vector<2x4x7x8x8xbf16> to vector<2x1x5x5x8xbf16>
    %94 = vector.shape_cast %93 : vector<2x1x5x5x8xbf16> to vector<2x5x5x8xbf16>
    %95 = vector.extract_strided_slice %23 {offsets = [0, 2, 0, 2, 0], sizes = [2, 1, 5, 5, 8], strides = [1, 1, 1, 1, 1]} : vector<2x4x7x8x8xbf16> to vector<2x1x5x5x8xbf16>
    %96 = vector.shape_cast %95 : vector<2x1x5x5x8xbf16> to vector<2x5x5x8xbf16>
    %97 = vector.extract_strided_slice %23 {offsets = [0, 3, 0, 2, 0], sizes = [2, 1, 5, 5, 8], strides = [1, 1, 1, 1, 1]} : vector<2x4x7x8x8xbf16> to vector<2x1x5x5x8xbf16>
    %98 = vector.shape_cast %97 : vector<2x1x5x5x8xbf16> to vector<2x5x5x8xbf16>
    %99 = vector.extract_strided_slice %23 {offsets = [0, 1, 1, 0, 0], sizes = [2, 1, 5, 5, 8], strides = [1, 1, 1, 1, 1]} : vector<2x4x7x8x8xbf16> to vector<2x1x5x5x8xbf16>
    %100 = vector.shape_cast %99 : vector<2x1x5x5x8xbf16> to vector<2x5x5x8xbf16>
    %101 = vector.extract_strided_slice %23 {offsets = [0, 0, 1, 1, 0], sizes = [2, 1, 5, 5, 8], strides = [1, 1, 1, 1, 1]} : vector<2x4x7x8x8xbf16> to vector<2x1x5x5x8xbf16>
    %102 = vector.shape_cast %101 : vector<2x1x5x5x8xbf16> to vector<2x5x5x8xbf16>
    %103 = vector.extract_strided_slice %23 {offsets = [0, 1, 1, 1, 0], sizes = [2, 1, 5, 5, 8], strides = [1, 1, 1, 1, 1]} : vector<2x4x7x8x8xbf16> to vector<2x1x5x5x8xbf16>
    %104 = vector.shape_cast %103 : vector<2x1x5x5x8xbf16> to vector<2x5x5x8xbf16>
    %105 = vector.extract_strided_slice %23 {offsets = [0, 0, 1, 2, 0], sizes = [2, 1, 5, 5, 8], strides = [1, 1, 1, 1, 1]} : vector<2x4x7x8x8xbf16> to vector<2x1x5x5x8xbf16>
    %106 = vector.shape_cast %105 : vector<2x1x5x5x8xbf16> to vector<2x5x5x8xbf16>
    %107 = vector.extract_strided_slice %23 {offsets = [0, 1, 1, 2, 0], sizes = [2, 1, 5, 5, 8], strides = [1, 1, 1, 1, 1]} : vector<2x4x7x8x8xbf16> to vector<2x1x5x5x8xbf16>
    %108 = vector.shape_cast %107 : vector<2x1x5x5x8xbf16> to vector<2x5x5x8xbf16>
    %109 = vector.extract_strided_slice %23 {offsets = [0, 3, 1, 0, 0], sizes = [2, 1, 5, 5, 8], strides = [1, 1, 1, 1, 1]} : vector<2x4x7x8x8xbf16> to vector<2x1x5x5x8xbf16>
    %110 = vector.shape_cast %109 : vector<2x1x5x5x8xbf16> to vector<2x5x5x8xbf16>
    %111 = vector.extract_strided_slice %23 {offsets = [0, 2, 1, 1, 0], sizes = [2, 1, 5, 5, 8], strides = [1, 1, 1, 1, 1]} : vector<2x4x7x8x8xbf16> to vector<2x1x5x5x8xbf16>
    %112 = vector.shape_cast %111 : vector<2x1x5x5x8xbf16> to vector<2x5x5x8xbf16>
    %113 = vector.extract_strided_slice %23 {offsets = [0, 3, 1, 1, 0], sizes = [2, 1, 5, 5, 8], strides = [1, 1, 1, 1, 1]} : vector<2x4x7x8x8xbf16> to vector<2x1x5x5x8xbf16>
    %114 = vector.shape_cast %113 : vector<2x1x5x5x8xbf16> to vector<2x5x5x8xbf16>
    %115 = vector.extract_strided_slice %23 {offsets = [0, 2, 1, 2, 0], sizes = [2, 1, 5, 5, 8], strides = [1, 1, 1, 1, 1]} : vector<2x4x7x8x8xbf16> to vector<2x1x5x5x8xbf16>
    %116 = vector.shape_cast %115 : vector<2x1x5x5x8xbf16> to vector<2x5x5x8xbf16>
    %117 = vector.extract_strided_slice %23 {offsets = [0, 3, 1, 2, 0], sizes = [2, 1, 5, 5, 8], strides = [1, 1, 1, 1, 1]} : vector<2x4x7x8x8xbf16> to vector<2x1x5x5x8xbf16>
    %118 = vector.shape_cast %117 : vector<2x1x5x5x8xbf16> to vector<2x5x5x8xbf16>
    %119 = vector.extract_strided_slice %23 {offsets = [0, 1, 2, 0, 0], sizes = [2, 1, 5, 5, 8], strides = [1, 1, 1, 1, 1]} : vector<2x4x7x8x8xbf16> to vector<2x1x5x5x8xbf16>
    %120 = vector.shape_cast %119 : vector<2x1x5x5x8xbf16> to vector<2x5x5x8xbf16>
    %121 = vector.extract_strided_slice %23 {offsets = [0, 0, 2, 1, 0], sizes = [2, 1, 5, 5, 8], strides = [1, 1, 1, 1, 1]} : vector<2x4x7x8x8xbf16> to vector<2x1x5x5x8xbf16>
    %122 = vector.shape_cast %121 : vector<2x1x5x5x8xbf16> to vector<2x5x5x8xbf16>
    %123 = vector.extract_strided_slice %23 {offsets = [0, 1, 2, 1, 0], sizes = [2, 1, 5, 5, 8], strides = [1, 1, 1, 1, 1]} : vector<2x4x7x8x8xbf16> to vector<2x1x5x5x8xbf16>
    %124 = vector.shape_cast %123 : vector<2x1x5x5x8xbf16> to vector<2x5x5x8xbf16>
    %125 = vector.extract_strided_slice %23 {offsets = [0, 0, 2, 2, 0], sizes = [2, 1, 5, 5, 8], strides = [1, 1, 1, 1, 1]} : vector<2x4x7x8x8xbf16> to vector<2x1x5x5x8xbf16>
    %126 = vector.shape_cast %125 : vector<2x1x5x5x8xbf16> to vector<2x5x5x8xbf16>
    %127 = vector.extract_strided_slice %23 {offsets = [0, 1, 2, 2, 0], sizes = [2, 1, 5, 5, 8], strides = [1, 1, 1, 1, 1]} : vector<2x4x7x8x8xbf16> to vector<2x1x5x5x8xbf16>
    %128 = vector.shape_cast %127 : vector<2x1x5x5x8xbf16> to vector<2x5x5x8xbf16>
    %129 = tpu.concatenate %80, %82, %84, %86, %88, %90, %92, %94, %96, %98, %100, %102, %104, %106, %108, %110 in 3 : vector<2x5x5x8xbf16>, vector<2x5x5x8xbf16>, vector<2x5x5x8xbf16>, vector<2x5x5x8xbf16>, vector<2x5x5x8xbf16>, vector<2x5x5x8xbf16>, vector<2x5x5x8xbf16>, vector<2x5x5x8xbf16>, vector<2x5x5x8xbf16>, vector<2x5x5x8xbf16>, vector<2x5x5x8xbf16>, vector<2x5x5x8xbf16>, vector<2x5x5x8xbf16>, vector<2x5x5x8xbf16>, vector<2x5x5x8xbf16>, vector<2x5x5x8xbf16> -> vector<2x5x5x128xbf16>
    %130 = tpu.concatenate %112, %114, %116, %118, %120, %122, %124, %126, %128 in 3 : vector<2x5x5x8xbf16>, vector<2x5x5x8xbf16>, vector<2x5x5x8xbf16>, vector<2x5x5x8xbf16>, vector<2x5x5x8xbf16>, vector<2x5x5x8xbf16>, vector<2x5x5x8xbf16>, vector<2x5x5x8xbf16>, vector<2x5x5x8xbf16> -> vector<2x5x5x72xbf16>
    %131 = tpu.concatenate %129, %130 in 3 : vector<2x5x5x128xbf16>, vector<2x5x5x72xbf16> -> vector<2x5x5x200xbf16>
    %cst_21 = arith.constant 0.000000e+00 : bf16
    %132 = vector.broadcast %cst_21 : bf16 to vector<2x5x3x200xbf16>
    %133 = tpu.concatenate %131, %132 in 2 : vector<2x5x5x200xbf16>, vector<2x5x3x200xbf16> -> vector<2x5x8x200xbf16>
    %134 = vector.extract_strided_slice %23 {offsets = [0, 2, 0, 0, 0], sizes = [2, 1, 5, 5, 8], strides = [1, 1, 1, 1, 1]} : vector<2x4x7x8x8xbf16> to vector<2x1x5x5x8xbf16>
    %135 = vector.shape_cast %134 : vector<2x1x5x5x8xbf16> to vector<2x5x5x8xbf16>
    %136 = vector.extract_strided_slice %23 {offsets = [0, 3, 0, 0, 0], sizes = [2, 1, 5, 5, 8], strides = [1, 1, 1, 1, 1]} : vector<2x4x7x8x8xbf16> to vector<2x1x5x5x8xbf16>
    %137 = vector.shape_cast %136 : vector<2x1x5x5x8xbf16> to vector<2x5x5x8xbf16>
    %138 = vector.extract_strided_slice %23 {offsets = [0, 2, 0, 1, 0], sizes = [2, 1, 5, 5, 8], strides = [1, 1, 1, 1, 1]} : vector<2x4x7x8x8xbf16> to vector<2x1x5x5x8xbf16>
    %139 = vector.shape_cast %138 : vector<2x1x5x5x8xbf16> to vector<2x5x5x8xbf16>
    %140 = vector.extract_strided_slice %23 {offsets = [0, 3, 0, 1, 0], sizes = [2, 1, 5, 5, 8], strides = [1, 1, 1, 1, 1]} : vector<2x4x7x8x8xbf16> to vector<2x1x5x5x8xbf16>
    %141 = vector.shape_cast %140 : vector<2x1x5x5x8xbf16> to vector<2x5x5x8xbf16>
    %142 = vector.extract_strided_slice %23 {offsets = [0, 2, 0, 2, 0], sizes = [2, 1, 5, 5, 8], strides = [1, 1, 1, 1, 1]} : vector<2x4x7x8x8xbf16> to vector<2x1x5x5x8xbf16>
    %143 = vector.shape_cast %142 : vector<2x1x5x5x8xbf16> to vector<2x5x5x8xbf16>
    %144 = vector.extract_strided_slice %23 {offsets = [0, 0, 1, 0, 0], sizes = [2, 1, 5, 5, 8], strides = [1, 1, 1, 1, 1]} : vector<2x4x7x8x8xbf16> to vector<2x1x5x5x8xbf16>
    %145 = vector.shape_cast %144 : vector<2x1x5x5x8xbf16> to vector<2x5x5x8xbf16>
    %146 = vector.extract_strided_slice %23 {offsets = [0, 1, 1, 0, 0], sizes = [2, 1, 5, 5, 8], strides = [1, 1, 1, 1, 1]} : vector<2x4x7x8x8xbf16> to vector<2x1x5x5x8xbf16>
    %147 = vector.shape_cast %146 : vector<2x1x5x5x8xbf16> to vector<2x5x5x8xbf16>
    %148 = vector.extract_strided_slice %23 {offsets = [0, 0, 1, 1, 0], sizes = [2, 1, 5, 5, 8], strides = [1, 1, 1, 1, 1]} : vector<2x4x7x8x8xbf16> to vector<2x1x5x5x8xbf16>
    %149 = vector.shape_cast %148 : vector<2x1x5x5x8xbf16> to vector<2x5x5x8xbf16>
    %150 = vector.extract_strided_slice %23 {offsets = [0, 1, 1, 1, 0], sizes = [2, 1, 5, 5, 8], strides = [1, 1, 1, 1, 1]} : vector<2x4x7x8x8xbf16> to vector<2x1x5x5x8xbf16>
    %151 = vector.shape_cast %150 : vector<2x1x5x5x8xbf16> to vector<2x5x5x8xbf16>
    %152 = vector.extract_strided_slice %23 {offsets = [0, 0, 1, 2, 0], sizes = [2, 1, 5, 5, 8], strides = [1, 1, 1, 1, 1]} : vector<2x4x7x8x8xbf16> to vector<2x1x5x5x8xbf16>
    %153 = vector.shape_cast %152 : vector<2x1x5x5x8xbf16> to vector<2x5x5x8xbf16>
    %154 = vector.extract_strided_slice %23 {offsets = [0, 2, 1, 0, 0], sizes = [2, 1, 5, 5, 8], strides = [1, 1, 1, 1, 1]} : vector<2x4x7x8x8xbf16> to vector<2x1x5x5x8xbf16>
    %155 = vector.shape_cast %154 : vector<2x1x5x5x8xbf16> to vector<2x5x5x8xbf16>
    %156 = vector.extract_strided_slice %23 {offsets = [0, 3, 1, 0, 0], sizes = [2, 1, 5, 5, 8], strides = [1, 1, 1, 1, 1]} : vector<2x4x7x8x8xbf16> to vector<2x1x5x5x8xbf16>
    %157 = vector.shape_cast %156 : vector<2x1x5x5x8xbf16> to vector<2x5x5x8xbf16>
    %158 = vector.extract_strided_slice %23 {offsets = [0, 2, 1, 1, 0], sizes = [2, 1, 5, 5, 8], strides = [1, 1, 1, 1, 1]} : vector<2x4x7x8x8xbf16> to vector<2x1x5x5x8xbf16>
    %159 = vector.shape_cast %158 : vector<2x1x5x5x8xbf16> to vector<2x5x5x8xbf16>
    %160 = vector.extract_strided_slice %23 {offsets = [0, 3, 1, 1, 0], sizes = [2, 1, 5, 5, 8], strides = [1, 1, 1, 1, 1]} : vector<2x4x7x8x8xbf16> to vector<2x1x5x5x8xbf16>
    %161 = vector.shape_cast %160 : vector<2x1x5x5x8xbf16> to vector<2x5x5x8xbf16>
    %162 = vector.extract_strided_slice %23 {offsets = [0, 2, 1, 2, 0], sizes = [2, 1, 5, 5, 8], strides = [1, 1, 1, 1, 1]} : vector<2x4x7x8x8xbf16> to vector<2x1x5x5x8xbf16>
    %163 = vector.shape_cast %162 : vector<2x1x5x5x8xbf16> to vector<2x5x5x8xbf16>
    %164 = vector.extract_strided_slice %23 {offsets = [0, 0, 2, 0, 0], sizes = [2, 1, 5, 5, 8], strides = [1, 1, 1, 1, 1]} : vector<2x4x7x8x8xbf16> to vector<2x1x5x5x8xbf16>
    %165 = vector.shape_cast %164 : vector<2x1x5x5x8xbf16> to vector<2x5x5x8xbf16>
    %166 = vector.extract_strided_slice %23 {offsets = [0, 1, 2, 0, 0], sizes = [2, 1, 5, 5, 8], strides = [1, 1, 1, 1, 1]} : vector<2x4x7x8x8xbf16> to vector<2x1x5x5x8xbf16>
    %167 = vector.shape_cast %166 : vector<2x1x5x5x8xbf16> to vector<2x5x5x8xbf16>
    %168 = vector.extract_strided_slice %23 {offsets = [0, 0, 2, 1, 0], sizes = [2, 1, 5, 5, 8], strides = [1, 1, 1, 1, 1]} : vector<2x4x7x8x8xbf16> to vector<2x1x5x5x8xbf16>
    %169 = vector.shape_cast %168 : vector<2x1x5x5x8xbf16> to vector<2x5x5x8xbf16>
    %170 = vector.extract_strided_slice %23 {offsets = [0, 1, 2, 1, 0], sizes = [2, 1, 5, 5, 8], strides = [1, 1, 1, 1, 1]} : vector<2x4x7x8x8xbf16> to vector<2x1x5x5x8xbf16>
    %171 = vector.shape_cast %170 : vector<2x1x5x5x8xbf16> to vector<2x5x5x8xbf16>
    %172 = vector.extract_strided_slice %23 {offsets = [0, 0, 2, 2, 0], sizes = [2, 1, 5, 5, 8], strides = [1, 1, 1, 1, 1]} : vector<2x4x7x8x8xbf16> to vector<2x1x5x5x8xbf16>
    %173 = vector.shape_cast %172 : vector<2x1x5x5x8xbf16> to vector<2x5x5x8xbf16>
    %174 = vector.extract_strided_slice %23 {offsets = [0, 2, 2, 0, 0], sizes = [2, 1, 5, 5, 8], strides = [1, 1, 1, 1, 1]} : vector<2x4x7x8x8xbf16> to vector<2x1x5x5x8xbf16>
    %175 = vector.shape_cast %174 : vector<2x1x5x5x8xbf16> to vector<2x5x5x8xbf16>
    %176 = vector.extract_strided_slice %23 {offsets = [0, 3, 2, 0, 0], sizes = [2, 1, 5, 5, 8], strides = [1, 1, 1, 1, 1]} : vector<2x4x7x8x8xbf16> to vector<2x1x5x5x8xbf16>
    %177 = vector.shape_cast %176 : vector<2x1x5x5x8xbf16> to vector<2x5x5x8xbf16>
    %178 = vector.extract_strided_slice %23 {offsets = [0, 2, 2, 1, 0], sizes = [2, 1, 5, 5, 8], strides = [1, 1, 1, 1, 1]} : vector<2x4x7x8x8xbf16> to vector<2x1x5x5x8xbf16>
    %179 = vector.shape_cast %178 : vector<2x1x5x5x8xbf16> to vector<2x5x5x8xbf16>
    %180 = vector.extract_strided_slice %23 {offsets = [0, 3, 2, 1, 0], sizes = [2, 1, 5, 5, 8], strides = [1, 1, 1, 1, 1]} : vector<2x4x7x8x8xbf16> to vector<2x1x5x5x8xbf16>
    %181 = vector.shape_cast %180 : vector<2x1x5x5x8xbf16> to vector<2x5x5x8xbf16>
    %182 = vector.extract_strided_slice %23 {offsets = [0, 2, 2, 2, 0], sizes = [2, 1, 5, 5, 8], strides = [1, 1, 1, 1, 1]} : vector<2x4x7x8x8xbf16> to vector<2x1x5x5x8xbf16>
    %183 = vector.shape_cast %182 : vector<2x1x5x5x8xbf16> to vector<2x5x5x8xbf16>
    %184 = tpu.concatenate %135, %137, %139, %141, %143, %145, %147, %149, %151, %153, %155, %157, %159, %161, %163, %165 in 3 : vector<2x5x5x8xbf16>, vector<2x5x5x8xbf16>, vector<2x5x5x8xbf16>, vector<2x5x5x8xbf16>, vector<2x5x5x8xbf16>, vector<2x5x5x8xbf16>, vector<2x5x5x8xbf16>, vector<2x5x5x8xbf16>, vector<2x5x5x8xbf16>, vector<2x5x5x8xbf16>, vector<2x5x5x8xbf16>, vector<2x5x5x8xbf16>, vector<2x5x5x8xbf16>, vector<2x5x5x8xbf16>, vector<2x5x5x8xbf16>, vector<2x5x5x8xbf16> -> vector<2x5x5x128xbf16>
    %185 = tpu.concatenate %167, %169, %171, %173, %175, %177, %179, %181, %183 in 3 : vector<2x5x5x8xbf16>, vector<2x5x5x8xbf16>, vector<2x5x5x8xbf16>, vector<2x5x5x8xbf16>, vector<2x5x5x8xbf16>, vector<2x5x5x8xbf16>, vector<2x5x5x8xbf16>, vector<2x5x5x8xbf16>, vector<2x5x5x8xbf16> -> vector<2x5x5x72xbf16>
    %186 = tpu.concatenate %184, %185 in 3 : vector<2x5x5x128xbf16>, vector<2x5x5x72xbf16> -> vector<2x5x5x200xbf16>
    %cst_22 = arith.constant 0.000000e+00 : bf16
    %187 = vector.broadcast %cst_22 : bf16 to vector<2x5x3x200xbf16>
    %188 = tpu.concatenate %186, %187 in 2 : vector<2x5x5x200xbf16>, vector<2x5x3x200xbf16> -> vector<2x5x8x200xbf16>
    %189 = vector.extract_strided_slice %23 {offsets = [0, 3, 0, 0, 0], sizes = [2, 1, 5, 5, 8], strides = [1, 1, 1, 1, 1]} : vector<2x4x7x8x8xbf16> to vector<2x1x5x5x8xbf16>
    %190 = vector.shape_cast %189 : vector<2x1x5x5x8xbf16> to vector<2x5x5x8xbf16>
    %191 = vector.extract_strided_slice %23 {offsets = [0, 2, 0, 1, 0], sizes = [2, 1, 5, 5, 8], strides = [1, 1, 1, 1, 1]} : vector<2x4x7x8x8xbf16> to vector<2x1x5x5x8xbf16>
    %192 = vector.shape_cast %191 : vector<2x1x5x5x8xbf16> to vector<2x5x5x8xbf16>
    %193 = vector.extract_strided_slice %23 {offsets = [0, 3, 0, 1, 0], sizes = [2, 1, 5, 5, 8], strides = [1, 1, 1, 1, 1]} : vector<2x4x7x8x8xbf16> to vector<2x1x5x5x8xbf16>
    %194 = vector.shape_cast %193 : vector<2x1x5x5x8xbf16> to vector<2x5x5x8xbf16>
    %195 = vector.extract_strided_slice %23 {offsets = [0, 2, 0, 2, 0], sizes = [2, 1, 5, 5, 8], strides = [1, 1, 1, 1, 1]} : vector<2x4x7x8x8xbf16> to vector<2x1x5x5x8xbf16>
    %196 = vector.shape_cast %195 : vector<2x1x5x5x8xbf16> to vector<2x5x5x8xbf16>
    %197 = vector.extract_strided_slice %23 {offsets = [0, 3, 0, 2, 0], sizes = [2, 1, 5, 5, 8], strides = [1, 1, 1, 1, 1]} : vector<2x4x7x8x8xbf16> to vector<2x1x5x5x8xbf16>
    %198 = vector.shape_cast %197 : vector<2x1x5x5x8xbf16> to vector<2x5x5x8xbf16>
    %199 = vector.extract_strided_slice %23 {offsets = [0, 1, 1, 0, 0], sizes = [2, 1, 5, 5, 8], strides = [1, 1, 1, 1, 1]} : vector<2x4x7x8x8xbf16> to vector<2x1x5x5x8xbf16>
    %200 = vector.shape_cast %199 : vector<2x1x5x5x8xbf16> to vector<2x5x5x8xbf16>
    %201 = vector.extract_strided_slice %23 {offsets = [0, 0, 1, 1, 0], sizes = [2, 1, 5, 5, 8], strides = [1, 1, 1, 1, 1]} : vector<2x4x7x8x8xbf16> to vector<2x1x5x5x8xbf16>
    %202 = vector.shape_cast %201 : vector<2x1x5x5x8xbf16> to vector<2x5x5x8xbf16>
    %203 = vector.extract_strided_slice %23 {offsets = [0, 1, 1, 1, 0], sizes = [2, 1, 5, 5, 8], strides = [1, 1, 1, 1, 1]} : vector<2x4x7x8x8xbf16> to vector<2x1x5x5x8xbf16>
    %204 = vector.shape_cast %203 : vector<2x1x5x5x8xbf16> to vector<2x5x5x8xbf16>
    %205 = vector.extract_strided_slice %23 {offsets = [0, 0, 1, 2, 0], sizes = [2, 1, 5, 5, 8], strides = [1, 1, 1, 1, 1]} : vector<2x4x7x8x8xbf16> to vector<2x1x5x5x8xbf16>
    %206 = vector.shape_cast %205 : vector<2x1x5x5x8xbf16> to vector<2x5x5x8xbf16>
    %207 = vector.extract_strided_slice %23 {offsets = [0, 1, 1, 2, 0], sizes = [2, 1, 5, 5, 8], strides = [1, 1, 1, 1, 1]} : vector<2x4x7x8x8xbf16> to vector<2x1x5x5x8xbf16>
    %208 = vector.shape_cast %207 : vector<2x1x5x5x8xbf16> to vector<2x5x5x8xbf16>
    %209 = vector.extract_strided_slice %23 {offsets = [0, 3, 1, 0, 0], sizes = [2, 1, 5, 5, 8], strides = [1, 1, 1, 1, 1]} : vector<2x4x7x8x8xbf16> to vector<2x1x5x5x8xbf16>
    %210 = vector.shape_cast %209 : vector<2x1x5x5x8xbf16> to vector<2x5x5x8xbf16>
    %211 = vector.extract_strided_slice %23 {offsets = [0, 2, 1, 1, 0], sizes = [2, 1, 5, 5, 8], strides = [1, 1, 1, 1, 1]} : vector<2x4x7x8x8xbf16> to vector<2x1x5x5x8xbf16>
    %212 = vector.shape_cast %211 : vector<2x1x5x5x8xbf16> to vector<2x5x5x8xbf16>
    %213 = vector.extract_strided_slice %23 {offsets = [0, 3, 1, 1, 0], sizes = [2, 1, 5, 5, 8], strides = [1, 1, 1, 1, 1]} : vector<2x4x7x8x8xbf16> to vector<2x1x5x5x8xbf16>
    %214 = vector.shape_cast %213 : vector<2x1x5x5x8xbf16> to vector<2x5x5x8xbf16>
    %215 = vector.extract_strided_slice %23 {offsets = [0, 2, 1, 2, 0], sizes = [2, 1, 5, 5, 8], strides = [1, 1, 1, 1, 1]} : vector<2x4x7x8x8xbf16> to vector<2x1x5x5x8xbf16>
    %216 = vector.shape_cast %215 : vector<2x1x5x5x8xbf16> to vector<2x5x5x8xbf16>
    %217 = vector.extract_strided_slice %23 {offsets = [0, 3, 1, 2, 0], sizes = [2, 1, 5, 5, 8], strides = [1, 1, 1, 1, 1]} : vector<2x4x7x8x8xbf16> to vector<2x1x5x5x8xbf16>
    %218 = vector.shape_cast %217 : vector<2x1x5x5x8xbf16> to vector<2x5x5x8xbf16>
    %219 = vector.extract_strided_slice %23 {offsets = [0, 1, 2, 0, 0], sizes = [2, 1, 5, 5, 8], strides = [1, 1, 1, 1, 1]} : vector<2x4x7x8x8xbf16> to vector<2x1x5x5x8xbf16>
    %220 = vector.shape_cast %219 : vector<2x1x5x5x8xbf16> to vector<2x5x5x8xbf16>
    %221 = vector.extract_strided_slice %23 {offsets = [0, 0, 2, 1, 0], sizes = [2, 1, 5, 5, 8], strides = [1, 1, 1, 1, 1]} : vector<2x4x7x8x8xbf16> to vector<2x1x5x5x8xbf16>
    %222 = vector.shape_cast %221 : vector<2x1x5x5x8xbf16> to vector<2x5x5x8xbf16>
    %223 = vector.extract_strided_slice %23 {offsets = [0, 1, 2, 1, 0], sizes = [2, 1, 5, 5, 8], strides = [1, 1, 1, 1, 1]} : vector<2x4x7x8x8xbf16> to vector<2x1x5x5x8xbf16>
    %224 = vector.shape_cast %223 : vector<2x1x5x5x8xbf16> to vector<2x5x5x8xbf16>
    %225 = vector.extract_strided_slice %23 {offsets = [0, 0, 2, 2, 0], sizes = [2, 1, 5, 5, 8], strides = [1, 1, 1, 1, 1]} : vector<2x4x7x8x8xbf16> to vector<2x1x5x5x8xbf16>
    %226 = vector.shape_cast %225 : vector<2x1x5x5x8xbf16> to vector<2x5x5x8xbf16>
    %227 = vector.extract_strided_slice %23 {offsets = [0, 1, 2, 2, 0], sizes = [2, 1, 5, 5, 8], strides = [1, 1, 1, 1, 1]} : vector<2x4x7x8x8xbf16> to vector<2x1x5x5x8xbf16>
    %228 = vector.shape_cast %227 : vector<2x1x5x5x8xbf16> to vector<2x5x5x8xbf16>
    %229 = vector.extract_strided_slice %23 {offsets = [0, 3, 2, 0, 0], sizes = [2, 1, 5, 5, 8], strides = [1, 1, 1, 1, 1]} : vector<2x4x7x8x8xbf16> to vector<2x1x5x5x8xbf16>
    %230 = vector.shape_cast %229 : vector<2x1x5x5x8xbf16> to vector<2x5x5x8xbf16>
    %231 = vector.extract_strided_slice %23 {offsets = [0, 2, 2, 1, 0], sizes = [2, 1, 5, 5, 8], strides = [1, 1, 1, 1, 1]} : vector<2x4x7x8x8xbf16> to vector<2x1x5x5x8xbf16>
    %232 = vector.shape_cast %231 : vector<2x1x5x5x8xbf16> to vector<2x5x5x8xbf16>
    %233 = vector.extract_strided_slice %23 {offsets = [0, 3, 2, 1, 0], sizes = [2, 1, 5, 5, 8], strides = [1, 1, 1, 1, 1]} : vector<2x4x7x8x8xbf16> to vector<2x1x5x5x8xbf16>
    %234 = vector.shape_cast %233 : vector<2x1x5x5x8xbf16> to vector<2x5x5x8xbf16>
    %235 = vector.extract_strided_slice %23 {offsets = [0, 2, 2, 2, 0], sizes = [2, 1, 5, 5, 8], strides = [1, 1, 1, 1, 1]} : vector<2x4x7x8x8xbf16> to vector<2x1x5x5x8xbf16>
    %236 = vector.shape_cast %235 : vector<2x1x5x5x8xbf16> to vector<2x5x5x8xbf16>
    %237 = vector.extract_strided_slice %23 {offsets = [0, 3, 2, 2, 0], sizes = [2, 1, 5, 5, 8], strides = [1, 1, 1, 1, 1]} : vector<2x4x7x8x8xbf16> to vector<2x1x5x5x8xbf16>
    %238 = vector.shape_cast %237 : vector<2x1x5x5x8xbf16> to vector<2x5x5x8xbf16>
    %239 = tpu.concatenate %190, %192, %194, %196, %198, %200, %202, %204, %206, %208, %210, %212, %214, %216, %218, %220 in 3 : vector<2x5x5x8xbf16>, vector<2x5x5x8xbf16>, vector<2x5x5x8xbf16>, vector<2x5x5x8xbf16>, vector<2x5x5x8xbf16>, vector<2x5x5x8xbf16>, vector<2x5x5x8xbf16>, vector<2x5x5x8xbf16>, vector<2x5x5x8xbf16>, vector<2x5x5x8xbf16>, vector<2x5x5x8xbf16>, vector<2x5x5x8xbf16>, vector<2x5x5x8xbf16>, vector<2x5x5x8xbf16>, vector<2x5x5x8xbf16>, vector<2x5x5x8xbf16> -> vector<2x5x5x128xbf16>
    %240 = tpu.concatenate %222, %224, %226, %228, %230, %232, %234, %236, %238 in 3 : vector<2x5x5x8xbf16>, vector<2x5x5x8xbf16>, vector<2x5x5x8xbf16>, vector<2x5x5x8xbf16>, vector<2x5x5x8xbf16>, vector<2x5x5x8xbf16>, vector<2x5x5x8xbf16>, vector<2x5x5x8xbf16>, vector<2x5x5x8xbf16> -> vector<2x5x5x72xbf16>
    %241 = tpu.concatenate %239, %240 in 3 : vector<2x5x5x128xbf16>, vector<2x5x5x72xbf16> -> vector<2x5x5x200xbf16>
    %cst_23 = arith.constant 0.000000e+00 : bf16
    %242 = vector.broadcast %cst_23 : bf16 to vector<2x5x3x200xbf16>
    %243 = tpu.concatenate %241, %242 in 2 : vector<2x5x5x200xbf16>, vector<2x5x3x200xbf16> -> vector<2x5x8x200xbf16>
    %244 = vector.shape_cast %78 : vector<2x5x8x200xbf16> to vector<2x1x5x8x200xbf16>
    %245 = vector.shape_cast %133 : vector<2x5x8x200xbf16> to vector<2x1x5x8x200xbf16>
    %246 = vector.shape_cast %188 : vector<2x5x8x200xbf16> to vector<2x1x5x8x200xbf16>
    %247 = vector.shape_cast %243 : vector<2x5x8x200xbf16> to vector<2x1x5x8x200xbf16>
    %248 = tpu.concatenate %244, %245, %246, %247 in 1 : vector<2x1x5x8x200xbf16>, vector<2x1x5x8x200xbf16>, vector<2x1x5x8x200xbf16>, vector<2x1x5x8x200xbf16> -> vector<2x4x5x8x200xbf16>
    %249 = vector.shape_cast %248 : vector<2x4x5x8x200xbf16> to vector<320x200xbf16>
    %c0_24 = arith.constant 0 : index
    %c0_25 = arith.constant 0 : index
    %250 = vector.load %arg4[%c0_24, %c0_25] : memref<200x128xbf16, #tpu.memory_space<vmem>>, vector<200x128xbf16>
    %cst_26 = arith.constant dense<0.000000e+00> : vector<320x128xf32>
    %251 = tpu.matmul %249, %250, %cst_26 {dimension_numbers = #tpu.dot_dimension_numbers<[1], [0], [0], [1], [0, 0, 1, 1], [], []>} : vector<320x200xbf16>, vector<200x128xbf16>, vector<320x128xf32> -> vector<320x128xf32>
    %252 = vector.shape_cast %251 : vector<320x128xf32> to vector<2x4x5x8x128xf32>
    %cst_27 = arith.constant dense<0xFF800000> : vector<2x5x8x128xf32>
    %253 = vector.multi_reduction <maximumf>, %252, %cst_27 [1] : vector<2x4x5x8x128xf32> to vector<2x5x8x128xf32>
    %c0_28 = arith.constant 0 : index
    %c0_29 = arith.constant 0 : index
    %254 = vector.load %arg5[%c0_28, %c0_29] : memref<1x128xf32, #tpu.memory_space<vmem>>, vector<1x128xf32>
    %255 = vector.shape_cast %254 : vector<1x128xf32> to vector<1x1x1x128xf32>
    %256 = vector.broadcast %255 : vector<1x1x1x128xf32> to vector<2x5x8x128xf32>
    %257 = arith.addf %253, %256 : vector<2x5x8x128xf32>
    %cst_30 = arith.constant 0.000000e+00 : f32
    %258 = vector.broadcast %cst_30 : f32 to vector<2x5x8x128xf32>
    %259 = arith.maximumf %257, %258 : vector<2x5x8x128xf32>
    %260 = arith.truncf %259 : vector<2x5x8x128xf32> to vector<2x5x8x128xbf16>
    %261 = vector.extract_strided_slice %260 {offsets = [0, 0, 0, 0], sizes = [2, 1, 1, 16], strides = [1, 1, 1, 1]} : vector<2x5x8x128xbf16> to vector<2x1x1x16xbf16>
    %262 = vector.shape_cast %261 : vector<2x1x1x16xbf16> to vector<2x16xbf16>
    %263 = vector.extract_strided_slice %260 {offsets = [0, 0, 1, 0], sizes = [2, 1, 1, 16], strides = [1, 1, 1, 1]} : vector<2x5x8x128xbf16> to vector<2x1x1x16xbf16>
    %264 = vector.shape_cast %263 : vector<2x1x1x16xbf16> to vector<2x16xbf16>
    %265 = vector.extract_strided_slice %260 {offsets = [0, 0, 2, 0], sizes = [2, 1, 1, 16], strides = [1, 1, 1, 1]} : vector<2x5x8x128xbf16> to vector<2x1x1x16xbf16>
    %266 = vector.shape_cast %265 : vector<2x1x1x16xbf16> to vector<2x16xbf16>
    %267 = vector.extract_strided_slice %260 {offsets = [0, 0, 3, 0], sizes = [2, 1, 1, 16], strides = [1, 1, 1, 1]} : vector<2x5x8x128xbf16> to vector<2x1x1x16xbf16>
    %268 = vector.shape_cast %267 : vector<2x1x1x16xbf16> to vector<2x16xbf16>
    %269 = vector.extract_strided_slice %260 {offsets = [0, 0, 4, 0], sizes = [2, 1, 1, 16], strides = [1, 1, 1, 1]} : vector<2x5x8x128xbf16> to vector<2x1x1x16xbf16>
    %270 = vector.shape_cast %269 : vector<2x1x1x16xbf16> to vector<2x16xbf16>
    %271 = vector.extract_strided_slice %260 {offsets = [0, 1, 0, 0], sizes = [2, 1, 1, 16], strides = [1, 1, 1, 1]} : vector<2x5x8x128xbf16> to vector<2x1x1x16xbf16>
    %272 = vector.shape_cast %271 : vector<2x1x1x16xbf16> to vector<2x16xbf16>
    %273 = vector.extract_strided_slice %260 {offsets = [0, 1, 1, 0], sizes = [2, 1, 1, 16], strides = [1, 1, 1, 1]} : vector<2x5x8x128xbf16> to vector<2x1x1x16xbf16>
    %274 = vector.shape_cast %273 : vector<2x1x1x16xbf16> to vector<2x16xbf16>
    %275 = vector.extract_strided_slice %260 {offsets = [0, 1, 2, 0], sizes = [2, 1, 1, 16], strides = [1, 1, 1, 1]} : vector<2x5x8x128xbf16> to vector<2x1x1x16xbf16>
    %276 = vector.shape_cast %275 : vector<2x1x1x16xbf16> to vector<2x16xbf16>
    %277 = vector.extract_strided_slice %260 {offsets = [0, 1, 3, 0], sizes = [2, 1, 1, 16], strides = [1, 1, 1, 1]} : vector<2x5x8x128xbf16> to vector<2x1x1x16xbf16>
    %278 = vector.shape_cast %277 : vector<2x1x1x16xbf16> to vector<2x16xbf16>
    %279 = vector.extract_strided_slice %260 {offsets = [0, 1, 4, 0], sizes = [2, 1, 1, 16], strides = [1, 1, 1, 1]} : vector<2x5x8x128xbf16> to vector<2x1x1x16xbf16>
    %280 = vector.shape_cast %279 : vector<2x1x1x16xbf16> to vector<2x16xbf16>
    %281 = vector.extract_strided_slice %260 {offsets = [0, 2, 0, 0], sizes = [2, 1, 1, 16], strides = [1, 1, 1, 1]} : vector<2x5x8x128xbf16> to vector<2x1x1x16xbf16>
    %282 = vector.shape_cast %281 : vector<2x1x1x16xbf16> to vector<2x16xbf16>
    %283 = vector.extract_strided_slice %260 {offsets = [0, 2, 1, 0], sizes = [2, 1, 1, 16], strides = [1, 1, 1, 1]} : vector<2x5x8x128xbf16> to vector<2x1x1x16xbf16>
    %284 = vector.shape_cast %283 : vector<2x1x1x16xbf16> to vector<2x16xbf16>
    %285 = vector.extract_strided_slice %260 {offsets = [0, 2, 2, 0], sizes = [2, 1, 1, 16], strides = [1, 1, 1, 1]} : vector<2x5x8x128xbf16> to vector<2x1x1x16xbf16>
    %286 = vector.shape_cast %285 : vector<2x1x1x16xbf16> to vector<2x16xbf16>
    %287 = vector.extract_strided_slice %260 {offsets = [0, 2, 3, 0], sizes = [2, 1, 1, 16], strides = [1, 1, 1, 1]} : vector<2x5x8x128xbf16> to vector<2x1x1x16xbf16>
    %288 = vector.shape_cast %287 : vector<2x1x1x16xbf16> to vector<2x16xbf16>
    %289 = vector.extract_strided_slice %260 {offsets = [0, 2, 4, 0], sizes = [2, 1, 1, 16], strides = [1, 1, 1, 1]} : vector<2x5x8x128xbf16> to vector<2x1x1x16xbf16>
    %290 = vector.shape_cast %289 : vector<2x1x1x16xbf16> to vector<2x16xbf16>
    %291 = vector.extract_strided_slice %260 {offsets = [0, 3, 0, 0], sizes = [2, 1, 1, 16], strides = [1, 1, 1, 1]} : vector<2x5x8x128xbf16> to vector<2x1x1x16xbf16>
    %292 = vector.shape_cast %291 : vector<2x1x1x16xbf16> to vector<2x16xbf16>
    %293 = vector.extract_strided_slice %260 {offsets = [0, 3, 1, 0], sizes = [2, 1, 1, 16], strides = [1, 1, 1, 1]} : vector<2x5x8x128xbf16> to vector<2x1x1x16xbf16>
    %294 = vector.shape_cast %293 : vector<2x1x1x16xbf16> to vector<2x16xbf16>
    %295 = vector.extract_strided_slice %260 {offsets = [0, 3, 2, 0], sizes = [2, 1, 1, 16], strides = [1, 1, 1, 1]} : vector<2x5x8x128xbf16> to vector<2x1x1x16xbf16>
    %296 = vector.shape_cast %295 : vector<2x1x1x16xbf16> to vector<2x16xbf16>
    %297 = vector.extract_strided_slice %260 {offsets = [0, 3, 3, 0], sizes = [2, 1, 1, 16], strides = [1, 1, 1, 1]} : vector<2x5x8x128xbf16> to vector<2x1x1x16xbf16>
    %298 = vector.shape_cast %297 : vector<2x1x1x16xbf16> to vector<2x16xbf16>
    %299 = vector.extract_strided_slice %260 {offsets = [0, 3, 4, 0], sizes = [2, 1, 1, 16], strides = [1, 1, 1, 1]} : vector<2x5x8x128xbf16> to vector<2x1x1x16xbf16>
    %300 = vector.shape_cast %299 : vector<2x1x1x16xbf16> to vector<2x16xbf16>
    %301 = vector.extract_strided_slice %260 {offsets = [0, 4, 0, 0], sizes = [2, 1, 1, 16], strides = [1, 1, 1, 1]} : vector<2x5x8x128xbf16> to vector<2x1x1x16xbf16>
    %302 = vector.shape_cast %301 : vector<2x1x1x16xbf16> to vector<2x16xbf16>
    %303 = vector.extract_strided_slice %260 {offsets = [0, 4, 1, 0], sizes = [2, 1, 1, 16], strides = [1, 1, 1, 1]} : vector<2x5x8x128xbf16> to vector<2x1x1x16xbf16>
    %304 = vector.shape_cast %303 : vector<2x1x1x16xbf16> to vector<2x16xbf16>
    %305 = vector.extract_strided_slice %260 {offsets = [0, 4, 2, 0], sizes = [2, 1, 1, 16], strides = [1, 1, 1, 1]} : vector<2x5x8x128xbf16> to vector<2x1x1x16xbf16>
    %306 = vector.shape_cast %305 : vector<2x1x1x16xbf16> to vector<2x16xbf16>
    %307 = vector.extract_strided_slice %260 {offsets = [0, 4, 3, 0], sizes = [2, 1, 1, 16], strides = [1, 1, 1, 1]} : vector<2x5x8x128xbf16> to vector<2x1x1x16xbf16>
    %308 = vector.shape_cast %307 : vector<2x1x1x16xbf16> to vector<2x16xbf16>
    %309 = vector.extract_strided_slice %260 {offsets = [0, 4, 4, 0], sizes = [2, 1, 1, 16], strides = [1, 1, 1, 1]} : vector<2x5x8x128xbf16> to vector<2x1x1x16xbf16>
    %310 = vector.shape_cast %309 : vector<2x1x1x16xbf16> to vector<2x16xbf16>
    %311 = tpu.concatenate %262, %264, %266, %268, %270, %272, %274, %276, %278, %280, %282, %284, %286, %288, %290, %292 in 1 : vector<2x16xbf16>, vector<2x16xbf16>, vector<2x16xbf16>, vector<2x16xbf16>, vector<2x16xbf16>, vector<2x16xbf16>, vector<2x16xbf16>, vector<2x16xbf16>, vector<2x16xbf16>, vector<2x16xbf16>, vector<2x16xbf16>, vector<2x16xbf16>, vector<2x16xbf16>, vector<2x16xbf16>, vector<2x16xbf16>, vector<2x16xbf16> -> vector<2x256xbf16>
    %312 = tpu.concatenate %294, %296, %298, %300, %302, %304, %306, %308, %310 in 1 : vector<2x16xbf16>, vector<2x16xbf16>, vector<2x16xbf16>, vector<2x16xbf16>, vector<2x16xbf16>, vector<2x16xbf16>, vector<2x16xbf16>, vector<2x16xbf16>, vector<2x16xbf16> -> vector<2x144xbf16>
    %313 = tpu.concatenate %311, %312 in 1 : vector<2x256xbf16>, vector<2x144xbf16> -> vector<2x400xbf16>
    %c0_31 = arith.constant 0 : index
    %c0_32 = arith.constant 0 : index
    %314 = vector.load %arg6[%c0_31, %c0_32] : memref<400x128xbf16, #tpu.memory_space<vmem>>, vector<400x128xbf16>
    %cst_33 = arith.constant dense<0.000000e+00> : vector<2x128xf32>
    %315 = tpu.matmul %313, %314, %cst_33 {dimension_numbers = #tpu.dot_dimension_numbers<[1], [0], [0], [1], [0, 0, 1, 1], [], []>} : vector<2x400xbf16>, vector<400x128xbf16>, vector<2x128xf32> -> vector<2x128xf32>
    %c0_34 = arith.constant 0 : index
    %c0_35 = arith.constant 0 : index
    %316 = vector.load %arg7[%c0_34, %c0_35] : memref<1x128xf32, #tpu.memory_space<vmem>>, vector<1x128xf32>
    %317 = vector.broadcast %316 : vector<1x128xf32> to vector<2x128xf32>
    %318 = arith.addf %315, %317 : vector<2x128xf32>
    %cst_36 = arith.constant 0.000000e+00 : f32
    %319 = vector.broadcast %cst_36 : f32 to vector<2x128xf32>
    %320 = arith.maximumf %318, %319 : vector<2x128xf32>
    %321 = arith.truncf %320 : vector<2x128xf32> to vector<2x128xbf16>
    %c0_37 = arith.constant 0 : index
    %c0_38 = arith.constant 0 : index
    %322 = vector.load %arg8[%c0_37, %c0_38] : memref<128x128xbf16, #tpu.memory_space<vmem>>, vector<128x128xbf16>
    %cst_39 = arith.constant dense<0.000000e+00> : vector<2x128xf32>
    %323 = tpu.matmul %321, %322, %cst_39 {dimension_numbers = #tpu.dot_dimension_numbers<[1], [0], [0], [1], [0, 0, 1, 1], [], []>} : vector<2x128xbf16>, vector<128x128xbf16>, vector<2x128xf32> -> vector<2x128xf32>
    %c0_40 = arith.constant 0 : index
    %c0_41 = arith.constant 0 : index
    %324 = vector.load %arg9[%c0_40, %c0_41] : memref<1x128xf32, #tpu.memory_space<vmem>>, vector<1x128xf32>
    %325 = vector.broadcast %324 : vector<1x128xf32> to vector<2x128xf32>
    %326 = arith.addf %323, %325 : vector<2x128xf32>
    %cst_42 = arith.constant 0.000000e+00 : f32
    %327 = vector.broadcast %cst_42 : f32 to vector<2x128xf32>
    %328 = arith.maximumf %326, %327 : vector<2x128xf32>
    %329 = arith.truncf %328 : vector<2x128xf32> to vector<2x128xbf16>
    %c0_43 = arith.constant 0 : index
    %c0_44 = arith.constant 0 : index
    %330 = vector.load %arg10[%c0_43, %c0_44] : memref<128x128xbf16, #tpu.memory_space<vmem>>, vector<128x128xbf16>
    %cst_45 = arith.constant dense<0.000000e+00> : vector<2x128xf32>
    %331 = tpu.matmul %329, %330, %cst_45 {dimension_numbers = #tpu.dot_dimension_numbers<[1], [0], [0], [1], [0, 0, 1, 1], [], []>} : vector<2x128xbf16>, vector<128x128xbf16>, vector<2x128xf32> -> vector<2x128xf32>
    %c0_46 = arith.constant 0 : index
    %c0_47 = arith.constant 0 : index
    %332 = vector.load %arg11[%c0_46, %c0_47] : memref<1x128xf32, #tpu.memory_space<vmem>>, vector<1x128xf32>
    %333 = vector.broadcast %332 : vector<1x128xf32> to vector<2x128xf32>
    %334 = arith.addf %331, %333 : vector<2x128xf32>
    %335 = vector.shape_cast %334 : vector<2x128xf32> to vector<1x2x128xf32>
    %c0_48 = arith.constant 0 : index
    %c0_49 = arith.constant 0 : index
    %c0_50 = arith.constant 0 : index
    %336 = vector.load %arg12[%c0_48, %c0_49, %c0_50] : memref<1x2x128xf32, #tpu.memory_space<vmem>>, vector<1x2x128xf32>
    tpu.vector_store %arg12[%c0_48, %c0_49, %c0_50], %335 {strides = array<i32>} : memref<1x2x128xf32, #tpu.memory_space<vmem>>, vector<1x2x128xf32>,
    return
  }
  func.func @transform_0(%arg0: i32) -> (i32, i32, i32, i32) {
    %c0_i32 = arith.constant 0 : i32
    %c0_i32_0 = arith.constant 0 : i32
    %c0_i32_1 = arith.constant 0 : i32
    %c0_i32_2 = arith.constant 0 : i32
    return %arg0, %c0_i32, %c0_i32_0, %c0_i32_1 : i32, i32, i32, i32
  }
  func.func @transform_1(%arg0: i32) -> (i32, i32) {
    %c0_i32 = arith.constant 0 : i32
    %c0_i32_0 = arith.constant 0 : i32
    %c0_i32_1 = arith.constant 0 : i32
    return %c0_i32, %c0_i32_0 : i32, i32
  }
  func.func @transform_2(%arg0: i32) -> (i32, i32) {
    %c0_i32 = arith.constant 0 : i32
    %c0_i32_0 = arith.constant 0 : i32
    %c0_i32_1 = arith.constant 0 : i32
    return %c0_i32, %c0_i32_0 : i32, i32
  }
  func.func @transform_3(%arg0: i32) -> (i32, i32) {
    %c0_i32 = arith.constant 0 : i32
    %c0_i32_0 = arith.constant 0 : i32
    %c0_i32_1 = arith.constant 0 : i32
    return %c0_i32, %c0_i32_0 : i32, i32
  }
  func.func @transform_4(%arg0: i32) -> (i32, i32) {
    %c0_i32 = arith.constant 0 : i32
    %c0_i32_0 = arith.constant 0 : i32
    %c0_i32_1 = arith.constant 0 : i32
    return %c0_i32, %c0_i32_0 : i32, i32
  }
  func.func @transform_5(%arg0: i32) -> (i32, i32) {
    %c0_i32 = arith.constant 0 : i32
    %c0_i32_0 = arith.constant 0 : i32
    %c0_i32_1 = arith.constant 0 : i32
    return %c0_i32, %c0_i32_0 : i32, i32
  }
  func.func @transform_6(%arg0: i32) -> (i32, i32) {
    %c0_i32 = arith.constant 0 : i32
    %c0_i32_0 = arith.constant 0 : i32
    %c0_i32_1 = arith.constant 0 : i32
    return %c0_i32, %c0_i32_0 : i32, i32
  }
  func.func @transform_7(%arg0: i32) -> (i32, i32) {
    %c0_i32 = arith.constant 0 : i32
    %c0_i32_0 = arith.constant 0 : i32
    %c0_i32_1 = arith.constant 0 : i32
    return %c0_i32, %c0_i32_0 : i32, i32
  }
  func.func @transform_8(%arg0: i32) -> (i32, i32) {
    %c0_i32 = arith.constant 0 : i32
    %c0_i32_0 = arith.constant 0 : i32
    %c0_i32_1 = arith.constant 0 : i32
    return %c0_i32, %c0_i32_0 : i32, i32
  }
  func.func @transform_9(%arg0: i32) -> (i32, i32) {
    %c0_i32 = arith.constant 0 : i32
    %c0_i32_0 = arith.constant 0 : i32
    %c0_i32_1 = arith.constant 0 : i32
    return %c0_i32, %c0_i32_0 : i32, i32
  }
  func.func @transform_10(%arg0: i32) -> (i32, i32) {
    %c0_i32 = arith.constant 0 : i32
    %c0_i32_0 = arith.constant 0 : i32
    %c0_i32_1 = arith.constant 0 : i32
    return %c0_i32, %c0_i32_0 : i32, i32
  }
  func.func @transform_11(%arg0: i32) -> (i32, i32, i32) {
    %c0_i32 = arith.constant 0 : i32
    %c0_i32_0 = arith.constant 0 : i32
    %c0_i32_1 = arith.constant 0 : i32
    return %arg0, %c0_i32, %c0_i32_0 : i32, i32, i32
  }
}

</mosaic_0001>

<llo_original>
// kernel: cnn_cifar1_forward.1
$region0: #{cnn_cifar1_forward.1}
  #allocation0 [shape = 'u32[]', space=smem, size = 0x4, offset = 0x4, fixed_abs, tag = 'smem constant byte address 0x4 - core index']
  #allocation1 [shape = 'u32[72,128]{1,0:T(1,128)}', space=vmem, size = 0x9000, scoped, tag = 'internal scratch']
  %s0 = inlined_call_operand.vmem [shape: bf16[4,4,224,128], index: 0, kind: input, shape index: {}]
  %s1 = inlined_call_operand.vmem [shape: bf16[128,128], index: 1, kind: input, shape index: {}]
  %s2 = inlined_call_operand.vmem [shape: f32[1,128], index: 2, kind: input, shape index: {}]
  %s3 = inlined_call_operand.vmem [shape: bf16[200,128], index: 3, kind: input, shape index: {}]
  %s4 = inlined_call_operand.vmem [shape: f32[1,128], index: 4, kind: input, shape index: {}]
  %s5 = inlined_call_operand.vmem [shape: bf16[400,128], index: 5, kind: input, shape index: {}]
  %s6 = inlined_call_operand.vmem [shape: f32[1,128], index: 6, kind: input, shape index: {}]
  %s7 = inlined_call_operand.vmem [shape: bf16[128,128], index: 7, kind: input, shape index: {}]
  %s8 = inlined_call_operand.vmem [shape: f32[1,128], index: 8, kind: input, shape index: {}]
  %s9 = inlined_call_operand.vmem [shape: bf16[128,128], index: 9, kind: input, shape index: {}]
  %s10 = inlined_call_operand.vmem [shape: f32[1,128], index: 10, kind: input, shape index: {}]
  %s11 = inlined_call_operand.hbm [shape: f32[2,2,128], index: 11, kind: output, shape index: {}]
  %s12 = sld [smem:[#allocation0]]
  $region77: #{cnn_cifar1_forward.1} parent=0
    _
  %s14 = ssub.s32 1, %s12
  %s15 = scalar_select 0, %s14, %s12
  $region1: #{cnn_cifar1_forward.1} parent=0
    #allocation2 [shape = 'u8[2048]{0}', space=vmem, size = 0x800, scoped, tag = 'output window, operand 0']
    #allocation3 [shape = 's32[2]{0}', space=sflag, size = 0x8, scoped, tag = 'scoped memory for cnn_cifar1_forward.1']
    %16 = vsyncpa [#allocation3], 0
    %s17 = scalar_lea.sflag [#allocation3], 1
    %18 = vsyncpa %s17, 0
    loop: start=0, step=1, limit=4
    $region2: #{cnn_cifar1_forward.1} parent=1 // loop_pre_header
      _
    $region3: #{cnn_cifar1_forward.1} parent=1 // loop_header
      %s20 = sphi 0, %s24
      %p21 = scmp.ge.s32.totalorder %s20, 4
      %s30 = sphi 0, %s32
      %s33 = sphi 0, %s30
      %s34 = sphi 0, %s33
      %s50 = sphi 0, %s34
      %s54 = sphi 0, %s54
      %s56 = sphi 0, %s54
      %s57 = sphi 0, %s56
      %s71 = sphi 0, %s57
      %s75 = sphi 0, %s75
      %s77 = sphi 0, %s75
      %s78 = sphi 0, %s77
      %s92 = sphi 0, %s78
      %s96 = sphi 0, %s96
      %s98 = sphi 0, %s96
      %s99 = sphi 0, %s98
      %s113 = sphi 0, %s99
      %s117 = sphi 0, %s117
      %s119 = sphi 0, %s117
      %s120 = sphi 0, %s119
      %s134 = sphi 0, %s120
      %s138 = sphi 0, %s138
      %s140 = sphi 0, %s138
      %s141 = sphi 0, %s140
      %s155 = sphi 0, %s141
      %s159 = sphi 0, %s159
      %s161 = sphi 0, %s159
      %s162 = sphi 0, %s161
      %s176 = sphi 0, %s162
      %s180 = sphi 0, %s180
      %s182 = sphi 0, %s180
      %s183 = sphi 0, %s182
      %s197 = sphi 0, %s183
      %s201 = sphi 0, %s201
      %s203 = sphi 0, %s201
      %s204 = sphi 0, %s203
      %s218 = sphi 0, %s204
      %s222 = sphi 0, %s222
      %s224 = sphi 0, %s222
      %s225 = sphi 0, %s224
      %s239 = sphi 0, %s225
      %s243 = sphi 0, %s243
      %s245 = sphi 0, %s243
      %s246 = sphi 0, %s245
      %s260 = sphi 0, %s246
      %s266 = sphi 0, %s268
      %s269 = sphi 0, %s266
      %s270 = sphi 0, %s269
      %s286 = sphi 0, %s270
    $region4: #{cnn_cifar1_forward.1} parent=1 // loop_header_branch
      %23 = sbr.rel (%p21) target = $region8
    $region5: #{cnn_cifar1_forward.1} parent=1 // loop_body
      %s25 = ssub.s32 %s20, 1
      %s26 = ssub.s32 %s20, 2
      %s27 = sadd.s32 %s20, 1
      %s28 = ssub.s32 %s20, %s27
      %p29 = scmp.eq.s32.totalorder %s28, 0
      %s31 = sadd.s32 %s30, 1
      %s32 = scalar_select %p29, %s30, %s31
      %p35 = pneg %p29
      %p36 = scmp.eq.s32.totalorder %s20, 1
      %p37 = por %p35, %p36
      %p38 = scmp.ne.s32.totalorder %s30, %s33
      %p39 = scmp.eq.s32.totalorder %s20, 0
      %p40 = por %p38, %p39
      %p41 = scmp.ne.s32.totalorder %s30, %s33
      %p42 = scmp.eq.s32.totalorder %s25, 1
      %p43 = por %p41, %p42
      %p44 = scmp.ne.s32.totalorder %s33, %s34
      %p45 = scmp.eq.s32.totalorder %s25, 0
      %p46 = por %p44, %p45
      %p47 = scmp.ne.s32.totalorder %s33, %s34
      %p48 = scmp.eq.s32.totalorder %s26, 1
      %p49 = por %p47, %p48
      %p51 = scmp.ne.s32.totalorder %s34, %s50
      %p52 = scmp.eq.s32.totalorder %s26, 0
      %p53 = por %p51, %p52
      %s55 = sadd.s32 %s54, 1
      %p58 = scmp.eq.s32.totalorder %s20, 1
      %p59 = scmp.ne.s32.totalorder %s54, %s56
      %p60 = scmp.eq.s32.totalorder %s20, 0
      %p61 = por %p59, %p60
      %p62 = scmp.ne.s32.totalorder %s54, %s56
      %p63 = scmp.eq.s32.totalorder %s25, 1
      %p64 = por %p62, %p63
      %p65 = scmp.ne.s32.totalorder %s56, %s57
      %p66 = scmp.eq.s32.totalorder %s25, 0
      %p67 = por %p65, %p66
      %p68 = scmp.ne.s32.totalorder %s56, %s57
      %p69 = scmp.eq.s32.totalorder %s26, 1
      %p70 = por %p68, %p69
      %p72 = scmp.ne.s32.totalorder %s57, %s71
      %p73 = scmp.eq.s32.totalorder %s26, 0
      %p74 = por %p72, %p73
      %s76 = sadd.s32 %s75, 1
      %p79 = scmp.eq.s32.totalorder %s20, 1
      %p80 = scmp.ne.s32.totalorder %s75, %s77
      %p81 = scmp.eq.s32.totalorder %s20, 0
      %p82 = por %p80, %p81
      %p83 = scmp.ne.s32.totalorder %s75, %s77
      %p84 = scmp.eq.s32.totalorder %s25, 1
      %p85 = por %p83, %p84
      %p86 = scmp.ne.s32.totalorder %s77, %s78
      %p87 = scmp.eq.s32.totalorder %s25, 0
      %p88 = por %p86, %p87
      %p89 = scmp.ne.s32.totalorder %s77, %s78
      %p90 = scmp.eq.s32.totalorder %s26, 1
      %p91 = por %p89, %p90
      %p93 = scmp.ne.s32.totalorder %s78, %s92
      %p94 = scmp.eq.s32.totalorder %s26, 0
      %p95 = por %p93, %p94
      %s97 = sadd.s32 %s96, 1
      %p100 = scmp.eq.s32.totalorder %s20, 1
      %p101 = scmp.ne.s32.totalorder %s96, %s98
      %p102 = scmp.eq.s32.totalorder %s20, 0
      %p103 = por %p101, %p102
      %p104 = scmp.ne.s32.totalorder %s96, %s98
      %p105 = scmp.eq.s32.totalorder %s25, 1
      %p106 = por %p104, %p105
      %p107 = scmp.ne.s32.totalorder %s98, %s99
      %p108 = scmp.eq.s32.totalorder %s25, 0
      %p109 = por %p107, %p108
      %p110 = scmp.ne.s32.totalorder %s98, %s99
      %p111 = scmp.eq.s32.totalorder %s26, 1
      %p112 = por %p110, %p111
      %p114 = scmp.ne.s32.totalorder %s99, %s113
      %p115 = scmp.eq.s32.totalorder %s26, 0
      %p116 = por %p114, %p115
      %s118 = sadd.s32 %s117, 1
      %p121 = scmp.eq.s32.totalorder %s20, 1
      %p122 = scmp.ne.s32.totalorder %s117, %s119
      %p123 = scmp.eq.s32.totalorder %s20, 0
      %p124 = por %p122, %p123
      %p125 = scmp.ne.s32.totalorder %s117, %s119
      %p126 = scmp.eq.s32.totalorder %s25, 1
      %p127 = por %p125, %p126
      %p128 = scmp.ne.s32.totalorder %s119, %s120
      %p129 = scmp.eq.s32.totalorder %s25, 0
      %p130 = por %p128, %p129
      %p131 = scmp.ne.s32.totalorder %s119, %s120
      %p132 = scmp.eq.s32.totalorder %s26, 1
      %p133 = por %p131, %p132
      %p135 = scmp.ne.s32.totalorder %s120, %s134
      %p136 = scmp.eq.s32.totalorder %s26, 0
      %p137 = por %p135, %p136
      %s139 = sadd.s32 %s138, 1
      %p142 = scmp.eq.s32.totalorder %s20, 1
      %p143 = scmp.ne.s32.totalorder %s138, %s140
      %p144 = scmp.eq.s32.totalorder %s20, 0
      %p145 = por %p143, %p144
      %p146 = scmp.ne.s32.totalorder %s138, %s140
      %p147 = scmp.eq.s32.totalorder %s25, 1
      %p148 = por %p146, %p147
      %p149 = scmp.ne.s32.totalorder %s140, %s141
      %p150 = scmp.eq.s32.totalorder %s25, 0
      %p151 = por %p149, %p150
      %p152 = scmp.ne.s32.totalorder %s140, %s141
      %p153 = scmp.eq.s32.totalorder %s26, 1
      %p154 = por %p152, %p153
      %p156 = scmp.ne.s32.totalorder %s141, %s155
      %p157 = scmp.eq.s32.totalorder %s26, 0
      %p158 = por %p156, %p157
      %s160 = sadd.s32 %s159, 1
      %p163 = scmp.eq.s32.totalorder %s20, 1
      %p164 = scmp.ne.s32.totalorder %s159, %s161
      %p165 = scmp.eq.s32.totalorder %s20, 0
      %p166 = por %p164, %p165
      %p167 = scmp.ne.s32.totalorder %s159, %s161
      %p168 = scmp.eq.s32.totalorder %s25, 1
      %p169 = por %p167, %p168
      %p170 = scmp.ne.s32.totalorder %s161, %s162
      %p171 = scmp.eq.s32.totalorder %s25, 0
      %p172 = por %p170, %p171
      %p173 = scmp.ne.s32.totalorder %s161, %s162
      %p174 = scmp.eq.s32.totalorder %s26, 1
      %p175 = por %p173, %p174
      %p177 = scmp.ne.s32.totalorder %s162, %s176
      %p178 = scmp.eq.s32.totalorder %s26, 0
      %p179 = por %p177, %p178
      %s181 = sadd.s32 %s180, 1
      %p184 = scmp.eq.s32.totalorder %s20, 1
      %p185 = scmp.ne.s32.totalorder %s180, %s182
      %p186 = scmp.eq.s32.totalorder %s20, 0
      %p187 = por %p185, %p186
      %p188 = scmp.ne.s32.totalorder %s180, %s182
      %p189 = scmp.eq.s32.totalorder %s25, 1
      %p190 = por %p188, %p189
      %p191 = scmp.ne.s32.totalorder %s182, %s183
      %p192 = scmp.eq.s32.totalorder %s25, 0
      %p193 = por %p191, %p192
      %p194 = scmp.ne.s32.totalorder %s182, %s183
      %p195 = scmp.eq.s32.totalorder %s26, 1
      %p196 = por %p194, %p195
      %p198 = scmp.ne.s32.totalorder %s183, %s197
      %p199 = scmp.eq.s32.totalorder %s26, 0
      %p200 = por %p198, %p199
      %s202 = sadd.s32 %s201, 1
      %p205 = scmp.eq.s32.totalorder %s20, 1
      %p206 = scmp.ne.s32.totalorder %s201, %s203
      %p207 = scmp.eq.s32.totalorder %s20, 0
      %p208 = por %p206, %p207
      %p209 = scmp.ne.s32.totalorder %s201, %s203
      %p210 = scmp.eq.s32.totalorder %s25, 1
      %p211 = por %p209, %p210
      %p212 = scmp.ne.s32.totalorder %s203, %s204
      %p213 = scmp.eq.s32.totalorder %s25, 0
      %p214 = por %p212, %p213
      %p215 = scmp.ne.s32.totalorder %s203, %s204
      %p216 = scmp.eq.s32.totalorder %s26, 1
      %p217 = por %p215, %p216
      %p219 = scmp.ne.s32.totalorder %s204, %s218
      %p220 = scmp.eq.s32.totalorder %s26, 0
      %p221 = por %p219, %p220
      %s223 = sadd.s32 %s222, 1
      %p226 = scmp.eq.s32.totalorder %s20, 1
      %p227 = scmp.ne.s32.totalorder %s222, %s224
      %p228 = scmp.eq.s32.totalorder %s20, 0
      %p229 = por %p227, %p228
      %p230 = scmp.ne.s32.totalorder %s222, %s224
      %p231 = scmp.eq.s32.totalorder %s25, 1
      %p232 = por %p230, %p231
      %p233 = scmp.ne.s32.totalorder %s224, %s225
      %p234 = scmp.eq.s32.totalorder %s25, 0
      %p235 = por %p233, %p234
      %p236 = scmp.ne.s32.totalorder %s224, %s225
      %p237 = scmp.eq.s32.totalorder %s26, 1
      %p238 = por %p236, %p237
      %p240 = scmp.ne.s32.totalorder %s225, %s239
      %p241 = scmp.eq.s32.totalorder %s26, 0
      %p242 = por %p240, %p241
      %s244 = sadd.s32 %s243, 1
      %p247 = scmp.eq.s32.totalorder %s20, 1
      %p248 = scmp.ne.s32.totalorder %s243, %s245
      %p249 = scmp.eq.s32.totalorder %s20, 0
      %p250 = por %p248, %p249
      %p251 = scmp.ne.s32.totalorder %s243, %s245
      %p252 = scmp.eq.s32.totalorder %s25, 1
      %p253 = por %p251, %p252
      %p254 = scmp.ne.s32.totalorder %s245, %s246
      %p255 = scmp.eq.s32.totalorder %s25, 0
      %p256 = por %p254, %p255
      %p257 = scmp.ne.s32.totalorder %s245, %s246
      %p258 = scmp.eq.s32.totalorder %s26, 1
      %p259 = por %p257, %p258
      %p261 = scmp.ne.s32.totalorder %s246, %s260
      %p262 = scmp.eq.s32.totalorder %s26, 0
      %p263 = por %p261, %p262
      %s264 = ssub.s32 %s20, %s27
      %p265 = scmp.eq.s32.totalorder %s264, 0
      %s267 = sadd.s32 %s266, 1
      %s268 = scalar_select %p265, %s266, %s267
      %p271 = pneg %p265
      %p272 = scmp.eq.s32.totalorder %s20, 1
      %p273 = por %p271, %p272
      %p274 = scmp.ne.s32.totalorder %s266, %s269
      %p275 = scmp.eq.s32.totalorder %s20, 0
      %p276 = por %p274, %p275
      %p277 = scmp.ne.s32.totalorder %s266, %s269
      %p278 = scmp.eq.s32.totalorder %s25, 1
      %p279 = por %p277, %p278
      %p280 = scmp.ne.s32.totalorder %s269, %s270
      %p281 = scmp.eq.s32.totalorder %s25, 0
      %p282 = por %p280, %p281
      %p283 = scmp.ne.s32.totalorder %s269, %s270
      %p284 = scmp.eq.s32.totalorder %s26, 1
      %p285 = por %p283, %p284
      %p287 = scmp.ne.s32.totalorder %s270, %s286
      %p288 = scmp.eq.s32.totalorder %s26, 0
      %p289 = por %p287, %p288
      %p290 = scmp.le.s32.totalorder 1, %s20
      %p291 = scmp.lt.s32.totalorder %s20, 3
      %p292 = pnand %p290, %p291
      %p293 = pneg %p292
      // Predicated region
      $region9: #{cnn_cifar1_forward.1} parent=5 // pred_check
        _
      $region10: #{cnn_cifar1_forward.1} parent=5 // pred_check_branch
        %295 = sbr.rel (%p292) target = $region12
      $region11: #{cnn_cifar1_forward.1} parent=5 // pred_region
        %s296 = ssub.s32 %s20, 1
        // Predicated region
        $region13: #{cnn_cifar1_forward.1} parent=11 // pred_check
          %p297 = pneg %p67
        $region14: #{cnn_cifar1_forward.1} parent=11 // pred_check_branch
          %299 = sbr.rel (%p297) target = $region16
        $region15: #{cnn_cifar1_forward.1} parent=11 // pred_region
          _
        $region16: #{cnn_cifar1_forward.1} parent=11 // pred_fallthru
          _
        // Predicated region
        $region17: #{cnn_cifar1_forward.1} parent=11 // pred_check
          %p300 = pneg %p88
        $region18: #{cnn_cifar1_forward.1} parent=11 // pred_check_branch
          %302 = sbr.rel (%p300) target = $region20
        $region19: #{cnn_cifar1_forward.1} parent=11 // pred_region
          _
        $region20: #{cnn_cifar1_forward.1} parent=11 // pred_fallthru
          _
        // Predicated region
        $region21: #{cnn_cifar1_forward.1} parent=11 // pred_check
          %p303 = pneg %p109
        $region22: #{cnn_cifar1_forward.1} parent=11 // pred_check_branch
          %305 = sbr.rel (%p303) target = $region24
        $region23: #{cnn_cifar1_forward.1} parent=11 // pred_region
          _
        $region24: #{cnn_cifar1_forward.1} parent=11 // pred_fallthru
          _
        // Predicated region
        $region25: #{cnn_cifar1_forward.1} parent=11 // pred_check
          %p306 = pneg %p130
        $region26: #{cnn_cifar1_forward.1} parent=11 // pred_check_branch
          %308 = sbr.rel (%p306) target = $region28
        $region27: #{cnn_cifar1_forward.1} parent=11 // pred_region
          _
        $region28: #{cnn_cifar1_forward.1} parent=11 // pred_fallthru
          _
        // Predicated region
        $region29: #{cnn_cifar1_forward.1} parent=11 // pred_check
          %p309 = pneg %p151
        $region30: #{cnn_cifar1_forward.1} parent=11 // pred_check_branch
          %311 = sbr.rel (%p309) target = $region32
        $region31: #{cnn_cifar1_forward.1} parent=11 // pred_region
          _
        $region32: #{cnn_cifar1_forward.1} parent=11 // pred_fallthru
          _
        // Predicated region
        $region33: #{cnn_cifar1_forward.1} parent=11 // pred_check
          %p312 = pneg %p172
        $region34: #{cnn_cifar1_forward.1} parent=11 // pred_check_branch
          %314 = sbr.rel (%p312) target = $region36
        $region35: #{cnn_cifar1_forward.1} parent=11 // pred_region
          _
        $region36: #{cnn_cifar1_forward.1} parent=11 // pred_fallthru
          _
        // Predicated region
        $region37: #{cnn_cifar1_forward.1} parent=11 // pred_check
          %p315 = pneg %p193
        $region38: #{cnn_cifar1_forward.1} parent=11 // pred_check_branch
          %317 = sbr.rel (%p315) target = $region40
        $region39: #{cnn_cifar1_forward.1} parent=11 // pred_region
          _
        $region40: #{cnn_cifar1_forward.1} parent=11 // pred_fallthru
          _
        // Predicated region
        $region41: #{cnn_cifar1_forward.1} parent=11 // pred_check
          %p318 = pneg %p214
        $region42: #{cnn_cifar1_forward.1} parent=11 // pred_check_branch
          %320 = sbr.rel (%p318) target = $region44
        $region43: #{cnn_cifar1_forward.1} parent=11 // pred_region
          _
        $region44: #{cnn_cifar1_forward.1} parent=11 // pred_fallthru
          _
        // Predicated region
        $region45: #{cnn_cifar1_forward.1} parent=11 // pred_check
          %p321 = pneg %p235
        $region46: #{cnn_cifar1_forward.1} parent=11 // pred_check_branch
          %323 = sbr.rel (%p321) target = $region48
        $region47: #{cnn_cifar1_forward.1} parent=11 // pred_region
          _
        $region48: #{cnn_cifar1_forward.1} parent=11 // pred_fallthru
          _
        // Predicated region
        $region49: #{cnn_cifar1_forward.1} parent=11 // pred_check
          %p324 = pneg %p256
        $region50: #{cnn_cifar1_forward.1} parent=11 // pred_check_branch
          %326 = sbr.rel (%p324) target = $region52
        $region51: #{cnn_cifar1_forward.1} parent=11 // pred_region
          _
        $region52: #{cnn_cifar1_forward.1} parent=11 // pred_fallthru
          _
      $region12: #{cnn_cifar1_forward.1} parent=5 // pred_fallthru
        _
      %p327 = scmp.lt.s32.totalorder %s20, 2
      // Predicated region
      $region53: #{cnn_cifar1_forward.1} parent=5 // pred_check
        %p328 = pneg %p327
      $region54: #{cnn_cifar1_forward.1} parent=5 // pred_check_branch
        %330 = sbr.rel (%p328) target = $region56
      $region55: #{cnn_cifar1_forward.1} parent=5 // pred_region
        // Predicated region
        $region57: #{cnn_cifar1_forward.1} parent=55 // pred_check
          %p331 = pneg %p40
        $region58: #{cnn_cifar1_forward.1} parent=55 // pred_check_branch
          %333 = sbr.rel (%p331) target = $region60
        $region59: #{cnn_cifar1_forward.1} parent=55 // pred_region
          %s334 = smul.u32 2, %s20
          %p335 = scmp.lt.s32.totalorder %s334, 3
          %s336 = scalar_select %p335, %s334, 3
          %s337 = smul.addr %s336, 112
          %s338 = smul.addr %s337, 4
          %s339 = scalar_lea.vmem %s0, %s338
          %s340 = smul.u32 2, %s20
        $region60: #{cnn_cifar1_forward.1} parent=55 // pred_fallthru
          _
      $region56: #{cnn_cifar1_forward.1} parent=5 // pred_fallthru
        _
      %p341 = scmp.le.s32.totalorder 1, %s20
      %p342 = scmp.lt.s32.totalorder %s20, 3
      %p343 = pnand %p341, %p342
      %p344 = pneg %p343
      // Predicated region
      $region61: #{cnn_cifar1_forward.1} parent=5 // pred_check
        _
      $region62: #{cnn_cifar1_forward.1} parent=5 // pred_check_branch
        %346 = sbr.rel (%p343) target = $region64
      $region63: #{cnn_cifar1_forward.1} parent=5 // pred_region
        %s347 = ssub.s32 %s20, 1
        %s348 = smul.u32 2, %s25
        %p349 = scmp.lt.s32.totalorder %s348, 3
        %s350 = scalar_select %p349, %s348, 3
        %s351 = smul.addr %s350, 112
        %s352 = smul.addr %s351, 4
        %s353 = scalar_lea.vmem %s0, %s352
        %p354 = pneg %p46
        %p355 = pneg %p43
        %p356 = pneg %p67
        %p357 = pneg %p64
        %p358 = pneg %p88
        %p359 = pneg %p85
        %p360 = pneg %p109
        %p361 = pneg %p106
        %p362 = pneg %p130
        %p363 = pneg %p127
        %p364 = pneg %p151
        %p365 = pneg %p148
        %p366 = pneg %p172
        %p367 = pneg %p169
        %p368 = pneg %p193
        %p369 = pneg %p190
        %p370 = pneg %p214
        %p371 = pneg %p211
        %p372 = pneg %p235
        %p373 = pneg %p232
        %p374 = pneg %p256
        %p375 = pneg %p253
        %p376 = pneg %p282
        %p377 = pneg %p279
        %s378 = sand.u32 %s269, 1
        %s379 = scalar_lea.sflag [#allocation3], %s378
        %s380 = sand.u32 %s269, 1
        %s381 = smul.addr %s380, 2
        %s382 = scalar_lea.vmem [#allocation2], %s381
        %s383 = smul.u32 2, %s25
        %p384 = scmp.lt.s32.totalorder %s383, 3
        %s385 = scalar_select %p384, %s383, 3
        %s386 = smul.addr %s385, 112
        %s387 = smul.addr %s386, 4
        %s388 = scalar_lea.vmem %s0, %s387
        %s389 = smul.u32 2, %s25
        %v391 = vld [vmem:[%s1] sm:$0xf]
        %v392 = vld [vmem:[%s1 + $0x4] sm:$0xf]
        %v393 = vld [vmem:[%s1 + $0x8] sm:$0xf]
        %v394 = vld [vmem:[%s1 + $0xc] sm:$0xf]
        %v395 = vld [vmem:[%s1 + $0x10] sm:$0xf]
        %v396 = vld [vmem:[%s1 + $0x14] sm:$0xf]
        %v397 = vld [vmem:[%s1 + $0x18] sm:$0xf]
        %v398 = vld [vmem:[%s1 + $0x1c] sm:$0xf]
        %v399 = vld [vmem:[%s1 + $0x20] sm:$0xf]
        %v400 = vld [vmem:[%s1 + $0x24] sm:$0xf]
        %v401 = vld [vmem:[%s1 + $0x28] sm:$0xf]
        %v402 = vld [vmem:[%s1 + $0x2c] sm:$0xf]
        %v403 = vld [vmem:[%s1 + $0x30] sm:$0xf]
        %v404 = vld [vmem:[%s1 + $0x34] sm:$0xf]
        %v405 = vld [vmem:[%s1 + $0x38] sm:$0xf]
        %v406 = vld [vmem:[%s1 + $0x3c] sm:$0xf]
        %v407 = vld [vmem:[%s388] sm:$0xf]
        %v408 = vld [vmem:[%s388 + $0x4] sm:$0xf]
        %v409 = vld [vmem:[%s388 + $0x8] sm:$0xf]
        %v410 = vld [vmem:[%s388 + $0xc] sm:$0xf]
        %v411 = vld [vmem:[%s388 + $0x10] sm:$0xf]
        %v412 = vld [vmem:[%s388 + $0x14] sm:$0xf]
        %v413 = vld [vmem:[%s388 + $0x18] sm:$0xf]
        %v414 = vld [vmem:[%s388 + $0x1c] sm:$0xf]
        %v415 = vld [vmem:[%s388 + $0x20] sm:$0xf]
        %v416 = vld [vmem:[%s388 + $0x24] sm:$0xf]
        %v417 = vld [vmem:[%s388 + $0x28] sm:$0xf]
        %v418 = vld [vmem:[%s388 + $0x2c] sm:$0xf]
        %v419 = vld [vmem:[%s388 + $0x30] sm:$0xf]
        %v420 = vld [vmem:[%s388 + $0x34] sm:$0xf]
        %v421 = vld [vmem:[%s388 + $0x38] sm:$0xf]
        %v422 = vld [vmem:[%s388 + $0x3c] sm:$0xf]
        %v423 = vld [vmem:[%s388 + $0x40] sm:$0xf]
        %v424 = vld [vmem:[%s388 + $0x44] sm:$0xf]
        %v425 = vld [vmem:[%s388 + $0x48] sm:$0xf]
        %v426 = vld [vmem:[%s388 + $0x4c] sm:$0xf]
        %v427 = vld [vmem:[%s388 + $0x50] sm:$0xf]
        %v428 = vld [vmem:[%s388 + $0x54] sm:$0xf]
        %v429 = vld [vmem:[%s388 + $0x58] sm:$0xf]
        %v430 = vld [vmem:[%s388 + $0x5c] sm:$0xf]
        %v431 = vld [vmem:[%s388 + $0x60] sm:$0xf]
        %v432 = vld [vmem:[%s388 + $0x64] sm:$0xf]
        %v433 = vld [vmem:[%s388 + $0x68] sm:$0xf]
        %v434 = vld [vmem:[%s388 + $0x6c] sm:$0xf]
        %v435 = vld [vmem:[%s388 + $0x1c0] sm:$0xf]
        %v436 = vld [vmem:[%s388 + $0x1c4] sm:$0xf]
        %v437 = vld [vmem:[%s388 + $0x1c8] sm:$0xf]
        %v438 = vld [vmem:[%s388 + $0x1cc] sm:$0xf]
        %v439 = vld [vmem:[%s388 + $0x1d0] sm:$0xf]
        %v440 = vld [vmem:[%s388 + $0x1d4] sm:$0xf]
        %v441 = vld [vmem:[%s388 + $0x1d8] sm:$0xf]
        %v442 = vld [vmem:[%s388 + $0x1dc] sm:$0xf]
        %v443 = vld [vmem:[%s388 + $0x1e0] sm:$0xf]
        %v444 = vld [vmem:[%s388 + $0x1e4] sm:$0xf]
        %v445 = vld [vmem:[%s388 + $0x1e8] sm:$0xf]
        %v446 = vld [vmem:[%s388 + $0x1ec] sm:$0xf]
        %v447 = vld [vmem:[%s388 + $0x1f0] sm:$0xf]
        %v448 = vld [vmem:[%s388 + $0x1f4] sm:$0xf]
        %v449 = vld [vmem:[%s388 + $0x1f8] sm:$0xf]
        %v450 = vld [vmem:[%s388 + $0x1fc] sm:$0xf]
        %v451 = vld [vmem:[%s388 + $0x200] sm:$0xf]
        %v452 = vld [vmem:[%s388 + $0x204] sm:$0xf]
        %v453 = vld [vmem:[%s388 + $0x208] sm:$0xf]
        %v454 = vld [vmem:[%s388 + $0x20c] sm:$0xf]
        %v455 = vld [vmem:[%s388 + $0x210] sm:$0xf]
        %v456 = vld [vmem:[%s388 + $0x214] sm:$0xf]
        %v457 = vld [vmem:[%s388 + $0x218] sm:$0xf]
        %v458 = vld [vmem:[%s388 + $0x21c] sm:$0xf]
        %v459 = vld [vmem:[%s388 + $0x220] sm:$0xf]
        %v460 = vld [vmem:[%s388 + $0x224] sm:$0xf]
        %v461 = vld [vmem:[%s388 + $0x228] sm:$0xf]
        %v462 = vld [vmem:[%s388 + $0x22c] sm:$0xf]
        %v519 = vunpack.c.l.b16 %v407
        %v520 = vunpack.c.l.b16 %v408
        %v521 = vunpack.c.l.b16 %v409
        %v522 = vunpack.c.l.b16 %v410
        %v523 = vunpack.c.l.b16 %v411
        %v524 = vunpack.c.l.b16 %v412
        %v525 = vunpack.c.l.b16 %v413
        %v526 = vunpack.c.l.b16 %v414
        %v527 = vunpack.c.l.b16 %v415
        %v528 = vunpack.c.l.b16 %v416
        %v529 = vunpack.c.l.b16 %v417
        %v530 = vunpack.c.l.b16 %v418
        %v531 = vunpack.c.l.b16 %v419
        %v532 = vunpack.c.l.b16 %v420
        %v533 = vunpack.c.l.b16 %v421
        %v534 = vunpack.c.l.b16 %v422
        %v535 = vunpack.c.l.b16 %v423
        %v536 = vunpack.c.l.b16 %v424
        %v537 = vunpack.c.l.b16 %v425
        %v538 = vunpack.c.l.b16 %v426
        %v539 = vunpack.c.l.b16 %v427
        %v540 = vunpack.c.l.b16 %v428
        %v541 = vunpack.c.l.b16 %v429
        %v542 = vunpack.c.l.b16 %v430
        %v543 = vunpack.c.l.b16 %v431
        %v544 = vunpack.c.l.b16 %v432
        %v545 = vunpack.c.l.b16 %v433
        %v546 = vunpack.c.l.b16 %v434
        %v547 = vunpack.c.l.b16 %v435
        %v548 = vunpack.c.l.b16 %v436
        %v549 = vunpack.c.l.b16 %v437
        %v550 = vunpack.c.l.b16 %v438
        %v551 = vunpack.c.l.b16 %v439
        %v552 = vunpack.c.l.b16 %v440
        %v553 = vunpack.c.l.b16 %v441
        %v554 = vunpack.c.l.b16 %v442
        %v555 = vunpack.c.l.b16 %v443
        %v556 = vunpack.c.l.b16 %v444
        %v557 = vunpack.c.l.b16 %v445
        %v558 = vunpack.c.l.b16 %v446
        %v559 = vunpack.c.l.b16 %v447
        %v560 = vunpack.c.l.b16 %v448
        %v561 = vunpack.c.l.b16 %v449
        %v562 = vunpack.c.l.b16 %v450
        %v563 = vunpack.c.l.b16 %v451
        %v564 = vunpack.c.l.b16 %v452
        %v565 = vunpack.c.l.b16 %v453
        %v566 = vunpack.c.l.b16 %v454
        %v567 = vunpack.c.l.b16 %v455
        %v568 = vunpack.c.l.b16 %v456
        %v569 = vunpack.c.l.b16 %v457
        %v570 = vunpack.c.l.b16 %v458
        %v571 = vunpack.c.l.b16 %v459
        %v572 = vunpack.c.l.b16 %v460
        %v573 = vunpack.c.l.b16 %v461
        %v574 = vunpack.c.l.b16 %v462
        %v575 = vpack.c.b16 %v520, %v519
        %v576 = vpack.c.b16 %v522, %v521
        %v577 = vpack.c.b16 %v524, %v523
        %v578 = vpack.c.b16 %v526, %v525
        %v579 = vpack.c.b16 %v528, %v527
        %v580 = vpack.c.b16 %v530, %v529
        %v581 = vpack.c.b16 %v532, %v531
        %v582 = vpack.c.b16 %v534, %v533
        %v583 = vpack.c.b16 %v536, %v535
        %v584 = vpack.c.b16 %v538, %v537
        %v585 = vpack.c.b16 %v540, %v539
        %v586 = vpack.c.b16 %v542, %v541
        %v587 = vpack.c.b16 %v544, %v543
        %v588 = vpack.c.b16 %v546, %v545
        %v589 = vpack.c.b16 %v548, %v547
        %v590 = vpack.c.b16 %v550, %v549
        %v591 = vpack.c.b16 %v552, %v551
        %v592 = vpack.c.b16 %v554, %v553
        %v593 = vpack.c.b16 %v556, %v555
        %v594 = vpack.c.b16 %v558, %v557
        %v595 = vpack.c.b16 %v560, %v559
        %v596 = vpack.c.b16 %v562, %v561
        %v597 = vpack.c.b16 %v564, %v563
        %v598 = vpack.c.b16 %v566, %v565
        %v599 = vpack.c.b16 %v568, %v567
        %v600 = vpack.c.b16 %v570, %v569
        %v601 = vpack.c.b16 %v572, %v571
        %v602 = vpack.c.b16 %v574, %v573
        %v647 = vunpack.c.l.b16 %v391
        %v648 = vunpack.c.l.b16 %v392
        %v649 = vunpack.c.l.b16 %v393
        %v650 = vunpack.c.l.b16 %v394
        %v651 = vunpack.c.l.b16 %v395
        %v652 = vunpack.c.l.b16 %v396
        %v653 = vunpack.c.l.b16 %v397
        %v654 = vunpack.c.l.b16 %v398
        %v655 = vunpack.c.l.b16 %v399
        %v656 = vunpack.c.l.b16 %v400
        %v657 = vunpack.c.l.b16 %v401
        %v658 = vunpack.c.l.b16 %v402
        %v659 = vunpack.c.l.b16 %v403
        %v660 = vunpack.c.l.b16 %v404
        %v661 = vunpack.c.l.b16 %v405
        %v662 = vunpack.c.l.b16 %v406
        %v663 = vpack.c.b16 %v648, %v647
        %v664 = vpack.c.b16 %v650, %v649
        %v665 = vpack.c.b16 %v652, %v651
        %v666 = vpack.c.b16 %v654, %v653
        %v667 = vpack.c.b16 %v656, %v655
        %v668 = vpack.c.b16 %v658, %v657
        %v669 = vpack.c.b16 %v660, %v659
        %v670 = vpack.c.b16 %v662, %v661
        %679 = vmatpush.bf16.msra.mxu0 %v670
        %680 = vmatpush.bf16.msra.mxu0 %v669
        %681 = vmatpush.bf16.msra.mxu0 %v668
        %682 = vmatpush.bf16.msra.mxu0 %v667
        %683 = vmatpush.bf16.msra.mxu0 %v666
        %684 = vmatpush.bf16.msra.mxu0 %v665
        %685 = vmatpush.bf16.msra.mxu0 %v664
        %686 = vmatpush.bf16.msra.mxu0 %v663
        %687 = vmatmul.bf16.gmra.mxu0 %v575
        %v688 = vpop.f32.mrf.mxu0
        %v689 = vadd.f32 0.0, %v688
        %v690 = vpop.f32.mrf.mxu0
        %v691 = vadd.f32 0.0, %v690
        %692 = vmatmul.bf16.gmra.mxu0 %v576
        %v693 = vpop.f32.mrf.mxu0
        %v694 = vadd.f32 0.0, %v693
        %v695 = vpop.f32.mrf.mxu0
        %v696 = vadd.f32 0.0, %v695
        %697 = vmatmul.bf16.gmra.mxu0 %v577
        %v698 = vpop.f32.mrf.mxu0
        %v699 = vadd.f32 0.0, %v698
        %v700 = vpop.f32.mrf.mxu0
        %v701 = vadd.f32 0.0, %v700
        %702 = vmatmul.bf16.gmra.mxu0 %v578
        %v703 = vpop.f32.mrf.mxu0
        %v704 = vadd.f32 0.0, %v703
        %v705 = vpop.f32.mrf.mxu0
        %v706 = vadd.f32 0.0, %v705
        %707 = vmatmul.bf16.gmra.mxu0 %v579
        %v708 = vpop.f32.mrf.mxu0
        %v709 = vadd.f32 0.0, %v708
        %v710 = vpop.f32.mrf.mxu0
        %v711 = vadd.f32 0.0, %v710
        %712 = vmatmul.bf16.gmra.mxu0 %v580
        %v713 = vpop.f32.mrf.mxu0
        %v714 = vadd.f32 0.0, %v713
        %v715 = vpop.f32.mrf.mxu0
        %v716 = vadd.f32 0.0, %v715
        %717 = vmatmul.bf16.gmra.mxu0 %v581
        %v718 = vpop.f32.mrf.mxu0
        %v719 = vadd.f32 0.0, %v718
        %v720 = vpop.f32.mrf.mxu0
        %v721 = vadd.f32 0.0, %v720
        %722 = vmatmul.bf16.gmra.mxu0 %v582
        %v723 = vpop.f32.mrf.mxu0
        %v724 = vadd.f32 0.0, %v723
        %v725 = vpop.f32.mrf.mxu0
        %v726 = vadd.f32 0.0, %v725
        %727 = vmatmul.bf16.gmra.mxu0 %v583
        %v728 = vpop.f32.mrf.mxu0
        %v729 = vadd.f32 0.0, %v728
        %v730 = vpop.f32.mrf.mxu0
        %v731 = vadd.f32 0.0, %v730
        %732 = vmatmul.bf16.gmra.mxu0 %v584
        %v733 = vpop.f32.mrf.mxu0
        %v734 = vadd.f32 0.0, %v733
        %v735 = vpop.f32.mrf.mxu0
        %v736 = vadd.f32 0.0, %v735
        %737 = vmatmul.bf16.gmra.mxu0 %v585
        %v738 = vpop.f32.mrf.mxu0
        %v739 = vadd.f32 0.0, %v738
        %v740 = vpop.f32.mrf.mxu0
        %v741 = vadd.f32 0.0, %v740
        %742 = vmatmul.bf16.gmra.mxu0 %v586
        %v743 = vpop.f32.mrf.mxu0
        %v744 = vadd.f32 0.0, %v743
        %v745 = vpop.f32.mrf.mxu0
        %v746 = vadd.f32 0.0, %v745
        %747 = vmatmul.bf16.gmra.mxu0 %v587
        %v748 = vpop.f32.mrf.mxu0
        %v749 = vadd.f32 0.0, %v748
        %v750 = vpop.f32.mrf.mxu0
        %v751 = vadd.f32 0.0, %v750
        %752 = vmatmul.bf16.gmra.mxu0 %v588
        %v753 = vpop.f32.mrf.mxu0
        %v754 = vadd.f32 0.0, %v753
        %v755 = vpop.f32.mrf.mxu0
        %v756 = vadd.f32 0.0, %v755
        %757 = vmatmul.bf16.gmra.mxu0 %v589
        %v758 = vpop.f32.mrf.mxu0
        %v759 = vadd.f32 0.0, %v758
        %v760 = vpop.f32.mrf.mxu0
        %v761 = vadd.f32 0.0, %v760
        %762 = vmatmul.bf16.gmra.mxu0 %v590
        %v763 = vpop.f32.mrf.mxu0
        %v764 = vadd.f32 0.0, %v763
        %v765 = vpop.f32.mrf.mxu0
        %v766 = vadd.f32 0.0, %v765
        %767 = vmatmul.bf16.gmra.mxu0 %v591
        %v768 = vpop.f32.mrf.mxu0
        %v769 = vadd.f32 0.0, %v768
        %v770 = vpop.f32.mrf.mxu0
        %v771 = vadd.f32 0.0, %v770
        %772 = vmatmul.bf16.gmra.mxu0 %v592
        %v773 = vpop.f32.mrf.mxu0
        %v774 = vadd.f32 0.0, %v773
        %v775 = vpop.f32.mrf.mxu0
        %v776 = vadd.f32 0.0, %v775
        %777 = vmatmul.bf16.gmra.mxu0 %v593
        %v778 = vpop.f32.mrf.mxu0
        %v779 = vadd.f32 0.0, %v778
        %v780 = vpop.f32.mrf.mxu0
        %v781 = vadd.f32 0.0, %v780
        %782 = vmatmul.bf16.gmra.mxu0 %v594
        %v783 = vpop.f32.mrf.mxu0
        %v784 = vadd.f32 0.0, %v783
        %v785 = vpop.f32.mrf.mxu0
        %v786 = vadd.f32 0.0, %v785
        %787 = vmatmul.bf16.gmra.mxu0 %v595
        %v788 = vpop.f32.mrf.mxu0
        %v789 = vadd.f32 0.0, %v788
        %v790 = vpop.f32.mrf.mxu0
        %v791 = vadd.f32 0.0, %v790
        %792 = vmatmul.bf16.gmra.mxu0 %v596
        %v793 = vpop.f32.mrf.mxu0
        %v794 = vadd.f32 0.0, %v793
        %v795 = vpop.f32.mrf.mxu0
        %v796 = vadd.f32 0.0, %v795
        %797 = vmatmul.bf16.gmra.mxu0 %v597
        %v798 = vpop.f32.mrf.mxu0
        %v799 = vadd.f32 0.0, %v798
        %v800 = vpop.f32.mrf.mxu0
        %v801 = vadd.f32 0.0, %v800
        %802 = vmatmul.bf16.gmra.mxu0 %v598
        %v803 = vpop.f32.mrf.mxu0
        %v804 = vadd.f32 0.0, %v803
        %v805 = vpop.f32.mrf.mxu0
        %v806 = vadd.f32 0.0, %v805
        %807 = vmatmul.bf16.gmra.mxu0 %v599
        %v808 = vpop.f32.mrf.mxu0
        %v809 = vadd.f32 0.0, %v808
        %v810 = vpop.f32.mrf.mxu0
        %v811 = vadd.f32 0.0, %v810
        %812 = vmatmul.bf16.gmra.mxu0 %v600
        %v813 = vpop.f32.mrf.mxu0
        %v814 = vadd.f32 0.0, %v813
        %v815 = vpop.f32.mrf.mxu0
        %v816 = vadd.f32 0.0, %v815
        %817 = vmatmul.bf16.gmra.mxu0 %v601
        %v818 = vpop.f32.mrf.mxu0
        %v819 = vadd.f32 0.0, %v818
        %v820 = vpop.f32.mrf.mxu0
        %v821 = vadd.f32 0.0, %v820
        %822 = vmatmul.bf16.gmra.mxu0 %v602
        %v823 = vpop.f32.mrf.mxu0
        %v824 = vadd.f32 0.0, %v823
        %v825 = vpop.f32.mrf.mxu0
        %v826 = vadd.f32 0.0, %v825
        %827 = vdwg.mxu0
        %s828 = scalar_lea.vmem %s388, 112
        %v829 = vld [vmem:[%s828] sm:$0xf]
        %v830 = vld [vmem:[%s828 + $0x4] sm:$0xf]
        %v831 = vld [vmem:[%s828 + $0x8] sm:$0xf]
        %v832 = vld [vmem:[%s828 + $0xc] sm:$0xf]
        %v833 = vld [vmem:[%s828 + $0x10] sm:$0xf]
        %v834 = vld [vmem:[%s828 + $0x14] sm:$0xf]
        %v835 = vld [vmem:[%s828 + $0x18] sm:$0xf]
        %v836 = vld [vmem:[%s828 + $0x1c] sm:$0xf]
        %v837 = vld [vmem:[%s828 + $0x20] sm:$0xf]
        %v838 = vld [vmem:[%s828 + $0x24] sm:$0xf]
        %v839 = vld [vmem:[%s828 + $0x28] sm:$0xf]
        %v840 = vld [vmem:[%s828 + $0x2c] sm:$0xf]
        %v841 = vld [vmem:[%s828 + $0x30] sm:$0xf]
        %v842 = vld [vmem:[%s828 + $0x34] sm:$0xf]
        %v843 = vld [vmem:[%s828 + $0x38] sm:$0xf]
        %v844 = vld [vmem:[%s828 + $0x3c] sm:$0xf]
        %v845 = vld [vmem:[%s828 + $0x40] sm:$0xf]
        %v846 = vld [vmem:[%s828 + $0x44] sm:$0xf]
        %v847 = vld [vmem:[%s828 + $0x48] sm:$0xf]
        %v848 = vld [vmem:[%s828 + $0x4c] sm:$0xf]
        %v849 = vld [vmem:[%s828 + $0x50] sm:$0xf]
        %v850 = vld [vmem:[%s828 + $0x54] sm:$0xf]
        %v851 = vld [vmem:[%s828 + $0x58] sm:$0xf]
        %v852 = vld [vmem:[%s828 + $0x5c] sm:$0xf]
        %v853 = vld [vmem:[%s828 + $0x60] sm:$0xf]
        %v854 = vld [vmem:[%s828 + $0x64] sm:$0xf]
        %v855 = vld [vmem:[%s828 + $0x68] sm:$0xf]
        %v856 = vld [vmem:[%s828 + $0x6c] sm:$0xf]
        %v857 = vld [vmem:[%s828 + $0x1c0] sm:$0xf]
        %v858 = vld [vmem:[%s828 + $0x1c4] sm:$0xf]
        %v859 = vld [vmem:[%s828 + $0x1c8] sm:$0xf]
        %v860 = vld [vmem:[%s828 + $0x1cc] sm:$0xf]
        %v861 = vld [vmem:[%s828 + $0x1d0] sm:$0xf]
        %v862 = vld [vmem:[%s828 + $0x1d4] sm:$0xf]
        %v863 = vld [vmem:[%s828 + $0x1d8] sm:$0xf]
        %v864 = vld [vmem:[%s828 + $0x1dc] sm:$0xf]
        %v865 = vld [vmem:[%s828 + $0x1e0] sm:$0xf]
        %v866 = vld [vmem:[%s828 + $0x1e4] sm:$0xf]
        %v867 = vld [vmem:[%s828 + $0x1e8] sm:$0xf]
        %v868 = vld [vmem:[%s828 + $0x1ec] sm:$0xf]
        %v869 = vld [vmem:[%s828 + $0x1f0] sm:$0xf]
        %v870 = vld [vmem:[%s828 + $0x1f4] sm:$0xf]
        %v871 = vld [vmem:[%s828 + $0x1f8] sm:$0xf]
        %v872 = vld [vmem:[%s828 + $0x1fc] sm:$0xf]
        %v873 = vld [vmem:[%s828 + $0x200] sm:$0xf]
        %v874 = vld [vmem:[%s828 + $0x204] sm:$0xf]
        %v875 = vld [vmem:[%s828 + $0x208] sm:$0xf]
        %v876 = vld [vmem:[%s828 + $0x20c] sm:$0xf]
        %v877 = vld [vmem:[%s828 + $0x210] sm:$0xf]
        %v878 = vld [vmem:[%s828 + $0x214] sm:$0xf]
        %v879 = vld [vmem:[%s828 + $0x218] sm:$0xf]
        %v880 = vld [vmem:[%s828 + $0x21c] sm:$0xf]
        %v881 = vld [vmem:[%s828 + $0x220] sm:$0xf]
        %v882 = vld [vmem:[%s828 + $0x224] sm:$0xf]
        %v883 = vld [vmem:[%s828 + $0x228] sm:$0xf]
        %v884 = vld [vmem:[%s828 + $0x22c] sm:$0xf]
        %v941 = vunpack.c.l.b16 %v829
        %v942 = vunpack.c.l.b16 %v830
        %v943 = vunpack.c.l.b16 %v831
        %v944 = vunpack.c.l.b16 %v832
        %v945 = vunpack.c.l.b16 %v833
        %v946 = vunpack.c.l.b16 %v834
        %v947 = vunpack.c.l.b16 %v835
        %v948 = vunpack.c.l.b16 %v836
        %v949 = vunpack.c.l.b16 %v837
        %v950 = vunpack.c.l.b16 %v838
        %v951 = vunpack.c.l.b16 %v839
        %v952 = vunpack.c.l.b16 %v840
        %v953 = vunpack.c.l.b16 %v841
        %v954 = vunpack.c.l.b16 %v842
        %v955 = vunpack.c.l.b16 %v843
        %v956 = vunpack.c.l.b16 %v844
        %v957 = vunpack.c.l.b16 %v845
        %v958 = vunpack.c.l.b16 %v846
        %v959 = vunpack.c.l.b16 %v847
        %v960 = vunpack.c.l.b16 %v848
        %v961 = vunpack.c.l.b16 %v849
        %v962 = vunpack.c.l.b16 %v850
        %v963 = vunpack.c.l.b16 %v851
        %v964 = vunpack.c.l.b16 %v852
        %v965 = vunpack.c.l.b16 %v853
        %v966 = vunpack.c.l.b16 %v854
        %v967 = vunpack.c.l.b16 %v855
        %v968 = vunpack.c.l.b16 %v856
        %v969 = vunpack.c.l.b16 %v857
        %v970 = vunpack.c.l.b16 %v858
        %v971 = vunpack.c.l.b16 %v859
        %v972 = vunpack.c.l.b16 %v860
        %v973 = vunpack.c.l.b16 %v861
        %v974 = vunpack.c.l.b16 %v862
        %v975 = vunpack.c.l.b16 %v863
        %v976 = vunpack.c.l.b16 %v864
        %v977 = vunpack.c.l.b16 %v865
        %v978 = vunpack.c.l.b16 %v866
        %v979 = vunpack.c.l.b16 %v867
        %v980 = vunpack.c.l.b16 %v868
        %v981 = vunpack.c.l.b16 %v869
        %v982 = vunpack.c.l.b16 %v870
        %v983 = vunpack.c.l.b16 %v871
        %v984 = vunpack.c.l.b16 %v872
        %v985 = vunpack.c.l.b16 %v873
        %v986 = vunpack.c.l.b16 %v874
        %v987 = vunpack.c.l.b16 %v875
        %v988 = vunpack.c.l.b16 %v876
        %v989 = vunpack.c.l.b16 %v877
        %v990 = vunpack.c.l.b16 %v878
        %v991 = vunpack.c.l.b16 %v879
        %v992 = vunpack.c.l.b16 %v880
        %v993 = vunpack.c.l.b16 %v881
        %v994 = vunpack.c.l.b16 %v882
        %v995 = vunpack.c.l.b16 %v883
        %v996 = vunpack.c.l.b16 %v884
        %v997 = vpack.c.b16 %v942, %v941
        %v998 = vpack.c.b16 %v944, %v943
        %v999 = vpack.c.b16 %v946, %v945
        %v1000 = vpack.c.b16 %v948, %v947
        %v1001 = vpack.c.b16 %v950, %v949
        %v1002 = vpack.c.b16 %v952, %v951
        %v1003 = vpack.c.b16 %v954, %v953
        %v1004 = vpack.c.b16 %v956, %v955
        %v1005 = vpack.c.b16 %v958, %v957
        %v1006 = vpack.c.b16 %v960, %v959
        %v1007 = vpack.c.b16 %v962, %v961
        %v1008 = vpack.c.b16 %v964, %v963
        %v1009 = vpack.c.b16 %v966, %v965
        %v1010 = vpack.c.b16 %v968, %v967
        %v1011 = vpack.c.b16 %v970, %v969
        %v1012 = vpack.c.b16 %v972, %v971
        %v1013 = vpack.c.b16 %v974, %v973
        %v1014 = vpack.c.b16 %v976, %v975
        %v1015 = vpack.c.b16 %v978, %v977
        %v1016 = vpack.c.b16 %v980, %v979
        %v1017 = vpack.c.b16 %v982, %v981
        %v1018 = vpack.c.b16 %v984, %v983
        %v1019 = vpack.c.b16 %v986, %v985
        %v1020 = vpack.c.b16 %v988, %v987
        %v1021 = vpack.c.b16 %v990, %v989
        %v1022 = vpack.c.b16 %v992, %v991
        %v1023 = vpack.c.b16 %v994, %v993
        %v1024 = vpack.c.b16 %v996, %v995
        %1053 = vmatpush.bf16.msra.mxu0 %v670
        %1054 = vmatpush.bf16.msra.mxu0 %v669
        %1055 = vmatpush.bf16.msra.mxu0 %v668
        %1056 = vmatpush.bf16.msra.mxu0 %v667
        %1057 = vmatpush.bf16.msra.mxu0 %v666
        %1058 = vmatpush.bf16.msra.mxu0 %v665
        %1059 = vmatpush.bf16.msra.mxu0 %v664
        %1060 = vmatpush.bf16.msra.mxu0 %v663
        %1061 = vmatmul.bf16.gmra.mxu0 %v997
        %v1062 = vpop.f32.mrf.mxu0
        %v1063 = vadd.f32 0.0, %v1062
        %v1064 = vpop.f32.mrf.mxu0
        %v1065 = vadd.f32 0.0, %v1064
        %1066 = vmatmul.bf16.gmra.mxu0 %v998
        %v1067 = vpop.f32.mrf.mxu0
        %v1068 = vadd.f32 0.0, %v1067
        %v1069 = vpop.f32.mrf.mxu0
        %v1070 = vadd.f32 0.0, %v1069
        %1071 = vmatmul.bf16.gmra.mxu0 %v999
        %v1072 = vpop.f32.mrf.mxu0
        %v1073 = vadd.f32 0.0, %v1072
        %v1074 = vpop.f32.mrf.mxu0
        %v1075 = vadd.f32 0.0, %v1074
        %1076 = vmatmul.bf16.gmra.mxu0 %v1000
        %v1077 = vpop.f32.mrf.mxu0
        %v1078 = vadd.f32 0.0, %v1077
        %v1079 = vpop.f32.mrf.mxu0
        %v1080 = vadd.f32 0.0, %v1079
        %1081 = vmatmul.bf16.gmra.mxu0 %v1001
        %v1082 = vpop.f32.mrf.mxu0
        %v1083 = vadd.f32 0.0, %v1082
        %v1084 = vpop.f32.mrf.mxu0
        %v1085 = vadd.f32 0.0, %v1084
        %1086 = vmatmul.bf16.gmra.mxu0 %v1002
        %v1087 = vpop.f32.mrf.mxu0
        %v1088 = vadd.f32 0.0, %v1087
        %v1089 = vpop.f32.mrf.mxu0
        %v1090 = vadd.f32 0.0, %v1089
        %1091 = vmatmul.bf16.gmra.mxu0 %v1003
        %v1092 = vpop.f32.mrf.mxu0
        %v1093 = vadd.f32 0.0, %v1092
        %v1094 = vpop.f32.mrf.mxu0
        %v1095 = vadd.f32 0.0, %v1094
        %1096 = vmatmul.bf16.gmra.mxu0 %v1004
        %v1097 = vpop.f32.mrf.mxu0
        %v1098 = vadd.f32 0.0, %v1097
        %v1099 = vpop.f32.mrf.mxu0
        %v1100 = vadd.f32 0.0, %v1099
        %1101 = vmatmul.bf16.gmra.mxu0 %v1005
        %v1102 = vpop.f32.mrf.mxu0
        %v1103 = vadd.f32 0.0, %v1102
        %v1104 = vpop.f32.mrf.mxu0
        %v1105 = vadd.f32 0.0, %v1104
        %1106 = vmatmul.bf16.gmra.mxu0 %v1006
        %v1107 = vpop.f32.mrf.mxu0
        %v1108 = vadd.f32 0.0, %v1107
        %v1109 = vpop.f32.mrf.mxu0
        %v1110 = vadd.f32 0.0, %v1109
        %1111 = vmatmul.bf16.gmra.mxu0 %v1007
        %v1112 = vpop.f32.mrf.mxu0
        %v1113 = vadd.f32 0.0, %v1112
        %v1114 = vpop.f32.mrf.mxu0
        %v1115 = vadd.f32 0.0, %v1114
        %1116 = vmatmul.bf16.gmra.mxu0 %v1008
        %v1117 = vpop.f32.mrf.mxu0
        %v1118 = vadd.f32 0.0, %v1117
        %v1119 = vpop.f32.mrf.mxu0
        %v1120 = vadd.f32 0.0, %v1119
        %1121 = vmatmul.bf16.gmra.mxu0 %v1009
        %v1122 = vpop.f32.mrf.mxu0
        %v1123 = vadd.f32 0.0, %v1122
        %v1124 = vpop.f32.mrf.mxu0
        %v1125 = vadd.f32 0.0, %v1124
        %1126 = vmatmul.bf16.gmra.mxu0 %v1010
        %v1127 = vpop.f32.mrf.mxu0
        %v1128 = vadd.f32 0.0, %v1127
        %v1129 = vpop.f32.mrf.mxu0
        %v1130 = vadd.f32 0.0, %v1129
        %1131 = vmatmul.bf16.gmra.mxu0 %v1011
        %v1132 = vpop.f32.mrf.mxu0
        %v1133 = vadd.f32 0.0, %v1132
        %v1134 = vpop.f32.mrf.mxu0
        %v1135 = vadd.f32 0.0, %v1134
        %1136 = vmatmul.bf16.gmra.mxu0 %v1012
        %v1137 = vpop.f32.mrf.mxu0
        %v1138 = vadd.f32 0.0, %v1137
        %v1139 = vpop.f32.mrf.mxu0
        %v1140 = vadd.f32 0.0, %v1139
        %1141 = vmatmul.bf16.gmra.mxu0 %v1013
        %v1142 = vpop.f32.mrf.mxu0
        %v1143 = vadd.f32 0.0, %v1142
        %v1144 = vpop.f32.mrf.mxu0
        %v1145 = vadd.f32 0.0, %v1144
        %1146 = vmatmul.bf16.gmra.mxu0 %v1014
        %v1147 = vpop.f32.mrf.mxu0
        %v1148 = vadd.f32 0.0, %v1147
        %v1149 = vpop.f32.mrf.mxu0
        %v1150 = vadd.f32 0.0, %v1149
        %1151 = vmatmul.bf16.gmra.mxu0 %v1015
        %v1152 = vpop.f32.mrf.mxu0
        %v1153 = vadd.f32 0.0, %v1152
        %v1154 = vpop.f32.mrf.mxu0
        %v1155 = vadd.f32 0.0, %v1154
        %1156 = vmatmul.bf16.gmra.mxu0 %v1016
        %v1157 = vpop.f32.mrf.mxu0
        %v1158 = vadd.f32 0.0, %v1157
        %v1159 = vpop.f32.mrf.mxu0
        %v1160 = vadd.f32 0.0, %v1159
        %1161 = vmatmul.bf16.gmra.mxu0 %v1017
        %v1162 = vpop.f32.mrf.mxu0
        %v1163 = vadd.f32 0.0, %v1162
        %v1164 = vpop.f32.mrf.mxu0
        %v1165 = vadd.f32 0.0, %v1164
        %1166 = vmatmul.bf16.gmra.mxu0 %v1018
        %v1167 = vpop.f32.mrf.mxu0
        %v1168 = vadd.f32 0.0, %v1167
        %v1169 = vpop.f32.mrf.mxu0
        %v1170 = vadd.f32 0.0, %v1169
        %1171 = vmatmul.bf16.gmra.mxu0 %v1019
        %v1172 = vpop.f32.mrf.mxu0
        %v1173 = vadd.f32 0.0, %v1172
        %v1174 = vpop.f32.mrf.mxu0
        %v1175 = vadd.f32 0.0, %v1174
        %1176 = vmatmul.bf16.gmra.mxu0 %v1020
        %v1177 = vpop.f32.mrf.mxu0
        %v1178 = vadd.f32 0.0, %v1177
        %v1179 = vpop.f32.mrf.mxu0
        %v1180 = vadd.f32 0.0, %v1179
        %1181 = vmatmul.bf16.gmra.mxu0 %v1021
        %v1182 = vpop.f32.mrf.mxu0
        %v1183 = vadd.f32 0.0, %v1182
        %v1184 = vpop.f32.mrf.mxu0
        %v1185 = vadd.f32 0.0, %v1184
        %1186 = vmatmul.bf16.gmra.mxu0 %v1022
        %v1187 = vpop.f32.mrf.mxu0
        %v1188 = vadd.f32 0.0, %v1187
        %v1189 = vpop.f32.mrf.mxu0
        %v1190 = vadd.f32 0.0, %v1189
        %1191 = vmatmul.bf16.gmra.mxu0 %v1023
        %v1192 = vpop.f32.mrf.mxu0
        %v1193 = vadd.f32 0.0, %v1192
        %v1194 = vpop.f32.mrf.mxu0
        %v1195 = vadd.f32 0.0, %v1194
        %1196 = vmatmul.bf16.gmra.mxu0 %v1024
        %v1197 = vpop.f32.mrf.mxu0
        %v1198 = vadd.f32 0.0, %v1197
        %v1199 = vpop.f32.mrf.mxu0
        %v1200 = vadd.f32 0.0, %v1199
        %1201 = vdwg.mxu0
        %v1202 = vmax.f32 %v689, %v1063
        %v1203 = vmax.f32 %v691, %v1065
        %v1204 = vmax.f32 %v694, %v1068
        %v1205 = vmax.f32 %v696, %v1070
        %v1206 = vmax.f32 %v699, %v1073
        %v1207 = vmax.f32 %v701, %v1075
        %v1208 = vmax.f32 %v704, %v1078
        %v1209 = vmax.f32 %v706, %v1080
        %v1210 = vmax.f32 %v709, %v1083
        %v1211 = vmax.f32 %v711, %v1085
        %v1212 = vmax.f32 %v714, %v1088
        %v1213 = vmax.f32 %v716, %v1090
        %v1214 = vmax.f32 %v719, %v1093
        %v1215 = vmax.f32 %v721, %v1095
        %v1216 = vmax.f32 %v724, %v1098
        %v1217 = vmax.f32 %v726, %v1100
        %v1218 = vmax.f32 %v729, %v1103
        %v1219 = vmax.f32 %v731, %v1105
        %v1220 = vmax.f32 %v734, %v1108
        %v1221 = vmax.f32 %v736, %v1110
        %v1222 = vmax.f32 %v739, %v1113
        %v1223 = vmax.f32 %v741, %v1115
        %v1224 = vmax.f32 %v744, %v1118
        %v1225 = vmax.f32 %v746, %v1120
        %v1226 = vmax.f32 %v749, %v1123
        %v1227 = vmax.f32 %v751, %v1125
        %v1228 = vmax.f32 %v754, %v1128
        %v1229 = vmax.f32 %v756, %v1130
        %v1230 = vmax.f32 %v759, %v1133
        %v1231 = vmax.f32 %v761, %v1135
        %v1232 = vmax.f32 %v764, %v1138
        %v1233 = vmax.f32 %v766, %v1140
        %v1234 = vmax.f32 %v769, %v1143
        %v1235 = vmax.f32 %v771, %v1145
        %v1236 = vmax.f32 %v774, %v1148
        %v1237 = vmax.f32 %v776, %v1150
        %v1238 = vmax.f32 %v779, %v1153
        %v1239 = vmax.f32 %v781, %v1155
        %v1240 = vmax.f32 %v784, %v1158
        %v1241 = vmax.f32 %v786, %v1160
        %v1242 = vmax.f32 %v789, %v1163
        %v1243 = vmax.f32 %v791, %v1165
        %v1244 = vmax.f32 %v794, %v1168
        %v1245 = vmax.f32 %v796, %v1170
        %v1246 = vmax.f32 %v799, %v1173
        %v1247 = vmax.f32 %v801, %v1175
        %v1248 = vmax.f32 %v804, %v1178
        %v1249 = vmax.f32 %v806, %v1180
        %v1250 = vmax.f32 %v809, %v1183
        %v1251 = vmax.f32 %v811, %v1185
        %v1252 = vmax.f32 %v814, %v1188
        %v1253 = vmax.f32 %v816, %v1190
        %v1254 = vmax.f32 %v819, %v1193
        %v1255 = vmax.f32 %v821, %v1195
        %v1256 = vmax.f32 %v824, %v1198
        %v1257 = vmax.f32 %v826, %v1200
        %s1258 = scalar_lea.vmem %s388, 224
        %v1259 = vld [vmem:[%s1258] sm:$0xf]
        %v1260 = vld [vmem:[%s1258 + $0x4] sm:$0xf]
        %v1261 = vld [vmem:[%s1258 + $0x8] sm:$0xf]
        %v1262 = vld [vmem:[%s1258 + $0xc] sm:$0xf]
        %v1263 = vld [vmem:[%s1258 + $0x10] sm:$0xf]
        %v1264 = vld [vmem:[%s1258 + $0x14] sm:$0xf]
        %v1265 = vld [vmem:[%s1258 + $0x18] sm:$0xf]
        %v1266 = vld [vmem:[%s1258 + $0x1c] sm:$0xf]
        %v1267 = vld [vmem:[%s1258 + $0x20] sm:$0xf]
        %v1268 = vld [vmem:[%s1258 + $0x24] sm:$0xf]
        %v1269 = vld [vmem:[%s1258 + $0x28] sm:$0xf]
        %v1270 = vld [vmem:[%s1258 + $0x2c] sm:$0xf]
        %v1271 = vld [vmem:[%s1258 + $0x30] sm:$0xf]
        %v1272 = vld [vmem:[%s1258 + $0x34] sm:$0xf]
        %v1273 = vld [vmem:[%s1258 + $0x38] sm:$0xf]
        %v1274 = vld [vmem:[%s1258 + $0x3c] sm:$0xf]
        %v1275 = vld [vmem:[%s1258 + $0x40] sm:$0xf]
        %v1276 = vld [vmem:[%s1258 + $0x44] sm:$0xf]
        %v1277 = vld [vmem:[%s1258 + $0x48] sm:$0xf]
        %v1278 = vld [vmem:[%s1258 + $0x4c] sm:$0xf]
        %v1279 = vld [vmem:[%s1258 + $0x50] sm:$0xf]
        %v1280 = vld [vmem:[%s1258 + $0x54] sm:$0xf]
        %v1281 = vld [vmem:[%s1258 + $0x58] sm:$0xf]
        %v1282 = vld [vmem:[%s1258 + $0x5c] sm:$0xf]
        %v1283 = vld [vmem:[%s1258 + $0x60] sm:$0xf]
        %v1284 = vld [vmem:[%s1258 + $0x64] sm:$0xf]
        %v1285 = vld [vmem:[%s1258 + $0x68] sm:$0xf]
        %v1286 = vld [vmem:[%s1258 + $0x6c] sm:$0xf]
        %v1287 = vld [vmem:[%s1258 + $0x1c0] sm:$0xf]
        %v1288 = vld [vmem:[%s1258 + $0x1c4] sm:$0xf]
        %v1289 = vld [vmem:[%s1258 + $0x1c8] sm:$0xf]
        %v1290 = vld [vmem:[%s1258 + $0x1cc] sm:$0xf]
        %v1291 = vld [vmem:[%s1258 + $0x1d0] sm:$0xf]
        %v1292 = vld [vmem:[%s1258 + $0x1d4] sm:$0xf]
        %v1293 = vld [vmem:[%s1258 + $0x1d8] sm:$0xf]
        %v1294 = vld [vmem:[%s1258 + $0x1dc] sm:$0xf]
        %v1295 = vld [vmem:[%s1258 + $0x1e0] sm:$0xf]
        %v1296 = vld [vmem:[%s1258 + $0x1e4] sm:$0xf]
        %v1297 = vld [vmem:[%s1258 + $0x1e8] sm:$0xf]
        %v1298 = vld [vmem:[%s1258 + $0x1ec] sm:$0xf]
        %v1299 = vld [vmem:[%s1258 + $0x1f0] sm:$0xf]
        %v1300 = vld [vmem:[%s1258 + $0x1f4] sm:$0xf]
        %v1301 = vld [vmem:[%s1258 + $0x1f8] sm:$0xf]
        %v1302 = vld [vmem:[%s1258 + $0x1fc] sm:$0xf]
        %v1303 = vld [vmem:[%s1258 + $0x200] sm:$0xf]
        %v1304 = vld [vmem:[%s1258 + $0x204] sm:$0xf]
        %v1305 = vld [vmem:[%s1258 + $0x208] sm:$0xf]
        %v1306 = vld [vmem:[%s1258 + $0x20c] sm:$0xf]
        %v1307 = vld [vmem:[%s1258 + $0x210] sm:$0xf]
        %v1308 = vld [vmem:[%s1258 + $0x214] sm:$0xf]
        %v1309 = vld [vmem:[%s1258 + $0x218] sm:$0xf]
        %v1310 = vld [vmem:[%s1258 + $0x21c] sm:$0xf]
        %v1311 = vld [vmem:[%s1258 + $0x220] sm:$0xf]
        %v1312 = vld [vmem:[%s1258 + $0x224] sm:$0xf]
        %v1313 = vld [vmem:[%s1258 + $0x228] sm:$0xf]
        %v1314 = vld [vmem:[%s1258 + $0x22c] sm:$0xf]
        %v1371 = vunpack.c.l.b16 %v1259
        %v1372 = vunpack.c.l.b16 %v1260
        %v1373 = vunpack.c.l.b16 %v1261
        %v1374 = vunpack.c.l.b16 %v1262
        %v1375 = vunpack.c.l.b16 %v1263
        %v1376 = vunpack.c.l.b16 %v1264
        %v1377 = vunpack.c.l.b16 %v1265
        %v1378 = vunpack.c.l.b16 %v1266
        %v1379 = vunpack.c.l.b16 %v1267
        %v1380 = vunpack.c.l.b16 %v1268
        %v1381 = vunpack.c.l.b16 %v1269
        %v1382 = vunpack.c.l.b16 %v1270
        %v1383 = vunpack.c.l.b16 %v1271
        %v1384 = vunpack.c.l.b16 %v1272
        %v1385 = vunpack.c.l.b16 %v1273
        %v1386 = vunpack.c.l.b16 %v1274
        %v1387 = vunpack.c.l.b16 %v1275
        %v1388 = vunpack.c.l.b16 %v1276
        %v1389 = vunpack.c.l.b16 %v1277
        %v1390 = vunpack.c.l.b16 %v1278
        %v1391 = vunpack.c.l.b16 %v1279
        %v1392 = vunpack.c.l.b16 %v1280
        %v1393 = vunpack.c.l.b16 %v1281
        %v1394 = vunpack.c.l.b16 %v1282
        %v1395 = vunpack.c.l.b16 %v1283
        %v1396 = vunpack.c.l.b16 %v1284
        %v1397 = vunpack.c.l.b16 %v1285
        %v1398 = vunpack.c.l.b16 %v1286
        %v1399 = vunpack.c.l.b16 %v1287
        %v1400 = vunpack.c.l.b16 %v1288
        %v1401 = vunpack.c.l.b16 %v1289
        %v1402 = vunpack.c.l.b16 %v1290
        %v1403 = vunpack.c.l.b16 %v1291
        %v1404 = vunpack.c.l.b16 %v1292
        %v1405 = vunpack.c.l.b16 %v1293
        %v1406 = vunpack.c.l.b16 %v1294
        %v1407 = vunpack.c.l.b16 %v1295
        %v1408 = vunpack.c.l.b16 %v1296
        %v1409 = vunpack.c.l.b16 %v1297
        %v1410 = vunpack.c.l.b16 %v1298
        %v1411 = vunpack.c.l.b16 %v1299
        %v1412 = vunpack.c.l.b16 %v1300
        %v1413 = vunpack.c.l.b16 %v1301
        %v1414 = vunpack.c.l.b16 %v1302
        %v1415 = vunpack.c.l.b16 %v1303
        %v1416 = vunpack.c.l.b16 %v1304
        %v1417 = vunpack.c.l.b16 %v1305
        %v1418 = vunpack.c.l.b16 %v1306
        %v1419 = vunpack.c.l.b16 %v1307
        %v1420 = vunpack.c.l.b16 %v1308
        %v1421 = vunpack.c.l.b16 %v1309
        %v1422 = vunpack.c.l.b16 %v1310
        %v1423 = vunpack.c.l.b16 %v1311
        %v1424 = vunpack.c.l.b16 %v1312
        %v1425 = vunpack.c.l.b16 %v1313
        %v1426 = vunpack.c.l.b16 %v1314
        %v1427 = vpack.c.b16 %v1372, %v1371
        %v1428 = vpack.c.b16 %v1374, %v1373
        %v1429 = vpack.c.b16 %v1376, %v1375
        %v1430 = vpack.c.b16 %v1378, %v1377
        %v1431 = vpack.c.b16 %v1380, %v1379
        %v1432 = vpack.c.b16 %v1382, %v1381
        %v1433 = vpack.c.b16 %v1384, %v1383
        %v1434 = vpack.c.b16 %v1386, %v1385
        %v1435 = vpack.c.b16 %v1388, %v1387
        %v1436 = vpack.c.b16 %v1390, %v1389
        %v1437 = vpack.c.b16 %v1392, %v1391
        %v1438 = vpack.c.b16 %v1394, %v1393
        %v1439 = vpack.c.b16 %v1396, %v1395
        %v1440 = vpack.c.b16 %v1398, %v1397
        %v1441 = vpack.c.b16 %v1400, %v1399
        %v1442 = vpack.c.b16 %v1402, %v1401
        %v1443 = vpack.c.b16 %v1404, %v1403
        %v1444 = vpack.c.b16 %v1406, %v1405
        %v1445 = vpack.c.b16 %v1408, %v1407
        %v1446 = vpack.c.b16 %v1410, %v1409
        %v1447 = vpack.c.b16 %v1412, %v1411
        %v1448 = vpack.c.b16 %v1414, %v1413
        %v1449 = vpack.c.b16 %v1416, %v1415
        %v1450 = vpack.c.b16 %v1418, %v1417
        %v1451 = vpack.c.b16 %v1420, %v1419
        %v1452 = vpack.c.b16 %v1422, %v1421
        %v1453 = vpack.c.b16 %v1424, %v1423
        %v1454 = vpack.c.b16 %v1426, %v1425
        %1483 = vmatpush.bf16.msra.mxu0 %v670
        %1484 = vmatpush.bf16.msra.mxu0 %v669
        %1485 = vmatpush.bf16.msra.mxu0 %v668
        %1486 = vmatpush.bf16.msra.mxu0 %v667
        %1487 = vmatpush.bf16.msra.mxu0 %v666
        %1488 = vmatpush.bf16.msra.mxu0 %v665
        %1489 = vmatpush.bf16.msra.mxu0 %v664
        %1490 = vmatpush.bf16.msra.mxu0 %v663
        %1491 = vmatmul.bf16.gmra.mxu0 %v1427
        %v1492 = vpop.f32.mrf.mxu0
        %v1493 = vadd.f32 0.0, %v1492
        %v1494 = vpop.f32.mrf.mxu0
        %v1495 = vadd.f32 0.0, %v1494
        %1496 = vmatmul.bf16.gmra.mxu0 %v1428
        %v1497 = vpop.f32.mrf.mxu0
        %v1498 = vadd.f32 0.0, %v1497
        %v1499 = vpop.f32.mrf.mxu0
        %v1500 = vadd.f32 0.0, %v1499
        %1501 = vmatmul.bf16.gmra.mxu0 %v1429
        %v1502 = vpop.f32.mrf.mxu0
        %v1503 = vadd.f32 0.0, %v1502
        %v1504 = vpop.f32.mrf.mxu0
        %v1505 = vadd.f32 0.0, %v1504
        %1506 = vmatmul.bf16.gmra.mxu0 %v1430
        %v1507 = vpop.f32.mrf.mxu0
        %v1508 = vadd.f32 0.0, %v1507
        %v1509 = vpop.f32.mrf.mxu0
        %v1510 = vadd.f32 0.0, %v1509
        %1511 = vmatmul.bf16.gmra.mxu0 %v1431
        %v1512 = vpop.f32.mrf.mxu0
        %v1513 = vadd.f32 0.0, %v1512
        %v1514 = vpop.f32.mrf.mxu0
        %v1515 = vadd.f32 0.0, %v1514
        %1516 = vmatmul.bf16.gmra.mxu0 %v1432
        %v1517 = vpop.f32.mrf.mxu0
        %v1518 = vadd.f32 0.0, %v1517
        %v1519 = vpop.f32.mrf.mxu0
        %v1520 = vadd.f32 0.0, %v1519
        %1521 = vmatmul.bf16.gmra.mxu0 %v1433
        %v1522 = vpop.f32.mrf.mxu0
        %v1523 = vadd.f32 0.0, %v1522
        %v1524 = vpop.f32.mrf.mxu0
        %v1525 = vadd.f32 0.0, %v1524
        %1526 = vmatmul.bf16.gmra.mxu0 %v1434
        %v1527 = vpop.f32.mrf.mxu0
        %v1528 = vadd.f32 0.0, %v1527
        %v1529 = vpop.f32.mrf.mxu0
        %v1530 = vadd.f32 0.0, %v1529
        %1531 = vmatmul.bf16.gmra.mxu0 %v1435
        %v1532 = vpop.f32.mrf.mxu0
        %v1533 = vadd.f32 0.0, %v1532
        %v1534 = vpop.f32.mrf.mxu0
        %v1535 = vadd.f32 0.0, %v1534
        %1536 = vmatmul.bf16.gmra.mxu0 %v1436
        %v1537 = vpop.f32.mrf.mxu0
        %v1538 = vadd.f32 0.0, %v1537
        %v1539 = vpop.f32.mrf.mxu0
        %v1540 = vadd.f32 0.0, %v1539
        %1541 = vmatmul.bf16.gmra.mxu0 %v1437
        %v1542 = vpop.f32.mrf.mxu0
        %v1543 = vadd.f32 0.0, %v1542
        %v1544 = vpop.f32.mrf.mxu0
        %v1545 = vadd.f32 0.0, %v1544
        %1546 = vmatmul.bf16.gmra.mxu0 %v1438
        %v1547 = vpop.f32.mrf.mxu0
        %v1548 = vadd.f32 0.0, %v1547
        %v1549 = vpop.f32.mrf.mxu0
        %v1550 = vadd.f32 0.0, %v1549
        %1551 = vmatmul.bf16.gmra.mxu0 %v1439
        %v1552 = vpop.f32.mrf.mxu0
        %v1553 = vadd.f32 0.0, %v1552
        %v1554 = vpop.f32.mrf.mxu0
        %v1555 = vadd.f32 0.0, %v1554
        %1556 = vmatmul.bf16.gmra.mxu0 %v1440
        %v1557 = vpop.f32.mrf.mxu0
        %v1558 = vadd.f32 0.0, %v1557
        %v1559 = vpop.f32.mrf.mxu0
        %v1560 = vadd.f32 0.0, %v1559
        %1561 = vmatmul.bf16.gmra.mxu0 %v1441
        %v1562 = vpop.f32.mrf.mxu0
        %v1563 = vadd.f32 0.0, %v1562
        %v1564 = vpop.f32.mrf.mxu0
        %v1565 = vadd.f32 0.0, %v1564
        %1566 = vmatmul.bf16.gmra.mxu0 %v1442
        %v1567 = vpop.f32.mrf.mxu0
        %v1568 = vadd.f32 0.0, %v1567
        %v1569 = vpop.f32.mrf.mxu0
        %v1570 = vadd.f32 0.0, %v1569
        %1571 = vmatmul.bf16.gmra.mxu0 %v1443
        %v1572 = vpop.f32.mrf.mxu0
        %v1573 = vadd.f32 0.0, %v1572
        %v1574 = vpop.f32.mrf.mxu0
        %v1575 = vadd.f32 0.0, %v1574
        %1576 = vmatmul.bf16.gmra.mxu0 %v1444
        %v1577 = vpop.f32.mrf.mxu0
        %v1578 = vadd.f32 0.0, %v1577
        %v1579 = vpop.f32.mrf.mxu0
        %v1580 = vadd.f32 0.0, %v1579
        %1581 = vmatmul.bf16.gmra.mxu0 %v1445
        %v1582 = vpop.f32.mrf.mxu0
        %v1583 = vadd.f32 0.0, %v1582
        %v1584 = vpop.f32.mrf.mxu0
        %v1585 = vadd.f32 0.0, %v1584
        %1586 = vmatmul.bf16.gmra.mxu0 %v1446
        %v1587 = vpop.f32.mrf.mxu0
        %v1588 = vadd.f32 0.0, %v1587
        %v1589 = vpop.f32.mrf.mxu0
        %v1590 = vadd.f32 0.0, %v1589
        %1591 = vmatmul.bf16.gmra.mxu0 %v1447
        %v1592 = vpop.f32.mrf.mxu0
        %v1593 = vadd.f32 0.0, %v1592
        %v1594 = vpop.f32.mrf.mxu0
        %v1595 = vadd.f32 0.0, %v1594
        %1596 = vmatmul.bf16.gmra.mxu0 %v1448
        %v1597 = vpop.f32.mrf.mxu0
        %v1598 = vadd.f32 0.0, %v1597
        %v1599 = vpop.f32.mrf.mxu0
        %v1600 = vadd.f32 0.0, %v1599
        %1601 = vmatmul.bf16.gmra.mxu0 %v1449
        %v1602 = vpop.f32.mrf.mxu0
        %v1603 = vadd.f32 0.0, %v1602
        %v1604 = vpop.f32.mrf.mxu0
        %v1605 = vadd.f32 0.0, %v1604
        %1606 = vmatmul.bf16.gmra.mxu0 %v1450
        %v1607 = vpop.f32.mrf.mxu0
        %v1608 = vadd.f32 0.0, %v1607
        %v1609 = vpop.f32.mrf.mxu0
        %v1610 = vadd.f32 0.0, %v1609
        %1611 = vmatmul.bf16.gmra.mxu0 %v1451
        %v1612 = vpop.f32.mrf.mxu0
        %v1613 = vadd.f32 0.0, %v1612
        %v1614 = vpop.f32.mrf.mxu0
        %v1615 = vadd.f32 0.0, %v1614
        %1616 = vmatmul.bf16.gmra.mxu0 %v1452
        %v1617 = vpop.f32.mrf.mxu0
        %v1618 = vadd.f32 0.0, %v1617
        %v1619 = vpop.f32.mrf.mxu0
        %v1620 = vadd.f32 0.0, %v1619
        %1621 = vmatmul.bf16.gmra.mxu0 %v1453
        %v1622 = vpop.f32.mrf.mxu0
        %v1623 = vadd.f32 0.0, %v1622
        %v1624 = vpop.f32.mrf.mxu0
        %v1625 = vadd.f32 0.0, %v1624
        %1626 = vmatmul.bf16.gmra.mxu0 %v1454
        %v1627 = vpop.f32.mrf.mxu0
        %v1628 = vadd.f32 0.0, %v1627
        %v1629 = vpop.f32.mrf.mxu0
        %v1630 = vadd.f32 0.0, %v1629
        %1631 = vdwg.mxu0
        %v1632 = vmax.f32 %v1202, %v1493
        %v1633 = vmax.f32 %v1203, %v1495
        %v1634 = vmax.f32 %v1204, %v1498
        %v1635 = vmax.f32 %v1205, %v1500
        %v1636 = vmax.f32 %v1206, %v1503
        %v1637 = vmax.f32 %v1207, %v1505
        %v1638 = vmax.f32 %v1208, %v1508
        %v1639 = vmax.f32 %v1209, %v1510
        %v1640 = vmax.f32 %v1210, %v1513
        %v1641 = vmax.f32 %v1211, %v1515
        %v1642 = vmax.f32 %v1212, %v1518
        %v1643 = vmax.f32 %v1213, %v1520
        %v1644 = vmax.f32 %v1214, %v1523
        %v1645 = vmax.f32 %v1215, %v1525
        %v1646 = vmax.f32 %v1216, %v1528
        %v1647 = vmax.f32 %v1217, %v1530
        %v1648 = vmax.f32 %v1218, %v1533
        %v1649 = vmax.f32 %v1219, %v1535
        %v1650 = vmax.f32 %v1220, %v1538
        %v1651 = vmax.f32 %v1221, %v1540
        %v1652 = vmax.f32 %v1222, %v1543
        %v1653 = vmax.f32 %v1223, %v1545
        %v1654 = vmax.f32 %v1224, %v1548
        %v1655 = vmax.f32 %v1225, %v1550
        %v1656 = vmax.f32 %v1226, %v1553
        %v1657 = vmax.f32 %v1227, %v1555
        %v1658 = vmax.f32 %v1228, %v1558
        %v1659 = vmax.f32 %v1229, %v1560
        %v1660 = vmax.f32 %v1230, %v1563
        %v1661 = vmax.f32 %v1231, %v1565
        %v1662 = vmax.f32 %v1232, %v1568
        %v1663 = vmax.f32 %v1233, %v1570
        %v1664 = vmax.f32 %v1234, %v1573
        %v1665 = vmax.f32 %v1235, %v1575
        %v1666 = vmax.f32 %v1236, %v1578
        %v1667 = vmax.f32 %v1237, %v1580
        %v1668 = vmax.f32 %v1238, %v1583
        %v1669 = vmax.f32 %v1239, %v1585
        %v1670 = vmax.f32 %v1240, %v1588
        %v1671 = vmax.f32 %v1241, %v1590
        %v1672 = vmax.f32 %v1242, %v1593
        %v1673 = vmax.f32 %v1243, %v1595
        %v1674 = vmax.f32 %v1244, %v1598
        %v1675 = vmax.f32 %v1245, %v1600
        %v1676 = vmax.f32 %v1246, %v1603
        %v1677 = vmax.f32 %v1247, %v1605
        %v1678 = vmax.f32 %v1248, %v1608
        %v1679 = vmax.f32 %v1249, %v1610
        %v1680 = vmax.f32 %v1250, %v1613
        %v1681 = vmax.f32 %v1251, %v1615
        %v1682 = vmax.f32 %v1252, %v1618
        %v1683 = vmax.f32 %v1253, %v1620
        %v1684 = vmax.f32 %v1254, %v1623
        %v1685 = vmax.f32 %v1255, %v1625
        %v1686 = vmax.f32 %v1256, %v1628
        %v1687 = vmax.f32 %v1257, %v1630
        %s1688 = scalar_lea.vmem %s388, 336
        %v1689 = vld [vmem:[%s1688] sm:$0xf]
        %v1690 = vld [vmem:[%s1688 + $0x4] sm:$0xf]
        %v1691 = vld [vmem:[%s1688 + $0x8] sm:$0xf]
        %v1692 = vld [vmem:[%s1688 + $0xc] sm:$0xf]
        %v1693 = vld [vmem:[%s1688 + $0x10] sm:$0xf]
        %v1694 = vld [vmem:[%s1688 + $0x14] sm:$0xf]
        %v1695 = vld [vmem:[%s1688 + $0x18] sm:$0xf]
        %v1696 = vld [vmem:[%s1688 + $0x1c] sm:$0xf]
        %v1697 = vld [vmem:[%s1688 + $0x20] sm:$0xf]
        %v1698 = vld [vmem:[%s1688 + $0x24] sm:$0xf]
        %v1699 = vld [vmem:[%s1688 + $0x28] sm:$0xf]
        %v1700 = vld [vmem:[%s1688 + $0x2c] sm:$0xf]
        %v1701 = vld [vmem:[%s1688 + $0x30] sm:$0xf]
        %v1702 = vld [vmem:[%s1688 + $0x34] sm:$0xf]
        %v1703 = vld [vmem:[%s1688 + $0x38] sm:$0xf]
        %v1704 = vld [vmem:[%s1688 + $0x3c] sm:$0xf]
        %v1705 = vld [vmem:[%s1688 + $0x40] sm:$0xf]
        %v1706 = vld [vmem:[%s1688 + $0x44] sm:$0xf]
        %v1707 = vld [vmem:[%s1688 + $0x48] sm:$0xf]
        %v1708 = vld [vmem:[%s1688 + $0x4c] sm:$0xf]
        %v1709 = vld [vmem:[%s1688 + $0x50] sm:$0xf]
        %v1710 = vld [vmem:[%s1688 + $0x54] sm:$0xf]
        %v1711 = vld [vmem:[%s1688 + $0x58] sm:$0xf]
        %v1712 = vld [vmem:[%s1688 + $0x5c] sm:$0xf]
        %v1713 = vld [vmem:[%s1688 + $0x60] sm:$0xf]
        %v1714 = vld [vmem:[%s1688 + $0x64] sm:$0xf]
        %v1715 = vld [vmem:[%s1688 + $0x68] sm:$0xf]
        %v1716 = vld [vmem:[%s1688 + $0x6c] sm:$0xf]
        %v1717 = vld [vmem:[%s1688 + $0x1c0] sm:$0xf]
        %v1718 = vld [vmem:[%s1688 + $0x1c4] sm:$0xf]
        %v1719 = vld [vmem:[%s1688 + $0x1c8] sm:$0xf]
        %v1720 = vld [vmem:[%s1688 + $0x1cc] sm:$0xf]
        %v1721 = vld [vmem:[%s1688 + $0x1d0] sm:$0xf]
        %v1722 = vld [vmem:[%s1688 + $0x1d4] sm:$0xf]
        %v1723 = vld [vmem:[%s1688 + $0x1d8] sm:$0xf]
        %v1724 = vld [vmem:[%s1688 + $0x1dc] sm:$0xf]
        %v1725 = vld [vmem:[%s1688 + $0x1e0] sm:$0xf]
        %v1726 = vld [vmem:[%s1688 + $0x1e4] sm:$0xf]
        %v1727 = vld [vmem:[%s1688 + $0x1e8] sm:$0xf]
        %v1728 = vld [vmem:[%s1688 + $0x1ec] sm:$0xf]
        %v1729 = vld [vmem:[%s1688 + $0x1f0] sm:$0xf]
        %v1730 = vld [vmem:[%s1688 + $0x1f4] sm:$0xf]
        %v1731 = vld [vmem:[%s1688 + $0x1f8] sm:$0xf]
        %v1732 = vld [vmem:[%s1688 + $0x1fc] sm:$0xf]
        %v1733 = vld [vmem:[%s1688 + $0x200] sm:$0xf]
        %v1734 = vld [vmem:[%s1688 + $0x204] sm:$0xf]
        %v1735 = vld [vmem:[%s1688 + $0x208] sm:$0xf]
        %v1736 = vld [vmem:[%s1688 + $0x20c] sm:$0xf]
        %v1737 = vld [vmem:[%s1688 + $0x210] sm:$0xf]
        %v1738 = vld [vmem:[%s1688 + $0x214] sm:$0xf]
        %v1739 = vld [vmem:[%s1688 + $0x218] sm:$0xf]
        %v1740 = vld [vmem:[%s1688 + $0x21c] sm:$0xf]
        %v1741 = vld [vmem:[%s1688 + $0x220] sm:$0xf]
        %v1742 = vld [vmem:[%s1688 + $0x224] sm:$0xf]
        %v1743 = vld [vmem:[%s1688 + $0x228] sm:$0xf]
        %v1744 = vld [vmem:[%s1688 + $0x22c] sm:$0xf]
        %v1801 = vunpack.c.l.b16 %v1689
        %v1802 = vunpack.c.l.b16 %v1690
        %v1803 = vunpack.c.l.b16 %v1691
        %v1804 = vunpack.c.l.b16 %v1692
        %v1805 = vunpack.c.l.b16 %v1693
        %v1806 = vunpack.c.l.b16 %v1694
        %v1807 = vunpack.c.l.b16 %v1695
        %v1808 = vunpack.c.l.b16 %v1696
        %v1809 = vunpack.c.l.b16 %v1697
        %v1810 = vunpack.c.l.b16 %v1698
        %v1811 = vunpack.c.l.b16 %v1699
        %v1812 = vunpack.c.l.b16 %v1700
        %v1813 = vunpack.c.l.b16 %v1701
        %v1814 = vunpack.c.l.b16 %v1702
        %v1815 = vunpack.c.l.b16 %v1703
        %v1816 = vunpack.c.l.b16 %v1704
        %v1817 = vunpack.c.l.b16 %v1705
        %v1818 = vunpack.c.l.b16 %v1706
        %v1819 = vunpack.c.l.b16 %v1707
        %v1820 = vunpack.c.l.b16 %v1708
        %v1821 = vunpack.c.l.b16 %v1709
        %v1822 = vunpack.c.l.b16 %v1710
        %v1823 = vunpack.c.l.b16 %v1711
        %v1824 = vunpack.c.l.b16 %v1712
        %v1825 = vunpack.c.l.b16 %v1713
        %v1826 = vunpack.c.l.b16 %v1714
        %v1827 = vunpack.c.l.b16 %v1715
        %v1828 = vunpack.c.l.b16 %v1716
        %v1829 = vunpack.c.l.b16 %v1717
        %v1830 = vunpack.c.l.b16 %v1718
        %v1831 = vunpack.c.l.b16 %v1719
        %v1832 = vunpack.c.l.b16 %v1720
        %v1833 = vunpack.c.l.b16 %v1721
        %v1834 = vunpack.c.l.b16 %v1722
        %v1835 = vunpack.c.l.b16 %v1723
        %v1836 = vunpack.c.l.b16 %v1724
        %v1837 = vunpack.c.l.b16 %v1725
        %v1838 = vunpack.c.l.b16 %v1726
        %v1839 = vunpack.c.l.b16 %v1727
        %v1840 = vunpack.c.l.b16 %v1728
        %v1841 = vunpack.c.l.b16 %v1729
        %v1842 = vunpack.c.l.b16 %v1730
        %v1843 = vunpack.c.l.b16 %v1731
        %v1844 = vunpack.c.l.b16 %v1732
        %v1845 = vunpack.c.l.b16 %v1733
        %v1846 = vunpack.c.l.b16 %v1734
        %v1847 = vunpack.c.l.b16 %v1735
        %v1848 = vunpack.c.l.b16 %v1736
        %v1849 = vunpack.c.l.b16 %v1737
        %v1850 = vunpack.c.l.b16 %v1738
        %v1851 = vunpack.c.l.b16 %v1739
        %v1852 = vunpack.c.l.b16 %v1740
        %v1853 = vunpack.c.l.b16 %v1741
        %v1854 = vunpack.c.l.b16 %v1742
        %v1855 = vunpack.c.l.b16 %v1743
        %v1856 = vunpack.c.l.b16 %v1744
        %v1857 = vpack.c.b16 %v1802, %v1801
        %v1858 = vpack.c.b16 %v1804, %v1803
        %v1859 = vpack.c.b16 %v1806, %v1805
        %v1860 = vpack.c.b16 %v1808, %v1807
        %v1861 = vpack.c.b16 %v1810, %v1809
        %v1862 = vpack.c.b16 %v1812, %v1811
        %v1863 = vpack.c.b16 %v1814, %v1813
        %v1864 = vpack.c.b16 %v1816, %v1815
        %v1865 = vpack.c.b16 %v1818, %v1817
        %v1866 = vpack.c.b16 %v1820, %v1819
        %v1867 = vpack.c.b16 %v1822, %v1821
        %v1868 = vpack.c.b16 %v1824, %v1823
        %v1869 = vpack.c.b16 %v1826, %v1825
        %v1870 = vpack.c.b16 %v1828, %v1827
        %v1871 = vpack.c.b16 %v1830, %v1829
        %v1872 = vpack.c.b16 %v1832, %v1831
        %v1873 = vpack.c.b16 %v1834, %v1833
        %v1874 = vpack.c.b16 %v1836, %v1835
        %v1875 = vpack.c.b16 %v1838, %v1837
        %v1876 = vpack.c.b16 %v1840, %v1839
        %v1877 = vpack.c.b16 %v1842, %v1841
        %v1878 = vpack.c.b16 %v1844, %v1843
        %v1879 = vpack.c.b16 %v1846, %v1845
        %v1880 = vpack.c.b16 %v1848, %v1847
        %v1881 = vpack.c.b16 %v1850, %v1849
        %v1882 = vpack.c.b16 %v1852, %v1851
        %v1883 = vpack.c.b16 %v1854, %v1853
        %v1884 = vpack.c.b16 %v1856, %v1855
        %1913 = vmatpush.bf16.msra.mxu0 %v670
        %1914 = vmatpush.bf16.msra.mxu0 %v669
        %1915 = vmatpush.bf16.msra.mxu0 %v668
        %1916 = vmatpush.bf16.msra.mxu0 %v667
        %1917 = vmatpush.bf16.msra.mxu0 %v666
        %1918 = vmatpush.bf16.msra.mxu0 %v665
        %1919 = vmatpush.bf16.msra.mxu0 %v664
        %1920 = vmatpush.bf16.msra.mxu0 %v663
        %1921 = vmatmul.bf16.gmra.mxu0 %v1857
        %v1922 = vpop.f32.mrf.mxu0
        %v1923 = vadd.f32 0.0, %v1922
        %v1924 = vpop.f32.mrf.mxu0
        %v1925 = vadd.f32 0.0, %v1924
        %1926 = vmatmul.bf16.gmra.mxu0 %v1858
        %v1927 = vpop.f32.mrf.mxu0
        %v1928 = vadd.f32 0.0, %v1927
        %v1929 = vpop.f32.mrf.mxu0
        %v1930 = vadd.f32 0.0, %v1929
        %1931 = vmatmul.bf16.gmra.mxu0 %v1859
        %v1932 = vpop.f32.mrf.mxu0
        %v1933 = vadd.f32 0.0, %v1932
        %v1934 = vpop.f32.mrf.mxu0
        %v1935 = vadd.f32 0.0, %v1934
        %1936 = vmatmul.bf16.gmra.mxu0 %v1860
        %v1937 = vpop.f32.mrf.mxu0
        %v1938 = vadd.f32 0.0, %v1937
        %v1939 = vpop.f32.mrf.mxu0
        %v1940 = vadd.f32 0.0, %v1939
        %1941 = vmatmul.bf16.gmra.mxu0 %v1861
        %v1942 = vpop.f32.mrf.mxu0
        %v1943 = vadd.f32 0.0, %v1942
        %v1944 = vpop.f32.mrf.mxu0
        %v1945 = vadd.f32 0.0, %v1944
        %1946 = vmatmul.bf16.gmra.mxu0 %v1862
        %v1947 = vpop.f32.mrf.mxu0
        %v1948 = vadd.f32 0.0, %v1947
        %v1949 = vpop.f32.mrf.mxu0
        %v1950 = vadd.f32 0.0, %v1949
        %1951 = vmatmul.bf16.gmra.mxu0 %v1863
        %v1952 = vpop.f32.mrf.mxu0
        %v1953 = vadd.f32 0.0, %v1952
        %v1954 = vpop.f32.mrf.mxu0
        %v1955 = vadd.f32 0.0, %v1954
        %1956 = vmatmul.bf16.gmra.mxu0 %v1864
        %v1957 = vpop.f32.mrf.mxu0
        %v1958 = vadd.f32 0.0, %v1957
        %v1959 = vpop.f32.mrf.mxu0
        %v1960 = vadd.f32 0.0, %v1959
        %1961 = vmatmul.bf16.gmra.mxu0 %v1865
        %v1962 = vpop.f32.mrf.mxu0
        %v1963 = vadd.f32 0.0, %v1962
        %v1964 = vpop.f32.mrf.mxu0
        %v1965 = vadd.f32 0.0, %v1964
        %1966 = vmatmul.bf16.gmra.mxu0 %v1866
        %v1967 = vpop.f32.mrf.mxu0
        %v1968 = vadd.f32 0.0, %v1967
        %v1969 = vpop.f32.mrf.mxu0
        %v1970 = vadd.f32 0.0, %v1969
        %1971 = vmatmul.bf16.gmra.mxu0 %v1867
        %v1972 = vpop.f32.mrf.mxu0
        %v1973 = vadd.f32 0.0, %v1972
        %v1974 = vpop.f32.mrf.mxu0
        %v1975 = vadd.f32 0.0, %v1974
        %1976 = vmatmul.bf16.gmra.mxu0 %v1868
        %v1977 = vpop.f32.mrf.mxu0
        %v1978 = vadd.f32 0.0, %v1977
        %v1979 = vpop.f32.mrf.mxu0
        %v1980 = vadd.f32 0.0, %v1979
        %1981 = vmatmul.bf16.gmra.mxu0 %v1869
        %v1982 = vpop.f32.mrf.mxu0
        %v1983 = vadd.f32 0.0, %v1982
        %v1984 = vpop.f32.mrf.mxu0
        %v1985 = vadd.f32 0.0, %v1984
        %1986 = vmatmul.bf16.gmra.mxu0 %v1870
        %v1987 = vpop.f32.mrf.mxu0
        %v1988 = vadd.f32 0.0, %v1987
        %v1989 = vpop.f32.mrf.mxu0
        %v1990 = vadd.f32 0.0, %v1989
        %1991 = vmatmul.bf16.gmra.mxu0 %v1871
        %v1992 = vpop.f32.mrf.mxu0
        %v1993 = vadd.f32 0.0, %v1992
        %v1994 = vpop.f32.mrf.mxu0
        %v1995 = vadd.f32 0.0, %v1994
        %1996 = vmatmul.bf16.gmra.mxu0 %v1872
        %v1997 = vpop.f32.mrf.mxu0
        %v1998 = vadd.f32 0.0, %v1997
        %v1999 = vpop.f32.mrf.mxu0
        %v2000 = vadd.f32 0.0, %v1999
        %2001 = vmatmul.bf16.gmra.mxu0 %v1873
        %v2002 = vpop.f32.mrf.mxu0
        %v2003 = vadd.f32 0.0, %v2002
        %v2004 = vpop.f32.mrf.mxu0
        %v2005 = vadd.f32 0.0, %v2004
        %2006 = vmatmul.bf16.gmra.mxu0 %v1874
        %v2007 = vpop.f32.mrf.mxu0
        %v2008 = vadd.f32 0.0, %v2007
        %v2009 = vpop.f32.mrf.mxu0
        %v2010 = vadd.f32 0.0, %v2009
        %2011 = vmatmul.bf16.gmra.mxu0 %v1875
        %v2012 = vpop.f32.mrf.mxu0
        %v2013 = vadd.f32 0.0, %v2012
        %v2014 = vpop.f32.mrf.mxu0
        %v2015 = vadd.f32 0.0, %v2014
        %2016 = vmatmul.bf16.gmra.mxu0 %v1876
        %v2017 = vpop.f32.mrf.mxu0
        %v2018 = vadd.f32 0.0, %v2017
        %v2019 = vpop.f32.mrf.mxu0
        %v2020 = vadd.f32 0.0, %v2019
        %2021 = vmatmul.bf16.gmra.mxu0 %v1877
        %v2022 = vpop.f32.mrf.mxu0
        %v2023 = vadd.f32 0.0, %v2022
        %v2024 = vpop.f32.mrf.mxu0
        %v2025 = vadd.f32 0.0, %v2024
        %2026 = vmatmul.bf16.gmra.mxu0 %v1878
        %v2027 = vpop.f32.mrf.mxu0
        %v2028 = vadd.f32 0.0, %v2027
        %v2029 = vpop.f32.mrf.mxu0
        %v2030 = vadd.f32 0.0, %v2029
        %2031 = vmatmul.bf16.gmra.mxu0 %v1879
        %v2032 = vpop.f32.mrf.mxu0
        %v2033 = vadd.f32 0.0, %v2032
        %v2034 = vpop.f32.mrf.mxu0
        %v2035 = vadd.f32 0.0, %v2034
        %2036 = vmatmul.bf16.gmra.mxu0 %v1880
        %v2037 = vpop.f32.mrf.mxu0
        %v2038 = vadd.f32 0.0, %v2037
        %v2039 = vpop.f32.mrf.mxu0
        %v2040 = vadd.f32 0.0, %v2039
        %2041 = vmatmul.bf16.gmra.mxu0 %v1881
        %v2042 = vpop.f32.mrf.mxu0
        %v2043 = vadd.f32 0.0, %v2042
        %v2044 = vpop.f32.mrf.mxu0
        %v2045 = vadd.f32 0.0, %v2044
        %2046 = vmatmul.bf16.gmra.mxu0 %v1882
        %v2047 = vpop.f32.mrf.mxu0
        %v2048 = vadd.f32 0.0, %v2047
        %v2049 = vpop.f32.mrf.mxu0
        %v2050 = vadd.f32 0.0, %v2049
        %2051 = vmatmul.bf16.gmra.mxu0 %v1883
        %v2052 = vpop.f32.mrf.mxu0
        %v2053 = vadd.f32 0.0, %v2052
        %v2054 = vpop.f32.mrf.mxu0
        %v2055 = vadd.f32 0.0, %v2054
        %2056 = vmatmul.bf16.gmra.mxu0 %v1884
        %v2057 = vpop.f32.mrf.mxu0
        %v2058 = vadd.f32 0.0, %v2057
        %v2059 = vpop.f32.mrf.mxu0
        %v2060 = vadd.f32 0.0, %v2059
        %2061 = vdwg.mxu0
        %v2062 = vmax.f32 %v1632, %v1923
        %v2063 = vmax.f32 %v1633, %v1925
        %v2064 = vmax.f32 %v1634, %v1928
        %v2065 = vmax.f32 %v1635, %v1930
        %v2066 = vmax.f32 %v1636, %v1933
        %v2067 = vmax.f32 %v1637, %v1935
        %v2068 = vmax.f32 %v1638, %v1938
        %v2069 = vmax.f32 %v1639, %v1940
        %v2070 = vmax.f32 %v1640, %v1943
        %v2071 = vmax.f32 %v1641, %v1945
        %v2072 = vmax.f32 %v1642, %v1948
        %v2073 = vmax.f32 %v1643, %v1950
        %v2074 = vmax.f32 %v1644, %v1953
        %v2075 = vmax.f32 %v1645, %v1955
        %v2076 = vmax.f32 %v1646, %v1958
        %v2077 = vmax.f32 %v1647, %v1960
        %v2078 = vmax.f32 %v1648, %v1963
        %v2079 = vmax.f32 %v1649, %v1965
        %v2080 = vmax.f32 %v1650, %v1968
        %v2081 = vmax.f32 %v1651, %v1970
        %v2082 = vmax.f32 %v1652, %v1973
        %v2083 = vmax.f32 %v1653, %v1975
        %v2084 = vmax.f32 %v1654, %v1978
        %v2085 = vmax.f32 %v1655, %v1980
        %v2086 = vmax.f32 %v1656, %v1983
        %v2087 = vmax.f32 %v1657, %v1985
        %v2088 = vmax.f32 %v1658, %v1988
        %v2089 = vmax.f32 %v1659, %v1990
        %v2090 = vmax.f32 %v1660, %v1993
        %v2091 = vmax.f32 %v1661, %v1995
        %v2092 = vmax.f32 %v1662, %v1998
        %v2093 = vmax.f32 %v1663, %v2000
        %v2094 = vmax.f32 %v1664, %v2003
        %v2095 = vmax.f32 %v1665, %v2005
        %v2096 = vmax.f32 %v1666, %v2008
        %v2097 = vmax.f32 %v1667, %v2010
        %v2098 = vmax.f32 %v1668, %v2013
        %v2099 = vmax.f32 %v1669, %v2015
        %v2100 = vmax.f32 %v1670, %v2018
        %v2101 = vmax.f32 %v1671, %v2020
        %v2102 = vmax.f32 %v1672, %v2023
        %v2103 = vmax.f32 %v1673, %v2025
        %v2104 = vmax.f32 %v1674, %v2028
        %v2105 = vmax.f32 %v1675, %v2030
        %v2106 = vmax.f32 %v1676, %v2033
        %v2107 = vmax.f32 %v1677, %v2035
        %v2108 = vmax.f32 %v1678, %v2038
        %v2109 = vmax.f32 %v1679, %v2040
        %v2110 = vmax.f32 %v1680, %v2043
        %v2111 = vmax.f32 %v1681, %v2045
        %v2112 = vmax.f32 %v1682, %v2048
        %v2113 = vmax.f32 %v1683, %v2050
        %v2114 = vmax.f32 %v1684, %v2053
        %v2115 = vmax.f32 %v1685, %v2055
        %v2116 = vmax.f32 %v1686, %v2058
        %v2117 = vmax.f32 %v1687, %v2060
        %v2118 = vld [vmem:[%s2] sm:$0x1]
        %v2120 = vperm.slane %v2118, 0
        %v2122 = vadd.f32 %v2062, %v2120
        %v2123 = vadd.f32 %v2063, %v2120
        %v2124 = vadd.f32 %v2064, %v2120
        %v2125 = vadd.f32 %v2065, %v2120
        %v2126 = vadd.f32 %v2066, %v2120
        %v2127 = vadd.f32 %v2067, %v2120
        %v2128 = vadd.f32 %v2068, %v2120
        %v2129 = vadd.f32 %v2069, %v2120
        %v2130 = vadd.f32 %v2070, %v2120
        %v2131 = vadd.f32 %v2071, %v2120
        %v2132 = vadd.f32 %v2072, %v2120
        %v2133 = vadd.f32 %v2073, %v2120
        %v2134 = vadd.f32 %v2074, %v2120
        %v2135 = vadd.f32 %v2075, %v2120
        %v2136 = vadd.f32 %v2076, %v2120
        %v2137 = vadd.f32 %v2077, %v2120
        %v2138 = vadd.f32 %v2078, %v2120
        %v2139 = vadd.f32 %v2079, %v2120
        %v2140 = vadd.f32 %v2080, %v2120
        %v2141 = vadd.f32 %v2081, %v2120
        %v2142 = vadd.f32 %v2082, %v2120
        %v2143 = vadd.f32 %v2083, %v2120
        %v2144 = vadd.f32 %v2084, %v2120
        %v2145 = vadd.f32 %v2085, %v2120
        %v2146 = vadd.f32 %v2086, %v2120
        %v2147 = vadd.f32 %v2087, %v2120
        %v2148 = vadd.f32 %v2088, %v2120
        %v2149 = vadd.f32 %v2089, %v2120
        %v2150 = vadd.f32 %v2090, %v2120
        %v2151 = vadd.f32 %v2091, %v2120
        %v2152 = vadd.f32 %v2092, %v2120
        %v2153 = vadd.f32 %v2093, %v2120
        %v2154 = vadd.f32 %v2094, %v2120
        %v2155 = vadd.f32 %v2095, %v2120
        %v2156 = vadd.f32 %v2096, %v2120
        %v2157 = vadd.f32 %v2097, %v2120
        %v2158 = vadd.f32 %v2098, %v2120
        %v2159 = vadd.f32 %v2099, %v2120
        %v2160 = vadd.f32 %v2100, %v2120
        %v2161 = vadd.f32 %v2101, %v2120
        %v2162 = vadd.f32 %v2102, %v2120
        %v2163 = vadd.f32 %v2103, %v2120
        %v2164 = vadd.f32 %v2104, %v2120
        %v2165 = vadd.f32 %v2105, %v2120
        %v2166 = vadd.f32 %v2106, %v2120
        %v2167 = vadd.f32 %v2107, %v2120
        %v2168 = vadd.f32 %v2108, %v2120
        %v2169 = vadd.f32 %v2109, %v2120
        %v2170 = vadd.f32 %v2110, %v2120
        %v2171 = vadd.f32 %v2111, %v2120
        %v2172 = vadd.f32 %v2112, %v2120
        %v2173 = vadd.f32 %v2113, %v2120
        %v2174 = vadd.f32 %v2114, %v2120
        %v2175 = vadd.f32 %v2115, %v2120
        %v2176 = vadd.f32 %v2116, %v2120
        %v2177 = vadd.f32 %v2117, %v2120
        %v2178 = vmax.f32 %v2122, 0.0
        %v2179 = vmax.f32 %v2123, 0.0
        %v2180 = vmax.f32 %v2124, 0.0
        %v2181 = vmax.f32 %v2125, 0.0
        %v2182 = vmax.f32 %v2126, 0.0
        %v2183 = vmax.f32 %v2127, 0.0
        %v2184 = vmax.f32 %v2128, 0.0
        %v2185 = vmax.f32 %v2129, 0.0
        %v2186 = vmax.f32 %v2130, 0.0
        %v2187 = vmax.f32 %v2131, 0.0
        %v2188 = vmax.f32 %v2132, 0.0
        %v2189 = vmax.f32 %v2133, 0.0
        %v2190 = vmax.f32 %v2134, 0.0
        %v2191 = vmax.f32 %v2135, 0.0
        %v2192 = vmax.f32 %v2136, 0.0
        %v2193 = vmax.f32 %v2137, 0.0
        %v2194 = vmax.f32 %v2138, 0.0
        %v2195 = vmax.f32 %v2139, 0.0
        %v2196 = vmax.f32 %v2140, 0.0
        %v2197 = vmax.f32 %v2141, 0.0
        %v2198 = vmax.f32 %v2142, 0.0
        %v2199 = vmax.f32 %v2143, 0.0
        %v2200 = vmax.f32 %v2144, 0.0
        %v2201 = vmax.f32 %v2145, 0.0
        %v2202 = vmax.f32 %v2146, 0.0
        %v2203 = vmax.f32 %v2147, 0.0
        %v2204 = vmax.f32 %v2148, 0.0
        %v2205 = vmax.f32 %v2149, 0.0
        %v2206 = vmax.f32 %v2150, 0.0
        %v2207 = vmax.f32 %v2151, 0.0
        %v2208 = vmax.f32 %v2152, 0.0
        %v2209 = vmax.f32 %v2153, 0.0
        %v2210 = vmax.f32 %v2154, 0.0
        %v2211 = vmax.f32 %v2155, 0.0
        %v2212 = vmax.f32 %v2156, 0.0
        %v2213 = vmax.f32 %v2157, 0.0
        %v2214 = vmax.f32 %v2158, 0.0
        %v2215 = vmax.f32 %v2159, 0.0
        %v2216 = vmax.f32 %v2160, 0.0
        %v2217 = vmax.f32 %v2161, 0.0
        %v2218 = vmax.f32 %v2162, 0.0
        %v2219 = vmax.f32 %v2163, 0.0
        %v2220 = vmax.f32 %v2164, 0.0
        %v2221 = vmax.f32 %v2165, 0.0
        %v2222 = vmax.f32 %v2166, 0.0
        %v2223 = vmax.f32 %v2167, 0.0
        %v2224 = vmax.f32 %v2168, 0.0
        %v2225 = vmax.f32 %v2169, 0.0
        %v2226 = vmax.f32 %v2170, 0.0
        %v2227 = vmax.f32 %v2171, 0.0
        %v2228 = vmax.f32 %v2172, 0.0
        %v2229 = vmax.f32 %v2173, 0.0
        %v2230 = vmax.f32 %v2174, 0.0
        %v2231 = vmax.f32 %v2175, 0.0
        %v2232 = vmax.f32 %v2176, 0.0
        %v2233 = vmax.f32 %v2177, 0.0
        %v2234 = vpack.c.bf16 %v2178, %v2178
        %v2235 = vpack.c.bf16 %v2179, %v2179
        %v2236 = vpack.c.bf16 %v2180, %v2180
        %v2237 = vpack.c.bf16 %v2181, %v2181
        %v2238 = vpack.c.bf16 %v2182, %v2182
        %v2239 = vpack.c.bf16 %v2183, %v2183
        %v2240 = vpack.c.bf16 %v2184, %v2184
        %v2241 = vpack.c.bf16 %v2185, %v2185
        %v2242 = vpack.c.bf16 %v2186, %v2186
        %v2243 = vpack.c.bf16 %v2187, %v2187
        %v2244 = vpack.c.bf16 %v2188, %v2188
        %v2245 = vpack.c.bf16 %v2189, %v2189
        %v2246 = vpack.c.bf16 %v2190, %v2190
        %v2247 = vpack.c.bf16 %v2191, %v2191
        %v2248 = vpack.c.bf16 %v2192, %v2192
        %v2249 = vpack.c.bf16 %v2193, %v2193
        %v2250 = vpack.c.bf16 %v2194, %v2194
        %v2251 = vpack.c.bf16 %v2195, %v2195
        %v2252 = vpack.c.bf16 %v2196, %v2196
        %v2253 = vpack.c.bf16 %v2197, %v2197
        %v2254 = vpack.c.bf16 %v2198, %v2198
        %v2255 = vpack.c.bf16 %v2199, %v2199
        %v2256 = vpack.c.bf16 %v2200, %v2200
        %v2257 = vpack.c.bf16 %v2201, %v2201
        %v2258 = vpack.c.bf16 %v2202, %v2202
        %v2259 = vpack.c.bf16 %v2203, %v2203
        %v2260 = vpack.c.bf16 %v2204, %v2204
        %v2261 = vpack.c.bf16 %v2205, %v2205
        %v2262 = vpack.c.bf16 %v2206, %v2206
        %v2263 = vpack.c.bf16 %v2207, %v2207
        %v2264 = vpack.c.bf16 %v2208, %v2208
        %v2265 = vpack.c.bf16 %v2209, %v2209
        %v2266 = vpack.c.bf16 %v2210, %v2210
        %v2267 = vpack.c.bf16 %v2211, %v2211
        %v2268 = vpack.c.bf16 %v2212, %v2212
        %v2269 = vpack.c.bf16 %v2213, %v2213
        %v2270 = vpack.c.bf16 %v2214, %v2214
        %v2271 = vpack.c.bf16 %v2215, %v2215
        %v2272 = vpack.c.bf16 %v2216, %v2216
        %v2273 = vpack.c.bf16 %v2217, %v2217
        %v2274 = vpack.c.bf16 %v2218, %v2218
        %v2275 = vpack.c.bf16 %v2219, %v2219
        %v2276 = vpack.c.bf16 %v2220, %v2220
        %v2277 = vpack.c.bf16 %v2221, %v2221
        %v2278 = vpack.c.bf16 %v2222, %v2222
        %v2279 = vpack.c.bf16 %v2223, %v2223
        %v2280 = vpack.c.bf16 %v2224, %v2224
        %v2281 = vpack.c.bf16 %v2225, %v2225
        %v2282 = vpack.c.bf16 %v2226, %v2226
        %v2283 = vpack.c.bf16 %v2227, %v2227
        %v2284 = vpack.c.bf16 %v2228, %v2228
        %v2285 = vpack.c.bf16 %v2229, %v2229
        %v2286 = vpack.c.bf16 %v2230, %v2230
        %v2287 = vpack.c.bf16 %v2231, %v2231
        %v2288 = vpack.c.bf16 %v2232, %v2232
        %v2289 = vpack.c.bf16 %v2233, %v2233
        %v2300 = vunpack.c.l.b16 %v2241
        %v2301 = vunpack.c.l.b16 %v2242
        %v2302 = vunpack.c.l.b16 %v2243
        %v2303 = vunpack.c.l.b16 %v2244
        %v2304 = vunpack.c.l.b16 %v2245
        %v2305 = vunpack.c.l.b16 %v2269
        %v2306 = vunpack.c.l.b16 %v2270
        %v2307 = vunpack.c.l.b16 %v2271
        %v2308 = vunpack.c.l.b16 %v2272
        %v2309 = vunpack.c.l.b16 %v2273
        %v2310 = vpack.c.b16 %v2300, %v2300
        %v2311 = vpack.c.b16 %v2301, %v2301
        %v2312 = vpack.c.b16 %v2302, %v2302
        %v2313 = vpack.c.b16 %v2303, %v2303
        %v2314 = vpack.c.b16 %v2304, %v2304
        %v2315 = vpack.c.b16 %v2305, %v2305
        %v2316 = vpack.c.b16 %v2306, %v2306
        %v2317 = vpack.c.b16 %v2307, %v2307
        %v2318 = vpack.c.b16 %v2308, %v2308
        %v2319 = vpack.c.b16 %v2309, %v2309
        %2320 = vrot.lane.b32.xlu0 %v2310, 8
        %v2321 = vpop.permute.xlu0 %2320
        %2322 = vrot.lane.b32.xlu0 %v2311, 8
        %v2323 = vpop.permute.xlu0 %2322
        %2324 = vrot.lane.b32.xlu0 %v2312, 8
        %v2325 = vpop.permute.xlu0 %2324
        %2326 = vrot.lane.b32.xlu0 %v2313, 8
        %v2327 = vpop.permute.xlu0 %2326
        %2328 = vrot.lane.b32.xlu0 %v2314, 8
        %v2329 = vpop.permute.xlu0 %2328
        %2330 = vrot.lane.b32.xlu0 %v2315, 8
        %v2331 = vpop.permute.xlu0 %2330
        %2332 = vrot.lane.b32.xlu0 %v2316, 8
        %v2333 = vpop.permute.xlu0 %2332
        %2334 = vrot.lane.b32.xlu0 %v2317, 8
        %v2335 = vpop.permute.xlu0 %2334
        %2336 = vrot.lane.b32.xlu0 %v2318, 8
        %v2337 = vpop.permute.xlu0 %2336
        %2338 = vrot.lane.b32.xlu0 %v2319, 8
        %v2339 = vpop.permute.xlu0 %2338
        %v2350 = vunpack.c.l.b16 %v2234
        %v2351 = vunpack.c.l.b16 %v2235
        %v2352 = vunpack.c.l.b16 %v2236
        %v2353 = vunpack.c.l.b16 %v2237
        %v2354 = vunpack.c.l.b16 %v2238
        %v2355 = vunpack.c.l.b16 %v2262
        %v2356 = vunpack.c.l.b16 %v2263
        %v2357 = vunpack.c.l.b16 %v2264
        %v2358 = vunpack.c.l.b16 %v2265
        %v2359 = vunpack.c.l.b16 %v2266
        %v2360 = vpack.c.b16 %v2350, %v2350
        %v2361 = vpack.c.b16 %v2351, %v2351
        %v2362 = vpack.c.b16 %v2352, %v2352
        %v2363 = vpack.c.b16 %v2353, %v2353
        %v2364 = vpack.c.b16 %v2354, %v2354
        %v2365 = vpack.c.b16 %v2355, %v2355
        %v2366 = vpack.c.b16 %v2356, %v2356
        %v2367 = vpack.c.b16 %v2357, %v2357
        %v2368 = vpack.c.b16 %v2358, %v2358
        %v2369 = vpack.c.b16 %v2359, %v2359
        %v2371 = vshrl.u32 %v2360, 16
        %v2373 = vshll.u32 %v2360, 16
        %v2375 = vrot.slane %v2373, 1
        %v2376 = vor.u32 %v2371, %v2375
        %v2378 = vshrl.u32 %v2361, 16
        %v2380 = vshll.u32 %v2361, 16
        %v2382 = vrot.slane %v2380, 1
        %v2383 = vor.u32 %v2378, %v2382
        %v2385 = vshrl.u32 %v2362, 16
        %v2387 = vshll.u32 %v2362, 16
        %v2389 = vrot.slane %v2387, 1
        %v2390 = vor.u32 %v2385, %v2389
        %v2392 = vshrl.u32 %v2363, 16
        %v2394 = vshll.u32 %v2363, 16
        %v2396 = vrot.slane %v2394, 1
        %v2397 = vor.u32 %v2392, %v2396
        %v2399 = vshrl.u32 %v2364, 16
        %v2401 = vshll.u32 %v2364, 16
        %v2403 = vrot.slane %v2401, 1
        %v2404 = vor.u32 %v2399, %v2403
        %v2406 = vshrl.u32 %v2365, 16
        %v2408 = vshll.u32 %v2365, 16
        %v2410 = vrot.slane %v2408, 1
        %v2411 = vor.u32 %v2406, %v2410
        %v2413 = vshrl.u32 %v2366, 16
        %v2415 = vshll.u32 %v2366, 16
        %v2417 = vrot.slane %v2415, 1
        %v2418 = vor.u32 %v2413, %v2417
        %v2420 = vshrl.u32 %v2367, 16
        %v2422 = vshll.u32 %v2367, 16
        %v2424 = vrot.slane %v2422, 1
        %v2425 = vor.u32 %v2420, %v2424
        %v2427 = vshrl.u32 %v2368, 16
        %v2429 = vshll.u32 %v2368, 16
        %v2431 = vrot.slane %v2429, 1
        %v2432 = vor.u32 %v2427, %v2431
        %v2434 = vshrl.u32 %v2369, 16
        %v2436 = vshll.u32 %v2369, 16
        %v2438 = vrot.slane %v2436, 1
        %v2439 = vor.u32 %v2434, %v2438
        %2440 = vrot.lane.b32.xlu0 %v2376, 16
        %v2441 = vpop.permute.xlu0 %2440
        %2442 = vrot.lane.b32.xlu0 %v2383, 16
        %v2443 = vpop.permute.xlu0 %2442
        %2444 = vrot.lane.b32.xlu0 %v2390, 16
        %v2445 = vpop.permute.xlu0 %2444
        %2446 = vrot.lane.b32.xlu0 %v2397, 16
        %v2447 = vpop.permute.xlu0 %2446
        %2448 = vrot.lane.b32.xlu0 %v2404, 16
        %v2449 = vpop.permute.xlu0 %2448
        %2450 = vrot.lane.b32.xlu0 %v2411, 16
        %v2451 = vpop.permute.xlu0 %2450
        %2452 = vrot.lane.b32.xlu0 %v2418, 16
        %v2453 = vpop.permute.xlu0 %2452
        %2454 = vrot.lane.b32.xlu0 %v2425, 16
        %v2455 = vpop.permute.xlu0 %2454
        %2456 = vrot.lane.b32.xlu0 %v2432, 16
        %v2457 = vpop.permute.xlu0 %2456
        %2458 = vrot.lane.b32.xlu0 %v2439, 16
        %v2459 = vpop.permute.xlu0 %2458
        %v2461 = vshrl.u32 %v2310, 16
        %v2463 = vshll.u32 %v2310, 16
        %v2465 = vrot.slane %v2463, 1
        %v2466 = vor.u32 %v2461, %v2465
        %v2468 = vshrl.u32 %v2311, 16
        %v2470 = vshll.u32 %v2311, 16
        %v2472 = vrot.slane %v2470, 1
        %v2473 = vor.u32 %v2468, %v2472
        %v2475 = vshrl.u32 %v2312, 16
        %v2477 = vshll.u32 %v2312, 16
        %v2479 = vrot.slane %v2477, 1
        %v2480 = vor.u32 %v2475, %v2479
        %v2482 = vshrl.u32 %v2313, 16
        %v2484 = vshll.u32 %v2313, 16
        %v2486 = vrot.slane %v2484, 1
        %v2487 = vor.u32 %v2482, %v2486
        %v2489 = vshrl.u32 %v2314, 16
        %v2491 = vshll.u32 %v2314, 16
        %v2493 = vrot.slane %v2491, 1
        %v2494 = vor.u32 %v2489, %v2493
        %v2496 = vshrl.u32 %v2315, 16
        %v2498 = vshll.u32 %v2315, 16
        %v2500 = vrot.slane %v2498, 1
        %v2501 = vor.u32 %v2496, %v2500
        %v2503 = vshrl.u32 %v2316, 16
        %v2505 = vshll.u32 %v2316, 16
        %v2507 = vrot.slane %v2505, 1
        %v2508 = vor.u32 %v2503, %v2507
        %v2510 = vshrl.u32 %v2317, 16
        %v2512 = vshll.u32 %v2317, 16
        %v2514 = vrot.slane %v2512, 1
        %v2515 = vor.u32 %v2510, %v2514
        %v2517 = vshrl.u32 %v2318, 16
        %v2519 = vshll.u32 %v2318, 16
        %v2521 = vrot.slane %v2519, 1
        %v2522 = vor.u32 %v2517, %v2521
        %v2524 = vshrl.u32 %v2319, 16
        %v2526 = vshll.u32 %v2319, 16
        %v2528 = vrot.slane %v2526, 1
        %v2529 = vor.u32 %v2524, %v2528
        %2530 = vrot.lane.b32.xlu0 %v2466, 24
        %v2531 = vpop.permute.xlu0 %2530
        %2532 = vrot.lane.b32.xlu0 %v2473, 24
        %v2533 = vpop.permute.xlu0 %2532
        %2534 = vrot.lane.b32.xlu0 %v2480, 24
        %v2535 = vpop.permute.xlu0 %2534
        %2536 = vrot.lane.b32.xlu0 %v2487, 24
        %v2537 = vpop.permute.xlu0 %2536
        %2538 = vrot.lane.b32.xlu0 %v2494, 24
        %v2539 = vpop.permute.xlu0 %2538
        %2540 = vrot.lane.b32.xlu0 %v2501, 24
        %v2541 = vpop.permute.xlu0 %2540
        %2542 = vrot.lane.b32.xlu0 %v2508, 24
        %v2543 = vpop.permute.xlu0 %2542
        %2544 = vrot.lane.b32.xlu0 %v2515, 24
        %v2545 = vpop.permute.xlu0 %2544
        %2546 = vrot.lane.b32.xlu0 %v2522, 24
        %v2547 = vpop.permute.xlu0 %2546
        %2548 = vrot.lane.b32.xlu0 %v2529, 24
        %v2549 = vpop.permute.xlu0 %2548
        %v2550 = vrot.slane %v2360, 1
        %v2551 = vrot.slane %v2361, 1
        %v2552 = vrot.slane %v2362, 1
        %v2553 = vrot.slane %v2363, 1
        %v2554 = vrot.slane %v2364, 1
        %v2555 = vrot.slane %v2365, 1
        %v2556 = vrot.slane %v2366, 1
        %v2557 = vrot.slane %v2367, 1
        %v2558 = vrot.slane %v2368, 1
        %v2559 = vrot.slane %v2369, 1
        %2560 = vrot.lane.b32.xlu0 %v2550, 32
        %v2561 = vpop.permute.xlu0 %2560
        %2562 = vrot.lane.b32.xlu0 %v2551, 32
        %v2563 = vpop.permute.xlu0 %2562
        %2564 = vrot.lane.b32.xlu0 %v2552, 32
        %v2565 = vpop.permute.xlu0 %2564
        %2566 = vrot.lane.b32.xlu0 %v2553, 32
        %v2567 = vpop.permute.xlu0 %2566
        %2568 = vrot.lane.b32.xlu0 %v2554, 32
        %v2569 = vpop.permute.xlu0 %2568
        %2570 = vrot.lane.b32.xlu0 %v2555, 32
        %v2571 = vpop.permute.xlu0 %2570
        %2572 = vrot.lane.b32.xlu0 %v2556, 32
        %v2573 = vpop.permute.xlu0 %2572
        %2574 = vrot.lane.b32.xlu0 %v2557, 32
        %v2575 = vpop.permute.xlu0 %2574
        %2576 = vrot.lane.b32.xlu0 %v2558, 32
        %v2577 = vpop.permute.xlu0 %2576
        %2578 = vrot.lane.b32.xlu0 %v2559, 32
        %v2579 = vpop.permute.xlu0 %2578
        %v2590 = vunpack.c.l.b16 %v2248
        %v2591 = vunpack.c.l.b16 %v2249
        %v2592 = vunpack.c.l.b16 %v2250
        %v2593 = vunpack.c.l.b16 %v2251
        %v2594 = vunpack.c.l.b16 %v2252
        %v2595 = vunpack.c.l.b16 %v2276
        %v2596 = vunpack.c.l.b16 %v2277
        %v2597 = vunpack.c.l.b16 %v2278
        %v2598 = vunpack.c.l.b16 %v2279
        %v2599 = vunpack.c.l.b16 %v2280
        %v2600 = vpack.c.b16 %v2590, %v2590
        %v2601 = vpack.c.b16 %v2591, %v2591
        %v2602 = vpack.c.b16 %v2592, %v2592
        %v2603 = vpack.c.b16 %v2593, %v2593
        %v2604 = vpack.c.b16 %v2594, %v2594
        %v2605 = vpack.c.b16 %v2595, %v2595
        %v2606 = vpack.c.b16 %v2596, %v2596
        %v2607 = vpack.c.b16 %v2597, %v2597
        %v2608 = vpack.c.b16 %v2598, %v2598
        %v2609 = vpack.c.b16 %v2599, %v2599
        %2610 = vrot.lane.b32.xlu0 %v2600, 40
        %v2611 = vpop.permute.xlu0 %2610
        %2612 = vrot.lane.b32.xlu0 %v2601, 40
        %v2613 = vpop.permute.xlu0 %2612
        %2614 = vrot.lane.b32.xlu0 %v2602, 40
        %v2615 = vpop.permute.xlu0 %2614
        %2616 = vrot.lane.b32.xlu0 %v2603, 40
        %v2617 = vpop.permute.xlu0 %2616
        %2618 = vrot.lane.b32.xlu0 %v2604, 40
        %v2619 = vpop.permute.xlu0 %2618
        %2620 = vrot.lane.b32.xlu0 %v2605, 40
        %v2621 = vpop.permute.xlu0 %2620
        %2622 = vrot.lane.b32.xlu0 %v2606, 40
        %v2623 = vpop.permute.xlu0 %2622
        %2624 = vrot.lane.b32.xlu0 %v2607, 40
        %v2625 = vpop.permute.xlu0 %2624
        %2626 = vrot.lane.b32.xlu0 %v2608, 40
        %v2627 = vpop.permute.xlu0 %2626
        %2628 = vrot.lane.b32.xlu0 %v2609, 40
        %v2629 = vpop.permute.xlu0 %2628
        %v2640 = vunpack.c.l.b16 %v2255
        %v2641 = vunpack.c.l.b16 %v2256
        %v2642 = vunpack.c.l.b16 %v2257
        %v2643 = vunpack.c.l.b16 %v2258
        %v2644 = vunpack.c.l.b16 %v2259
        %v2645 = vunpack.c.l.b16 %v2283
        %v2646 = vunpack.c.l.b16 %v2284
        %v2647 = vunpack.c.l.b16 %v2285
        %v2648 = vunpack.c.l.b16 %v2286
        %v2649 = vunpack.c.l.b16 %v2287
        %v2650 = vpack.c.b16 %v2640, %v2640
        %v2651 = vpack.c.b16 %v2641, %v2641
        %v2652 = vpack.c.b16 %v2642, %v2642
        %v2653 = vpack.c.b16 %v2643, %v2643
        %v2654 = vpack.c.b16 %v2644, %v2644
        %v2655 = vpack.c.b16 %v2645, %v2645
        %v2656 = vpack.c.b16 %v2646, %v2646
        %v2657 = vpack.c.b16 %v2647, %v2647
        %v2658 = vpack.c.b16 %v2648, %v2648
        %v2659 = vpack.c.b16 %v2649, %v2649
        %2660 = vrot.lane.b32.xlu0 %v2650, 48
        %v2661 = vpop.permute.xlu0 %2660
        %2662 = vrot.lane.b32.xlu0 %v2651, 48
        %v2663 = vpop.permute.xlu0 %2662
        %2664 = vrot.lane.b32.xlu0 %v2652, 48
        %v2665 = vpop.permute.xlu0 %2664
        %2666 = vrot.lane.b32.xlu0 %v2653, 48
        %v2667 = vpop.permute.xlu0 %2666
        %2668 = vrot.lane.b32.xlu0 %v2654, 48
        %v2669 = vpop.permute.xlu0 %2668
        %2670 = vrot.lane.b32.xlu0 %v2655, 48
        %v2671 = vpop.permute.xlu0 %2670
        %2672 = vrot.lane.b32.xlu0 %v2656, 48
        %v2673 = vpop.permute.xlu0 %2672
        %2674 = vrot.lane.b32.xlu0 %v2657, 48
        %v2675 = vpop.permute.xlu0 %2674
        %2676 = vrot.lane.b32.xlu0 %v2658, 48
        %v2677 = vpop.permute.xlu0 %2676
        %2678 = vrot.lane.b32.xlu0 %v2659, 48
        %v2679 = vpop.permute.xlu0 %2678
        %v2681 = vshrl.u32 %v2600, 16
        %v2683 = vshll.u32 %v2600, 16
        %v2685 = vrot.slane %v2683, 1
        %v2686 = vor.u32 %v2681, %v2685
        %v2688 = vshrl.u32 %v2601, 16
        %v2690 = vshll.u32 %v2601, 16
        %v2692 = vrot.slane %v2690, 1
        %v2693 = vor.u32 %v2688, %v2692
        %v2695 = vshrl.u32 %v2602, 16
        %v2697 = vshll.u32 %v2602, 16
        %v2699 = vrot.slane %v2697, 1
        %v2700 = vor.u32 %v2695, %v2699
        %v2702 = vshrl.u32 %v2603, 16
        %v2704 = vshll.u32 %v2603, 16
        %v2706 = vrot.slane %v2704, 1
        %v2707 = vor.u32 %v2702, %v2706
        %v2709 = vshrl.u32 %v2604, 16
        %v2711 = vshll.u32 %v2604, 16
        %v2713 = vrot.slane %v2711, 1
        %v2714 = vor.u32 %v2709, %v2713
        %v2716 = vshrl.u32 %v2605, 16
        %v2718 = vshll.u32 %v2605, 16
        %v2720 = vrot.slane %v2718, 1
        %v2721 = vor.u32 %v2716, %v2720
        %v2723 = vshrl.u32 %v2606, 16
        %v2725 = vshll.u32 %v2606, 16
        %v2727 = vrot.slane %v2725, 1
        %v2728 = vor.u32 %v2723, %v2727
        %v2730 = vshrl.u32 %v2607, 16
        %v2732 = vshll.u32 %v2607, 16
        %v2734 = vrot.slane %v2732, 1
        %v2735 = vor.u32 %v2730, %v2734
        %v2737 = vshrl.u32 %v2608, 16
        %v2739 = vshll.u32 %v2608, 16
        %v2741 = vrot.slane %v2739, 1
        %v2742 = vor.u32 %v2737, %v2741
        %v2744 = vshrl.u32 %v2609, 16
        %v2746 = vshll.u32 %v2609, 16
        %v2748 = vrot.slane %v2746, 1
        %v2749 = vor.u32 %v2744, %v2748
        %2750 = vrot.lane.b32.xlu0 %v2686, 56
        %v2751 = vpop.permute.xlu0 %2750
        %2752 = vrot.lane.b32.xlu0 %v2693, 56
        %v2753 = vpop.permute.xlu0 %2752
        %2754 = vrot.lane.b32.xlu0 %v2700, 56
        %v2755 = vpop.permute.xlu0 %2754
        %2756 = vrot.lane.b32.xlu0 %v2707, 56
        %v2757 = vpop.permute.xlu0 %2756
        %2758 = vrot.lane.b32.xlu0 %v2714, 56
        %v2759 = vpop.permute.xlu0 %2758
        %2760 = vrot.lane.b32.xlu0 %v2721, 56
        %v2761 = vpop.permute.xlu0 %2760
        %2762 = vrot.lane.b32.xlu0 %v2728, 56
        %v2763 = vpop.permute.xlu0 %2762
        %2764 = vrot.lane.b32.xlu0 %v2735, 56
        %v2765 = vpop.permute.xlu0 %2764
        %2766 = vrot.lane.b32.xlu0 %v2742, 56
        %v2767 = vpop.permute.xlu0 %2766
        %2768 = vrot.lane.b32.xlu0 %v2749, 56
        %v2769 = vpop.permute.xlu0 %2768
        %v2771 = vshrl.u32 %v2650, 16
        %v2773 = vshll.u32 %v2650, 16
        %v2775 = vrot.slane %v2773, 1
        %v2776 = vor.u32 %v2771, %v2775
        %v2778 = vshrl.u32 %v2651, 16
        %v2780 = vshll.u32 %v2651, 16
        %v2782 = vrot.slane %v2780, 1
        %v2783 = vor.u32 %v2778, %v2782
        %v2785 = vshrl.u32 %v2652, 16
        %v2787 = vshll.u32 %v2652, 16
        %v2789 = vrot.slane %v2787, 1
        %v2790 = vor.u32 %v2785, %v2789
        %v2792 = vshrl.u32 %v2653, 16
        %v2794 = vshll.u32 %v2653, 16
        %v2796 = vrot.slane %v2794, 1
        %v2797 = vor.u32 %v2792, %v2796
        %v2799 = vshrl.u32 %v2654, 16
        %v2801 = vshll.u32 %v2654, 16
        %v2803 = vrot.slane %v2801, 1
        %v2804 = vor.u32 %v2799, %v2803
        %v2806 = vshrl.u32 %v2655, 16
        %v2808 = vshll.u32 %v2655, 16
        %v2810 = vrot.slane %v2808, 1
        %v2811 = vor.u32 %v2806, %v2810
        %v2813 = vshrl.u32 %v2656, 16
        %v2815 = vshll.u32 %v2656, 16
        %v2817 = vrot.slane %v2815, 1
        %v2818 = vor.u32 %v2813, %v2817
        %v2820 = vshrl.u32 %v2657, 16
        %v2822 = vshll.u32 %v2657, 16
        %v2824 = vrot.slane %v2822, 1
        %v2825 = vor.u32 %v2820, %v2824
        %v2827 = vshrl.u32 %v2658, 16
        %v2829 = vshll.u32 %v2658, 16
        %v2831 = vrot.slane %v2829, 1
        %v2832 = vor.u32 %v2827, %v2831
        %v2834 = vshrl.u32 %v2659, 16
        %v2836 = vshll.u32 %v2659, 16
        %v2838 = vrot.slane %v2836, 1
        %v2839 = vor.u32 %v2834, %v2838
        %2840 = vrot.lane.b32.xlu0 %v2776, 64
        %v2841 = vpop.permute.xlu0 %2840
        %2842 = vrot.lane.b32.xlu0 %v2783, 64
        %v2843 = vpop.permute.xlu0 %2842
        %2844 = vrot.lane.b32.xlu0 %v2790, 64
        %v2845 = vpop.permute.xlu0 %2844
        %2846 = vrot.lane.b32.xlu0 %v2797, 64
        %v2847 = vpop.permute.xlu0 %2846
        %2848 = vrot.lane.b32.xlu0 %v2804, 64
        %v2849 = vpop.permute.xlu0 %2848
        %2850 = vrot.lane.b32.xlu0 %v2811, 64
        %v2851 = vpop.permute.xlu0 %2850
        %2852 = vrot.lane.b32.xlu0 %v2818, 64
        %v2853 = vpop.permute.xlu0 %2852
        %2854 = vrot.lane.b32.xlu0 %v2825, 64
        %v2855 = vpop.permute.xlu0 %2854
        %2856 = vrot.lane.b32.xlu0 %v2832, 64
        %v2857 = vpop.permute.xlu0 %2856
        %2858 = vrot.lane.b32.xlu0 %v2839, 64
        %v2859 = vpop.permute.xlu0 %2858
        %v2860 = vrot.slane %v2600, 1
        %v2861 = vrot.slane %v2601, 1
        %v2862 = vrot.slane %v2602, 1
        %v2863 = vrot.slane %v2603, 1
        %v2864 = vrot.slane %v2604, 1
        %v2865 = vrot.slane %v2605, 1
        %v2866 = vrot.slane %v2606, 1
        %v2867 = vrot.slane %v2607, 1
        %v2868 = vrot.slane %v2608, 1
        %v2869 = vrot.slane %v2609, 1
        %2870 = vrot.lane.b32.xlu0 %v2860, 72
        %v2871 = vpop.permute.xlu0 %2870
        %2872 = vrot.lane.b32.xlu0 %v2861, 72
        %v2873 = vpop.permute.xlu0 %2872
        %2874 = vrot.lane.b32.xlu0 %v2862, 72
        %v2875 = vpop.permute.xlu0 %2874
        %2876 = vrot.lane.b32.xlu0 %v2863, 72
        %v2877 = vpop.permute.xlu0 %2876
        %2878 = vrot.lane.b32.xlu0 %v2864, 72
        %v2879 = vpop.permute.xlu0 %2878
        %2880 = vrot.lane.b32.xlu0 %v2865, 72
        %v2881 = vpop.permute.xlu0 %2880
        %2882 = vrot.lane.b32.xlu0 %v2866, 72
        %v2883 = vpop.permute.xlu0 %2882
        %2884 = vrot.lane.b32.xlu0 %v2867, 72
        %v2885 = vpop.permute.xlu0 %2884
        %2886 = vrot.lane.b32.xlu0 %v2868, 72
        %v2887 = vpop.permute.xlu0 %2886
        %2888 = vrot.lane.b32.xlu0 %v2869, 72
        %v2889 = vpop.permute.xlu0 %2888
        %v2892 = vunpack.c.l.b16 %v2239
        %v2893 = vunpack.c.l.b16 %v2267
        %v2894 = vpack.c.b16 %v2892, %v2892
        %v2895 = vpack.c.b16 %v2893, %v2893
        %2896 = vrot.lane.b32.xlu0 %v2361, 80
        %v2897 = vpop.permute.xlu0 %2896
        %2898 = vrot.lane.b32.xlu0 %v2362, 80
        %v2899 = vpop.permute.xlu0 %2898
        %2900 = vrot.lane.b32.xlu0 %v2363, 80
        %v2901 = vpop.permute.xlu0 %2900
        %2902 = vrot.lane.b32.xlu0 %v2364, 80
        %v2903 = vpop.permute.xlu0 %2902
        %2904 = vrot.lane.b32.xlu0 %v2894, 80
        %v2905 = vpop.permute.xlu0 %2904
        %2906 = vrot.lane.b32.xlu0 %v2366, 80
        %v2907 = vpop.permute.xlu0 %2906
        %2908 = vrot.lane.b32.xlu0 %v2367, 80
        %v2909 = vpop.permute.xlu0 %2908
        %2910 = vrot.lane.b32.xlu0 %v2368, 80
        %v2911 = vpop.permute.xlu0 %2910
        %2912 = vrot.lane.b32.xlu0 %v2369, 80
        %v2913 = vpop.permute.xlu0 %2912
        %2914 = vrot.lane.b32.xlu0 %v2895, 80
        %v2915 = vpop.permute.xlu0 %2914
        %v2918 = vunpack.c.l.b16 %v2246
        %v2919 = vunpack.c.l.b16 %v2274
        %v2920 = vpack.c.b16 %v2918, %v2918
        %v2921 = vpack.c.b16 %v2919, %v2919
        %2922 = vrot.lane.b32.xlu0 %v2311, 88
        %v2923 = vpop.permute.xlu0 %2922
        %2924 = vrot.lane.b32.xlu0 %v2312, 88
        %v2925 = vpop.permute.xlu0 %2924
        %2926 = vrot.lane.b32.xlu0 %v2313, 88
        %v2927 = vpop.permute.xlu0 %2926
        %2928 = vrot.lane.b32.xlu0 %v2314, 88
        %v2929 = vpop.permute.xlu0 %2928
        %2930 = vrot.lane.b32.xlu0 %v2920, 88
        %v2931 = vpop.permute.xlu0 %2930
        %2932 = vrot.lane.b32.xlu0 %v2316, 88
        %v2933 = vpop.permute.xlu0 %2932
        %2934 = vrot.lane.b32.xlu0 %v2317, 88
        %v2935 = vpop.permute.xlu0 %2934
        %2936 = vrot.lane.b32.xlu0 %v2318, 88
        %v2937 = vpop.permute.xlu0 %2936
        %2938 = vrot.lane.b32.xlu0 %v2319, 88
        %v2939 = vpop.permute.xlu0 %2938
        %2940 = vrot.lane.b32.xlu0 %v2921, 88
        %v2941 = vpop.permute.xlu0 %2940
        %v2943 = vshrl.u32 %v2894, 16
        %v2945 = vshll.u32 %v2894, 16
        %v2947 = vrot.slane %v2945, 1
        %v2948 = vor.u32 %v2943, %v2947
        %v2950 = vshrl.u32 %v2895, 16
        %v2952 = vshll.u32 %v2895, 16
        %v2954 = vrot.slane %v2952, 1
        %v2955 = vor.u32 %v2950, %v2954
        %2956 = vrot.lane.b32.xlu0 %v2383, 96
        %v2957 = vpop.permute.xlu0 %2956
        %2958 = vrot.lane.b32.xlu0 %v2390, 96
        %v2959 = vpop.permute.xlu0 %2958
        %2960 = vrot.lane.b32.xlu0 %v2397, 96
        %v2961 = vpop.permute.xlu0 %2960
        %2962 = vrot.lane.b32.xlu0 %v2404, 96
        %v2963 = vpop.permute.xlu0 %2962
        %2964 = vrot.lane.b32.xlu0 %v2948, 96
        %v2965 = vpop.permute.xlu0 %2964
        %2966 = vrot.lane.b32.xlu0 %v2418, 96
        %v2967 = vpop.permute.xlu0 %2966
        %2968 = vrot.lane.b32.xlu0 %v2425, 96
        %v2969 = vpop.permute.xlu0 %2968
        %2970 = vrot.lane.b32.xlu0 %v2432, 96
        %v2971 = vpop.permute.xlu0 %2970
        %2972 = vrot.lane.b32.xlu0 %v2439, 96
        %v2973 = vpop.permute.xlu0 %2972
        %2974 = vrot.lane.b32.xlu0 %v2955, 96
        %v2975 = vpop.permute.xlu0 %2974
        %v2977 = vshrl.u32 %v2920, 16
        %v2979 = vshll.u32 %v2920, 16
        %v2981 = vrot.slane %v2979, 1
        %v2982 = vor.u32 %v2977, %v2981
        %v2984 = vshrl.u32 %v2921, 16
        %v2986 = vshll.u32 %v2921, 16
        %v2988 = vrot.slane %v2986, 1
        %v2989 = vor.u32 %v2984, %v2988
        %2990 = vrot.lane.b32.xlu0 %v2473, 104
        %v2991 = vpop.permute.xlu0 %2990
        %2992 = vrot.lane.b32.xlu0 %v2480, 104
        %v2993 = vpop.permute.xlu0 %2992
        %2994 = vrot.lane.b32.xlu0 %v2487, 104
        %v2995 = vpop.permute.xlu0 %2994
        %2996 = vrot.lane.b32.xlu0 %v2494, 104
        %v2997 = vpop.permute.xlu0 %2996
        %2998 = vrot.lane.b32.xlu0 %v2982, 104
        %v2999 = vpop.permute.xlu0 %2998
        %3000 = vrot.lane.b32.xlu0 %v2508, 104
        %v3001 = vpop.permute.xlu0 %3000
        %3002 = vrot.lane.b32.xlu0 %v2515, 104
        %v3003 = vpop.permute.xlu0 %3002
        %3004 = vrot.lane.b32.xlu0 %v2522, 104
        %v3005 = vpop.permute.xlu0 %3004
        %3006 = vrot.lane.b32.xlu0 %v2529, 104
        %v3007 = vpop.permute.xlu0 %3006
        %3008 = vrot.lane.b32.xlu0 %v2989, 104
        %v3009 = vpop.permute.xlu0 %3008
        %v3010 = vrot.slane %v2894, 1
        %v3011 = vrot.slane %v2895, 1
        %3012 = vrot.lane.b32.xlu0 %v2551, 112
        %v3013 = vpop.permute.xlu0 %3012
        %3014 = vrot.lane.b32.xlu0 %v2552, 112
        %v3015 = vpop.permute.xlu0 %3014
        %3016 = vrot.lane.b32.xlu0 %v2553, 112
        %v3017 = vpop.permute.xlu0 %3016
        %3018 = vrot.lane.b32.xlu0 %v2554, 112
        %v3019 = vpop.permute.xlu0 %3018
        %3020 = vrot.lane.b32.xlu0 %v3010, 112
        %v3021 = vpop.permute.xlu0 %3020
        %3022 = vrot.lane.b32.xlu0 %v2556, 112
        %v3023 = vpop.permute.xlu0 %3022
        %3024 = vrot.lane.b32.xlu0 %v2557, 112
        %v3025 = vpop.permute.xlu0 %3024
        %3026 = vrot.lane.b32.xlu0 %v2558, 112
        %v3027 = vpop.permute.xlu0 %3026
        %3028 = vrot.lane.b32.xlu0 %v2559, 112
        %v3029 = vpop.permute.xlu0 %3028
        %3030 = vrot.lane.b32.xlu0 %v3011, 112
        %v3031 = vpop.permute.xlu0 %3030
        %v3034 = vunpack.c.l.b16 %v2253
        %v3035 = vunpack.c.l.b16 %v2281
        %v3036 = vpack.c.b16 %v3034, %v3034
        %v3037 = vpack.c.b16 %v3035, %v3035
        %3038 = vrot.lane.b32.xlu0 %v2601, 120
        %v3039 = vpop.permute.xlu0 %3038
        %3040 = vrot.lane.b32.xlu0 %v2602, 120
        %v3041 = vpop.permute.xlu0 %3040
        %3042 = vrot.lane.b32.xlu0 %v2603, 120
        %v3043 = vpop.permute.xlu0 %3042
        %3044 = vrot.lane.b32.xlu0 %v2604, 120
        %v3045 = vpop.permute.xlu0 %3044
        %3046 = vrot.lane.b32.xlu0 %v3036, 120
        %v3047 = vpop.permute.xlu0 %3046
        %3048 = vrot.lane.b32.xlu0 %v2606, 120
        %v3049 = vpop.permute.xlu0 %3048
        %3050 = vrot.lane.b32.xlu0 %v2607, 120
        %v3051 = vpop.permute.xlu0 %3050
        %3052 = vrot.lane.b32.xlu0 %v2608, 120
        %v3053 = vpop.permute.xlu0 %3052
        %3054 = vrot.lane.b32.xlu0 %v2609, 120
        %v3055 = vpop.permute.xlu0 %3054
        %3056 = vrot.lane.b32.xlu0 %v3037, 120
        %v3057 = vpop.permute.xlu0 %3056
        %vm3058 = vcmask 64512
        %v3061 = vsel %vm3058, %v2234, %v2321
        %v3064 = vsel %vm3058, %v2235, %v2323
        %v3067 = vsel %vm3058, %v2236, %v2325
        %v3070 = vsel %vm3058, %v2237, %v2327
        %v3073 = vsel %vm3058, %v2238, %v2329
        %v3076 = vsel %vm3058, %v2262, %v2331
        %v3079 = vsel %vm3058, %v2263, %v2333
        %v3082 = vsel %vm3058, %v2264, %v2335
        %v3085 = vsel %vm3058, %v2265, %v2337
        %v3088 = vsel %vm3058, %v2266, %v2339
        %vm3089 = vcmask 130048
        %v3091 = vsel %vm3089, %v3061, %v2441
        %v3093 = vsel %vm3089, %v3064, %v2443
        %v3095 = vsel %vm3089, %v3067, %v2445
        %v3097 = vsel %vm3089, %v3070, %v2447
        %v3099 = vsel %vm3089, %v3073, %v2449
        %v3101 = vsel %vm3089, %v3076, %v2451
        %v3103 = vsel %vm3089, %v3079, %v2453
        %v3105 = vsel %vm3089, %v3082, %v2455
        %v3107 = vsel %vm3089, %v3085, %v2457
        %v3109 = vsel %vm3089, %v3088, %v2459
        %vm3110 = vcmask 195584
        %v3112 = vsel %vm3110, %v3091, %v2531
        %v3114 = vsel %vm3110, %v3093, %v2533
        %v3116 = vsel %vm3110, %v3095, %v2535
        %v3118 = vsel %vm3110, %v3097, %v2537
        %v3120 = vsel %vm3110, %v3099, %v2539
        %v3122 = vsel %vm3110, %v3101, %v2541
        %v3124 = vsel %vm3110, %v3103, %v2543
        %v3126 = vsel %vm3110, %v3105, %v2545
        %v3128 = vsel %vm3110, %v3107, %v2547
        %v3130 = vsel %vm3110, %v3109, %v2549
        %vm3131 = vcmask 261120
        %v3133 = vsel %vm3131, %v3112, %v2561
        %v3135 = vsel %vm3131, %v3114, %v2563
        %v3137 = vsel %vm3131, %v3116, %v2565
        %v3139 = vsel %vm3131, %v3118, %v2567
        %v3141 = vsel %vm3131, %v3120, %v2569
        %v3143 = vsel %vm3131, %v3122, %v2571
        %v3145 = vsel %vm3131, %v3124, %v2573
        %v3147 = vsel %vm3131, %v3126, %v2575
        %v3149 = vsel %vm3131, %v3128, %v2577
        %v3151 = vsel %vm3131, %v3130, %v2579
        %vm3152 = vcmask 326656
        %v3154 = vsel %vm3152, %v3133, %v2611
        %v3156 = vsel %vm3152, %v3135, %v2613
        %v3158 = vsel %vm3152, %v3137, %v2615
        %v3160 = vsel %vm3152, %v3139, %v2617
        %v3162 = vsel %vm3152, %v3141, %v2619
        %v3164 = vsel %vm3152, %v3143, %v2621
        %v3166 = vsel %vm3152, %v3145, %v2623
        %v3168 = vsel %vm3152, %v3147, %v2625
        %v3170 = vsel %vm3152, %v3149, %v2627
        %v3172 = vsel %vm3152, %v3151, %v2629
        %vm3173 = vcmask 392192
        %v3175 = vsel %vm3173, %v3154, %v2661
        %v3177 = vsel %vm3173, %v3156, %v2663
        %v3179 = vsel %vm3173, %v3158, %v2665
        %v3181 = vsel %vm3173, %v3160, %v2667
        %v3183 = vsel %vm3173, %v3162, %v2669
        %v3185 = vsel %vm3173, %v3164, %v2671
        %v3187 = vsel %vm3173, %v3166, %v2673
        %v3189 = vsel %vm3173, %v3168, %v2675
        %v3191 = vsel %vm3173, %v3170, %v2677
        %v3193 = vsel %vm3173, %v3172, %v2679
        %vm3194 = vcmask 457728
        %v3196 = vsel %vm3194, %v3175, %v2751
        %v3198 = vsel %vm3194, %v3177, %v2753
        %v3200 = vsel %vm3194, %v3179, %v2755
        %v3202 = vsel %vm3194, %v3181, %v2757
        %v3204 = vsel %vm3194, %v3183, %v2759
        %v3206 = vsel %vm3194, %v3185, %v2761
        %v3208 = vsel %vm3194, %v3187, %v2763
        %v3210 = vsel %vm3194, %v3189, %v2765
        %v3212 = vsel %vm3194, %v3191, %v2767
        %v3214 = vsel %vm3194, %v3193, %v2769
        %vm3215 = vcmask 523264
        %v3217 = vsel %vm3215, %v3196, %v2841
        %v3219 = vsel %vm3215, %v3198, %v2843
        %v3221 = vsel %vm3215, %v3200, %v2845
        %v3223 = vsel %vm3215, %v3202, %v2847
        %v3225 = vsel %vm3215, %v3204, %v2849
        %v3227 = vsel %vm3215, %v3206, %v2851
        %v3229 = vsel %vm3215, %v3208, %v2853
        %v3231 = vsel %vm3215, %v3210, %v2855
        %v3233 = vsel %vm3215, %v3212, %v2857
        %v3235 = vsel %vm3215, %v3214, %v2859
        %vm3236 = vcmask 588800
        %v3238 = vsel %vm3236, %v3217, %v2871
        %v3240 = vsel %vm3236, %v3219, %v2873
        %v3242 = vsel %vm3236, %v3221, %v2875
        %v3244 = vsel %vm3236, %v3223, %v2877
        %v3246 = vsel %vm3236, %v3225, %v2879
        %v3248 = vsel %vm3236, %v3227, %v2881
        %v3250 = vsel %vm3236, %v3229, %v2883
        %v3252 = vsel %vm3236, %v3231, %v2885
        %v3254 = vsel %vm3236, %v3233, %v2887
        %v3256 = vsel %vm3236, %v3235, %v2889
        %vm3257 = vcmask 654336
        %v3259 = vsel %vm3257, %v3238, %v2897
        %v3261 = vsel %vm3257, %v3240, %v2899
        %v3263 = vsel %vm3257, %v3242, %v2901
        %v3265 = vsel %vm3257, %v3244, %v2903
        %v3267 = vsel %vm3257, %v3246, %v2905
        %v3269 = vsel %vm3257, %v3248, %v2907
        %v3271 = vsel %vm3257, %v3250, %v2909
        %v3273 = vsel %vm3257, %v3252, %v2911
        %v3275 = vsel %vm3257, %v3254, %v2913
        %v3277 = vsel %vm3257, %v3256, %v2915
        %vm3278 = vcmask 719872
        %v3280 = vsel %vm3278, %v3259, %v2923
        %v3282 = vsel %vm3278, %v3261, %v2925
        %v3284 = vsel %vm3278, %v3263, %v2927
        %v3286 = vsel %vm3278, %v3265, %v2929
        %v3288 = vsel %vm3278, %v3267, %v2931
        %v3290 = vsel %vm3278, %v3269, %v2933
        %v3292 = vsel %vm3278, %v3271, %v2935
        %v3294 = vsel %vm3278, %v3273, %v2937
        %v3296 = vsel %vm3278, %v3275, %v2939
        %v3298 = vsel %vm3278, %v3277, %v2941
        %vm3299 = vcmask 785408
        %v3301 = vsel %vm3299, %v3280, %v2957
        %v3303 = vsel %vm3299, %v3282, %v2959
        %v3305 = vsel %vm3299, %v3284, %v2961
        %v3307 = vsel %vm3299, %v3286, %v2963
        %v3309 = vsel %vm3299, %v3288, %v2965
        %v3311 = vsel %vm3299, %v3290, %v2967
        %v3313 = vsel %vm3299, %v3292, %v2969
        %v3315 = vsel %vm3299, %v3294, %v2971
        %v3317 = vsel %vm3299, %v3296, %v2973
        %v3319 = vsel %vm3299, %v3298, %v2975
        %vm3320 = vcmask 850944
        %v3322 = vsel %vm3320, %v3301, %v2991
        %v3324 = vsel %vm3320, %v3303, %v2993
        %v3326 = vsel %vm3320, %v3305, %v2995
        %v3328 = vsel %vm3320, %v3307, %v2997
        %v3330 = vsel %vm3320, %v3309, %v2999
        %v3332 = vsel %vm3320, %v3311, %v3001
        %v3334 = vsel %vm3320, %v3313, %v3003
        %v3336 = vsel %vm3320, %v3315, %v3005
        %v3338 = vsel %vm3320, %v3317, %v3007
        %v3340 = vsel %vm3320, %v3319, %v3009
        %vm3341 = vcmask 916480
        %v3343 = vsel %vm3341, %v3322, %v3013
        %v3345 = vsel %vm3341, %v3324, %v3015
        %v3347 = vsel %vm3341, %v3326, %v3017
        %v3349 = vsel %vm3341, %v3328, %v3019
        %v3351 = vsel %vm3341, %v3330, %v3021
        %v3353 = vsel %vm3341, %v3332, %v3023
        %v3355 = vsel %vm3341, %v3334, %v3025
        %v3357 = vsel %vm3341, %v3336, %v3027
        %v3359 = vsel %vm3341, %v3338, %v3029
        %v3361 = vsel %vm3341, %v3340, %v3031
        %vm3362 = vcmask 982016
        %v3364 = vsel %vm3362, %v3343, %v3039
        %v3367 = vsel %vm3362, %v3345, %v3041
        %v3370 = vsel %vm3362, %v3347, %v3043
        %v3373 = vsel %vm3362, %v3349, %v3045
        %v3376 = vsel %vm3362, %v3351, %v3047
        %v3379 = vsel %vm3362, %v3353, %v3049
        %v3382 = vsel %vm3362, %v3355, %v3051
        %v3385 = vsel %vm3362, %v3357, %v3053
        %v3388 = vsel %vm3362, %v3359, %v3055
        %v3391 = vsel %vm3362, %v3361, %v3057
        %v3394 = vshrl.u32 %v3036, 16
        %v3396 = vshll.u32 %v3036, 16
        %v3398 = vrot.slane %v3396, 1
        %v3399 = vor.u32 %v3394, %v3398
        %v3401 = vshrl.u32 %v3037, 16
        %v3403 = vshll.u32 %v3037, 16
        %v3405 = vrot.slane %v3403, 1
        %v3406 = vor.u32 %v3401, %v3405
        %3407 = vrot.lane.b32.xlu0 %v2693, 8
        %v3408 = vpop.permute.xlu0 %3407
        %3409 = vrot.lane.b32.xlu0 %v2700, 8
        %v3410 = vpop.permute.xlu0 %3409
        %3411 = vrot.lane.b32.xlu0 %v2707, 8
        %v3412 = vpop.permute.xlu0 %3411
        %3413 = vrot.lane.b32.xlu0 %v2714, 8
        %v3414 = vpop.permute.xlu0 %3413
        %3415 = vrot.lane.b32.xlu0 %v3399, 8
        %v3416 = vpop.permute.xlu0 %3415
        %3417 = vrot.lane.b32.xlu0 %v2728, 8
        %v3418 = vpop.permute.xlu0 %3417
        %3419 = vrot.lane.b32.xlu0 %v2735, 8
        %v3420 = vpop.permute.xlu0 %3419
        %3421 = vrot.lane.b32.xlu0 %v2742, 8
        %v3422 = vpop.permute.xlu0 %3421
        %3423 = vrot.lane.b32.xlu0 %v2749, 8
        %v3424 = vpop.permute.xlu0 %3423
        %3425 = vrot.lane.b32.xlu0 %v3406, 8
        %v3426 = vpop.permute.xlu0 %3425
        %v3429 = vunpack.c.l.b16 %v2260
        %v3430 = vunpack.c.l.b16 %v2288
        %v3431 = vpack.c.b16 %v3429, %v3429
        %v3432 = vpack.c.b16 %v3430, %v3430
        %v3434 = vshrl.u32 %v3431, 16
        %v3436 = vshll.u32 %v3431, 16
        %v3438 = vrot.slane %v3436, 1
        %v3439 = vor.u32 %v3434, %v3438
        %v3441 = vshrl.u32 %v3432, 16
        %v3443 = vshll.u32 %v3432, 16
        %v3445 = vrot.slane %v3443, 1
        %v3446 = vor.u32 %v3441, %v3445
        %3447 = vrot.lane.b32.xlu0 %v2783, 16
        %v3448 = vpop.permute.xlu0 %3447
        %3449 = vrot.lane.b32.xlu0 %v2790, 16
        %v3450 = vpop.permute.xlu0 %3449
        %3451 = vrot.lane.b32.xlu0 %v2797, 16
        %v3452 = vpop.permute.xlu0 %3451
        %3453 = vrot.lane.b32.xlu0 %v2804, 16
        %v3454 = vpop.permute.xlu0 %3453
        %3455 = vrot.lane.b32.xlu0 %v3439, 16
        %v3456 = vpop.permute.xlu0 %3455
        %3457 = vrot.lane.b32.xlu0 %v2818, 16
        %v3458 = vpop.permute.xlu0 %3457
        %3459 = vrot.lane.b32.xlu0 %v2825, 16
        %v3460 = vpop.permute.xlu0 %3459
        %3461 = vrot.lane.b32.xlu0 %v2832, 16
        %v3462 = vpop.permute.xlu0 %3461
        %3463 = vrot.lane.b32.xlu0 %v2839, 16
        %v3464 = vpop.permute.xlu0 %3463
        %3465 = vrot.lane.b32.xlu0 %v3446, 16
        %v3466 = vpop.permute.xlu0 %3465
        %v3467 = vrot.slane %v3036, 1
        %v3468 = vrot.slane %v3037, 1
        %3469 = vrot.lane.b32.xlu0 %v2861, 24
        %v3470 = vpop.permute.xlu0 %3469
        %3471 = vrot.lane.b32.xlu0 %v2862, 24
        %v3472 = vpop.permute.xlu0 %3471
        %3473 = vrot.lane.b32.xlu0 %v2863, 24
        %v3474 = vpop.permute.xlu0 %3473
        %3475 = vrot.lane.b32.xlu0 %v2864, 24
        %v3476 = vpop.permute.xlu0 %3475
        %3477 = vrot.lane.b32.xlu0 %v3467, 24
        %v3478 = vpop.permute.xlu0 %3477
        %3479 = vrot.lane.b32.xlu0 %v2866, 24
        %v3480 = vpop.permute.xlu0 %3479
        %3481 = vrot.lane.b32.xlu0 %v2867, 24
        %v3482 = vpop.permute.xlu0 %3481
        %3483 = vrot.lane.b32.xlu0 %v2868, 24
        %v3484 = vpop.permute.xlu0 %3483
        %3485 = vrot.lane.b32.xlu0 %v2869, 24
        %v3486 = vpop.permute.xlu0 %3485
        %3487 = vrot.lane.b32.xlu0 %v3468, 24
        %v3488 = vpop.permute.xlu0 %3487
        %v3491 = vunpack.c.l.b16 %v2240
        %v3492 = vunpack.c.l.b16 %v2268
        %v3493 = vpack.c.b16 %v3491, %v3491
        %v3494 = vpack.c.b16 %v3492, %v3492
        %3495 = vrot.lane.b32.xlu0 %v2362, 32
        %v3496 = vpop.permute.xlu0 %3495
        %3497 = vrot.lane.b32.xlu0 %v2363, 32
        %v3498 = vpop.permute.xlu0 %3497
        %3499 = vrot.lane.b32.xlu0 %v2364, 32
        %v3500 = vpop.permute.xlu0 %3499
        %3501 = vrot.lane.b32.xlu0 %v2894, 32
        %v3502 = vpop.permute.xlu0 %3501
        %3503 = vrot.lane.b32.xlu0 %v3493, 32
        %v3504 = vpop.permute.xlu0 %3503
        %3505 = vrot.lane.b32.xlu0 %v2367, 32
        %v3506 = vpop.permute.xlu0 %3505
        %3507 = vrot.lane.b32.xlu0 %v2368, 32
        %v3508 = vpop.permute.xlu0 %3507
        %3509 = vrot.lane.b32.xlu0 %v2369, 32
        %v3510 = vpop.permute.xlu0 %3509
        %3511 = vrot.lane.b32.xlu0 %v2895, 32
        %v3512 = vpop.permute.xlu0 %3511
        %3513 = vrot.lane.b32.xlu0 %v3494, 32
        %v3514 = vpop.permute.xlu0 %3513
        %v3517 = vunpack.c.l.b16 %v2247
        %v3518 = vunpack.c.l.b16 %v2275
        %v3519 = vpack.c.b16 %v3517, %v3517
        %v3520 = vpack.c.b16 %v3518, %v3518
        %3521 = vrot.lane.b32.xlu0 %v2312, 40
        %v3522 = vpop.permute.xlu0 %3521
        %3523 = vrot.lane.b32.xlu0 %v2313, 40
        %v3524 = vpop.permute.xlu0 %3523
        %3525 = vrot.lane.b32.xlu0 %v2314, 40
        %v3526 = vpop.permute.xlu0 %3525
        %3527 = vrot.lane.b32.xlu0 %v2920, 40
        %v3528 = vpop.permute.xlu0 %3527
        %3529 = vrot.lane.b32.xlu0 %v3519, 40
        %v3530 = vpop.permute.xlu0 %3529
        %3531 = vrot.lane.b32.xlu0 %v2317, 40
        %v3532 = vpop.permute.xlu0 %3531
        %3533 = vrot.lane.b32.xlu0 %v2318, 40
        %v3534 = vpop.permute.xlu0 %3533
        %3535 = vrot.lane.b32.xlu0 %v2319, 40
        %v3536 = vpop.permute.xlu0 %3535
        %3537 = vrot.lane.b32.xlu0 %v2921, 40
        %v3538 = vpop.permute.xlu0 %3537
        %3539 = vrot.lane.b32.xlu0 %v3520, 40
        %v3540 = vpop.permute.xlu0 %3539
        %v3542 = vshrl.u32 %v3493, 16
        %v3544 = vshll.u32 %v3493, 16
        %v3546 = vrot.slane %v3544, 1
        %v3547 = vor.u32 %v3542, %v3546
        %v3549 = vshrl.u32 %v3494, 16
        %v3551 = vshll.u32 %v3494, 16
        %v3553 = vrot.slane %v3551, 1
        %v3554 = vor.u32 %v3549, %v3553
        %3555 = vrot.lane.b32.xlu0 %v2390, 48
        %v3556 = vpop.permute.xlu0 %3555
        %3557 = vrot.lane.b32.xlu0 %v2397, 48
        %v3558 = vpop.permute.xlu0 %3557
        %3559 = vrot.lane.b32.xlu0 %v2404, 48
        %v3560 = vpop.permute.xlu0 %3559
        %3561 = vrot.lane.b32.xlu0 %v2948, 48
        %v3562 = vpop.permute.xlu0 %3561
        %3563 = vrot.lane.b32.xlu0 %v3547, 48
        %v3564 = vpop.permute.xlu0 %3563
        %3565 = vrot.lane.b32.xlu0 %v2425, 48
        %v3566 = vpop.permute.xlu0 %3565
        %3567 = vrot.lane.b32.xlu0 %v2432, 48
        %v3568 = vpop.permute.xlu0 %3567
        %3569 = vrot.lane.b32.xlu0 %v2439, 48
        %v3570 = vpop.permute.xlu0 %3569
        %3571 = vrot.lane.b32.xlu0 %v2955, 48
        %v3572 = vpop.permute.xlu0 %3571
        %3573 = vrot.lane.b32.xlu0 %v3554, 48
        %v3574 = vpop.permute.xlu0 %3573
        %v3576 = vshrl.u32 %v3519, 16
        %v3578 = vshll.u32 %v3519, 16
        %v3580 = vrot.slane %v3578, 1
        %v3581 = vor.u32 %v3576, %v3580
        %v3583 = vshrl.u32 %v3520, 16
        %v3585 = vshll.u32 %v3520, 16
        %v3587 = vrot.slane %v3585, 1
        %v3588 = vor.u32 %v3583, %v3587
        %3589 = vrot.lane.b32.xlu0 %v2480, 56
        %v3590 = vpop.permute.xlu0 %3589
        %3591 = vrot.lane.b32.xlu0 %v2487, 56
        %v3592 = vpop.permute.xlu0 %3591
        %3593 = vrot.lane.b32.xlu0 %v2494, 56
        %v3594 = vpop.permute.xlu0 %3593
        %3595 = vrot.lane.b32.xlu0 %v2982, 56
        %v3596 = vpop.permute.xlu0 %3595
        %3597 = vrot.lane.b32.xlu0 %v3581, 56
        %v3598 = vpop.permute.xlu0 %3597
        %3599 = vrot.lane.b32.xlu0 %v2515, 56
        %v3600 = vpop.permute.xlu0 %3599
        %3601 = vrot.lane.b32.xlu0 %v2522, 56
        %v3602 = vpop.permute.xlu0 %3601
        %3603 = vrot.lane.b32.xlu0 %v2529, 56
        %v3604 = vpop.permute.xlu0 %3603
        %3605 = vrot.lane.b32.xlu0 %v2989, 56
        %v3606 = vpop.permute.xlu0 %3605
        %3607 = vrot.lane.b32.xlu0 %v3588, 56
        %v3608 = vpop.permute.xlu0 %3607
        %v3609 = vrot.slane %v3493, 1
        %v3610 = vrot.slane %v3494, 1
        %3611 = vrot.lane.b32.xlu0 %v2552, 64
        %v3612 = vpop.permute.xlu0 %3611
        %3613 = vrot.lane.b32.xlu0 %v2553, 64
        %v3614 = vpop.permute.xlu0 %3613
        %3615 = vrot.lane.b32.xlu0 %v2554, 64
        %v3616 = vpop.permute.xlu0 %3615
        %3617 = vrot.lane.b32.xlu0 %v3010, 64
        %v3618 = vpop.permute.xlu0 %3617
        %3619 = vrot.lane.b32.xlu0 %v3609, 64
        %v3620 = vpop.permute.xlu0 %3619
        %3621 = vrot.lane.b32.xlu0 %v2557, 64
        %v3622 = vpop.permute.xlu0 %3621
        %3623 = vrot.lane.b32.xlu0 %v2558, 64
        %v3624 = vpop.permute.xlu0 %3623
        %3625 = vrot.lane.b32.xlu0 %v2559, 64
        %v3626 = vpop.permute.xlu0 %3625
        %3627 = vrot.lane.b32.xlu0 %v3011, 64
        %v3628 = vpop.permute.xlu0 %3627
        %3629 = vrot.lane.b32.xlu0 %v3610, 64
        %v3630 = vpop.permute.xlu0 %3629
        %v3633 = vsel %vm3058, %v2256, %v3408
        %v3636 = vsel %vm3058, %v2257, %v3410
        %v3639 = vsel %vm3058, %v2258, %v3412
        %v3642 = vsel %vm3058, %v2259, %v3414
        %v3645 = vsel %vm3058, %v2260, %v3416
        %v3648 = vsel %vm3058, %v2284, %v3418
        %v3651 = vsel %vm3058, %v2285, %v3420
        %v3654 = vsel %vm3058, %v2286, %v3422
        %v3657 = vsel %vm3058, %v2287, %v3424
        %v3660 = vsel %vm3058, %v2288, %v3426
        %v3662 = vsel %vm3089, %v3633, %v3448
        %v3664 = vsel %vm3089, %v3636, %v3450
        %v3666 = vsel %vm3089, %v3639, %v3452
        %v3668 = vsel %vm3089, %v3642, %v3454
        %v3670 = vsel %vm3089, %v3645, %v3456
        %v3672 = vsel %vm3089, %v3648, %v3458
        %v3674 = vsel %vm3089, %v3651, %v3460
        %v3676 = vsel %vm3089, %v3654, %v3462
        %v3678 = vsel %vm3089, %v3657, %v3464
        %v3680 = vsel %vm3089, %v3660, %v3466
        %v3682 = vsel %vm3110, %v3662, %v3470
        %v3684 = vsel %vm3110, %v3664, %v3472
        %v3686 = vsel %vm3110, %v3666, %v3474
        %v3688 = vsel %vm3110, %v3668, %v3476
        %v3690 = vsel %vm3110, %v3670, %v3478
        %v3692 = vsel %vm3110, %v3672, %v3480
        %v3694 = vsel %vm3110, %v3674, %v3482
        %v3696 = vsel %vm3110, %v3676, %v3484
        %v3698 = vsel %vm3110, %v3678, %v3486
        %v3700 = vsel %vm3110, %v3680, %v3488
        %v3702 = vsel %vm3131, %v3682, %v3496
        %v3704 = vsel %vm3131, %v3684, %v3498
        %v3706 = vsel %vm3131, %v3686, %v3500
        %v3708 = vsel %vm3131, %v3688, %v3502
        %v3710 = vsel %vm3131, %v3690, %v3504
        %v3712 = vsel %vm3131, %v3692, %v3506
        %v3714 = vsel %vm3131, %v3694, %v3508
        %v3716 = vsel %vm3131, %v3696, %v3510
        %v3718 = vsel %vm3131, %v3698, %v3512
        %v3720 = vsel %vm3131, %v3700, %v3514
        %v3722 = vsel %vm3152, %v3702, %v3522
        %v3724 = vsel %vm3152, %v3704, %v3524
        %v3726 = vsel %vm3152, %v3706, %v3526
        %v3728 = vsel %vm3152, %v3708, %v3528
        %v3730 = vsel %vm3152, %v3710, %v3530
        %v3732 = vsel %vm3152, %v3712, %v3532
        %v3734 = vsel %vm3152, %v3714, %v3534
        %v3736 = vsel %vm3152, %v3716, %v3536
        %v3738 = vsel %vm3152, %v3718, %v3538
        %v3740 = vsel %vm3152, %v3720, %v3540
        %v3742 = vsel %vm3173, %v3722, %v3556
        %v3744 = vsel %vm3173, %v3724, %v3558
        %v3746 = vsel %vm3173, %v3726, %v3560
        %v3748 = vsel %vm3173, %v3728, %v3562
        %v3750 = vsel %vm3173, %v3730, %v3564
        %v3752 = vsel %vm3173, %v3732, %v3566
        %v3754 = vsel %vm3173, %v3734, %v3568
        %v3756 = vsel %vm3173, %v3736, %v3570
        %v3758 = vsel %vm3173, %v3738, %v3572
        %v3760 = vsel %vm3173, %v3740, %v3574
        %v3762 = vsel %vm3194, %v3742, %v3590
        %v3764 = vsel %vm3194, %v3744, %v3592
        %v3766 = vsel %vm3194, %v3746, %v3594
        %v3768 = vsel %vm3194, %v3748, %v3596
        %v3770 = vsel %vm3194, %v3750, %v3598
        %v3772 = vsel %vm3194, %v3752, %v3600
        %v3774 = vsel %vm3194, %v3754, %v3602
        %v3776 = vsel %vm3194, %v3756, %v3604
        %v3778 = vsel %vm3194, %v3758, %v3606
        %v3780 = vsel %vm3194, %v3760, %v3608
        %v3782 = vsel %vm3215, %v3762, %v3612
        %v3785 = vsel %vm3215, %v3764, %v3614
        %v3788 = vsel %vm3215, %v3766, %v3616
        %v3791 = vsel %vm3215, %v3768, %v3618
        %v3794 = vsel %vm3215, %v3770, %v3620
        %v3797 = vsel %vm3215, %v3772, %v3622
        %v3800 = vsel %vm3215, %v3774, %v3624
        %v3803 = vsel %vm3215, %v3776, %v3626
        %v3806 = vsel %vm3215, %v3778, %v3628
        %v3809 = vsel %vm3215, %v3780, %v3630
        %vm3811 = vcmask 1042432
        %vm3812 = vsmask.f32 2304
        %vm3813 = vmand %vm3811, %vm3812
        %v3814 = vsel %vm3813, %v3364, 0
        %v3815 = vsel %vm3813, %v3782, 0
        %v3816 = vsel %vm3813, %v3367, 0
        %v3817 = vsel %vm3813, %v3785, 0
        %v3818 = vsel %vm3813, %v3370, 0
        %v3819 = vsel %vm3813, %v3788, 0
        %v3820 = vsel %vm3813, %v3373, 0
        %v3821 = vsel %vm3813, %v3791, 0
        %v3822 = vsel %vm3813, %v3376, 0
        %v3823 = vsel %vm3813, %v3794, 0
        %v3824 = vsel %vm3813, %v3379, 0
        %v3825 = vsel %vm3813, %v3797, 0
        %v3826 = vsel %vm3813, %v3382, 0
        %v3827 = vsel %vm3813, %v3800, 0
        %v3828 = vsel %vm3813, %v3385, 0
        %v3829 = vsel %vm3813, %v3803, 0
        %v3830 = vsel %vm3813, %v3388, 0
        %v3831 = vsel %vm3813, %v3806, 0
        %v3832 = vsel %vm3813, %v3391, 0
        %v3833 = vsel %vm3813, %v3809, 0
        %3834 = vrot.lane.b32.xlu0 %v2376, 8
        %v3835 = vpop.permute.xlu0 %3834
        %3836 = vrot.lane.b32.xlu0 %v2383, 8
        %v3837 = vpop.permute.xlu0 %3836
        %3838 = vrot.lane.b32.xlu0 %v2390, 8
        %v3839 = vpop.permute.xlu0 %3838
        %3840 = vrot.lane.b32.xlu0 %v2397, 8
        %v3841 = vpop.permute.xlu0 %3840
        %3842 = vrot.lane.b32.xlu0 %v2404, 8
        %v3843 = vpop.permute.xlu0 %3842
        %3844 = vrot.lane.b32.xlu0 %v2411, 8
        %v3845 = vpop.permute.xlu0 %3844
        %3846 = vrot.lane.b32.xlu0 %v2418, 8
        %v3847 = vpop.permute.xlu0 %3846
        %3848 = vrot.lane.b32.xlu0 %v2425, 8
        %v3849 = vpop.permute.xlu0 %3848
        %3850 = vrot.lane.b32.xlu0 %v2432, 8
        %v3851 = vpop.permute.xlu0 %3850
        %3852 = vrot.lane.b32.xlu0 %v2439, 8
        %v3853 = vpop.permute.xlu0 %3852
        %3854 = vrot.lane.b32.xlu0 %v2466, 16
        %v3855 = vpop.permute.xlu0 %3854
        %3856 = vrot.lane.b32.xlu0 %v2473, 16
        %v3857 = vpop.permute.xlu0 %3856
        %3858 = vrot.lane.b32.xlu0 %v2480, 16
        %v3859 = vpop.permute.xlu0 %3858
        %3860 = vrot.lane.b32.xlu0 %v2487, 16
        %v3861 = vpop.permute.xlu0 %3860
        %3862 = vrot.lane.b32.xlu0 %v2494, 16
        %v3863 = vpop.permute.xlu0 %3862
        %3864 = vrot.lane.b32.xlu0 %v2501, 16
        %v3865 = vpop.permute.xlu0 %3864
        %3866 = vrot.lane.b32.xlu0 %v2508, 16
        %v3867 = vpop.permute.xlu0 %3866
        %3868 = vrot.lane.b32.xlu0 %v2515, 16
        %v3869 = vpop.permute.xlu0 %3868
        %3870 = vrot.lane.b32.xlu0 %v2522, 16
        %v3871 = vpop.permute.xlu0 %3870
        %3872 = vrot.lane.b32.xlu0 %v2529, 16
        %v3873 = vpop.permute.xlu0 %3872
        %3874 = vrot.lane.b32.xlu0 %v2550, 24
        %v3875 = vpop.permute.xlu0 %3874
        %3876 = vrot.lane.b32.xlu0 %v2551, 24
        %v3877 = vpop.permute.xlu0 %3876
        %3878 = vrot.lane.b32.xlu0 %v2552, 24
        %v3879 = vpop.permute.xlu0 %3878
        %3880 = vrot.lane.b32.xlu0 %v2553, 24
        %v3881 = vpop.permute.xlu0 %3880
        %3882 = vrot.lane.b32.xlu0 %v2554, 24
        %v3883 = vpop.permute.xlu0 %3882
        %3884 = vrot.lane.b32.xlu0 %v2555, 24
        %v3885 = vpop.permute.xlu0 %3884
        %3886 = vrot.lane.b32.xlu0 %v2556, 24
        %v3887 = vpop.permute.xlu0 %3886
        %3888 = vrot.lane.b32.xlu0 %v2557, 24
        %v3889 = vpop.permute.xlu0 %3888
        %3890 = vrot.lane.b32.xlu0 %v2558, 24
        %v3891 = vpop.permute.xlu0 %3890
        %3892 = vrot.lane.b32.xlu0 %v2559, 24
        %v3893 = vpop.permute.xlu0 %3892
        %v3894 = vrot.slane %v2310, 1
        %v3895 = vrot.slane %v2311, 1
        %v3896 = vrot.slane %v2312, 1
        %v3897 = vrot.slane %v2313, 1
        %v3898 = vrot.slane %v2314, 1
        %v3899 = vrot.slane %v2315, 1
        %v3900 = vrot.slane %v2316, 1
        %v3901 = vrot.slane %v2317, 1
        %v3902 = vrot.slane %v2318, 1
        %v3903 = vrot.slane %v2319, 1
        %3904 = vrot.lane.b32.xlu0 %v3894, 32
        %v3905 = vpop.permute.xlu0 %3904
        %3906 = vrot.lane.b32.xlu0 %v3895, 32
        %v3907 = vpop.permute.xlu0 %3906
        %3908 = vrot.lane.b32.xlu0 %v3896, 32
        %v3909 = vpop.permute.xlu0 %3908
        %3910 = vrot.lane.b32.xlu0 %v3897, 32
        %v3911 = vpop.permute.xlu0 %3910
        %3912 = vrot.lane.b32.xlu0 %v3898, 32
        %v3913 = vpop.permute.xlu0 %3912
        %3914 = vrot.lane.b32.xlu0 %v3899, 32
        %v3915 = vpop.permute.xlu0 %3914
        %3916 = vrot.lane.b32.xlu0 %v3900, 32
        %v3917 = vpop.permute.xlu0 %3916
        %3918 = vrot.lane.b32.xlu0 %v3901, 32
        %v3919 = vpop.permute.xlu0 %3918
        %3920 = vrot.lane.b32.xlu0 %v3902, 32
        %v3921 = vpop.permute.xlu0 %3920
        %3922 = vrot.lane.b32.xlu0 %v3903, 32
        %v3923 = vpop.permute.xlu0 %3922
        %3924 = vrot.lane.b32.xlu0 %v2650, 40
        %v3925 = vpop.permute.xlu0 %3924
        %3926 = vrot.lane.b32.xlu0 %v2651, 40
        %v3927 = vpop.permute.xlu0 %3926
        %3928 = vrot.lane.b32.xlu0 %v2652, 40
        %v3929 = vpop.permute.xlu0 %3928
        %3930 = vrot.lane.b32.xlu0 %v2653, 40
        %v3931 = vpop.permute.xlu0 %3930
        %3932 = vrot.lane.b32.xlu0 %v2654, 40
        %v3933 = vpop.permute.xlu0 %3932
        %3934 = vrot.lane.b32.xlu0 %v2655, 40
        %v3935 = vpop.permute.xlu0 %3934
        %3936 = vrot.lane.b32.xlu0 %v2656, 40
        %v3937 = vpop.permute.xlu0 %3936
        %3938 = vrot.lane.b32.xlu0 %v2657, 40
        %v3939 = vpop.permute.xlu0 %3938
        %3940 = vrot.lane.b32.xlu0 %v2658, 40
        %v3941 = vpop.permute.xlu0 %3940
        %3942 = vrot.lane.b32.xlu0 %v2659, 40
        %v3943 = vpop.permute.xlu0 %3942
        %3944 = vrot.lane.b32.xlu0 %v2686, 48
        %v3945 = vpop.permute.xlu0 %3944
        %3946 = vrot.lane.b32.xlu0 %v2693, 48
        %v3947 = vpop.permute.xlu0 %3946
        %3948 = vrot.lane.b32.xlu0 %v2700, 48
        %v3949 = vpop.permute.xlu0 %3948
        %3950 = vrot.lane.b32.xlu0 %v2707, 48
        %v3951 = vpop.permute.xlu0 %3950
        %3952 = vrot.lane.b32.xlu0 %v2714, 48
        %v3953 = vpop.permute.xlu0 %3952
        %3954 = vrot.lane.b32.xlu0 %v2721, 48
        %v3955 = vpop.permute.xlu0 %3954
        %3956 = vrot.lane.b32.xlu0 %v2728, 48
        %v3957 = vpop.permute.xlu0 %3956
        %3958 = vrot.lane.b32.xlu0 %v2735, 48
        %v3959 = vpop.permute.xlu0 %3958
        %3960 = vrot.lane.b32.xlu0 %v2742, 48
        %v3961 = vpop.permute.xlu0 %3960
        %3962 = vrot.lane.b32.xlu0 %v2749, 48
        %v3963 = vpop.permute.xlu0 %3962
        %3964 = vrot.lane.b32.xlu0 %v2776, 56
        %v3965 = vpop.permute.xlu0 %3964
        %3966 = vrot.lane.b32.xlu0 %v2783, 56
        %v3967 = vpop.permute.xlu0 %3966
        %3968 = vrot.lane.b32.xlu0 %v2790, 56
        %v3969 = vpop.permute.xlu0 %3968
        %3970 = vrot.lane.b32.xlu0 %v2797, 56
        %v3971 = vpop.permute.xlu0 %3970
        %3972 = vrot.lane.b32.xlu0 %v2804, 56
        %v3973 = vpop.permute.xlu0 %3972
        %3974 = vrot.lane.b32.xlu0 %v2811, 56
        %v3975 = vpop.permute.xlu0 %3974
        %3976 = vrot.lane.b32.xlu0 %v2818, 56
        %v3977 = vpop.permute.xlu0 %3976
        %3978 = vrot.lane.b32.xlu0 %v2825, 56
        %v3979 = vpop.permute.xlu0 %3978
        %3980 = vrot.lane.b32.xlu0 %v2832, 56
        %v3981 = vpop.permute.xlu0 %3980
        %3982 = vrot.lane.b32.xlu0 %v2839, 56
        %v3983 = vpop.permute.xlu0 %3982
        %3984 = vrot.lane.b32.xlu0 %v2860, 64
        %v3985 = vpop.permute.xlu0 %3984
        %3986 = vrot.lane.b32.xlu0 %v2861, 64
        %v3987 = vpop.permute.xlu0 %3986
        %3988 = vrot.lane.b32.xlu0 %v2862, 64
        %v3989 = vpop.permute.xlu0 %3988
        %3990 = vrot.lane.b32.xlu0 %v2863, 64
        %v3991 = vpop.permute.xlu0 %3990
        %3992 = vrot.lane.b32.xlu0 %v2864, 64
        %v3993 = vpop.permute.xlu0 %3992
        %3994 = vrot.lane.b32.xlu0 %v2865, 64
        %v3995 = vpop.permute.xlu0 %3994
        %3996 = vrot.lane.b32.xlu0 %v2866, 64
        %v3997 = vpop.permute.xlu0 %3996
        %3998 = vrot.lane.b32.xlu0 %v2867, 64
        %v3999 = vpop.permute.xlu0 %3998
        %4000 = vrot.lane.b32.xlu0 %v2868, 64
        %v4001 = vpop.permute.xlu0 %4000
        %4002 = vrot.lane.b32.xlu0 %v2869, 64
        %v4003 = vpop.permute.xlu0 %4002
        %v4004 = vrot.slane %v2650, 1
        %v4005 = vrot.slane %v2651, 1
        %v4006 = vrot.slane %v2652, 1
        %v4007 = vrot.slane %v2653, 1
        %v4008 = vrot.slane %v2654, 1
        %v4009 = vrot.slane %v2655, 1
        %v4010 = vrot.slane %v2656, 1
        %v4011 = vrot.slane %v2657, 1
        %v4012 = vrot.slane %v2658, 1
        %v4013 = vrot.slane %v2659, 1
        %4014 = vrot.lane.b32.xlu0 %v4004, 72
        %v4015 = vpop.permute.xlu0 %4014
        %4016 = vrot.lane.b32.xlu0 %v4005, 72
        %v4017 = vpop.permute.xlu0 %4016
        %4018 = vrot.lane.b32.xlu0 %v4006, 72
        %v4019 = vpop.permute.xlu0 %4018
        %4020 = vrot.lane.b32.xlu0 %v4007, 72
        %v4021 = vpop.permute.xlu0 %4020
        %4022 = vrot.lane.b32.xlu0 %v4008, 72
        %v4023 = vpop.permute.xlu0 %4022
        %4024 = vrot.lane.b32.xlu0 %v4009, 72
        %v4025 = vpop.permute.xlu0 %4024
        %4026 = vrot.lane.b32.xlu0 %v4010, 72
        %v4027 = vpop.permute.xlu0 %4026
        %4028 = vrot.lane.b32.xlu0 %v4011, 72
        %v4029 = vpop.permute.xlu0 %4028
        %4030 = vrot.lane.b32.xlu0 %v4012, 72
        %v4031 = vpop.permute.xlu0 %4030
        %4032 = vrot.lane.b32.xlu0 %v4013, 72
        %v4033 = vpop.permute.xlu0 %4032
        %4034 = vrot.lane.b32.xlu0 %v2311, 80
        %v4035 = vpop.permute.xlu0 %4034
        %4036 = vrot.lane.b32.xlu0 %v2312, 80
        %v4037 = vpop.permute.xlu0 %4036
        %4038 = vrot.lane.b32.xlu0 %v2313, 80
        %v4039 = vpop.permute.xlu0 %4038
        %4040 = vrot.lane.b32.xlu0 %v2314, 80
        %v4041 = vpop.permute.xlu0 %4040
        %4042 = vrot.lane.b32.xlu0 %v2920, 80
        %v4043 = vpop.permute.xlu0 %4042
        %4044 = vrot.lane.b32.xlu0 %v2316, 80
        %v4045 = vpop.permute.xlu0 %4044
        %4046 = vrot.lane.b32.xlu0 %v2317, 80
        %v4047 = vpop.permute.xlu0 %4046
        %4048 = vrot.lane.b32.xlu0 %v2318, 80
        %v4049 = vpop.permute.xlu0 %4048
        %4050 = vrot.lane.b32.xlu0 %v2319, 80
        %v4051 = vpop.permute.xlu0 %4050
        %4052 = vrot.lane.b32.xlu0 %v2921, 80
        %v4053 = vpop.permute.xlu0 %4052
        %4054 = vrot.lane.b32.xlu0 %v2383, 88
        %v4055 = vpop.permute.xlu0 %4054
        %4056 = vrot.lane.b32.xlu0 %v2390, 88
        %v4057 = vpop.permute.xlu0 %4056
        %4058 = vrot.lane.b32.xlu0 %v2397, 88
        %v4059 = vpop.permute.xlu0 %4058
        %4060 = vrot.lane.b32.xlu0 %v2404, 88
        %v4061 = vpop.permute.xlu0 %4060
        %4062 = vrot.lane.b32.xlu0 %v2948, 88
        %v4063 = vpop.permute.xlu0 %4062
        %4064 = vrot.lane.b32.xlu0 %v2418, 88
        %v4065 = vpop.permute.xlu0 %4064
        %4066 = vrot.lane.b32.xlu0 %v2425, 88
        %v4067 = vpop.permute.xlu0 %4066
        %4068 = vrot.lane.b32.xlu0 %v2432, 88
        %v4069 = vpop.permute.xlu0 %4068
        %4070 = vrot.lane.b32.xlu0 %v2439, 88
        %v4071 = vpop.permute.xlu0 %4070
        %4072 = vrot.lane.b32.xlu0 %v2955, 88
        %v4073 = vpop.permute.xlu0 %4072
        %4074 = vrot.lane.b32.xlu0 %v2473, 96
        %v4075 = vpop.permute.xlu0 %4074
        %4076 = vrot.lane.b32.xlu0 %v2480, 96
        %v4077 = vpop.permute.xlu0 %4076
        %4078 = vrot.lane.b32.xlu0 %v2487, 96
        %v4079 = vpop.permute.xlu0 %4078
        %4080 = vrot.lane.b32.xlu0 %v2494, 96
        %v4081 = vpop.permute.xlu0 %4080
        %4082 = vrot.lane.b32.xlu0 %v2982, 96
        %v4083 = vpop.permute.xlu0 %4082
        %4084 = vrot.lane.b32.xlu0 %v2508, 96
        %v4085 = vpop.permute.xlu0 %4084
        %4086 = vrot.lane.b32.xlu0 %v2515, 96
        %v4087 = vpop.permute.xlu0 %4086
        %4088 = vrot.lane.b32.xlu0 %v2522, 96
        %v4089 = vpop.permute.xlu0 %4088
        %4090 = vrot.lane.b32.xlu0 %v2529, 96
        %v4091 = vpop.permute.xlu0 %4090
        %4092 = vrot.lane.b32.xlu0 %v2989, 96
        %v4093 = vpop.permute.xlu0 %4092
        %4094 = vrot.lane.b32.xlu0 %v2551, 104
        %v4095 = vpop.permute.xlu0 %4094
        %4096 = vrot.lane.b32.xlu0 %v2552, 104
        %v4097 = vpop.permute.xlu0 %4096
        %4098 = vrot.lane.b32.xlu0 %v2553, 104
        %v4099 = vpop.permute.xlu0 %4098
        %4100 = vrot.lane.b32.xlu0 %v2554, 104
        %v4101 = vpop.permute.xlu0 %4100
        %4102 = vrot.lane.b32.xlu0 %v3010, 104
        %v4103 = vpop.permute.xlu0 %4102
        %4104 = vrot.lane.b32.xlu0 %v2556, 104
        %v4105 = vpop.permute.xlu0 %4104
        %4106 = vrot.lane.b32.xlu0 %v2557, 104
        %v4107 = vpop.permute.xlu0 %4106
        %4108 = vrot.lane.b32.xlu0 %v2558, 104
        %v4109 = vpop.permute.xlu0 %4108
        %4110 = vrot.lane.b32.xlu0 %v2559, 104
        %v4111 = vpop.permute.xlu0 %4110
        %4112 = vrot.lane.b32.xlu0 %v3011, 104
        %v4113 = vpop.permute.xlu0 %4112
        %v4114 = vrot.slane %v2920, 1
        %v4115 = vrot.slane %v2921, 1
        %4116 = vrot.lane.b32.xlu0 %v3895, 112
        %v4117 = vpop.permute.xlu0 %4116
        %4118 = vrot.lane.b32.xlu0 %v3896, 112
        %v4119 = vpop.permute.xlu0 %4118
        %4120 = vrot.lane.b32.xlu0 %v3897, 112
        %v4121 = vpop.permute.xlu0 %4120
        %4122 = vrot.lane.b32.xlu0 %v3898, 112
        %v4123 = vpop.permute.xlu0 %4122
        %4124 = vrot.lane.b32.xlu0 %v4114, 112
        %v4125 = vpop.permute.xlu0 %4124
        %4126 = vrot.lane.b32.xlu0 %v3900, 112
        %v4127 = vpop.permute.xlu0 %4126
        %4128 = vrot.lane.b32.xlu0 %v3901, 112
        %v4129 = vpop.permute.xlu0 %4128
        %4130 = vrot.lane.b32.xlu0 %v3902, 112
        %v4131 = vpop.permute.xlu0 %4130
        %4132 = vrot.lane.b32.xlu0 %v3903, 112
        %v4133 = vpop.permute.xlu0 %4132
        %4134 = vrot.lane.b32.xlu0 %v4115, 112
        %v4135 = vpop.permute.xlu0 %4134
        %4136 = vrot.lane.b32.xlu0 %v2651, 120
        %v4137 = vpop.permute.xlu0 %4136
        %4138 = vrot.lane.b32.xlu0 %v2652, 120
        %v4139 = vpop.permute.xlu0 %4138
        %4140 = vrot.lane.b32.xlu0 %v2653, 120
        %v4141 = vpop.permute.xlu0 %4140
        %4142 = vrot.lane.b32.xlu0 %v2654, 120
        %v4143 = vpop.permute.xlu0 %4142
        %4144 = vrot.lane.b32.xlu0 %v3431, 120
        %v4145 = vpop.permute.xlu0 %4144
        %4146 = vrot.lane.b32.xlu0 %v2656, 120
        %v4147 = vpop.permute.xlu0 %4146
        %4148 = vrot.lane.b32.xlu0 %v2657, 120
        %v4149 = vpop.permute.xlu0 %4148
        %4150 = vrot.lane.b32.xlu0 %v2658, 120
        %v4151 = vpop.permute.xlu0 %4150
        %4152 = vrot.lane.b32.xlu0 %v2659, 120
        %v4153 = vpop.permute.xlu0 %4152
        %4154 = vrot.lane.b32.xlu0 %v3432, 120
        %v4155 = vpop.permute.xlu0 %4154
        %v4158 = vsel %vm3058, %v2241, %v3835
        %v4161 = vsel %vm3058, %v2242, %v3837
        %v4164 = vsel %vm3058, %v2243, %v3839
        %v4167 = vsel %vm3058, %v2244, %v3841
        %v4170 = vsel %vm3058, %v2245, %v3843
        %v4173 = vsel %vm3058, %v2269, %v3845
        %v4176 = vsel %vm3058, %v2270, %v3847
        %v4179 = vsel %vm3058, %v2271, %v3849
        %v4182 = vsel %vm3058, %v2272, %v3851
        %v4185 = vsel %vm3058, %v2273, %v3853
        %v4187 = vsel %vm3089, %v4158, %v3855
        %v4189 = vsel %vm3089, %v4161, %v3857
        %v4191 = vsel %vm3089, %v4164, %v3859
        %v4193 = vsel %vm3089, %v4167, %v3861
        %v4195 = vsel %vm3089, %v4170, %v3863
        %v4197 = vsel %vm3089, %v4173, %v3865
        %v4199 = vsel %vm3089, %v4176, %v3867
        %v4201 = vsel %vm3089, %v4179, %v3869
        %v4203 = vsel %vm3089, %v4182, %v3871
        %v4205 = vsel %vm3089, %v4185, %v3873
        %v4207 = vsel %vm3110, %v4187, %v3875
        %v4209 = vsel %vm3110, %v4189, %v3877
        %v4211 = vsel %vm3110, %v4191, %v3879
        %v4213 = vsel %vm3110, %v4193, %v3881
        %v4215 = vsel %vm3110, %v4195, %v3883
        %v4217 = vsel %vm3110, %v4197, %v3885
        %v4219 = vsel %vm3110, %v4199, %v3887
        %v4221 = vsel %vm3110, %v4201, %v3889
        %v4223 = vsel %vm3110, %v4203, %v3891
        %v4225 = vsel %vm3110, %v4205, %v3893
        %v4227 = vsel %vm3131, %v4207, %v3905
        %v4229 = vsel %vm3131, %v4209, %v3907
        %v4231 = vsel %vm3131, %v4211, %v3909
        %v4233 = vsel %vm3131, %v4213, %v3911
        %v4235 = vsel %vm3131, %v4215, %v3913
        %v4237 = vsel %vm3131, %v4217, %v3915
        %v4239 = vsel %vm3131, %v4219, %v3917
        %v4241 = vsel %vm3131, %v4221, %v3919
        %v4243 = vsel %vm3131, %v4223, %v3921
        %v4245 = vsel %vm3131, %v4225, %v3923
        %v4247 = vsel %vm3152, %v4227, %v3925
        %v4249 = vsel %vm3152, %v4229, %v3927
        %v4251 = vsel %vm3152, %v4231, %v3929
        %v4253 = vsel %vm3152, %v4233, %v3931
        %v4255 = vsel %vm3152, %v4235, %v3933
        %v4257 = vsel %vm3152, %v4237, %v3935
        %v4259 = vsel %vm3152, %v4239, %v3937
        %v4261 = vsel %vm3152, %v4241, %v3939
        %v4263 = vsel %vm3152, %v4243, %v3941
        %v4265 = vsel %vm3152, %v4245, %v3943
        %v4267 = vsel %vm3173, %v4247, %v3945
        %v4269 = vsel %vm3173, %v4249, %v3947
        %v4271 = vsel %vm3173, %v4251, %v3949
        %v4273 = vsel %vm3173, %v4253, %v3951
        %v4275 = vsel %vm3173, %v4255, %v3953
        %v4277 = vsel %vm3173, %v4257, %v3955
        %v4279 = vsel %vm3173, %v4259, %v3957
        %v4281 = vsel %vm3173, %v4261, %v3959
        %v4283 = vsel %vm3173, %v4263, %v3961
        %v4285 = vsel %vm3173, %v4265, %v3963
        %v4287 = vsel %vm3194, %v4267, %v3965
        %v4289 = vsel %vm3194, %v4269, %v3967
        %v4291 = vsel %vm3194, %v4271, %v3969
        %v4293 = vsel %vm3194, %v4273, %v3971
        %v4295 = vsel %vm3194, %v4275, %v3973
        %v4297 = vsel %vm3194, %v4277, %v3975
        %v4299 = vsel %vm3194, %v4279, %v3977
        %v4301 = vsel %vm3194, %v4281, %v3979
        %v4303 = vsel %vm3194, %v4283, %v3981
        %v4305 = vsel %vm3194, %v4285, %v3983
        %v4307 = vsel %vm3215, %v4287, %v3985
        %v4309 = vsel %vm3215, %v4289, %v3987
        %v4311 = vsel %vm3215, %v4291, %v3989
        %v4313 = vsel %vm3215, %v4293, %v3991
        %v4315 = vsel %vm3215, %v4295, %v3993
        %v4317 = vsel %vm3215, %v4297, %v3995
        %v4319 = vsel %vm3215, %v4299, %v3997
        %v4321 = vsel %vm3215, %v4301, %v3999
        %v4323 = vsel %vm3215, %v4303, %v4001
        %v4325 = vsel %vm3215, %v4305, %v4003
        %v4327 = vsel %vm3236, %v4307, %v4015
        %v4329 = vsel %vm3236, %v4309, %v4017
        %v4331 = vsel %vm3236, %v4311, %v4019
        %v4333 = vsel %vm3236, %v4313, %v4021
        %v4335 = vsel %vm3236, %v4315, %v4023
        %v4337 = vsel %vm3236, %v4317, %v4025
        %v4339 = vsel %vm3236, %v4319, %v4027
        %v4341 = vsel %vm3236, %v4321, %v4029
        %v4343 = vsel %vm3236, %v4323, %v4031
        %v4345 = vsel %vm3236, %v4325, %v4033
        %v4347 = vsel %vm3257, %v4327, %v4035
        %v4349 = vsel %vm3257, %v4329, %v4037
        %v4351 = vsel %vm3257, %v4331, %v4039
        %v4353 = vsel %vm3257, %v4333, %v4041
        %v4355 = vsel %vm3257, %v4335, %v4043
        %v4357 = vsel %vm3257, %v4337, %v4045
        %v4359 = vsel %vm3257, %v4339, %v4047
        %v4361 = vsel %vm3257, %v4341, %v4049
        %v4363 = vsel %vm3257, %v4343, %v4051
        %v4365 = vsel %vm3257, %v4345, %v4053
        %v4367 = vsel %vm3278, %v4347, %v4055
        %v4369 = vsel %vm3278, %v4349, %v4057
        %v4371 = vsel %vm3278, %v4351, %v4059
        %v4373 = vsel %vm3278, %v4353, %v4061
        %v4375 = vsel %vm3278, %v4355, %v4063
        %v4377 = vsel %vm3278, %v4357, %v4065
        %v4379 = vsel %vm3278, %v4359, %v4067
        %v4381 = vsel %vm3278, %v4361, %v4069
        %v4383 = vsel %vm3278, %v4363, %v4071
        %v4385 = vsel %vm3278, %v4365, %v4073
        %v4387 = vsel %vm3299, %v4367, %v4075
        %v4389 = vsel %vm3299, %v4369, %v4077
        %v4391 = vsel %vm3299, %v4371, %v4079
        %v4393 = vsel %vm3299, %v4373, %v4081
        %v4395 = vsel %vm3299, %v4375, %v4083
        %v4397 = vsel %vm3299, %v4377, %v4085
        %v4399 = vsel %vm3299, %v4379, %v4087
        %v4401 = vsel %vm3299, %v4381, %v4089
        %v4403 = vsel %vm3299, %v4383, %v4091
        %v4405 = vsel %vm3299, %v4385, %v4093
        %v4407 = vsel %vm3320, %v4387, %v4095
        %v4409 = vsel %vm3320, %v4389, %v4097
        %v4411 = vsel %vm3320, %v4391, %v4099
        %v4413 = vsel %vm3320, %v4393, %v4101
        %v4415 = vsel %vm3320, %v4395, %v4103
        %v4417 = vsel %vm3320, %v4397, %v4105
        %v4419 = vsel %vm3320, %v4399, %v4107
        %v4421 = vsel %vm3320, %v4401, %v4109
        %v4423 = vsel %vm3320, %v4403, %v4111
        %v4425 = vsel %vm3320, %v4405, %v4113
        %v4427 = vsel %vm3341, %v4407, %v4117
        %v4429 = vsel %vm3341, %v4409, %v4119
        %v4431 = vsel %vm3341, %v4411, %v4121
        %v4433 = vsel %vm3341, %v4413, %v4123
        %v4435 = vsel %vm3341, %v4415, %v4125
        %v4437 = vsel %vm3341, %v4417, %v4127
        %v4439 = vsel %vm3341, %v4419, %v4129
        %v4441 = vsel %vm3341, %v4421, %v4131
        %v4443 = vsel %vm3341, %v4423, %v4133
        %v4445 = vsel %vm3341, %v4425, %v4135
        %v4447 = vsel %vm3362, %v4427, %v4137
        %v4450 = vsel %vm3362, %v4429, %v4139
        %v4453 = vsel %vm3362, %v4431, %v4141
        %v4456 = vsel %vm3362, %v4433, %v4143
        %v4459 = vsel %vm3362, %v4435, %v4145
        %v4462 = vsel %vm3362, %v4437, %v4147
        %v4465 = vsel %vm3362, %v4439, %v4149
        %v4468 = vsel %vm3362, %v4441, %v4151
        %v4471 = vsel %vm3362, %v4443, %v4153
        %v4474 = vsel %vm3362, %v4445, %v4155
        %4476 = vrot.lane.b32.xlu0 %v2651, 8
        %v4477 = vpop.permute.xlu0 %4476
        %4478 = vrot.lane.b32.xlu0 %v2652, 8
        %v4479 = vpop.permute.xlu0 %4478
        %4480 = vrot.lane.b32.xlu0 %v2653, 8
        %v4481 = vpop.permute.xlu0 %4480
        %4482 = vrot.lane.b32.xlu0 %v2654, 8
        %v4483 = vpop.permute.xlu0 %4482
        %4484 = vrot.lane.b32.xlu0 %v3431, 8
        %v4485 = vpop.permute.xlu0 %4484
        %4486 = vrot.lane.b32.xlu0 %v2656, 8
        %v4487 = vpop.permute.xlu0 %4486
        %4488 = vrot.lane.b32.xlu0 %v2657, 8
        %v4489 = vpop.permute.xlu0 %4488
        %4490 = vrot.lane.b32.xlu0 %v2658, 8
        %v4491 = vpop.permute.xlu0 %4490
        %4492 = vrot.lane.b32.xlu0 %v2659, 8
        %v4493 = vpop.permute.xlu0 %4492
        %4494 = vrot.lane.b32.xlu0 %v3432, 8
        %v4495 = vpop.permute.xlu0 %4494
        %4496 = vrot.lane.b32.xlu0 %v2693, 16
        %v4497 = vpop.permute.xlu0 %4496
        %4498 = vrot.lane.b32.xlu0 %v2700, 16
        %v4499 = vpop.permute.xlu0 %4498
        %4500 = vrot.lane.b32.xlu0 %v2707, 16
        %v4501 = vpop.permute.xlu0 %4500
        %4502 = vrot.lane.b32.xlu0 %v2714, 16
        %v4503 = vpop.permute.xlu0 %4502
        %4504 = vrot.lane.b32.xlu0 %v3399, 16
        %v4505 = vpop.permute.xlu0 %4504
        %4506 = vrot.lane.b32.xlu0 %v2728, 16
        %v4507 = vpop.permute.xlu0 %4506
        %4508 = vrot.lane.b32.xlu0 %v2735, 16
        %v4509 = vpop.permute.xlu0 %4508
        %4510 = vrot.lane.b32.xlu0 %v2742, 16
        %v4511 = vpop.permute.xlu0 %4510
        %4512 = vrot.lane.b32.xlu0 %v2749, 16
        %v4513 = vpop.permute.xlu0 %4512
        %4514 = vrot.lane.b32.xlu0 %v3406, 16
        %v4515 = vpop.permute.xlu0 %4514
        %4516 = vrot.lane.b32.xlu0 %v2783, 24
        %v4517 = vpop.permute.xlu0 %4516
        %4518 = vrot.lane.b32.xlu0 %v2790, 24
        %v4519 = vpop.permute.xlu0 %4518
        %4520 = vrot.lane.b32.xlu0 %v2797, 24
        %v4521 = vpop.permute.xlu0 %4520
        %4522 = vrot.lane.b32.xlu0 %v2804, 24
        %v4523 = vpop.permute.xlu0 %4522
        %4524 = vrot.lane.b32.xlu0 %v3439, 24
        %v4525 = vpop.permute.xlu0 %4524
        %4526 = vrot.lane.b32.xlu0 %v2818, 24
        %v4527 = vpop.permute.xlu0 %4526
        %4528 = vrot.lane.b32.xlu0 %v2825, 24
        %v4529 = vpop.permute.xlu0 %4528
        %4530 = vrot.lane.b32.xlu0 %v2832, 24
        %v4531 = vpop.permute.xlu0 %4530
        %4532 = vrot.lane.b32.xlu0 %v2839, 24
        %v4533 = vpop.permute.xlu0 %4532
        %4534 = vrot.lane.b32.xlu0 %v3446, 24
        %v4535 = vpop.permute.xlu0 %4534
        %v4536 = vrot.slane %v2475, 7
        %v4537 = vor.u32 %v4536, %v2477
        %v4538 = vrot.slane %v2482, 7
        %v4539 = vor.u32 %v4538, %v2484
        %v4540 = vrot.slane %v2489, 7
        %v4541 = vor.u32 %v4540, %v2491
        %v4542 = vrot.slane %v2977, 7
        %v4543 = vor.u32 %v4542, %v2979
        %v4544 = vrot.slane %v3576, 7
        %v4545 = vor.u32 %v4544, %v3578
        %v4546 = vrot.slane %v2510, 7
        %v4547 = vor.u32 %v4546, %v2512
        %v4548 = vrot.slane %v2517, 7
        %v4549 = vor.u32 %v4548, %v2519
        %v4550 = vrot.slane %v2524, 7
        %v4551 = vor.u32 %v4550, %v2526
        %v4552 = vrot.slane %v2984, 7
        %v4553 = vor.u32 %v4552, %v2986
        %v4554 = vrot.slane %v3583, 7
        %v4555 = vor.u32 %v4554, %v3585
        %4556 = vrot.lane.b32.xlu0 %v4537, 32
        %v4557 = vpop.permute.xlu0 %4556
        %4558 = vrot.lane.b32.xlu0 %v4539, 32
        %v4559 = vpop.permute.xlu0 %4558
        %4560 = vrot.lane.b32.xlu0 %v4541, 32
        %v4561 = vpop.permute.xlu0 %4560
        %4562 = vrot.lane.b32.xlu0 %v4543, 32
        %v4563 = vpop.permute.xlu0 %4562
        %4564 = vrot.lane.b32.xlu0 %v4545, 32
        %v4565 = vpop.permute.xlu0 %4564
        %4566 = vrot.lane.b32.xlu0 %v4547, 32
        %v4567 = vpop.permute.xlu0 %4566
        %4568 = vrot.lane.b32.xlu0 %v4549, 32
        %v4569 = vpop.permute.xlu0 %4568
        %4570 = vrot.lane.b32.xlu0 %v4551, 32
        %v4571 = vpop.permute.xlu0 %4570
        %4572 = vrot.lane.b32.xlu0 %v4553, 32
        %v4573 = vpop.permute.xlu0 %4572
        %4574 = vrot.lane.b32.xlu0 %v4555, 32
        %v4575 = vpop.permute.xlu0 %4574
        %4576 = vrot.lane.b32.xlu0 %v2362, 40
        %v4577 = vpop.permute.xlu0 %4576
        %4578 = vrot.lane.b32.xlu0 %v2363, 40
        %v4579 = vpop.permute.xlu0 %4578
        %4580 = vrot.lane.b32.xlu0 %v2364, 40
        %v4581 = vpop.permute.xlu0 %4580
        %4582 = vrot.lane.b32.xlu0 %v2894, 40
        %v4583 = vpop.permute.xlu0 %4582
        %4584 = vrot.lane.b32.xlu0 %v3493, 40
        %v4585 = vpop.permute.xlu0 %4584
        %4586 = vrot.lane.b32.xlu0 %v2367, 40
        %v4587 = vpop.permute.xlu0 %4586
        %4588 = vrot.lane.b32.xlu0 %v2368, 40
        %v4589 = vpop.permute.xlu0 %4588
        %4590 = vrot.lane.b32.xlu0 %v2369, 40
        %v4591 = vpop.permute.xlu0 %4590
        %4592 = vrot.lane.b32.xlu0 %v2895, 40
        %v4593 = vpop.permute.xlu0 %4592
        %4594 = vrot.lane.b32.xlu0 %v3494, 40
        %v4595 = vpop.permute.xlu0 %4594
        %4596 = vrot.lane.b32.xlu0 %v2312, 48
        %v4597 = vpop.permute.xlu0 %4596
        %4598 = vrot.lane.b32.xlu0 %v2313, 48
        %v4599 = vpop.permute.xlu0 %4598
        %4600 = vrot.lane.b32.xlu0 %v2314, 48
        %v4601 = vpop.permute.xlu0 %4600
        %4602 = vrot.lane.b32.xlu0 %v2920, 48
        %v4603 = vpop.permute.xlu0 %4602
        %4604 = vrot.lane.b32.xlu0 %v3519, 48
        %v4605 = vpop.permute.xlu0 %4604
        %4606 = vrot.lane.b32.xlu0 %v2317, 48
        %v4607 = vpop.permute.xlu0 %4606
        %4608 = vrot.lane.b32.xlu0 %v2318, 48
        %v4609 = vpop.permute.xlu0 %4608
        %4610 = vrot.lane.b32.xlu0 %v2319, 48
        %v4611 = vpop.permute.xlu0 %4610
        %4612 = vrot.lane.b32.xlu0 %v2921, 48
        %v4613 = vpop.permute.xlu0 %4612
        %4614 = vrot.lane.b32.xlu0 %v3520, 48
        %v4615 = vpop.permute.xlu0 %4614
        %4616 = vrot.lane.b32.xlu0 %v2390, 56
        %v4617 = vpop.permute.xlu0 %4616
        %4618 = vrot.lane.b32.xlu0 %v2397, 56
        %v4619 = vpop.permute.xlu0 %4618
        %4620 = vrot.lane.b32.xlu0 %v2404, 56
        %v4621 = vpop.permute.xlu0 %4620
        %4622 = vrot.lane.b32.xlu0 %v2948, 56
        %v4623 = vpop.permute.xlu0 %4622
        %4624 = vrot.lane.b32.xlu0 %v3547, 56
        %v4625 = vpop.permute.xlu0 %4624
        %4626 = vrot.lane.b32.xlu0 %v2425, 56
        %v4627 = vpop.permute.xlu0 %4626
        %4628 = vrot.lane.b32.xlu0 %v2432, 56
        %v4629 = vpop.permute.xlu0 %4628
        %4630 = vrot.lane.b32.xlu0 %v2439, 56
        %v4631 = vpop.permute.xlu0 %4630
        %4632 = vrot.lane.b32.xlu0 %v2955, 56
        %v4633 = vpop.permute.xlu0 %4632
        %4634 = vrot.lane.b32.xlu0 %v3554, 56
        %v4635 = vpop.permute.xlu0 %4634
        %4636 = vrot.lane.b32.xlu0 %v2480, 64
        %v4637 = vpop.permute.xlu0 %4636
        %4638 = vrot.lane.b32.xlu0 %v2487, 64
        %v4639 = vpop.permute.xlu0 %4638
        %4640 = vrot.lane.b32.xlu0 %v2494, 64
        %v4641 = vpop.permute.xlu0 %4640
        %4642 = vrot.lane.b32.xlu0 %v2982, 64
        %v4643 = vpop.permute.xlu0 %4642
        %4644 = vrot.lane.b32.xlu0 %v3581, 64
        %v4645 = vpop.permute.xlu0 %4644
        %4646 = vrot.lane.b32.xlu0 %v2515, 64
        %v4647 = vpop.permute.xlu0 %4646
        %4648 = vrot.lane.b32.xlu0 %v2522, 64
        %v4649 = vpop.permute.xlu0 %4648
        %4650 = vrot.lane.b32.xlu0 %v2529, 64
        %v4651 = vpop.permute.xlu0 %4650
        %4652 = vrot.lane.b32.xlu0 %v2989, 64
        %v4653 = vpop.permute.xlu0 %4652
        %4654 = vrot.lane.b32.xlu0 %v3588, 64
        %v4655 = vpop.permute.xlu0 %4654
        %v4658 = vsel %vm3058, %v2249, %v4477
        %v4661 = vsel %vm3058, %v2250, %v4479
        %v4664 = vsel %vm3058, %v2251, %v4481
        %v4667 = vsel %vm3058, %v2252, %v4483
        %v4670 = vsel %vm3058, %v2253, %v4485
        %v4673 = vsel %vm3058, %v2277, %v4487
        %v4676 = vsel %vm3058, %v2278, %v4489
        %v4679 = vsel %vm3058, %v2279, %v4491
        %v4682 = vsel %vm3058, %v2280, %v4493
        %v4685 = vsel %vm3058, %v2281, %v4495
        %v4687 = vsel %vm3089, %v4658, %v4497
        %v4689 = vsel %vm3089, %v4661, %v4499
        %v4691 = vsel %vm3089, %v4664, %v4501
        %v4693 = vsel %vm3089, %v4667, %v4503
        %v4695 = vsel %vm3089, %v4670, %v4505
        %v4697 = vsel %vm3089, %v4673, %v4507
        %v4699 = vsel %vm3089, %v4676, %v4509
        %v4701 = vsel %vm3089, %v4679, %v4511
        %v4703 = vsel %vm3089, %v4682, %v4513
        %v4705 = vsel %vm3089, %v4685, %v4515
        %v4707 = vsel %vm3110, %v4687, %v4517
        %v4709 = vsel %vm3110, %v4689, %v4519
        %v4711 = vsel %vm3110, %v4691, %v4521
        %v4713 = vsel %vm3110, %v4693, %v4523
        %v4715 = vsel %vm3110, %v4695, %v4525
        %v4717 = vsel %vm3110, %v4697, %v4527
        %v4719 = vsel %vm3110, %v4699, %v4529
        %v4721 = vsel %vm3110, %v4701, %v4531
        %v4723 = vsel %vm3110, %v4703, %v4533
        %v4725 = vsel %vm3110, %v4705, %v4535
        %v4727 = vsel %vm3131, %v4707, %v4557
        %v4729 = vsel %vm3131, %v4709, %v4559
        %v4731 = vsel %vm3131, %v4711, %v4561
        %v4733 = vsel %vm3131, %v4713, %v4563
        %v4735 = vsel %vm3131, %v4715, %v4565
        %v4737 = vsel %vm3131, %v4717, %v4567
        %v4739 = vsel %vm3131, %v4719, %v4569
        %v4741 = vsel %vm3131, %v4721, %v4571
        %v4743 = vsel %vm3131, %v4723, %v4573
        %v4745 = vsel %vm3131, %v4725, %v4575
        %v4747 = vsel %vm3152, %v4727, %v4577
        %v4749 = vsel %vm3152, %v4729, %v4579
        %v4751 = vsel %vm3152, %v4731, %v4581
        %v4753 = vsel %vm3152, %v4733, %v4583
        %v4755 = vsel %vm3152, %v4735, %v4585
        %v4757 = vsel %vm3152, %v4737, %v4587
        %v4759 = vsel %vm3152, %v4739, %v4589
        %v4761 = vsel %vm3152, %v4741, %v4591
        %v4763 = vsel %vm3152, %v4743, %v4593
        %v4765 = vsel %vm3152, %v4745, %v4595
        %v4767 = vsel %vm3173, %v4747, %v4597
        %v4769 = vsel %vm3173, %v4749, %v4599
        %v4771 = vsel %vm3173, %v4751, %v4601
        %v4773 = vsel %vm3173, %v4753, %v4603
        %v4775 = vsel %vm3173, %v4755, %v4605
        %v4777 = vsel %vm3173, %v4757, %v4607
        %v4779 = vsel %vm3173, %v4759, %v4609
        %v4781 = vsel %vm3173, %v4761, %v4611
        %v4783 = vsel %vm3173, %v4763, %v4613
        %v4785 = vsel %vm3173, %v4765, %v4615
        %v4787 = vsel %vm3194, %v4767, %v4617
        %v4789 = vsel %vm3194, %v4769, %v4619
        %v4791 = vsel %vm3194, %v4771, %v4621
        %v4793 = vsel %vm3194, %v4773, %v4623
        %v4795 = vsel %vm3194, %v4775, %v4625
        %v4797 = vsel %vm3194, %v4777, %v4627
        %v4799 = vsel %vm3194, %v4779, %v4629
        %v4801 = vsel %vm3194, %v4781, %v4631
        %v4803 = vsel %vm3194, %v4783, %v4633
        %v4805 = vsel %vm3194, %v4785, %v4635
        %v4807 = vsel %vm3215, %v4787, %v4637
        %v4809 = vsel %vm3215, %v4789, %v4639
        %v4811 = vsel %vm3215, %v4791, %v4641
        %v4813 = vsel %vm3215, %v4793, %v4643
        %v4815 = vsel %vm3215, %v4795, %v4645
        %v4817 = vsel %vm3215, %v4797, %v4647
        %v4819 = vsel %vm3215, %v4799, %v4649
        %v4821 = vsel %vm3215, %v4801, %v4651
        %v4823 = vsel %vm3215, %v4803, %v4653
        %v4825 = vsel %vm3215, %v4805, %v4655
        %v4826 = vshrl.u32 %v4807, 16
        %v4828 = vshll.u32 %v4807, 16
        %v4830 = vrot.slane %v4828, 1
        %v4831 = vor.u32 %v4826, %v4830
        %v4832 = vshrl.u32 %v4809, 16
        %v4834 = vshll.u32 %v4809, 16
        %v4836 = vrot.slane %v4834, 1
        %v4837 = vor.u32 %v4832, %v4836
        %v4838 = vshrl.u32 %v4811, 16
        %v4840 = vshll.u32 %v4811, 16
        %v4842 = vrot.slane %v4840, 1
        %v4843 = vor.u32 %v4838, %v4842
        %v4844 = vshrl.u32 %v4813, 16
        %v4846 = vshll.u32 %v4813, 16
        %v4848 = vrot.slane %v4846, 1
        %v4849 = vor.u32 %v4844, %v4848
        %v4850 = vshrl.u32 %v4815, 16
        %v4852 = vshll.u32 %v4815, 16
        %v4854 = vrot.slane %v4852, 1
        %v4855 = vor.u32 %v4850, %v4854
        %v4856 = vshrl.u32 %v4817, 16
        %v4858 = vshll.u32 %v4817, 16
        %v4860 = vrot.slane %v4858, 1
        %v4861 = vor.u32 %v4856, %v4860
        %v4862 = vshrl.u32 %v4819, 16
        %v4864 = vshll.u32 %v4819, 16
        %v4866 = vrot.slane %v4864, 1
        %v4867 = vor.u32 %v4862, %v4866
        %v4868 = vshrl.u32 %v4821, 16
        %v4870 = vshll.u32 %v4821, 16
        %v4872 = vrot.slane %v4870, 1
        %v4873 = vor.u32 %v4868, %v4872
        %v4874 = vshrl.u32 %v4823, 16
        %v4876 = vshll.u32 %v4823, 16
        %v4878 = vrot.slane %v4876, 1
        %v4879 = vor.u32 %v4874, %v4878
        %v4880 = vshrl.u32 %v4825, 16
        %v4882 = vshll.u32 %v4825, 16
        %v4884 = vrot.slane %v4882, 1
        %v4885 = vor.u32 %v4880, %v4884
        %v4896 = vsel %vm3813, %v4447, 0
        %v4897 = vsel %vm3813, %v4831, 0
        %v4898 = vsel %vm3813, %v4450, 0
        %v4899 = vsel %vm3813, %v4837, 0
        %v4900 = vsel %vm3813, %v4453, 0
        %v4901 = vsel %vm3813, %v4843, 0
        %v4902 = vsel %vm3813, %v4456, 0
        %v4903 = vsel %vm3813, %v4849, 0
        %v4904 = vsel %vm3813, %v4459, 0
        %v4905 = vsel %vm3813, %v4855, 0
        %v4906 = vsel %vm3813, %v4462, 0
        %v4907 = vsel %vm3813, %v4861, 0
        %v4908 = vsel %vm3813, %v4465, 0
        %v4909 = vsel %vm3813, %v4867, 0
        %v4910 = vsel %vm3813, %v4468, 0
        %v4911 = vsel %vm3813, %v4873, 0
        %v4912 = vsel %vm3813, %v4471, 0
        %v4913 = vsel %vm3813, %v4879, 0
        %v4914 = vsel %vm3813, %v4474, 0
        %v4915 = vsel %vm3813, %v4885, 0
        %4916 = vrot.lane.b32.xlu0 %v2650, 8
        %v4917 = vpop.permute.xlu0 %4916
        %4918 = vrot.lane.b32.xlu0 %v2655, 8
        %v4919 = vpop.permute.xlu0 %4918
        %4920 = vrot.lane.b32.xlu0 %v2686, 16
        %v4921 = vpop.permute.xlu0 %4920
        %4922 = vrot.lane.b32.xlu0 %v2721, 16
        %v4923 = vpop.permute.xlu0 %4922
        %4924 = vrot.lane.b32.xlu0 %v2776, 24
        %v4925 = vpop.permute.xlu0 %4924
        %4926 = vrot.lane.b32.xlu0 %v2811, 24
        %v4927 = vpop.permute.xlu0 %4926
        %4928 = vrot.lane.b32.xlu0 %v2860, 32
        %v4929 = vpop.permute.xlu0 %4928
        %4930 = vrot.lane.b32.xlu0 %v2861, 32
        %v4931 = vpop.permute.xlu0 %4930
        %4932 = vrot.lane.b32.xlu0 %v2862, 32
        %v4933 = vpop.permute.xlu0 %4932
        %4934 = vrot.lane.b32.xlu0 %v2863, 32
        %v4935 = vpop.permute.xlu0 %4934
        %4936 = vrot.lane.b32.xlu0 %v2864, 32
        %v4937 = vpop.permute.xlu0 %4936
        %4938 = vrot.lane.b32.xlu0 %v2865, 32
        %v4939 = vpop.permute.xlu0 %4938
        %4940 = vrot.lane.b32.xlu0 %v2866, 32
        %v4941 = vpop.permute.xlu0 %4940
        %4942 = vrot.lane.b32.xlu0 %v2867, 32
        %v4943 = vpop.permute.xlu0 %4942
        %4944 = vrot.lane.b32.xlu0 %v2868, 32
        %v4945 = vpop.permute.xlu0 %4944
        %4946 = vrot.lane.b32.xlu0 %v2869, 32
        %v4947 = vpop.permute.xlu0 %4946
        %4948 = vrot.lane.b32.xlu0 %v2361, 40
        %v4949 = vpop.permute.xlu0 %4948
        %4950 = vrot.lane.b32.xlu0 %v2366, 40
        %v4951 = vpop.permute.xlu0 %4950
        %4952 = vrot.lane.b32.xlu0 %v2311, 48
        %v4953 = vpop.permute.xlu0 %4952
        %4954 = vrot.lane.b32.xlu0 %v2316, 48
        %v4955 = vpop.permute.xlu0 %4954
        %4956 = vrot.lane.b32.xlu0 %v2383, 56
        %v4957 = vpop.permute.xlu0 %4956
        %4958 = vrot.lane.b32.xlu0 %v2418, 56
        %v4959 = vpop.permute.xlu0 %4958
        %4960 = vrot.lane.b32.xlu0 %v2473, 64
        %v4961 = vpop.permute.xlu0 %4960
        %4962 = vrot.lane.b32.xlu0 %v2508, 64
        %v4963 = vpop.permute.xlu0 %4962
        %4964 = vrot.lane.b32.xlu0 %v2551, 72
        %v4965 = vpop.permute.xlu0 %4964
        %4966 = vrot.lane.b32.xlu0 %v2552, 72
        %v4967 = vpop.permute.xlu0 %4966
        %4968 = vrot.lane.b32.xlu0 %v2553, 72
        %v4969 = vpop.permute.xlu0 %4968
        %4970 = vrot.lane.b32.xlu0 %v2554, 72
        %v4971 = vpop.permute.xlu0 %4970
        %4972 = vrot.lane.b32.xlu0 %v3010, 72
        %v4973 = vpop.permute.xlu0 %4972
        %4974 = vrot.lane.b32.xlu0 %v2556, 72
        %v4975 = vpop.permute.xlu0 %4974
        %4976 = vrot.lane.b32.xlu0 %v2557, 72
        %v4977 = vpop.permute.xlu0 %4976
        %4978 = vrot.lane.b32.xlu0 %v2558, 72
        %v4979 = vpop.permute.xlu0 %4978
        %4980 = vrot.lane.b32.xlu0 %v2559, 72
        %v4981 = vpop.permute.xlu0 %4980
        %4982 = vrot.lane.b32.xlu0 %v3011, 72
        %v4983 = vpop.permute.xlu0 %4982
        %4984 = vrot.lane.b32.xlu0 %v2601, 80
        %v4985 = vpop.permute.xlu0 %4984
        %4986 = vrot.lane.b32.xlu0 %v2602, 80
        %v4987 = vpop.permute.xlu0 %4986
        %4988 = vrot.lane.b32.xlu0 %v2603, 80
        %v4989 = vpop.permute.xlu0 %4988
        %4990 = vrot.lane.b32.xlu0 %v2604, 80
        %v4991 = vpop.permute.xlu0 %4990
        %4992 = vrot.lane.b32.xlu0 %v3036, 80
        %v4993 = vpop.permute.xlu0 %4992
        %4994 = vrot.lane.b32.xlu0 %v2606, 80
        %v4995 = vpop.permute.xlu0 %4994
        %4996 = vrot.lane.b32.xlu0 %v2607, 80
        %v4997 = vpop.permute.xlu0 %4996
        %4998 = vrot.lane.b32.xlu0 %v2608, 80
        %v4999 = vpop.permute.xlu0 %4998
        %5000 = vrot.lane.b32.xlu0 %v2609, 80
        %v5001 = vpop.permute.xlu0 %5000
        %5002 = vrot.lane.b32.xlu0 %v3037, 80
        %v5003 = vpop.permute.xlu0 %5002
        %5004 = vrot.lane.b32.xlu0 %v2651, 88
        %v5005 = vpop.permute.xlu0 %5004
        %5006 = vrot.lane.b32.xlu0 %v2652, 88
        %v5007 = vpop.permute.xlu0 %5006
        %5008 = vrot.lane.b32.xlu0 %v2653, 88
        %v5009 = vpop.permute.xlu0 %5008
        %5010 = vrot.lane.b32.xlu0 %v2654, 88
        %v5011 = vpop.permute.xlu0 %5010
        %5012 = vrot.lane.b32.xlu0 %v3431, 88
        %v5013 = vpop.permute.xlu0 %5012
        %5014 = vrot.lane.b32.xlu0 %v2656, 88
        %v5015 = vpop.permute.xlu0 %5014
        %5016 = vrot.lane.b32.xlu0 %v2657, 88
        %v5017 = vpop.permute.xlu0 %5016
        %5018 = vrot.lane.b32.xlu0 %v2658, 88
        %v5019 = vpop.permute.xlu0 %5018
        %5020 = vrot.lane.b32.xlu0 %v2659, 88
        %v5021 = vpop.permute.xlu0 %5020
        %5022 = vrot.lane.b32.xlu0 %v3432, 88
        %v5023 = vpop.permute.xlu0 %5022
        %5024 = vrot.lane.b32.xlu0 %v2693, 96
        %v5025 = vpop.permute.xlu0 %5024
        %5026 = vrot.lane.b32.xlu0 %v2700, 96
        %v5027 = vpop.permute.xlu0 %5026
        %5028 = vrot.lane.b32.xlu0 %v2707, 96
        %v5029 = vpop.permute.xlu0 %5028
        %5030 = vrot.lane.b32.xlu0 %v2714, 96
        %v5031 = vpop.permute.xlu0 %5030
        %5032 = vrot.lane.b32.xlu0 %v3399, 96
        %v5033 = vpop.permute.xlu0 %5032
        %5034 = vrot.lane.b32.xlu0 %v2728, 96
        %v5035 = vpop.permute.xlu0 %5034
        %5036 = vrot.lane.b32.xlu0 %v2735, 96
        %v5037 = vpop.permute.xlu0 %5036
        %5038 = vrot.lane.b32.xlu0 %v2742, 96
        %v5039 = vpop.permute.xlu0 %5038
        %5040 = vrot.lane.b32.xlu0 %v2749, 96
        %v5041 = vpop.permute.xlu0 %5040
        %5042 = vrot.lane.b32.xlu0 %v3406, 96
        %v5043 = vpop.permute.xlu0 %5042
        %5044 = vrot.lane.b32.xlu0 %v2783, 104
        %v5045 = vpop.permute.xlu0 %5044
        %5046 = vrot.lane.b32.xlu0 %v2790, 104
        %v5047 = vpop.permute.xlu0 %5046
        %5048 = vrot.lane.b32.xlu0 %v2797, 104
        %v5049 = vpop.permute.xlu0 %5048
        %5050 = vrot.lane.b32.xlu0 %v2804, 104
        %v5051 = vpop.permute.xlu0 %5050
        %5052 = vrot.lane.b32.xlu0 %v3439, 104
        %v5053 = vpop.permute.xlu0 %5052
        %5054 = vrot.lane.b32.xlu0 %v2818, 104
        %v5055 = vpop.permute.xlu0 %5054
        %5056 = vrot.lane.b32.xlu0 %v2825, 104
        %v5057 = vpop.permute.xlu0 %5056
        %5058 = vrot.lane.b32.xlu0 %v2832, 104
        %v5059 = vpop.permute.xlu0 %5058
        %5060 = vrot.lane.b32.xlu0 %v2839, 104
        %v5061 = vpop.permute.xlu0 %5060
        %5062 = vrot.lane.b32.xlu0 %v3446, 104
        %v5063 = vpop.permute.xlu0 %5062
        %5064 = vrot.lane.b32.xlu0 %v2861, 112
        %v5065 = vpop.permute.xlu0 %5064
        %5066 = vrot.lane.b32.xlu0 %v2862, 112
        %v5067 = vpop.permute.xlu0 %5066
        %5068 = vrot.lane.b32.xlu0 %v2863, 112
        %v5069 = vpop.permute.xlu0 %5068
        %5070 = vrot.lane.b32.xlu0 %v2864, 112
        %v5071 = vpop.permute.xlu0 %5070
        %5072 = vrot.lane.b32.xlu0 %v3467, 112
        %v5073 = vpop.permute.xlu0 %5072
        %5074 = vrot.lane.b32.xlu0 %v2866, 112
        %v5075 = vpop.permute.xlu0 %5074
        %5076 = vrot.lane.b32.xlu0 %v2867, 112
        %v5077 = vpop.permute.xlu0 %5076
        %5078 = vrot.lane.b32.xlu0 %v2868, 112
        %v5079 = vpop.permute.xlu0 %5078
        %5080 = vrot.lane.b32.xlu0 %v2869, 112
        %v5081 = vpop.permute.xlu0 %5080
        %5082 = vrot.lane.b32.xlu0 %v3468, 112
        %v5083 = vpop.permute.xlu0 %5082
        %5084 = vrot.lane.b32.xlu0 %v2362, 120
        %v5085 = vpop.permute.xlu0 %5084
        %5086 = vrot.lane.b32.xlu0 %v2363, 120
        %v5087 = vpop.permute.xlu0 %5086
        %5088 = vrot.lane.b32.xlu0 %v2364, 120
        %v5089 = vpop.permute.xlu0 %5088
        %5090 = vrot.lane.b32.xlu0 %v2894, 120
        %v5091 = vpop.permute.xlu0 %5090
        %5092 = vrot.lane.b32.xlu0 %v3493, 120
        %v5093 = vpop.permute.xlu0 %5092
        %5094 = vrot.lane.b32.xlu0 %v2367, 120
        %v5095 = vpop.permute.xlu0 %5094
        %5096 = vrot.lane.b32.xlu0 %v2368, 120
        %v5097 = vpop.permute.xlu0 %5096
        %5098 = vrot.lane.b32.xlu0 %v2369, 120
        %v5099 = vpop.permute.xlu0 %5098
        %5100 = vrot.lane.b32.xlu0 %v2895, 120
        %v5101 = vpop.permute.xlu0 %5100
        %5102 = vrot.lane.b32.xlu0 %v3494, 120
        %v5103 = vpop.permute.xlu0 %5102
        %v5106 = vsel %vm3058, %v2248, %v4917
        %v5109 = vsel %vm3058, %v2276, %v4919
        %v5111 = vsel %vm3089, %v5106, %v4921
        %v5113 = vsel %vm3089, %v5109, %v4923
        %v5115 = vsel %vm3110, %v5111, %v4925
        %v5117 = vsel %vm3110, %v5113, %v4927
        %v5119 = vsel %vm3131, %v5115, %v4929
        %v5121 = vsel %vm3131, %v4707, %v4931
        %v5123 = vsel %vm3131, %v4709, %v4933
        %v5125 = vsel %vm3131, %v4711, %v4935
        %v5127 = vsel %vm3131, %v4713, %v4937
        %v5129 = vsel %vm3131, %v5117, %v4939
        %v5131 = vsel %vm3131, %v4717, %v4941
        %v5133 = vsel %vm3131, %v4719, %v4943
        %v5135 = vsel %vm3131, %v4721, %v4945
        %v5137 = vsel %vm3131, %v4723, %v4947
        %v5139 = vsel %vm3152, %v5119, %v4949
        %v5140 = vsel %vm3152, %v5121, %v4577
        %v5141 = vsel %vm3152, %v5123, %v4579
        %v5142 = vsel %vm3152, %v5125, %v4581
        %v5143 = vsel %vm3152, %v5127, %v4583
        %v5145 = vsel %vm3152, %v5129, %v4951
        %v5146 = vsel %vm3152, %v5131, %v4587
        %v5147 = vsel %vm3152, %v5133, %v4589
        %v5148 = vsel %vm3152, %v5135, %v4591
        %v5149 = vsel %vm3152, %v5137, %v4593
        %v5151 = vsel %vm3173, %v5139, %v4953
        %v5152 = vsel %vm3173, %v5140, %v4597
        %v5153 = vsel %vm3173, %v5141, %v4599
        %v5154 = vsel %vm3173, %v5142, %v4601
        %v5155 = vsel %vm3173, %v5143, %v4603
        %v5157 = vsel %vm3173, %v5145, %v4955
        %v5158 = vsel %vm3173, %v5146, %v4607
        %v5159 = vsel %vm3173, %v5147, %v4609
        %v5160 = vsel %vm3173, %v5148, %v4611
        %v5161 = vsel %vm3173, %v5149, %v4613
        %v5163 = vsel %vm3194, %v5151, %v4957
        %v5164 = vsel %vm3194, %v5152, %v4617
        %v5165 = vsel %vm3194, %v5153, %v4619
        %v5166 = vsel %vm3194, %v5154, %v4621
        %v5167 = vsel %vm3194, %v5155, %v4623
        %v5169 = vsel %vm3194, %v5157, %v4959
        %v5170 = vsel %vm3194, %v5158, %v4627
        %v5171 = vsel %vm3194, %v5159, %v4629
        %v5172 = vsel %vm3194, %v5160, %v4631
        %v5173 = vsel %vm3194, %v5161, %v4633
        %v5175 = vsel %vm3215, %v5163, %v4961
        %v5176 = vsel %vm3215, %v5164, %v4637
        %v5177 = vsel %vm3215, %v5165, %v4639
        %v5178 = vsel %vm3215, %v5166, %v4641
        %v5179 = vsel %vm3215, %v5167, %v4643
        %v5181 = vsel %vm3215, %v5169, %v4963
        %v5182 = vsel %vm3215, %v5170, %v4647
        %v5183 = vsel %vm3215, %v5171, %v4649
        %v5184 = vsel %vm3215, %v5172, %v4651
        %v5185 = vsel %vm3215, %v5173, %v4653
        %v5187 = vsel %vm3236, %v5175, %v4965
        %v5189 = vsel %vm3236, %v5176, %v4967
        %v5191 = vsel %vm3236, %v5177, %v4969
        %v5193 = vsel %vm3236, %v5178, %v4971
        %v5195 = vsel %vm3236, %v5179, %v4973
        %v5197 = vsel %vm3236, %v5181, %v4975
        %v5199 = vsel %vm3236, %v5182, %v4977
        %v5201 = vsel %vm3236, %v5183, %v4979
        %v5203 = vsel %vm3236, %v5184, %v4981
        %v5205 = vsel %vm3236, %v5185, %v4983
        %v5207 = vsel %vm3257, %v5187, %v4985
        %v5209 = vsel %vm3257, %v5189, %v4987
        %v5211 = vsel %vm3257, %v5191, %v4989
        %v5213 = vsel %vm3257, %v5193, %v4991
        %v5215 = vsel %vm3257, %v5195, %v4993
        %v5217 = vsel %vm3257, %v5197, %v4995
        %v5219 = vsel %vm3257, %v5199, %v4997
        %v5221 = vsel %vm3257, %v5201, %v4999
        %v5223 = vsel %vm3257, %v5203, %v5001
        %v5225 = vsel %vm3257, %v5205, %v5003
        %v5227 = vsel %vm3278, %v5207, %v5005
        %v5229 = vsel %vm3278, %v5209, %v5007
        %v5231 = vsel %vm3278, %v5211, %v5009
        %v5233 = vsel %vm3278, %v5213, %v5011
        %v5235 = vsel %vm3278, %v5215, %v5013
        %v5237 = vsel %vm3278, %v5217, %v5015
        %v5239 = vsel %vm3278, %v5219, %v5017
        %v5241 = vsel %vm3278, %v5221, %v5019
        %v5243 = vsel %vm3278, %v5223, %v5021
        %v5245 = vsel %vm3278, %v5225, %v5023
        %v5247 = vsel %vm3299, %v5227, %v5025
        %v5249 = vsel %vm3299, %v5229, %v5027
        %v5251 = vsel %vm3299, %v5231, %v5029
        %v5253 = vsel %vm3299, %v5233, %v5031
        %v5255 = vsel %vm3299, %v5235, %v5033
        %v5257 = vsel %vm3299, %v5237, %v5035
        %v5259 = vsel %vm3299, %v5239, %v5037
        %v5261 = vsel %vm3299, %v5241, %v5039
        %v5263 = vsel %vm3299, %v5243, %v5041
        %v5265 = vsel %vm3299, %v5245, %v5043
        %v5267 = vsel %vm3320, %v5247, %v5045
        %v5269 = vsel %vm3320, %v5249, %v5047
        %v5271 = vsel %vm3320, %v5251, %v5049
        %v5273 = vsel %vm3320, %v5253, %v5051
        %v5275 = vsel %vm3320, %v5255, %v5053
        %v5277 = vsel %vm3320, %v5257, %v5055
        %v5279 = vsel %vm3320, %v5259, %v5057
        %v5281 = vsel %vm3320, %v5261, %v5059
        %v5283 = vsel %vm3320, %v5263, %v5061
        %v5285 = vsel %vm3320, %v5265, %v5063
        %v5287 = vsel %vm3341, %v5267, %v5065
        %v5289 = vsel %vm3341, %v5269, %v5067
        %v5291 = vsel %vm3341, %v5271, %v5069
        %v5293 = vsel %vm3341, %v5273, %v5071
        %v5295 = vsel %vm3341, %v5275, %v5073
        %v5297 = vsel %vm3341, %v5277, %v5075
        %v5299 = vsel %vm3341, %v5279, %v5077
        %v5301 = vsel %vm3341, %v5281, %v5079
        %v5303 = vsel %vm3341, %v5283, %v5081
        %v5305 = vsel %vm3341, %v5285, %v5083
        %v5307 = vsel %vm3362, %v5287, %v5085
        %v5310 = vsel %vm3362, %v5289, %v5087
        %v5313 = vsel %vm3362, %v5291, %v5089
        %v5316 = vsel %vm3362, %v5293, %v5091
        %v5319 = vsel %vm3362, %v5295, %v5093
        %v5322 = vsel %vm3362, %v5297, %v5095
        %v5325 = vsel %vm3362, %v5299, %v5097
        %v5328 = vsel %vm3362, %v5301, %v5099
        %v5331 = vsel %vm3362, %v5303, %v5101
        %v5334 = vsel %vm3362, %v5305, %v5103
        %5336 = vrot.lane.b32.xlu0 %v2948, 8
        %v5337 = vpop.permute.xlu0 %5336
        %5338 = vrot.lane.b32.xlu0 %v3547, 8
        %v5339 = vpop.permute.xlu0 %5338
        %5340 = vrot.lane.b32.xlu0 %v2955, 8
        %v5341 = vpop.permute.xlu0 %5340
        %5342 = vrot.lane.b32.xlu0 %v3554, 8
        %v5343 = vpop.permute.xlu0 %5342
        %5344 = vrot.lane.b32.xlu0 %v2982, 16
        %v5345 = vpop.permute.xlu0 %5344
        %5346 = vrot.lane.b32.xlu0 %v3581, 16
        %v5347 = vpop.permute.xlu0 %5346
        %5348 = vrot.lane.b32.xlu0 %v2989, 16
        %v5349 = vpop.permute.xlu0 %5348
        %5350 = vrot.lane.b32.xlu0 %v3588, 16
        %v5351 = vpop.permute.xlu0 %5350
        %5352 = vrot.lane.b32.xlu0 %v3010, 24
        %v5353 = vpop.permute.xlu0 %5352
        %5354 = vrot.lane.b32.xlu0 %v3609, 24
        %v5355 = vpop.permute.xlu0 %5354
        %5356 = vrot.lane.b32.xlu0 %v3011, 24
        %v5357 = vpop.permute.xlu0 %5356
        %5358 = vrot.lane.b32.xlu0 %v3610, 24
        %v5359 = vpop.permute.xlu0 %5358
        %v5362 = vunpack.c.l.b16 %v2254
        %v5363 = vunpack.c.l.b16 %v2282
        %v5364 = vpack.c.b16 %v5362, %v5362
        %v5365 = vpack.c.b16 %v5363, %v5363
        %5366 = vrot.lane.b32.xlu0 %v2602, 32
        %v5367 = vpop.permute.xlu0 %5366
        %5368 = vrot.lane.b32.xlu0 %v2603, 32
        %v5369 = vpop.permute.xlu0 %5368
        %5370 = vrot.lane.b32.xlu0 %v2604, 32
        %v5371 = vpop.permute.xlu0 %5370
        %5372 = vrot.lane.b32.xlu0 %v3036, 32
        %v5373 = vpop.permute.xlu0 %5372
        %5374 = vrot.lane.b32.xlu0 %v5364, 32
        %v5375 = vpop.permute.xlu0 %5374
        %5376 = vrot.lane.b32.xlu0 %v2607, 32
        %v5377 = vpop.permute.xlu0 %5376
        %5378 = vrot.lane.b32.xlu0 %v2608, 32
        %v5379 = vpop.permute.xlu0 %5378
        %5380 = vrot.lane.b32.xlu0 %v2609, 32
        %v5381 = vpop.permute.xlu0 %5380
        %5382 = vrot.lane.b32.xlu0 %v3037, 32
        %v5383 = vpop.permute.xlu0 %5382
        %5384 = vrot.lane.b32.xlu0 %v5365, 32
        %v5385 = vpop.permute.xlu0 %5384
        %v5388 = vunpack.c.l.b16 %v2261
        %v5389 = vunpack.c.l.b16 %v2289
        %v5390 = vpack.c.b16 %v5388, %v5388
        %v5391 = vpack.c.b16 %v5389, %v5389
        %5392 = vrot.lane.b32.xlu0 %v3431, 40
        %v5393 = vpop.permute.xlu0 %5392
        %5394 = vrot.lane.b32.xlu0 %v5390, 40
        %v5395 = vpop.permute.xlu0 %5394
        %5396 = vrot.lane.b32.xlu0 %v3432, 40
        %v5397 = vpop.permute.xlu0 %5396
        %5398 = vrot.lane.b32.xlu0 %v5391, 40
        %v5399 = vpop.permute.xlu0 %5398
        %v5401 = vshrl.u32 %v5364, 16
        %v5403 = vshll.u32 %v5364, 16
        %v5405 = vrot.slane %v5403, 1
        %v5406 = vor.u32 %v5401, %v5405
        %v5408 = vshrl.u32 %v5365, 16
        %v5410 = vshll.u32 %v5365, 16
        %v5412 = vrot.slane %v5410, 1
        %v5413 = vor.u32 %v5408, %v5412
        %5414 = vrot.lane.b32.xlu0 %v3399, 48
        %v5415 = vpop.permute.xlu0 %5414
        %5416 = vrot.lane.b32.xlu0 %v5406, 48
        %v5417 = vpop.permute.xlu0 %5416
        %5418 = vrot.lane.b32.xlu0 %v3406, 48
        %v5419 = vpop.permute.xlu0 %5418
        %5420 = vrot.lane.b32.xlu0 %v5413, 48
        %v5421 = vpop.permute.xlu0 %5420
        %v5423 = vshrl.u32 %v5390, 16
        %v5425 = vshll.u32 %v5390, 16
        %v5427 = vrot.slane %v5425, 1
        %v5428 = vor.u32 %v5423, %v5427
        %v5430 = vshrl.u32 %v5391, 16
        %v5432 = vshll.u32 %v5391, 16
        %v5434 = vrot.slane %v5432, 1
        %v5435 = vor.u32 %v5430, %v5434
        %5436 = vrot.lane.b32.xlu0 %v3439, 56
        %v5437 = vpop.permute.xlu0 %5436
        %5438 = vrot.lane.b32.xlu0 %v5428, 56
        %v5439 = vpop.permute.xlu0 %5438
        %5440 = vrot.lane.b32.xlu0 %v3446, 56
        %v5441 = vpop.permute.xlu0 %5440
        %5442 = vrot.lane.b32.xlu0 %v5435, 56
        %v5443 = vpop.permute.xlu0 %5442
        %v5444 = vrot.slane %v5364, 1
        %v5445 = vrot.slane %v5365, 1
        %5446 = vrot.lane.b32.xlu0 %v3467, 64
        %v5447 = vpop.permute.xlu0 %5446
        %5448 = vrot.lane.b32.xlu0 %v5444, 64
        %v5449 = vpop.permute.xlu0 %5448
        %5450 = vrot.lane.b32.xlu0 %v3468, 64
        %v5451 = vpop.permute.xlu0 %5450
        %5452 = vrot.lane.b32.xlu0 %v5445, 64
        %v5453 = vpop.permute.xlu0 %5452
        %v5456 = vsel %vm3058, %v2246, %v5337
        %v5459 = vsel %vm3058, %v2247, %v5339
        %v5462 = vsel %vm3058, %v2274, %v5341
        %v5465 = vsel %vm3058, %v2275, %v5343
        %v5467 = vsel %vm3089, %v5456, %v5345
        %v5469 = vsel %vm3089, %v5459, %v5347
        %v5471 = vsel %vm3089, %v5462, %v5349
        %v5473 = vsel %vm3089, %v5465, %v5351
        %v5475 = vsel %vm3110, %v5467, %v5353
        %v5477 = vsel %vm3110, %v5469, %v5355
        %v5479 = vsel %vm3110, %v5471, %v5357
        %v5481 = vsel %vm3110, %v5473, %v5359
        %v5483 = vsel %vm3131, %v4211, %v5367
        %v5485 = vsel %vm3131, %v4213, %v5369
        %v5487 = vsel %vm3131, %v4215, %v5371
        %v5489 = vsel %vm3131, %v5475, %v5373
        %v5491 = vsel %vm3131, %v5477, %v5375
        %v5493 = vsel %vm3131, %v4221, %v5377
        %v5495 = vsel %vm3131, %v4223, %v5379
        %v5497 = vsel %vm3131, %v4225, %v5381
        %v5499 = vsel %vm3131, %v5479, %v5383
        %v5501 = vsel %vm3131, %v5481, %v5385
        %v5502 = vsel %vm3152, %v5483, %v3929
        %v5503 = vsel %vm3152, %v5485, %v3931
        %v5504 = vsel %vm3152, %v5487, %v3933
        %v5506 = vsel %vm3152, %v5489, %v5393
        %v5508 = vsel %vm3152, %v5491, %v5395
        %v5509 = vsel %vm3152, %v5493, %v3939
        %v5510 = vsel %vm3152, %v5495, %v3941
        %v5511 = vsel %vm3152, %v5497, %v3943
        %v5513 = vsel %vm3152, %v5499, %v5397
        %v5515 = vsel %vm3152, %v5501, %v5399
        %v5516 = vsel %vm3173, %v5502, %v3949
        %v5517 = vsel %vm3173, %v5503, %v3951
        %v5518 = vsel %vm3173, %v5504, %v3953
        %v5520 = vsel %vm3173, %v5506, %v5415
        %v5522 = vsel %vm3173, %v5508, %v5417
        %v5523 = vsel %vm3173, %v5509, %v3959
        %v5524 = vsel %vm3173, %v5510, %v3961
        %v5525 = vsel %vm3173, %v5511, %v3963
        %v5527 = vsel %vm3173, %v5513, %v5419
        %v5529 = vsel %vm3173, %v5515, %v5421
        %v5530 = vsel %vm3194, %v5516, %v3969
        %v5531 = vsel %vm3194, %v5517, %v3971
        %v5532 = vsel %vm3194, %v5518, %v3973
        %v5534 = vsel %vm3194, %v5520, %v5437
        %v5536 = vsel %vm3194, %v5522, %v5439
        %v5537 = vsel %vm3194, %v5523, %v3979
        %v5538 = vsel %vm3194, %v5524, %v3981
        %v5539 = vsel %vm3194, %v5525, %v3983
        %v5541 = vsel %vm3194, %v5527, %v5441
        %v5543 = vsel %vm3194, %v5529, %v5443
        %v5544 = vsel %vm3215, %v5530, %v3989
        %v5546 = vsel %vm3215, %v5531, %v3991
        %v5548 = vsel %vm3215, %v5532, %v3993
        %v5551 = vsel %vm3215, %v5534, %v5447
        %v5554 = vsel %vm3215, %v5536, %v5449
        %v5556 = vsel %vm3215, %v5537, %v3999
        %v5558 = vsel %vm3215, %v5538, %v4001
        %v5560 = vsel %vm3215, %v5539, %v4003
        %v5563 = vsel %vm3215, %v5541, %v5451
        %v5566 = vsel %vm3215, %v5543, %v5453
        %v5568 = vsel %vm3813, %v5307, 0
        %v5569 = vsel %vm3813, %v5544, 0
        %v5570 = vsel %vm3813, %v5310, 0
        %v5571 = vsel %vm3813, %v5546, 0
        %v5572 = vsel %vm3813, %v5313, 0
        %v5573 = vsel %vm3813, %v5548, 0
        %v5574 = vsel %vm3813, %v5316, 0
        %v5575 = vsel %vm3813, %v5551, 0
        %v5576 = vsel %vm3813, %v5319, 0
        %v5577 = vsel %vm3813, %v5554, 0
        %v5578 = vsel %vm3813, %v5322, 0
        %v5579 = vsel %vm3813, %v5556, 0
        %v5580 = vsel %vm3813, %v5325, 0
        %v5581 = vsel %vm3813, %v5558, 0
        %v5582 = vsel %vm3813, %v5328, 0
        %v5583 = vsel %vm3813, %v5560, 0
        %v5584 = vsel %vm3813, %v5331, 0
        %v5585 = vsel %vm3813, %v5563, 0
        %v5586 = vsel %vm3813, %v5334, 0
        %v5587 = vsel %vm3813, %v5566, 0
        %5588 = vrot.lane.b32.xlu0 %v2686, 8
        %v5589 = vpop.permute.xlu0 %5588
        %5590 = vrot.lane.b32.xlu0 %v2721, 8
        %v5591 = vpop.permute.xlu0 %5590
        %5592 = vrot.lane.b32.xlu0 %v2776, 16
        %v5593 = vpop.permute.xlu0 %5592
        %5594 = vrot.lane.b32.xlu0 %v2811, 16
        %v5595 = vpop.permute.xlu0 %5594
        %5596 = vrot.lane.b32.xlu0 %v2860, 24
        %v5597 = vpop.permute.xlu0 %5596
        %5598 = vrot.lane.b32.xlu0 %v2865, 24
        %v5599 = vpop.permute.xlu0 %5598
        %5600 = vrot.lane.b32.xlu0 %v4004, 32
        %v5601 = vpop.permute.xlu0 %5600
        %5602 = vrot.lane.b32.xlu0 %v4005, 32
        %v5603 = vpop.permute.xlu0 %5602
        %5604 = vrot.lane.b32.xlu0 %v4006, 32
        %v5605 = vpop.permute.xlu0 %5604
        %5606 = vrot.lane.b32.xlu0 %v4007, 32
        %v5607 = vpop.permute.xlu0 %5606
        %5608 = vrot.lane.b32.xlu0 %v4008, 32
        %v5609 = vpop.permute.xlu0 %5608
        %5610 = vrot.lane.b32.xlu0 %v4009, 32
        %v5611 = vpop.permute.xlu0 %5610
        %5612 = vrot.lane.b32.xlu0 %v4010, 32
        %v5613 = vpop.permute.xlu0 %5612
        %5614 = vrot.lane.b32.xlu0 %v4011, 32
        %v5615 = vpop.permute.xlu0 %5614
        %5616 = vrot.lane.b32.xlu0 %v4012, 32
        %v5617 = vpop.permute.xlu0 %5616
        %5618 = vrot.lane.b32.xlu0 %v4013, 32
        %v5619 = vpop.permute.xlu0 %5618
        %5620 = vrot.lane.b32.xlu0 %v2311, 40
        %v5621 = vpop.permute.xlu0 %5620
        %5622 = vrot.lane.b32.xlu0 %v2316, 40
        %v5623 = vpop.permute.xlu0 %5622
        %5624 = vrot.lane.b32.xlu0 %v2383, 48
        %v5625 = vpop.permute.xlu0 %5624
        %5626 = vrot.lane.b32.xlu0 %v2418, 48
        %v5627 = vpop.permute.xlu0 %5626
        %5628 = vrot.lane.b32.xlu0 %v2473, 56
        %v5629 = vpop.permute.xlu0 %5628
        %5630 = vrot.lane.b32.xlu0 %v2508, 56
        %v5631 = vpop.permute.xlu0 %5630
        %5632 = vrot.lane.b32.xlu0 %v2551, 64
        %v5633 = vpop.permute.xlu0 %5632
        %5634 = vrot.lane.b32.xlu0 %v2556, 64
        %v5635 = vpop.permute.xlu0 %5634
        %5636 = vrot.lane.b32.xlu0 %v3895, 72
        %v5637 = vpop.permute.xlu0 %5636
        %5638 = vrot.lane.b32.xlu0 %v3896, 72
        %v5639 = vpop.permute.xlu0 %5638
        %5640 = vrot.lane.b32.xlu0 %v3897, 72
        %v5641 = vpop.permute.xlu0 %5640
        %5642 = vrot.lane.b32.xlu0 %v3898, 72
        %v5643 = vpop.permute.xlu0 %5642
        %5644 = vrot.lane.b32.xlu0 %v4114, 72
        %v5645 = vpop.permute.xlu0 %5644
        %5646 = vrot.lane.b32.xlu0 %v3900, 72
        %v5647 = vpop.permute.xlu0 %5646
        %5648 = vrot.lane.b32.xlu0 %v3901, 72
        %v5649 = vpop.permute.xlu0 %5648
        %5650 = vrot.lane.b32.xlu0 %v3902, 72
        %v5651 = vpop.permute.xlu0 %5650
        %5652 = vrot.lane.b32.xlu0 %v3903, 72
        %v5653 = vpop.permute.xlu0 %5652
        %5654 = vrot.lane.b32.xlu0 %v4115, 72
        %v5655 = vpop.permute.xlu0 %5654
        %5656 = vrot.lane.b32.xlu0 %v2651, 80
        %v5657 = vpop.permute.xlu0 %5656
        %5658 = vrot.lane.b32.xlu0 %v2652, 80
        %v5659 = vpop.permute.xlu0 %5658
        %5660 = vrot.lane.b32.xlu0 %v2653, 80
        %v5661 = vpop.permute.xlu0 %5660
        %5662 = vrot.lane.b32.xlu0 %v2654, 80
        %v5663 = vpop.permute.xlu0 %5662
        %5664 = vrot.lane.b32.xlu0 %v3431, 80
        %v5665 = vpop.permute.xlu0 %5664
        %5666 = vrot.lane.b32.xlu0 %v2656, 80
        %v5667 = vpop.permute.xlu0 %5666
        %5668 = vrot.lane.b32.xlu0 %v2657, 80
        %v5669 = vpop.permute.xlu0 %5668
        %5670 = vrot.lane.b32.xlu0 %v2658, 80
        %v5671 = vpop.permute.xlu0 %5670
        %5672 = vrot.lane.b32.xlu0 %v2659, 80
        %v5673 = vpop.permute.xlu0 %5672
        %5674 = vrot.lane.b32.xlu0 %v3432, 80
        %v5675 = vpop.permute.xlu0 %5674
        %5676 = vrot.lane.b32.xlu0 %v2693, 88
        %v5677 = vpop.permute.xlu0 %5676
        %5678 = vrot.lane.b32.xlu0 %v2700, 88
        %v5679 = vpop.permute.xlu0 %5678
        %5680 = vrot.lane.b32.xlu0 %v2707, 88
        %v5681 = vpop.permute.xlu0 %5680
        %5682 = vrot.lane.b32.xlu0 %v2714, 88
        %v5683 = vpop.permute.xlu0 %5682
        %5684 = vrot.lane.b32.xlu0 %v3399, 88
        %v5685 = vpop.permute.xlu0 %5684
        %5686 = vrot.lane.b32.xlu0 %v2728, 88
        %v5687 = vpop.permute.xlu0 %5686
        %5688 = vrot.lane.b32.xlu0 %v2735, 88
        %v5689 = vpop.permute.xlu0 %5688
        %5690 = vrot.lane.b32.xlu0 %v2742, 88
        %v5691 = vpop.permute.xlu0 %5690
        %5692 = vrot.lane.b32.xlu0 %v2749, 88
        %v5693 = vpop.permute.xlu0 %5692
        %5694 = vrot.lane.b32.xlu0 %v3406, 88
        %v5695 = vpop.permute.xlu0 %5694
        %5696 = vrot.lane.b32.xlu0 %v2783, 96
        %v5697 = vpop.permute.xlu0 %5696
        %5698 = vrot.lane.b32.xlu0 %v2790, 96
        %v5699 = vpop.permute.xlu0 %5698
        %5700 = vrot.lane.b32.xlu0 %v2797, 96
        %v5701 = vpop.permute.xlu0 %5700
        %5702 = vrot.lane.b32.xlu0 %v2804, 96
        %v5703 = vpop.permute.xlu0 %5702
        %5704 = vrot.lane.b32.xlu0 %v3439, 96
        %v5705 = vpop.permute.xlu0 %5704
        %5706 = vrot.lane.b32.xlu0 %v2818, 96
        %v5707 = vpop.permute.xlu0 %5706
        %5708 = vrot.lane.b32.xlu0 %v2825, 96
        %v5709 = vpop.permute.xlu0 %5708
        %5710 = vrot.lane.b32.xlu0 %v2832, 96
        %v5711 = vpop.permute.xlu0 %5710
        %5712 = vrot.lane.b32.xlu0 %v2839, 96
        %v5713 = vpop.permute.xlu0 %5712
        %5714 = vrot.lane.b32.xlu0 %v3446, 96
        %v5715 = vpop.permute.xlu0 %5714
        %5716 = vrot.lane.b32.xlu0 %v2861, 104
        %v5717 = vpop.permute.xlu0 %5716
        %5718 = vrot.lane.b32.xlu0 %v2862, 104
        %v5719 = vpop.permute.xlu0 %5718
        %5720 = vrot.lane.b32.xlu0 %v2863, 104
        %v5721 = vpop.permute.xlu0 %5720
        %5722 = vrot.lane.b32.xlu0 %v2864, 104
        %v5723 = vpop.permute.xlu0 %5722
        %5724 = vrot.lane.b32.xlu0 %v3467, 104
        %v5725 = vpop.permute.xlu0 %5724
        %5726 = vrot.lane.b32.xlu0 %v2866, 104
        %v5727 = vpop.permute.xlu0 %5726
        %5728 = vrot.lane.b32.xlu0 %v2867, 104
        %v5729 = vpop.permute.xlu0 %5728
        %5730 = vrot.lane.b32.xlu0 %v2868, 104
        %v5731 = vpop.permute.xlu0 %5730
        %5732 = vrot.lane.b32.xlu0 %v2869, 104
        %v5733 = vpop.permute.xlu0 %5732
        %5734 = vrot.lane.b32.xlu0 %v3468, 104
        %v5735 = vpop.permute.xlu0 %5734
        %v5736 = vrot.slane %v3431, 1
        %v5737 = vrot.slane %v3432, 1
        %5738 = vrot.lane.b32.xlu0 %v4005, 112
        %v5739 = vpop.permute.xlu0 %5738
        %5740 = vrot.lane.b32.xlu0 %v4006, 112
        %v5741 = vpop.permute.xlu0 %5740
        %5742 = vrot.lane.b32.xlu0 %v4007, 112
        %v5743 = vpop.permute.xlu0 %5742
        %5744 = vrot.lane.b32.xlu0 %v4008, 112
        %v5745 = vpop.permute.xlu0 %5744
        %5746 = vrot.lane.b32.xlu0 %v5736, 112
        %v5747 = vpop.permute.xlu0 %5746
        %5748 = vrot.lane.b32.xlu0 %v4010, 112
        %v5749 = vpop.permute.xlu0 %5748
        %5750 = vrot.lane.b32.xlu0 %v4011, 112
        %v5751 = vpop.permute.xlu0 %5750
        %5752 = vrot.lane.b32.xlu0 %v4012, 112
        %v5753 = vpop.permute.xlu0 %5752
        %5754 = vrot.lane.b32.xlu0 %v4013, 112
        %v5755 = vpop.permute.xlu0 %5754
        %5756 = vrot.lane.b32.xlu0 %v5737, 112
        %v5757 = vpop.permute.xlu0 %5756
        %5758 = vrot.lane.b32.xlu0 %v2312, 120
        %v5759 = vpop.permute.xlu0 %5758
        %5760 = vrot.lane.b32.xlu0 %v2313, 120
        %v5761 = vpop.permute.xlu0 %5760
        %5762 = vrot.lane.b32.xlu0 %v2314, 120
        %v5763 = vpop.permute.xlu0 %5762
        %5764 = vrot.lane.b32.xlu0 %v2920, 120
        %v5765 = vpop.permute.xlu0 %5764
        %5766 = vrot.lane.b32.xlu0 %v3519, 120
        %v5767 = vpop.permute.xlu0 %5766
        %5768 = vrot.lane.b32.xlu0 %v2317, 120
        %v5769 = vpop.permute.xlu0 %5768
        %5770 = vrot.lane.b32.xlu0 %v2318, 120
        %v5771 = vpop.permute.xlu0 %5770
        %5772 = vrot.lane.b32.xlu0 %v2319, 120
        %v5773 = vpop.permute.xlu0 %5772
        %5774 = vrot.lane.b32.xlu0 %v2921, 120
        %v5775 = vpop.permute.xlu0 %5774
        %5776 = vrot.lane.b32.xlu0 %v3520, 120
        %v5777 = vpop.permute.xlu0 %5776
        %v5780 = vsel %vm3058, %v2255, %v5589
        %v5783 = vsel %vm3058, %v2283, %v5591
        %v5785 = vsel %vm3089, %v5780, %v5593
        %v5787 = vsel %vm3089, %v5783, %v5595
        %v5789 = vsel %vm3110, %v5785, %v5597
        %v5791 = vsel %vm3110, %v5787, %v5599
        %v5793 = vsel %vm3131, %v5789, %v5601
        %v5795 = vsel %vm3131, %v3682, %v5603
        %v5797 = vsel %vm3131, %v3684, %v5605
        %v5799 = vsel %vm3131, %v3686, %v5607
        %v5801 = vsel %vm3131, %v3688, %v5609
        %v5803 = vsel %vm3131, %v5791, %v5611
        %v5805 = vsel %vm3131, %v3692, %v5613
        %v5807 = vsel %vm3131, %v3694, %v5615
        %v5809 = vsel %vm3131, %v3696, %v5617
        %v5811 = vsel %vm3131, %v3698, %v5619
        %v5813 = vsel %vm3152, %v5793, %v5621
        %v5814 = vsel %vm3152, %v5795, %v3522
        %v5815 = vsel %vm3152, %v5797, %v3524
        %v5816 = vsel %vm3152, %v5799, %v3526
        %v5817 = vsel %vm3152, %v5801, %v3528
        %v5819 = vsel %vm3152, %v5803, %v5623
        %v5820 = vsel %vm3152, %v5805, %v3532
        %v5821 = vsel %vm3152, %v5807, %v3534
        %v5822 = vsel %vm3152, %v5809, %v3536
        %v5823 = vsel %vm3152, %v5811, %v3538
        %v5825 = vsel %vm3173, %v5813, %v5625
        %v5826 = vsel %vm3173, %v5814, %v3556
        %v5827 = vsel %vm3173, %v5815, %v3558
        %v5828 = vsel %vm3173, %v5816, %v3560
        %v5829 = vsel %vm3173, %v5817, %v3562
        %v5831 = vsel %vm3173, %v5819, %v5627
        %v5832 = vsel %vm3173, %v5820, %v3566
        %v5833 = vsel %vm3173, %v5821, %v3568
        %v5834 = vsel %vm3173, %v5822, %v3570
        %v5835 = vsel %vm3173, %v5823, %v3572
        %v5837 = vsel %vm3194, %v5825, %v5629
        %v5838 = vsel %vm3194, %v5826, %v3590
        %v5839 = vsel %vm3194, %v5827, %v3592
        %v5840 = vsel %vm3194, %v5828, %v3594
        %v5841 = vsel %vm3194, %v5829, %v3596
        %v5843 = vsel %vm3194, %v5831, %v5631
        %v5844 = vsel %vm3194, %v5832, %v3600
        %v5845 = vsel %vm3194, %v5833, %v3602
        %v5846 = vsel %vm3194, %v5834, %v3604
        %v5847 = vsel %vm3194, %v5835, %v3606
        %v5849 = vsel %vm3215, %v5837, %v5633
        %v5850 = vsel %vm3215, %v5838, %v3612
        %v5851 = vsel %vm3215, %v5839, %v3614
        %v5852 = vsel %vm3215, %v5840, %v3616
        %v5853 = vsel %vm3215, %v5841, %v3618
        %v5855 = vsel %vm3215, %v5843, %v5635
        %v5856 = vsel %vm3215, %v5844, %v3622
        %v5857 = vsel %vm3215, %v5845, %v3624
        %v5858 = vsel %vm3215, %v5846, %v3626
        %v5859 = vsel %vm3215, %v5847, %v3628
        %v5861 = vsel %vm3236, %v5849, %v5637
        %v5863 = vsel %vm3236, %v5850, %v5639
        %v5865 = vsel %vm3236, %v5851, %v5641
        %v5867 = vsel %vm3236, %v5852, %v5643
        %v5869 = vsel %vm3236, %v5853, %v5645
        %v5871 = vsel %vm3236, %v5855, %v5647
        %v5873 = vsel %vm3236, %v5856, %v5649
        %v5875 = vsel %vm3236, %v5857, %v5651
        %v5877 = vsel %vm3236, %v5858, %v5653
        %v5879 = vsel %vm3236, %v5859, %v5655
        %v5881 = vsel %vm3257, %v5861, %v5657
        %v5883 = vsel %vm3257, %v5863, %v5659
        %v5885 = vsel %vm3257, %v5865, %v5661
        %v5887 = vsel %vm3257, %v5867, %v5663
        %v5889 = vsel %vm3257, %v5869, %v5665
        %v5891 = vsel %vm3257, %v5871, %v5667
        %v5893 = vsel %vm3257, %v5873, %v5669
        %v5895 = vsel %vm3257, %v5875, %v5671
        %v5897 = vsel %vm3257, %v5877, %v5673
        %v5899 = vsel %vm3257, %v5879, %v5675
        %v5901 = vsel %vm3278, %v5881, %v5677
        %v5903 = vsel %vm3278, %v5883, %v5679
        %v5905 = vsel %vm3278, %v5885, %v5681
        %v5907 = vsel %vm3278, %v5887, %v5683
        %v5909 = vsel %vm3278, %v5889, %v5685
        %v5911 = vsel %vm3278, %v5891, %v5687
        %v5913 = vsel %vm3278, %v5893, %v5689
        %v5915 = vsel %vm3278, %v5895, %v5691
        %v5917 = vsel %vm3278, %v5897, %v5693
        %v5919 = vsel %vm3278, %v5899, %v5695
        %v5921 = vsel %vm3299, %v5901, %v5697
        %v5923 = vsel %vm3299, %v5903, %v5699
        %v5925 = vsel %vm3299, %v5905, %v5701
        %v5927 = vsel %vm3299, %v5907, %v5703
        %v5929 = vsel %vm3299, %v5909, %v5705
        %v5931 = vsel %vm3299, %v5911, %v5707
        %v5933 = vsel %vm3299, %v5913, %v5709
        %v5935 = vsel %vm3299, %v5915, %v5711
        %v5937 = vsel %vm3299, %v5917, %v5713
        %v5939 = vsel %vm3299, %v5919, %v5715
        %v5941 = vsel %vm3320, %v5921, %v5717
        %v5943 = vsel %vm3320, %v5923, %v5719
        %v5945 = vsel %vm3320, %v5925, %v5721
        %v5947 = vsel %vm3320, %v5927, %v5723
        %v5949 = vsel %vm3320, %v5929, %v5725
        %v5951 = vsel %vm3320, %v5931, %v5727
        %v5953 = vsel %vm3320, %v5933, %v5729
        %v5955 = vsel %vm3320, %v5935, %v5731
        %v5957 = vsel %vm3320, %v5937, %v5733
        %v5959 = vsel %vm3320, %v5939, %v5735
        %v5961 = vsel %vm3341, %v5941, %v5739
        %v5963 = vsel %vm3341, %v5943, %v5741
        %v5965 = vsel %vm3341, %v5945, %v5743
        %v5967 = vsel %vm3341, %v5947, %v5745
        %v5969 = vsel %vm3341, %v5949, %v5747
        %v5971 = vsel %vm3341, %v5951, %v5749
        %v5973 = vsel %vm3341, %v5953, %v5751
        %v5975 = vsel %vm3341, %v5955, %v5753
        %v5977 = vsel %vm3341, %v5957, %v5755
        %v5979 = vsel %vm3341, %v5959, %v5757
        %v5981 = vsel %vm3362, %v5961, %v5759
        %v5984 = vsel %vm3362, %v5963, %v5761
        %v5987 = vsel %vm3362, %v5965, %v5763
        %v5990 = vsel %vm3362, %v5967, %v5765
        %v5993 = vsel %vm3362, %v5969, %v5767
        %v5996 = vsel %vm3362, %v5971, %v5769
        %v5999 = vsel %vm3362, %v5973, %v5771
        %v6002 = vsel %vm3362, %v5975, %v5773
        %v6005 = vsel %vm3362, %v5977, %v5775
        %v6008 = vsel %vm3362, %v5979, %v5777
        %6010 = vrot.lane.b32.xlu0 %v2920, 8
        %v6011 = vpop.permute.xlu0 %6010
        %6012 = vrot.lane.b32.xlu0 %v3519, 8
        %v6013 = vpop.permute.xlu0 %6012
        %6014 = vrot.lane.b32.xlu0 %v2921, 8
        %v6015 = vpop.permute.xlu0 %6014
        %6016 = vrot.lane.b32.xlu0 %v3520, 8
        %v6017 = vpop.permute.xlu0 %6016
        %6018 = vrot.lane.b32.xlu0 %v2948, 16
        %v6019 = vpop.permute.xlu0 %6018
        %6020 = vrot.lane.b32.xlu0 %v3547, 16
        %v6021 = vpop.permute.xlu0 %6020
        %6022 = vrot.lane.b32.xlu0 %v2955, 16
        %v6023 = vpop.permute.xlu0 %6022
        %6024 = vrot.lane.b32.xlu0 %v3554, 16
        %v6025 = vpop.permute.xlu0 %6024
        %6026 = vrot.lane.b32.xlu0 %v2982, 24
        %v6027 = vpop.permute.xlu0 %6026
        %6028 = vrot.lane.b32.xlu0 %v3581, 24
        %v6029 = vpop.permute.xlu0 %6028
        %6030 = vrot.lane.b32.xlu0 %v2989, 24
        %v6031 = vpop.permute.xlu0 %6030
        %6032 = vrot.lane.b32.xlu0 %v3588, 24
        %v6033 = vpop.permute.xlu0 %6032
        %v6034 = vrot.slane %v2785, 7
        %v6035 = vor.u32 %v6034, %v2787
        %v6036 = vrot.slane %v2792, 7
        %v6037 = vor.u32 %v6036, %v2794
        %v6038 = vrot.slane %v2799, 7
        %v6039 = vor.u32 %v6038, %v2801
        %v6040 = vrot.slane %v3434, 7
        %v6041 = vor.u32 %v6040, %v3436
        %v6042 = vrot.slane %v5423, 7
        %v6043 = vor.u32 %v6042, %v5425
        %v6044 = vrot.slane %v2820, 7
        %v6045 = vor.u32 %v6044, %v2822
        %v6046 = vrot.slane %v2827, 7
        %v6047 = vor.u32 %v6046, %v2829
        %v6048 = vrot.slane %v2834, 7
        %v6049 = vor.u32 %v6048, %v2836
        %v6050 = vrot.slane %v3441, 7
        %v6051 = vor.u32 %v6050, %v3443
        %v6052 = vrot.slane %v5430, 7
        %v6053 = vor.u32 %v6052, %v5432
        %6054 = vrot.lane.b32.xlu0 %v6035, 32
        %v6055 = vpop.permute.xlu0 %6054
        %6056 = vrot.lane.b32.xlu0 %v6037, 32
        %v6057 = vpop.permute.xlu0 %6056
        %6058 = vrot.lane.b32.xlu0 %v6039, 32
        %v6059 = vpop.permute.xlu0 %6058
        %6060 = vrot.lane.b32.xlu0 %v6041, 32
        %v6061 = vpop.permute.xlu0 %6060
        %6062 = vrot.lane.b32.xlu0 %v6043, 32
        %v6063 = vpop.permute.xlu0 %6062
        %6064 = vrot.lane.b32.xlu0 %v6045, 32
        %v6065 = vpop.permute.xlu0 %6064
        %6066 = vrot.lane.b32.xlu0 %v6047, 32
        %v6067 = vpop.permute.xlu0 %6066
        %6068 = vrot.lane.b32.xlu0 %v6049, 32
        %v6069 = vpop.permute.xlu0 %6068
        %6070 = vrot.lane.b32.xlu0 %v6051, 32
        %v6071 = vpop.permute.xlu0 %6070
        %6072 = vrot.lane.b32.xlu0 %v6053, 32
        %v6073 = vpop.permute.xlu0 %6072
        %6074 = vrot.lane.b32.xlu0 %v3036, 40
        %v6075 = vpop.permute.xlu0 %6074
        %6076 = vrot.lane.b32.xlu0 %v5364, 40
        %v6077 = vpop.permute.xlu0 %6076
        %6078 = vrot.lane.b32.xlu0 %v3037, 40
        %v6079 = vpop.permute.xlu0 %6078
        %6080 = vrot.lane.b32.xlu0 %v5365, 40
        %v6081 = vpop.permute.xlu0 %6080
        %6082 = vrot.lane.b32.xlu0 %v3431, 48
        %v6083 = vpop.permute.xlu0 %6082
        %6084 = vrot.lane.b32.xlu0 %v5390, 48
        %v6085 = vpop.permute.xlu0 %6084
        %6086 = vrot.lane.b32.xlu0 %v3432, 48
        %v6087 = vpop.permute.xlu0 %6086
        %6088 = vrot.lane.b32.xlu0 %v5391, 48
        %v6089 = vpop.permute.xlu0 %6088
        %6090 = vrot.lane.b32.xlu0 %v3399, 56
        %v6091 = vpop.permute.xlu0 %6090
        %6092 = vrot.lane.b32.xlu0 %v5406, 56
        %v6093 = vpop.permute.xlu0 %6092
        %6094 = vrot.lane.b32.xlu0 %v3406, 56
        %v6095 = vpop.permute.xlu0 %6094
        %6096 = vrot.lane.b32.xlu0 %v5413, 56
        %v6097 = vpop.permute.xlu0 %6096
        %6098 = vrot.lane.b32.xlu0 %v3439, 64
        %v6099 = vpop.permute.xlu0 %6098
        %6100 = vrot.lane.b32.xlu0 %v5428, 64
        %v6101 = vpop.permute.xlu0 %6100
        %6102 = vrot.lane.b32.xlu0 %v3446, 64
        %v6103 = vpop.permute.xlu0 %6102
        %6104 = vrot.lane.b32.xlu0 %v5435, 64
        %v6105 = vpop.permute.xlu0 %6104
        %v6108 = vsel %vm3058, %v2239, %v6011
        %v6111 = vsel %vm3058, %v2240, %v6013
        %v6114 = vsel %vm3058, %v2267, %v6015
        %v6117 = vsel %vm3058, %v2268, %v6017
        %v6119 = vsel %vm3089, %v6108, %v6019
        %v6121 = vsel %vm3089, %v6111, %v6021
        %v6123 = vsel %vm3089, %v6114, %v6023
        %v6125 = vsel %vm3089, %v6117, %v6025
        %v6127 = vsel %vm3110, %v6119, %v6027
        %v6129 = vsel %vm3110, %v6121, %v6029
        %v6131 = vsel %vm3110, %v6123, %v6031
        %v6133 = vsel %vm3110, %v6125, %v6033
        %v6135 = vsel %vm3131, %v3116, %v6055
        %v6137 = vsel %vm3131, %v3118, %v6057
        %v6139 = vsel %vm3131, %v3120, %v6059
        %v6141 = vsel %vm3131, %v6127, %v6061
        %v6143 = vsel %vm3131, %v6129, %v6063
        %v6145 = vsel %vm3131, %v3126, %v6065
        %v6147 = vsel %vm3131, %v3128, %v6067
        %v6149 = vsel %vm3131, %v3130, %v6069
        %v6151 = vsel %vm3131, %v6131, %v6071
        %v6153 = vsel %vm3131, %v6133, %v6073
        %v6154 = vsel %vm3152, %v6135, %v2615
        %v6155 = vsel %vm3152, %v6137, %v2617
        %v6156 = vsel %vm3152, %v6139, %v2619
        %v6158 = vsel %vm3152, %v6141, %v6075
        %v6160 = vsel %vm3152, %v6143, %v6077
        %v6161 = vsel %vm3152, %v6145, %v2625
        %v6162 = vsel %vm3152, %v6147, %v2627
        %v6163 = vsel %vm3152, %v6149, %v2629
        %v6165 = vsel %vm3152, %v6151, %v6079
        %v6167 = vsel %vm3152, %v6153, %v6081
        %v6168 = vsel %vm3173, %v6154, %v2665
        %v6169 = vsel %vm3173, %v6155, %v2667
        %v6170 = vsel %vm3173, %v6156, %v2669
        %v6172 = vsel %vm3173, %v6158, %v6083
        %v6174 = vsel %vm3173, %v6160, %v6085
        %v6175 = vsel %vm3173, %v6161, %v2675
        %v6176 = vsel %vm3173, %v6162, %v2677
        %v6177 = vsel %vm3173, %v6163, %v2679
        %v6179 = vsel %vm3173, %v6165, %v6087
        %v6181 = vsel %vm3173, %v6167, %v6089
        %v6182 = vsel %vm3194, %v6168, %v2755
        %v6183 = vsel %vm3194, %v6169, %v2757
        %v6184 = vsel %vm3194, %v6170, %v2759
        %v6186 = vsel %vm3194, %v6172, %v6091
        %v6188 = vsel %vm3194, %v6174, %v6093
        %v6189 = vsel %vm3194, %v6175, %v2765
        %v6190 = vsel %vm3194, %v6176, %v2767
        %v6191 = vsel %vm3194, %v6177, %v2769
        %v6193 = vsel %vm3194, %v6179, %v6095
        %v6195 = vsel %vm3194, %v6181, %v6097
        %v6196 = vsel %vm3215, %v6182, %v2845
        %v6197 = vsel %vm3215, %v6183, %v2847
        %v6198 = vsel %vm3215, %v6184, %v2849
        %v6200 = vsel %vm3215, %v6186, %v6099
        %v6202 = vsel %vm3215, %v6188, %v6101
        %v6203 = vsel %vm3215, %v6189, %v2855
        %v6204 = vsel %vm3215, %v6190, %v2857
        %v6205 = vsel %vm3215, %v6191, %v2859
        %v6207 = vsel %vm3215, %v6193, %v6103
        %v6209 = vsel %vm3215, %v6195, %v6105
        %v6210 = vshrl.u32 %v6196, 16
        %v6212 = vshll.u32 %v6196, 16
        %v6214 = vrot.slane %v6212, 1
        %v6215 = vor.u32 %v6210, %v6214
        %v6216 = vshrl.u32 %v6197, 16
        %v6218 = vshll.u32 %v6197, 16
        %v6220 = vrot.slane %v6218, 1
        %v6221 = vor.u32 %v6216, %v6220
        %v6222 = vshrl.u32 %v6198, 16
        %v6224 = vshll.u32 %v6198, 16
        %v6226 = vrot.slane %v6224, 1
        %v6227 = vor.u32 %v6222, %v6226
        %v6228 = vshrl.u32 %v6200, 16
        %v6230 = vshll.u32 %v6200, 16
        %v6232 = vrot.slane %v6230, 1
        %v6233 = vor.u32 %v6228, %v6232
        %v6234 = vshrl.u32 %v6202, 16
        %v6236 = vshll.u32 %v6202, 16
        %v6238 = vrot.slane %v6236, 1
        %v6239 = vor.u32 %v6234, %v6238
        %v6240 = vshrl.u32 %v6203, 16
        %v6242 = vshll.u32 %v6203, 16
        %v6244 = vrot.slane %v6242, 1
        %v6245 = vor.u32 %v6240, %v6244
        %v6246 = vshrl.u32 %v6204, 16
        %v6248 = vshll.u32 %v6204, 16
        %v6250 = vrot.slane %v6248, 1
        %v6251 = vor.u32 %v6246, %v6250
        %v6252 = vshrl.u32 %v6205, 16
        %v6254 = vshll.u32 %v6205, 16
        %v6256 = vrot.slane %v6254, 1
        %v6257 = vor.u32 %v6252, %v6256
        %v6258 = vshrl.u32 %v6207, 16
        %v6260 = vshll.u32 %v6207, 16
        %v6262 = vrot.slane %v6260, 1
        %v6263 = vor.u32 %v6258, %v6262
        %v6264 = vshrl.u32 %v6209, 16
        %v6266 = vshll.u32 %v6209, 16
        %v6268 = vrot.slane %v6266, 1
        %v6269 = vor.u32 %v6264, %v6268
        %v6280 = vsel %vm3813, %v5981, 0
        %v6281 = vsel %vm3813, %v6215, 0
        %v6282 = vsel %vm3813, %v5984, 0
        %v6283 = vsel %vm3813, %v6221, 0
        %v6284 = vsel %vm3813, %v5987, 0
        %v6285 = vsel %vm3813, %v6227, 0
        %v6286 = vsel %vm3813, %v5990, 0
        %v6287 = vsel %vm3813, %v6233, 0
        %v6288 = vsel %vm3813, %v5993, 0
        %v6289 = vsel %vm3813, %v6239, 0
        %v6290 = vsel %vm3813, %v5996, 0
        %v6291 = vsel %vm3813, %v6245, 0
        %v6292 = vsel %vm3813, %v5999, 0
        %v6293 = vsel %vm3813, %v6251, 0
        %v6294 = vsel %vm3813, %v6002, 0
        %v6295 = vsel %vm3813, %v6257, 0
        %v6296 = vsel %vm3813, %v6005, 0
        %v6297 = vsel %vm3813, %v6263, 0
        %v6298 = vsel %vm3813, %v6008, 0
        %v6299 = vsel %vm3813, %v6269, 0
        %v6380 = vunpack.c.l.b16 %v3814
        %v6381 = vunpack.c.l.b16 %v3815
        %v6382 = vunpack.c.l.b16 %v3816
        %v6383 = vunpack.c.l.b16 %v3817
        %v6384 = vunpack.c.l.b16 %v3818
        %v6385 = vunpack.c.l.b16 %v3819
        %v6386 = vunpack.c.l.b16 %v3820
        %v6387 = vunpack.c.l.b16 %v3821
        %v6388 = vunpack.c.l.b16 %v3822
        %v6389 = vunpack.c.l.b16 %v3823
        %v6390 = vunpack.c.l.b16 %v4896
        %v6391 = vunpack.c.l.b16 %v4897
        %v6392 = vunpack.c.l.b16 %v4898
        %v6393 = vunpack.c.l.b16 %v4899
        %v6394 = vunpack.c.l.b16 %v4900
        %v6395 = vunpack.c.l.b16 %v4901
        %v6396 = vunpack.c.l.b16 %v4902
        %v6397 = vunpack.c.l.b16 %v4903
        %v6398 = vunpack.c.l.b16 %v4904
        %v6399 = vunpack.c.l.b16 %v4905
        %v6400 = vunpack.c.l.b16 %v5568
        %v6401 = vunpack.c.l.b16 %v5569
        %v6402 = vunpack.c.l.b16 %v5570
        %v6403 = vunpack.c.l.b16 %v5571
        %v6404 = vunpack.c.l.b16 %v5572
        %v6405 = vunpack.c.l.b16 %v5573
        %v6406 = vunpack.c.l.b16 %v5574
        %v6407 = vunpack.c.l.b16 %v5575
        %v6408 = vunpack.c.l.b16 %v5576
        %v6409 = vunpack.c.l.b16 %v5577
        %v6410 = vunpack.c.l.b16 %v6280
        %v6411 = vunpack.c.l.b16 %v6281
        %v6412 = vunpack.c.l.b16 %v6282
        %v6413 = vunpack.c.l.b16 %v6283
        %v6414 = vunpack.c.l.b16 %v6284
        %v6415 = vunpack.c.l.b16 %v6285
        %v6416 = vunpack.c.l.b16 %v6286
        %v6417 = vunpack.c.l.b16 %v6287
        %v6418 = vunpack.c.l.b16 %v6288
        %v6419 = vunpack.c.l.b16 %v6289
        %v6420 = vunpack.c.l.b16 %v3824
        %v6421 = vunpack.c.l.b16 %v3825
        %v6422 = vunpack.c.l.b16 %v3826
        %v6423 = vunpack.c.l.b16 %v3827
        %v6424 = vunpack.c.l.b16 %v3828
        %v6425 = vunpack.c.l.b16 %v3829
        %v6426 = vunpack.c.l.b16 %v3830
        %v6427 = vunpack.c.l.b16 %v3831
        %v6428 = vunpack.c.l.b16 %v3832
        %v6429 = vunpack.c.l.b16 %v3833
        %v6430 = vunpack.c.l.b16 %v4906
        %v6431 = vunpack.c.l.b16 %v4907
        %v6432 = vunpack.c.l.b16 %v4908
        %v6433 = vunpack.c.l.b16 %v4909
        %v6434 = vunpack.c.l.b16 %v4910
        %v6435 = vunpack.c.l.b16 %v4911
        %v6436 = vunpack.c.l.b16 %v4912
        %v6437 = vunpack.c.l.b16 %v4913
        %v6438 = vunpack.c.l.b16 %v4914
        %v6439 = vunpack.c.l.b16 %v4915
        %v6440 = vunpack.c.l.b16 %v5578
        %v6441 = vunpack.c.l.b16 %v5579
        %v6442 = vunpack.c.l.b16 %v5580
        %v6443 = vunpack.c.l.b16 %v5581
        %v6444 = vunpack.c.l.b16 %v5582
        %v6445 = vunpack.c.l.b16 %v5583
        %v6446 = vunpack.c.l.b16 %v5584
        %v6447 = vunpack.c.l.b16 %v5585
        %v6448 = vunpack.c.l.b16 %v5586
        %v6449 = vunpack.c.l.b16 %v5587
        %v6450 = vunpack.c.l.b16 %v6290
        %v6451 = vunpack.c.l.b16 %v6291
        %v6452 = vunpack.c.l.b16 %v6292
        %v6453 = vunpack.c.l.b16 %v6293
        %v6454 = vunpack.c.l.b16 %v6294
        %v6455 = vunpack.c.l.b16 %v6295
        %v6456 = vunpack.c.l.b16 %v6296
        %v6457 = vunpack.c.l.b16 %v6297
        %v6458 = vunpack.c.l.b16 %v6298
        %v6459 = vunpack.c.l.b16 %v6299
        %v6460 = vld [vmem:[%s3] sm:$0xf]
        %v6461 = vld [vmem:[%s3 + $0x4] sm:$0xf]
        %v6462 = vld [vmem:[%s3 + $0x8] sm:$0xf]
        %v6463 = vld [vmem:[%s3 + $0xc] sm:$0xf]
        %v6464 = vld [vmem:[%s3 + $0x10] sm:$0xf]
        %v6465 = vld [vmem:[%s3 + $0x14] sm:$0xf]
        %v6466 = vld [vmem:[%s3 + $0x18] sm:$0xf]
        %v6467 = vld [vmem:[%s3 + $0x1c] sm:$0xf]
        %v6468 = vld [vmem:[%s3 + $0x20] sm:$0xf]
        %v6469 = vld [vmem:[%s3 + $0x24] sm:$0xf]
        %v6470 = vld [vmem:[%s3 + $0x28] sm:$0xf]
        %v6471 = vld [vmem:[%s3 + $0x2c] sm:$0xf]
        %v6472 = vld [vmem:[%s3 + $0x30] sm:$0xf]
        %v6473 = vld [vmem:[%s3 + $0x34] sm:$0xf]
        %v6474 = vld [vmem:[%s3 + $0x38] sm:$0xf]
        %v6475 = vld [vmem:[%s3 + $0x3c] sm:$0xf]
        %v6476 = vld [vmem:[%s3 + $0x40] sm:$0xf]
        %v6477 = vld [vmem:[%s3 + $0x44] sm:$0xf]
        %v6478 = vld [vmem:[%s3 + $0x48] sm:$0xf]
        %v6479 = vld [vmem:[%s3 + $0x4c] sm:$0xf]
        %v6480 = vld [vmem:[%s3 + $0x50] sm:$0xf]
        %v6481 = vld [vmem:[%s3 + $0x54] sm:$0xf]
        %v6482 = vld [vmem:[%s3 + $0x58] sm:$0xf]
        %v6483 = vld [vmem:[%s3 + $0x5c] sm:$0xf]
        %v6484 = vld [vmem:[%s3 + $0x60] sm:$0xf]
        %v6485 = vpack.c.b16 %v6382, %v6380
        %v6486 = vpack.c.b16 %v6383, %v6381
        %v6487 = vpack.c.b16 %v6386, %v6384
        %v6488 = vpack.c.b16 %v6387, %v6385
        %v6489 = vpack.c.b16 %v6390, %v6388
        %v6490 = vpack.c.b16 %v6391, %v6389
        %v6491 = vpack.c.b16 %v6394, %v6392
        %v6492 = vpack.c.b16 %v6395, %v6393
        %v6493 = vpack.c.b16 %v6398, %v6396
        %v6494 = vpack.c.b16 %v6399, %v6397
        %v6495 = vpack.c.b16 %v6402, %v6400
        %v6496 = vpack.c.b16 %v6403, %v6401
        %v6497 = vpack.c.b16 %v6406, %v6404
        %v6498 = vpack.c.b16 %v6407, %v6405
        %v6499 = vpack.c.b16 %v6410, %v6408
        %v6500 = vpack.c.b16 %v6411, %v6409
        %v6501 = vpack.c.b16 %v6414, %v6412
        %v6502 = vpack.c.b16 %v6415, %v6413
        %v6503 = vpack.c.b16 %v6418, %v6416
        %v6504 = vpack.c.b16 %v6419, %v6417
        %v6505 = vpack.c.b16 %v6422, %v6420
        %v6506 = vpack.c.b16 %v6423, %v6421
        %v6507 = vpack.c.b16 %v6426, %v6424
        %v6508 = vpack.c.b16 %v6427, %v6425
        %v6509 = vpack.c.b16 %v6430, %v6428
        %v6510 = vpack.c.b16 %v6431, %v6429
        %v6511 = vpack.c.b16 %v6434, %v6432
        %v6512 = vpack.c.b16 %v6435, %v6433
        %v6513 = vpack.c.b16 %v6438, %v6436
        %v6514 = vpack.c.b16 %v6439, %v6437
        %v6515 = vpack.c.b16 %v6442, %v6440
        %v6516 = vpack.c.b16 %v6443, %v6441
        %v6517 = vpack.c.b16 %v6446, %v6444
        %v6518 = vpack.c.b16 %v6447, %v6445
        %v6519 = vpack.c.b16 %v6450, %v6448
        %v6520 = vpack.c.b16 %v6451, %v6449
        %v6521 = vpack.c.b16 %v6454, %v6452
        %v6522 = vpack.c.b16 %v6455, %v6453
        %v6523 = vpack.c.b16 %v6458, %v6456
        %v6524 = vpack.c.b16 %v6459, %v6457
        %v6570 = vunpack.c.l.b16 %v6460
        %v6571 = vunpack.c.l.b16 %v6461
        %v6572 = vunpack.c.l.b16 %v6462
        %v6573 = vunpack.c.l.b16 %v6463
        %v6574 = vunpack.c.l.b16 %v6464
        %v6575 = vunpack.c.l.b16 %v6465
        %v6576 = vunpack.c.l.b16 %v6466
        %v6577 = vunpack.c.l.b16 %v6467
        %v6578 = vunpack.c.l.b16 %v6468
        %v6579 = vunpack.c.l.b16 %v6469
        %v6580 = vunpack.c.l.b16 %v6470
        %v6581 = vunpack.c.l.b16 %v6471
        %v6582 = vunpack.c.l.b16 %v6472
        %v6583 = vunpack.c.l.b16 %v6473
        %v6584 = vunpack.c.l.b16 %v6474
        %v6585 = vunpack.c.l.b16 %v6475
        %v6586 = vunpack.c.l.b16 %v6476
        %v6587 = vunpack.c.l.b16 %v6477
        %v6588 = vunpack.c.l.b16 %v6478
        %v6589 = vunpack.c.l.b16 %v6479
        %v6590 = vunpack.c.l.b16 %v6480
        %v6591 = vunpack.c.l.b16 %v6481
        %v6592 = vunpack.c.l.b16 %v6482
        %v6593 = vunpack.c.l.b16 %v6483
        %v6594 = vunpack.c.l.b16 %v6484
        %v6595 = vpack.c.b16 %v6571, %v6570
        %v6596 = vpack.c.b16 %v6573, %v6572
        %v6597 = vpack.c.b16 %v6575, %v6574
        %v6598 = vpack.c.b16 %v6577, %v6576
        %v6599 = vpack.c.b16 %v6579, %v6578
        %v6600 = vpack.c.b16 %v6581, %v6580
        %v6601 = vpack.c.b16 %v6583, %v6582
        %v6602 = vpack.c.b16 %v6585, %v6584
        %v6603 = vpack.c.b16 %v6587, %v6586
        %v6604 = vpack.c.b16 %v6589, %v6588
        %v6605 = vpack.c.b16 %v6591, %v6590
        %v6606 = vpack.c.b16 %v6593, %v6592
        %v6607 = vpack.c.b16 %v6594, %v6594
        %v6621 = vsel %vm3236, %v6486, 0
        %v6624 = vsel %vm3236, %v6488, 0
        %v6627 = vsel %vm3236, %v6490, 0
        %v6630 = vsel %vm3236, %v6492, 0
        %v6633 = vsel %vm3236, %v6494, 0
        %v6636 = vsel %vm3236, %v6496, 0
        %v6639 = vsel %vm3236, %v6498, 0
        %v6642 = vsel %vm3236, %v6500, 0
        %v6645 = vsel %vm3236, %v6502, 0
        %v6648 = vsel %vm3236, %v6504, 0
        %v6651 = vsel %vm3236, %v6506, 0
        %v6654 = vsel %vm3236, %v6508, 0
        %v6657 = vsel %vm3236, %v6510, 0
        %v6660 = vsel %vm3236, %v6512, 0
        %v6663 = vsel %vm3236, %v6514, 0
        %v6666 = vsel %vm3236, %v6516, 0
        %v6669 = vsel %vm3236, %v6518, 0
        %v6672 = vsel %vm3236, %v6520, 0
        %v6675 = vsel %vm3236, %v6522, 0
        %v6678 = vsel %vm3236, %v6524, 0
        %vm6680 = vcmask 1043456
        %v6682 = vsel %vm6680, %v6607, 0
        %6684 = vmatpush.bf16.msra.mxu0 %v6602
        %6685 = vmatpush.bf16.msra.mxu0 %v6601
        %6686 = vmatpush.bf16.msra.mxu0 %v6600
        %6687 = vmatpush.bf16.msra.mxu0 %v6599
        %6688 = vmatpush.bf16.msra.mxu0 %v6598
        %6689 = vmatpush.bf16.msra.mxu0 %v6597
        %6690 = vmatpush.bf16.msra.mxu0 %v6596
        %6691 = vmatpush.bf16.msra.mxu0 %v6595
        %6692 = vmatmul.bf16.gmra.mxu0 %v6485
        %v6693 = vpop.f32.mrf.mxu0
        %v6694 = vadd.f32 0.0, %v6693
        %v6695 = vpop.f32.mrf.mxu0
        %v6696 = vadd.f32 0.0, %v6695
        %6697 = vmatmul.bf16.gmra.mxu0 %v6487
        %v6698 = vpop.f32.mrf.mxu0
        %v6699 = vadd.f32 0.0, %v6698
        %v6700 = vpop.f32.mrf.mxu0
        %v6701 = vadd.f32 0.0, %v6700
        %6702 = vmatmul.bf16.gmra.mxu0 %v6489
        %v6703 = vpop.f32.mrf.mxu0
        %v6704 = vadd.f32 0.0, %v6703
        %v6705 = vpop.f32.mrf.mxu0
        %v6706 = vadd.f32 0.0, %v6705
        %6707 = vmatmul.bf16.gmra.mxu0 %v6491
        %v6708 = vpop.f32.mrf.mxu0
        %v6709 = vadd.f32 0.0, %v6708
        %v6710 = vpop.f32.mrf.mxu0
        %v6711 = vadd.f32 0.0, %v6710
        %6712 = vmatmul.bf16.gmra.mxu0 %v6493
        %v6713 = vpop.f32.mrf.mxu0
        %v6714 = vadd.f32 0.0, %v6713
        %v6715 = vpop.f32.mrf.mxu0
        %v6716 = vadd.f32 0.0, %v6715
        %6717 = vmatmul.bf16.gmra.mxu0 %v6495
        %v6718 = vpop.f32.mrf.mxu0
        %v6719 = vadd.f32 0.0, %v6718
        %v6720 = vpop.f32.mrf.mxu0
        %v6721 = vadd.f32 0.0, %v6720
        %6722 = vmatmul.bf16.gmra.mxu0 %v6497
        %v6723 = vpop.f32.mrf.mxu0
        %v6724 = vadd.f32 0.0, %v6723
        %v6725 = vpop.f32.mrf.mxu0
        %v6726 = vadd.f32 0.0, %v6725
        %6727 = vmatmul.bf16.gmra.mxu0 %v6499
        %v6728 = vpop.f32.mrf.mxu0
        %v6729 = vadd.f32 0.0, %v6728
        %v6730 = vpop.f32.mrf.mxu0
        %v6731 = vadd.f32 0.0, %v6730
        %6732 = vmatmul.bf16.gmra.mxu0 %v6501
        %v6733 = vpop.f32.mrf.mxu0
        %v6734 = vadd.f32 0.0, %v6733
        %v6735 = vpop.f32.mrf.mxu0
        %v6736 = vadd.f32 0.0, %v6735
        %6737 = vmatmul.bf16.gmra.mxu0 %v6503
        %v6738 = vpop.f32.mrf.mxu0
        %v6739 = vadd.f32 0.0, %v6738
        %v6740 = vpop.f32.mrf.mxu0
        %v6741 = vadd.f32 0.0, %v6740
        %6742 = vmatmul.bf16.gmra.mxu0 %v6505
        %v6743 = vpop.f32.mrf.mxu0
        %v6744 = vadd.f32 0.0, %v6743
        %v6745 = vpop.f32.mrf.mxu0
        %v6746 = vadd.f32 0.0, %v6745
        %6747 = vmatmul.bf16.gmra.mxu0 %v6507
        %v6748 = vpop.f32.mrf.mxu0
        %v6749 = vadd.f32 0.0, %v6748
        %v6750 = vpop.f32.mrf.mxu0
        %v6751 = vadd.f32 0.0, %v6750
        %6752 = vmatmul.bf16.gmra.mxu0 %v6509
        %v6753 = vpop.f32.mrf.mxu0
        %v6754 = vadd.f32 0.0, %v6753
        %v6755 = vpop.f32.mrf.mxu0
        %v6756 = vadd.f32 0.0, %v6755
        %6757 = vmatmul.bf16.gmra.mxu0 %v6511
        %v6758 = vpop.f32.mrf.mxu0
        %v6759 = vadd.f32 0.0, %v6758
        %v6760 = vpop.f32.mrf.mxu0
        %v6761 = vadd.f32 0.0, %v6760
        %6762 = vmatmul.bf16.gmra.mxu0 %v6513
        %v6763 = vpop.f32.mrf.mxu0
        %v6764 = vadd.f32 0.0, %v6763
        %v6765 = vpop.f32.mrf.mxu0
        %v6766 = vadd.f32 0.0, %v6765
        %6767 = vmatmul.bf16.gmra.mxu0 %v6515
        %v6768 = vpop.f32.mrf.mxu0
        %v6769 = vadd.f32 0.0, %v6768
        %v6770 = vpop.f32.mrf.mxu0
        %v6771 = vadd.f32 0.0, %v6770
        %6772 = vmatmul.bf16.gmra.mxu0 %v6517
        %v6773 = vpop.f32.mrf.mxu0
        %v6774 = vadd.f32 0.0, %v6773
        %v6775 = vpop.f32.mrf.mxu0
        %v6776 = vadd.f32 0.0, %v6775
        %6777 = vmatmul.bf16.gmra.mxu0 %v6519
        %v6778 = vpop.f32.mrf.mxu0
        %v6779 = vadd.f32 0.0, %v6778
        %v6780 = vpop.f32.mrf.mxu0
        %v6781 = vadd.f32 0.0, %v6780
        %6782 = vmatmul.bf16.gmra.mxu0 %v6521
        %v6783 = vpop.f32.mrf.mxu0
        %v6784 = vadd.f32 0.0, %v6783
        %v6785 = vpop.f32.mrf.mxu0
        %v6786 = vadd.f32 0.0, %v6785
        %6787 = vmatmul.bf16.gmra.mxu0 %v6523
        %v6788 = vpop.f32.mrf.mxu0
        %v6789 = vadd.f32 0.0, %v6788
        %v6790 = vpop.f32.mrf.mxu0
        %v6791 = vadd.f32 0.0, %v6790
        %6792 = vdwg.mxu0
        %6793 = vmatpush.bf16.msra.mxu0 0
        %6794 = vmatpush.bf16.msra.mxu0 0
        %6795 = vmatpush.bf16.msra.mxu0 0
        %6796 = vmatpush.bf16.msra.mxu0 %v6682
        %6797 = vmatpush.bf16.msra.mxu0 %v6606
        %6798 = vmatpush.bf16.msra.mxu0 %v6605
        %6799 = vmatpush.bf16.msra.mxu0 %v6604
        %6800 = vmatpush.bf16.msra.mxu0 %v6603
        %6801 = vmatmul.bf16.gmra.mxu0 %v6621
        %v6802 = vpop.f32.mrf.mxu0
        %v6803 = vadd.f32 %v6694, %v6802
        %v6804 = vpop.f32.mrf.mxu0
        %v6805 = vadd.f32 %v6696, %v6804
        %6806 = vmatmul.bf16.gmra.mxu0 %v6624
        %v6807 = vpop.f32.mrf.mxu0
        %v6808 = vadd.f32 %v6699, %v6807
        %v6809 = vpop.f32.mrf.mxu0
        %v6810 = vadd.f32 %v6701, %v6809
        %6811 = vmatmul.bf16.gmra.mxu0 %v6627
        %v6812 = vpop.f32.mrf.mxu0
        %v6813 = vadd.f32 %v6704, %v6812
        %v6814 = vpop.f32.mrf.mxu0
        %v6815 = vadd.f32 %v6706, %v6814
        %6816 = vmatmul.bf16.gmra.mxu0 %v6630
        %v6817 = vpop.f32.mrf.mxu0
        %v6818 = vadd.f32 %v6709, %v6817
        %v6819 = vpop.f32.mrf.mxu0
        %v6820 = vadd.f32 %v6711, %v6819
        %6821 = vmatmul.bf16.gmra.mxu0 %v6633
        %v6822 = vpop.f32.mrf.mxu0
        %v6823 = vadd.f32 %v6714, %v6822
        %v6824 = vpop.f32.mrf.mxu0
        %v6825 = vadd.f32 %v6716, %v6824
        %6826 = vmatmul.bf16.gmra.mxu0 %v6636
        %v6827 = vpop.f32.mrf.mxu0
        %v6828 = vadd.f32 %v6719, %v6827
        %v6829 = vpop.f32.mrf.mxu0
        %v6830 = vadd.f32 %v6721, %v6829
        %6831 = vmatmul.bf16.gmra.mxu0 %v6639
        %v6832 = vpop.f32.mrf.mxu0
        %v6833 = vadd.f32 %v6724, %v6832
        %v6834 = vpop.f32.mrf.mxu0
        %v6835 = vadd.f32 %v6726, %v6834
        %6836 = vmatmul.bf16.gmra.mxu0 %v6642
        %v6837 = vpop.f32.mrf.mxu0
        %v6838 = vadd.f32 %v6729, %v6837
        %v6839 = vpop.f32.mrf.mxu0
        %v6840 = vadd.f32 %v6731, %v6839
        %6841 = vmatmul.bf16.gmra.mxu0 %v6645
        %v6842 = vpop.f32.mrf.mxu0
        %v6843 = vadd.f32 %v6734, %v6842
        %v6844 = vpop.f32.mrf.mxu0
        %v6845 = vadd.f32 %v6736, %v6844
        %6846 = vmatmul.bf16.gmra.mxu0 %v6648
        %v6847 = vpop.f32.mrf.mxu0
        %v6848 = vadd.f32 %v6739, %v6847
        %v6849 = vpop.f32.mrf.mxu0
        %v6850 = vadd.f32 %v6741, %v6849
        %6851 = vmatmul.bf16.gmra.mxu0 %v6651
        %v6852 = vpop.f32.mrf.mxu0
        %v6853 = vadd.f32 %v6744, %v6852
        %v6854 = vpop.f32.mrf.mxu0
        %v6855 = vadd.f32 %v6746, %v6854
        %6856 = vmatmul.bf16.gmra.mxu0 %v6654
        %v6857 = vpop.f32.mrf.mxu0
        %v6858 = vadd.f32 %v6749, %v6857
        %v6859 = vpop.f32.mrf.mxu0
        %v6860 = vadd.f32 %v6751, %v6859
        %6861 = vmatmul.bf16.gmra.mxu0 %v6657
        %v6862 = vpop.f32.mrf.mxu0
        %v6863 = vadd.f32 %v6754, %v6862
        %v6864 = vpop.f32.mrf.mxu0
        %v6865 = vadd.f32 %v6756, %v6864
        %6866 = vmatmul.bf16.gmra.mxu0 %v6660
        %v6867 = vpop.f32.mrf.mxu0
        %v6868 = vadd.f32 %v6759, %v6867
        %v6869 = vpop.f32.mrf.mxu0
        %v6870 = vadd.f32 %v6761, %v6869
        %6871 = vmatmul.bf16.gmra.mxu0 %v6663
        %v6872 = vpop.f32.mrf.mxu0
        %v6873 = vadd.f32 %v6764, %v6872
        %v6874 = vpop.f32.mrf.mxu0
        %v6875 = vadd.f32 %v6766, %v6874
        %6876 = vmatmul.bf16.gmra.mxu0 %v6666
        %v6877 = vpop.f32.mrf.mxu0
        %v6878 = vadd.f32 %v6769, %v6877
        %v6879 = vpop.f32.mrf.mxu0
        %v6880 = vadd.f32 %v6771, %v6879
        %6881 = vmatmul.bf16.gmra.mxu0 %v6669
        %v6882 = vpop.f32.mrf.mxu0
        %v6883 = vadd.f32 %v6774, %v6882
        %v6884 = vpop.f32.mrf.mxu0
        %v6885 = vadd.f32 %v6776, %v6884
        %6886 = vmatmul.bf16.gmra.mxu0 %v6672
        %v6887 = vpop.f32.mrf.mxu0
        %v6888 = vadd.f32 %v6779, %v6887
        %v6889 = vpop.f32.mrf.mxu0
        %v6890 = vadd.f32 %v6781, %v6889
        %6891 = vmatmul.bf16.gmra.mxu0 %v6675
        %v6892 = vpop.f32.mrf.mxu0
        %v6893 = vadd.f32 %v6784, %v6892
        %v6894 = vpop.f32.mrf.mxu0
        %v6895 = vadd.f32 %v6786, %v6894
        %6896 = vmatmul.bf16.gmra.mxu0 %v6678
        %v6897 = vpop.f32.mrf.mxu0
        %v6898 = vadd.f32 %v6789, %v6897
        %v6899 = vpop.f32.mrf.mxu0
        %v6900 = vadd.f32 %v6791, %v6899
        %6901 = vdwg.mxu0
        %v6902 = vmax.f32 %v6803, %v6815
        %v6903 = vmax.f32 %v6902, %v6828
        %v6904 = vmax.f32 %v6903, %v6840
        %v6905 = vmax.f32 %v6805, %v6818
        %v6906 = vmax.f32 %v6905, %v6830
        %v6907 = vmax.f32 %v6906, %v6843
        %v6908 = vmax.f32 %v6808, %v6820
        %v6909 = vmax.f32 %v6908, %v6833
        %v6910 = vmax.f32 %v6909, %v6845
        %v6911 = vmax.f32 %v6810, %v6823
        %v6912 = vmax.f32 %v6911, %v6835
        %v6913 = vmax.f32 %v6912, %v6848
        %v6914 = vmax.f32 %v6813, %v6825
        %v6915 = vmax.f32 %v6914, %v6838
        %v6916 = vmax.f32 %v6915, %v6850
        %v6917 = vmax.f32 %v6853, %v6865
        %v6918 = vmax.f32 %v6917, %v6878
        %v6919 = vmax.f32 %v6918, %v6890
        %v6920 = vmax.f32 %v6855, %v6868
        %v6921 = vmax.f32 %v6920, %v6880
        %v6922 = vmax.f32 %v6921, %v6893
        %v6923 = vmax.f32 %v6858, %v6870
        %v6924 = vmax.f32 %v6923, %v6883
        %v6925 = vmax.f32 %v6924, %v6895
        %v6926 = vmax.f32 %v6860, %v6873
        %v6927 = vmax.f32 %v6926, %v6885
        %v6928 = vmax.f32 %v6927, %v6898
        %v6929 = vmax.f32 %v6863, %v6875
        %v6930 = vmax.f32 %v6929, %v6888
        %v6931 = vmax.f32 %v6930, %v6900
        %v6932 = vld [vmem:[%s4] sm:$0x1]
        %v6934 = vperm.slane %v6932, 0
        %v6936 = vadd.f32 %v6904, %v6934
        %v6937 = vadd.f32 %v6907, %v6934
        %v6938 = vadd.f32 %v6910, %v6934
        %v6939 = vadd.f32 %v6913, %v6934
        %v6940 = vadd.f32 %v6916, %v6934
        %v6941 = vadd.f32 %v6919, %v6934
        %v6942 = vadd.f32 %v6922, %v6934
        %v6943 = vadd.f32 %v6925, %v6934
        %v6944 = vadd.f32 %v6928, %v6934
        %v6945 = vadd.f32 %v6931, %v6934
        %v6946 = vmax.f32 %v6936, 0.0
        %v6947 = vmax.f32 %v6937, 0.0
        %v6948 = vmax.f32 %v6938, 0.0
        %v6949 = vmax.f32 %v6939, 0.0
        %v6950 = vmax.f32 %v6940, 0.0
        %v6951 = vmax.f32 %v6941, 0.0
        %v6952 = vmax.f32 %v6942, 0.0
        %v6953 = vmax.f32 %v6943, 0.0
        %v6954 = vmax.f32 %v6944, 0.0
        %v6955 = vmax.f32 %v6945, 0.0
        %v6956 = vpack.c.bf16 %v6946, %v6946
        %v6957 = vpack.c.bf16 %v6947, %v6947
        %v6958 = vpack.c.bf16 %v6948, %v6948
        %v6959 = vpack.c.bf16 %v6949, %v6949
        %v6960 = vpack.c.bf16 %v6950, %v6950
        %v6961 = vpack.c.bf16 %v6951, %v6951
        %v6962 = vpack.c.bf16 %v6952, %v6952
        %v6963 = vpack.c.bf16 %v6953, %v6953
        %v6964 = vpack.c.bf16 %v6954, %v6954
        %v6965 = vpack.c.bf16 %v6955, %v6955
        %v6968 = vunpack.c.l.b16 %v6956
        %v6969 = vunpack.c.l.b16 %v6961
        %v6970 = vpack.c.b16 %v6968, %v6968
        %v6971 = vpack.c.b16 %v6969, %v6969
        %v6972 = vunpack.c.l.b16 %v6970
        %v6973 = vunpack.c.l.b16 %v6971
        %v6974 = vrot.slane %v6973, 7
        %vm6975 = vcmask 1041409
        %v6976 = vsel %vm6975, %v6974, %v6972
        %v6977 = vpack.c.b16 %v6976, %v6976
        %v6978 = vrot.slane %v6972, 1
        %v6979 = vsel %vm6975, %v6973, %v6978
        %v6980 = vpack.c.b16 %v6979, %v6979
        %6981 = vrot.lane.b32.xlu0 %v6980, 16
        %v6982 = vpop.permute.xlu0 %6981
        %v6983 = vrot.slane %v6972, 2
        %v6984 = vrot.slane %v6973, 1
        %v6985 = vsel %vm6975, %v6984, %v6983
        %v6986 = vpack.c.b16 %v6985, %v6985
        %6987 = vrot.lane.b32.xlu0 %v6986, 32
        %v6988 = vpop.permute.xlu0 %6987
        %v6989 = vrot.slane %v6972, 3
        %v6990 = vrot.slane %v6973, 2
        %v6991 = vsel %vm6975, %v6990, %v6989
        %v6992 = vpack.c.b16 %v6991, %v6991
        %6993 = vrot.lane.b32.xlu0 %v6992, 48
        %v6994 = vpop.permute.xlu0 %6993
        %v6995 = vrot.slane %v6972, 4
        %v6996 = vrot.slane %v6973, 3
        %v6997 = vsel %vm6975, %v6996, %v6995
        %v6998 = vpack.c.b16 %v6997, %v6997
        %6999 = vrot.lane.b32.xlu0 %v6998, 64
        %v7000 = vpop.permute.xlu0 %6999
        %v7003 = vunpack.c.l.b16 %v6957
        %v7004 = vunpack.c.l.b16 %v6962
        %v7005 = vpack.c.b16 %v7003, %v7003
        %v7006 = vpack.c.b16 %v7004, %v7004
        %v7007 = vunpack.c.l.b16 %v7005
        %v7008 = vunpack.c.l.b16 %v7006
        %v7009 = vrot.slane %v7008, 7
        %v7010 = vsel %vm6975, %v7009, %v7007
        %v7011 = vpack.c.b16 %v7010, %v7010
        %7012 = vrot.lane.b32.xlu0 %v7011, 80
        %v7013 = vpop.permute.xlu0 %7012
        %v7014 = vrot.slane %v7007, 1
        %v7015 = vsel %vm6975, %v7008, %v7014
        %v7016 = vpack.c.b16 %v7015, %v7015
        %7017 = vrot.lane.b32.xlu0 %v7016, 96
        %v7018 = vpop.permute.xlu0 %7017
        %v7019 = vrot.slane %v7007, 2
        %v7020 = vrot.slane %v7008, 1
        %v7021 = vsel %vm6975, %v7020, %v7019
        %v7022 = vpack.c.b16 %v7021, %v7021
        %7023 = vrot.lane.b32.xlu0 %v7022, 112
        %v7024 = vpop.permute.xlu0 %7023
        %v7025 = vrot.slane %v7007, 3
        %v7026 = vrot.slane %v7008, 2
        %v7027 = vsel %vm6975, %v7026, %v7025
        %v7028 = vpack.c.b16 %v7027, %v7027
        %v7029 = vrot.slane %v7007, 4
        %v7030 = vrot.slane %v7008, 3
        %v7031 = vsel %vm6975, %v7030, %v7029
        %v7032 = vpack.c.b16 %v7031, %v7031
        %7033 = vrot.lane.b32.xlu0 %v7032, 16
        %v7034 = vpop.permute.xlu0 %7033
        %v7037 = vunpack.c.l.b16 %v6958
        %v7038 = vunpack.c.l.b16 %v6963
        %v7039 = vpack.c.b16 %v7037, %v7037
        %v7040 = vpack.c.b16 %v7038, %v7038
        %v7041 = vunpack.c.l.b16 %v7039
        %v7042 = vunpack.c.l.b16 %v7040
        %v7043 = vrot.slane %v7042, 7
        %v7044 = vsel %vm6975, %v7043, %v7041
        %v7045 = vpack.c.b16 %v7044, %v7044
        %7046 = vrot.lane.b32.xlu0 %v7045, 32
        %v7047 = vpop.permute.xlu0 %7046
        %v7048 = vrot.slane %v7041, 1
        %v7049 = vsel %vm6975, %v7042, %v7048
        %v7050 = vpack.c.b16 %v7049, %v7049
        %7051 = vrot.lane.b32.xlu0 %v7050, 48
        %v7052 = vpop.permute.xlu0 %7051
        %v7053 = vrot.slane %v7041, 2
        %v7054 = vrot.slane %v7042, 1
        %v7055 = vsel %vm6975, %v7054, %v7053
        %v7056 = vpack.c.b16 %v7055, %v7055
        %7057 = vrot.lane.b32.xlu0 %v7056, 64
        %v7058 = vpop.permute.xlu0 %7057
        %v7059 = vrot.slane %v7041, 3
        %v7060 = vrot.slane %v7042, 2
        %v7061 = vsel %vm6975, %v7060, %v7059
        %v7062 = vpack.c.b16 %v7061, %v7061
        %7063 = vrot.lane.b32.xlu0 %v7062, 80
        %v7064 = vpop.permute.xlu0 %7063
        %v7065 = vrot.slane %v7041, 4
        %v7066 = vrot.slane %v7042, 3
        %v7067 = vsel %vm6975, %v7066, %v7065
        %v7068 = vpack.c.b16 %v7067, %v7067
        %7069 = vrot.lane.b32.xlu0 %v7068, 96
        %v7070 = vpop.permute.xlu0 %7069
        %v7073 = vunpack.c.l.b16 %v6959
        %v7074 = vunpack.c.l.b16 %v6964
        %v7075 = vpack.c.b16 %v7073, %v7073
        %v7076 = vpack.c.b16 %v7074, %v7074
        %v7077 = vunpack.c.l.b16 %v7075
        %v7078 = vunpack.c.l.b16 %v7076
        %v7079 = vrot.slane %v7078, 7
        %v7080 = vsel %vm6975, %v7079, %v7077
        %v7081 = vpack.c.b16 %v7080, %v7080
        %7082 = vrot.lane.b32.xlu0 %v7081, 112
        %v7083 = vpop.permute.xlu0 %7082
        %v7086 = vsel %vm3089, %v6977, %v6982
        %v7088 = vsel %vm3131, %v7086, %v6988
        %v7090 = vsel %vm3173, %v7088, %v6994
        %v7092 = vsel %vm3215, %v7090, %v7000
        %v7094 = vsel %vm3257, %v7092, %v7013
        %v7096 = vsel %vm3299, %v7094, %v7018
        %v7098 = vsel %vm3341, %v7096, %v7024
        %v7102 = vsel %vm3089, %v7028, %v7034
        %v7104 = vsel %vm3131, %v7102, %v7047
        %v7106 = vsel %vm3173, %v7104, %v7052
        %v7108 = vsel %vm3215, %v7106, %v7058
        %v7110 = vsel %vm3257, %v7108, %v7064
        %v7112 = vsel %vm3299, %v7110, %v7070
        %v7114 = vsel %vm3341, %v7112, %v7083
        %vm7116 = vcmask 1042434
        %v7117 = vsel %vm7116, %v7079, %v7077
        %v7118 = vpack.c.b16 %v7117, %v7117
        %v7119 = vrot.slane %v7077, 1
        %v7120 = vsel %vm7116, %v7078, %v7119
        %v7121 = vpack.c.b16 %v7120, %v7120
        %7122 = vrot.lane.b32.xlu0 %v7121, 16
        %v7123 = vpop.permute.xlu0 %7122
        %v7124 = vrot.slane %v7077, 2
        %v7125 = vrot.slane %v7078, 1
        %v7126 = vsel %vm7116, %v7125, %v7124
        %v7127 = vpack.c.b16 %v7126, %v7126
        %7128 = vrot.lane.b32.xlu0 %v7127, 32
        %v7129 = vpop.permute.xlu0 %7128
        %v7130 = vrot.slane %v7077, 3
        %v7131 = vrot.slane %v7078, 2
        %v7132 = vsel %vm7116, %v7131, %v7130
        %v7133 = vpack.c.b16 %v7132, %v7132
        %7134 = vrot.lane.b32.xlu0 %v7133, 48
        %v7135 = vpop.permute.xlu0 %7134
        %v7138 = vunpack.c.l.b16 %v6960
        %v7139 = vunpack.c.l.b16 %v6965
        %v7140 = vpack.c.b16 %v7138, %v7138
        %v7141 = vpack.c.b16 %v7139, %v7139
        %v7142 = vunpack.c.l.b16 %v7140
        %v7143 = vunpack.c.l.b16 %v7141
        %v7144 = vrot.slane %v7142, 7
        %v7145 = vrot.slane %v7143, 6
        %v7146 = vsel %vm7116, %v7145, %v7144
        %v7147 = vpack.c.b16 %v7146, %v7146
        %7148 = vrot.lane.b32.xlu0 %v7147, 64
        %v7149 = vpop.permute.xlu0 %7148
        %v7150 = vrot.slane %v7143, 7
        %v7151 = vsel %vm7116, %v7150, %v7142
        %v7152 = vpack.c.b16 %v7151, %v7151
        %7153 = vrot.lane.b32.xlu0 %v7152, 80
        %v7154 = vpop.permute.xlu0 %7153
        %v7155 = vrot.slane %v7142, 1
        %v7156 = vsel %vm7116, %v7143, %v7155
        %v7157 = vpack.c.b16 %v7156, %v7156
        %7158 = vrot.lane.b32.xlu0 %v7157, 96
        %v7159 = vpop.permute.xlu0 %7158
        %v7160 = vrot.slane %v7142, 2
        %v7161 = vrot.slane %v7143, 1
        %v7162 = vsel %vm7116, %v7161, %v7160
        %v7163 = vpack.c.b16 %v7162, %v7162
        %7164 = vrot.lane.b32.xlu0 %v7163, 112
        %v7165 = vpop.permute.xlu0 %7164
        %v7166 = vrot.slane %v7142, 3
        %v7167 = vrot.slane %v7143, 2
        %v7168 = vsel %vm7116, %v7167, %v7166
        %v7169 = vpack.c.b16 %v7168, %v7168
        %v7172 = vsel %vm3089, %v7118, %v7123
        %v7174 = vsel %vm3131, %v7172, %v7129
        %v7176 = vsel %vm3173, %v7174, %v7135
        %v7178 = vsel %vm3215, %v7176, %v7149
        %v7180 = vsel %vm3257, %v7178, %v7154
        %v7182 = vsel %vm3299, %v7180, %v7159
        %v7184 = vsel %vm3341, %v7182, %v7165
        %v7185 = vshrl.u32 %v7184, 16
        %v7187 = vshll.u32 %v7184, 16
        %v7189 = vrot.slane %v7187, 1
        %v7190 = vor.u32 %v7185, %v7189
        %v7192 = vshrl.u32 %v7169, 16
        %v7194 = vshll.u32 %v7169, 16
        %v7196 = vrot.slane %v7194, 1
        %v7197 = vor.u32 %v7192, %v7196
        %v7199 = vld [vmem:[%s5] sm:$0xf]
        %v7200 = vld [vmem:[%s5 + $0x4] sm:$0xf]
        %v7201 = vld [vmem:[%s5 + $0x8] sm:$0xf]
        %v7202 = vld [vmem:[%s5 + $0xc] sm:$0xf]
        %v7203 = vld [vmem:[%s5 + $0x10] sm:$0xf]
        %v7204 = vld [vmem:[%s5 + $0x14] sm:$0xf]
        %v7205 = vld [vmem:[%s5 + $0x18] sm:$0xf]
        %v7206 = vld [vmem:[%s5 + $0x1c] sm:$0xf]
        %v7207 = vld [vmem:[%s5 + $0x20] sm:$0xf]
        %v7208 = vld [vmem:[%s5 + $0x24] sm:$0xf]
        %v7209 = vld [vmem:[%s5 + $0x28] sm:$0xf]
        %v7210 = vld [vmem:[%s5 + $0x2c] sm:$0xf]
        %v7211 = vld [vmem:[%s5 + $0x30] sm:$0xf]
        %v7212 = vld [vmem:[%s5 + $0x34] sm:$0xf]
        %v7213 = vld [vmem:[%s5 + $0x38] sm:$0xf]
        %v7214 = vld [vmem:[%s5 + $0x3c] sm:$0xf]
        %v7215 = vld [vmem:[%s5 + $0x40] sm:$0xf]
        %v7216 = vld [vmem:[%s5 + $0x44] sm:$0xf]
        %v7217 = vld [vmem:[%s5 + $0x48] sm:$0xf]
        %v7218 = vld [vmem:[%s5 + $0x4c] sm:$0xf]
        %v7219 = vld [vmem:[%s5 + $0x50] sm:$0xf]
        %v7220 = vld [vmem:[%s5 + $0x54] sm:$0xf]
        %v7221 = vld [vmem:[%s5 + $0x58] sm:$0xf]
        %v7222 = vld [vmem:[%s5 + $0x5c] sm:$0xf]
        %v7223 = vld [vmem:[%s5 + $0x60] sm:$0xf]
        %v7224 = vld [vmem:[%s5 + $0x64] sm:$0xf]
        %v7225 = vld [vmem:[%s5 + $0x68] sm:$0xf]
        %v7226 = vld [vmem:[%s5 + $0x6c] sm:$0xf]
        %v7227 = vld [vmem:[%s5 + $0x70] sm:$0xf]
        %v7228 = vld [vmem:[%s5 + $0x74] sm:$0xf]
        %v7229 = vld [vmem:[%s5 + $0x78] sm:$0xf]
        %v7230 = vld [vmem:[%s5 + $0x7c] sm:$0xf]
        %v7231 = vld [vmem:[%s5 + $0x80] sm:$0xf]
        %v7232 = vld [vmem:[%s5 + $0x84] sm:$0xf]
        %v7233 = vld [vmem:[%s5 + $0x88] sm:$0xf]
        %v7234 = vld [vmem:[%s5 + $0x8c] sm:$0xf]
        %v7235 = vld [vmem:[%s5 + $0x90] sm:$0xf]
        %v7236 = vld [vmem:[%s5 + $0x94] sm:$0xf]
        %v7237 = vld [vmem:[%s5 + $0x98] sm:$0xf]
        %v7238 = vld [vmem:[%s5 + $0x9c] sm:$0xf]
        %v7239 = vld [vmem:[%s5 + $0xa0] sm:$0xf]
        %v7240 = vld [vmem:[%s5 + $0xa4] sm:$0xf]
        %v7241 = vld [vmem:[%s5 + $0xa8] sm:$0xf]
        %v7242 = vld [vmem:[%s5 + $0xac] sm:$0xf]
        %v7243 = vld [vmem:[%s5 + $0xb0] sm:$0xf]
        %v7244 = vld [vmem:[%s5 + $0xb4] sm:$0xf]
        %v7245 = vld [vmem:[%s5 + $0xb8] sm:$0xf]
        %v7246 = vld [vmem:[%s5 + $0xbc] sm:$0xf]
        %v7247 = vld [vmem:[%s5 + $0xc0] sm:$0xf]
        %v7248 = vld [vmem:[%s5 + $0xc4] sm:$0xf]
        %v7249 = vld [vmem:[%s6] sm:$0x1]
        %v7251 = vperm.slane %v7249, 0
        %v7303 = vunpack.c.l.b16 %v7199
        %v7304 = vunpack.c.l.b16 %v7200
        %v7305 = vunpack.c.l.b16 %v7201
        %v7306 = vunpack.c.l.b16 %v7202
        %v7307 = vunpack.c.l.b16 %v7203
        %v7308 = vunpack.c.l.b16 %v7204
        %v7309 = vunpack.c.l.b16 %v7205
        %v7310 = vunpack.c.l.b16 %v7206
        %v7311 = vunpack.c.l.b16 %v7207
        %v7312 = vunpack.c.l.b16 %v7208
        %v7313 = vunpack.c.l.b16 %v7209
        %v7314 = vunpack.c.l.b16 %v7210
        %v7315 = vunpack.c.l.b16 %v7211
        %v7316 = vunpack.c.l.b16 %v7212
        %v7317 = vunpack.c.l.b16 %v7213
        %v7318 = vunpack.c.l.b16 %v7214
        %v7319 = vunpack.c.l.b16 %v7215
        %v7320 = vunpack.c.l.b16 %v7216
        %v7321 = vunpack.c.l.b16 %v7217
        %v7322 = vunpack.c.l.b16 %v7218
        %v7323 = vunpack.c.l.b16 %v7219
        %v7324 = vunpack.c.l.b16 %v7220
        %v7325 = vunpack.c.l.b16 %v7221
        %v7326 = vunpack.c.l.b16 %v7222
        %v7327 = vunpack.c.l.b16 %v7223
        %v7328 = vunpack.c.l.b16 %v7224
        %v7329 = vunpack.c.l.b16 %v7225
        %v7330 = vunpack.c.l.b16 %v7226
        %v7331 = vunpack.c.l.b16 %v7227
        %v7332 = vunpack.c.l.b16 %v7228
        %v7333 = vunpack.c.l.b16 %v7229
        %v7334 = vunpack.c.l.b16 %v7230
        %v7335 = vunpack.c.l.b16 %v7231
        %v7336 = vunpack.c.l.b16 %v7232
        %v7337 = vunpack.c.l.b16 %v7233
        %v7338 = vunpack.c.l.b16 %v7234
        %v7339 = vunpack.c.l.b16 %v7235
        %v7340 = vunpack.c.l.b16 %v7236
        %v7341 = vunpack.c.l.b16 %v7237
        %v7342 = vunpack.c.l.b16 %v7238
        %v7343 = vunpack.c.l.b16 %v7239
        %v7344 = vunpack.c.l.b16 %v7240
        %v7345 = vunpack.c.l.b16 %v7241
        %v7346 = vunpack.c.l.b16 %v7242
        %v7347 = vunpack.c.l.b16 %v7243
        %v7348 = vunpack.c.l.b16 %v7244
        %v7349 = vunpack.c.l.b16 %v7245
        %v7350 = vunpack.c.l.b16 %v7246
        %v7351 = vunpack.c.l.b16 %v7247
        %v7352 = vunpack.c.l.b16 %v7248
        %v7353 = vpack.c.b16 %v7304, %v7303
        %v7354 = vpack.c.b16 %v7306, %v7305
        %v7355 = vpack.c.b16 %v7308, %v7307
        %v7356 = vpack.c.b16 %v7310, %v7309
        %v7357 = vpack.c.b16 %v7312, %v7311
        %v7358 = vpack.c.b16 %v7314, %v7313
        %v7359 = vpack.c.b16 %v7316, %v7315
        %v7360 = vpack.c.b16 %v7318, %v7317
        %v7361 = vpack.c.b16 %v7320, %v7319
        %v7362 = vpack.c.b16 %v7322, %v7321
        %v7363 = vpack.c.b16 %v7324, %v7323
        %v7364 = vpack.c.b16 %v7326, %v7325
        %v7365 = vpack.c.b16 %v7328, %v7327
        %v7366 = vpack.c.b16 %v7330, %v7329
        %v7367 = vpack.c.b16 %v7332, %v7331
        %v7368 = vpack.c.b16 %v7334, %v7333
        %v7369 = vpack.c.b16 %v7336, %v7335
        %v7370 = vpack.c.b16 %v7338, %v7337
        %v7371 = vpack.c.b16 %v7340, %v7339
        %v7372 = vpack.c.b16 %v7342, %v7341
        %v7373 = vpack.c.b16 %v7344, %v7343
        %v7374 = vpack.c.b16 %v7346, %v7345
        %v7375 = vpack.c.b16 %v7348, %v7347
        %v7376 = vpack.c.b16 %v7350, %v7349
        %v7377 = vpack.c.b16 %v7352, %v7351
        %v7404 = vsel %vm3089, %v7197, 0
        %7406 = vmatpush.bf16.msra.mxu0 %v7360
        %7407 = vmatpush.bf16.msra.mxu0 %v7359
        %7408 = vmatpush.bf16.msra.mxu0 %v7358
        %7409 = vmatpush.bf16.msra.mxu0 %v7357
        %7410 = vmatpush.bf16.msra.mxu0 %v7356
        %7411 = vmatpush.bf16.msra.mxu0 %v7355
        %7412 = vmatpush.bf16.msra.mxu0 %v7354
        %7413 = vmatpush.bf16.msra.mxu0 %v7353
        %7414 = vmatmul.bf16.gmra.mxu0 %v7098
        %v7415 = vpop.f32.mrf.mxu0
        %v7416 = vadd.f32 %v7251, %v7415
        %v7417 = vpop.f32.mrf.mxu0
        %7418 = vdwg.mxu0
        %7419 = vmatpush.bf16.msra.mxu0 %v7368
        %7420 = vmatpush.bf16.msra.mxu0 %v7367
        %7421 = vmatpush.bf16.msra.mxu0 %v7366
        %7422 = vmatpush.bf16.msra.mxu0 %v7365
        %7423 = vmatpush.bf16.msra.mxu0 %v7364
        %7424 = vmatpush.bf16.msra.mxu0 %v7363
        %7425 = vmatpush.bf16.msra.mxu0 %v7362
        %7426 = vmatpush.bf16.msra.mxu0 %v7361
        %7427 = vmatmul.bf16.gmra.mxu0 %v7114
        %v7428 = vpop.f32.mrf.mxu0
        %v7429 = vadd.f32 %v7416, %v7428
        %v7430 = vpop.f32.mrf.mxu0
        %7431 = vdwg.mxu0
        %7432 = vmatpush.bf16.msra.mxu0 %v7376
        %7433 = vmatpush.bf16.msra.mxu0 %v7375
        %7434 = vmatpush.bf16.msra.mxu0 %v7374
        %7435 = vmatpush.bf16.msra.mxu0 %v7373
        %7436 = vmatpush.bf16.msra.mxu0 %v7372
        %7437 = vmatpush.bf16.msra.mxu0 %v7371
        %7438 = vmatpush.bf16.msra.mxu0 %v7370
        %7439 = vmatpush.bf16.msra.mxu0 %v7369
        %7440 = vmatmul.bf16.gmra.mxu0 %v7190
        %v7441 = vpop.f32.mrf.mxu0
        %v7442 = vadd.f32 %v7429, %v7441
        %v7443 = vpop.f32.mrf.mxu0
        %7444 = vdwg.mxu0
        %7445 = vmatpush.bf16.msra.mxu0 0
        %7446 = vmatpush.bf16.msra.mxu0 0
        %7447 = vmatpush.bf16.msra.mxu0 0
        %7448 = vmatpush.bf16.msra.mxu0 0
        %7449 = vmatpush.bf16.msra.mxu0 0
        %7450 = vmatpush.bf16.msra.mxu0 0
        %7451 = vmatpush.bf16.msra.mxu0 0
        %7452 = vmatpush.bf16.msra.mxu0 %v7377
        %7453 = vmatmul.bf16.gmra.mxu0 %v7404
        %v7454 = vpop.f32.mrf.mxu0
        %v7455 = vadd.f32 %v7442, %v7454
        %v7456 = vpop.f32.mrf.mxu0
        %7457 = vdwg.mxu0
        %v7458 = vmax.f32 %v7455, 0.0
        %v7459 = vpack.c.bf16 %v7458, %v7458
        %v7460 = vld [vmem:[%s7] sm:$0xf]
        %v7461 = vld [vmem:[%s7 + $0x4] sm:$0xf]
        %v7462 = vld [vmem:[%s7 + $0x8] sm:$0xf]
        %v7463 = vld [vmem:[%s7 + $0xc] sm:$0xf]
        %v7464 = vld [vmem:[%s7 + $0x10] sm:$0xf]
        %v7465 = vld [vmem:[%s7 + $0x14] sm:$0xf]
        %v7466 = vld [vmem:[%s7 + $0x18] sm:$0xf]
        %v7467 = vld [vmem:[%s7 + $0x1c] sm:$0xf]
        %v7468 = vld [vmem:[%s7 + $0x20] sm:$0xf]
        %v7469 = vld [vmem:[%s7 + $0x24] sm:$0xf]
        %v7470 = vld [vmem:[%s7 + $0x28] sm:$0xf]
        %v7471 = vld [vmem:[%s7 + $0x2c] sm:$0xf]
        %v7472 = vld [vmem:[%s7 + $0x30] sm:$0xf]
        %v7473 = vld [vmem:[%s7 + $0x34] sm:$0xf]
        %v7474 = vld [vmem:[%s7 + $0x38] sm:$0xf]
        %v7475 = vld [vmem:[%s7 + $0x3c] sm:$0xf]
        %v7476 = vld [vmem:[%s8] sm:$0x1]
        %v7478 = vperm.slane %v7476, 0
        %v7496 = vunpack.c.l.b16 %v7460
        %v7497 = vunpack.c.l.b16 %v7461
        %v7498 = vunpack.c.l.b16 %v7462
        %v7499 = vunpack.c.l.b16 %v7463
        %v7500 = vunpack.c.l.b16 %v7464
        %v7501 = vunpack.c.l.b16 %v7465
        %v7502 = vunpack.c.l.b16 %v7466
        %v7503 = vunpack.c.l.b16 %v7467
        %v7504 = vunpack.c.l.b16 %v7468
        %v7505 = vunpack.c.l.b16 %v7469
        %v7506 = vunpack.c.l.b16 %v7470
        %v7507 = vunpack.c.l.b16 %v7471
        %v7508 = vunpack.c.l.b16 %v7472
        %v7509 = vunpack.c.l.b16 %v7473
        %v7510 = vunpack.c.l.b16 %v7474
        %v7511 = vunpack.c.l.b16 %v7475
        %v7512 = vpack.c.b16 %v7497, %v7496
        %v7513 = vpack.c.b16 %v7499, %v7498
        %v7514 = vpack.c.b16 %v7501, %v7500
        %v7515 = vpack.c.b16 %v7503, %v7502
        %v7516 = vpack.c.b16 %v7505, %v7504
        %v7517 = vpack.c.b16 %v7507, %v7506
        %v7518 = vpack.c.b16 %v7509, %v7508
        %v7519 = vpack.c.b16 %v7511, %v7510
        %7528 = vmatpush.bf16.msra.mxu0 %v7519
        %7529 = vmatpush.bf16.msra.mxu0 %v7518
        %7530 = vmatpush.bf16.msra.mxu0 %v7517
        %7531 = vmatpush.bf16.msra.mxu0 %v7516
        %7532 = vmatpush.bf16.msra.mxu0 %v7515
        %7533 = vmatpush.bf16.msra.mxu0 %v7514
        %7534 = vmatpush.bf16.msra.mxu0 %v7513
        %7535 = vmatpush.bf16.msra.mxu0 %v7512
        %7536 = vmatmul.bf16.gmra.mxu0 %v7459
        %v7537 = vpop.f32.mrf.mxu0
        %v7538 = vadd.f32 %v7478, %v7537
        %v7539 = vpop.f32.mrf.mxu0
        %7540 = vdwg.mxu0
        %v7541 = vmax.f32 %v7538, 0.0
        %v7542 = vpack.c.bf16 %v7541, %v7541
        %v7543 = vld [vmem:[%s9] sm:$0xf]
        %v7544 = vld [vmem:[%s9 + $0x4] sm:$0xf]
        %v7545 = vld [vmem:[%s9 + $0x8] sm:$0xf]
        %v7546 = vld [vmem:[%s9 + $0xc] sm:$0xf]
        %v7547 = vld [vmem:[%s9 + $0x10] sm:$0xf]
        %v7548 = vld [vmem:[%s9 + $0x14] sm:$0xf]
        %v7549 = vld [vmem:[%s9 + $0x18] sm:$0xf]
        %v7550 = vld [vmem:[%s9 + $0x1c] sm:$0xf]
        %v7551 = vld [vmem:[%s9 + $0x20] sm:$0xf]
        %v7552 = vld [vmem:[%s9 + $0x24] sm:$0xf]
        %v7553 = vld [vmem:[%s9 + $0x28] sm:$0xf]
        %v7554 = vld [vmem:[%s9 + $0x2c] sm:$0xf]
        %v7555 = vld [vmem:[%s9 + $0x30] sm:$0xf]
        %v7556 = vld [vmem:[%s9 + $0x34] sm:$0xf]
        %v7557 = vld [vmem:[%s9 + $0x38] sm:$0xf]
        %v7558 = vld [vmem:[%s9 + $0x3c] sm:$0xf]
        %v7559 = vld [vmem:[%s10] sm:$0x1]
        %v7561 = vperm.slane %v7559, 0
        %v7579 = vunpack.c.l.b16 %v7543
        %v7580 = vunpack.c.l.b16 %v7544
        %v7581 = vunpack.c.l.b16 %v7545
        %v7582 = vunpack.c.l.b16 %v7546
        %v7583 = vunpack.c.l.b16 %v7547
        %v7584 = vunpack.c.l.b16 %v7548
        %v7585 = vunpack.c.l.b16 %v7549
        %v7586 = vunpack.c.l.b16 %v7550
        %v7587 = vunpack.c.l.b16 %v7551
        %v7588 = vunpack.c.l.b16 %v7552
        %v7589 = vunpack.c.l.b16 %v7553
        %v7590 = vunpack.c.l.b16 %v7554
        %v7591 = vunpack.c.l.b16 %v7555
        %v7592 = vunpack.c.l.b16 %v7556
        %v7593 = vunpack.c.l.b16 %v7557
        %v7594 = vunpack.c.l.b16 %v7558
        %v7595 = vpack.c.b16 %v7580, %v7579
        %v7596 = vpack.c.b16 %v7582, %v7581
        %v7597 = vpack.c.b16 %v7584, %v7583
        %v7598 = vpack.c.b16 %v7586, %v7585
        %v7599 = vpack.c.b16 %v7588, %v7587
        %v7600 = vpack.c.b16 %v7590, %v7589
        %v7601 = vpack.c.b16 %v7592, %v7591
        %v7602 = vpack.c.b16 %v7594, %v7593
        %7611 = vmatpush.bf16.msra.mxu0 %v7602
        %7612 = vmatpush.bf16.msra.mxu0 %v7601
        %7613 = vmatpush.bf16.msra.mxu0 %v7600
        %7614 = vmatpush.bf16.msra.mxu0 %v7599
        %7615 = vmatpush.bf16.msra.mxu0 %v7598
        %7616 = vmatpush.bf16.msra.mxu0 %v7597
        %7617 = vmatpush.bf16.msra.mxu0 %v7596
        %7618 = vmatpush.bf16.msra.mxu0 %v7595
        %7619 = vmatmul.bf16.gmra.mxu0 %v7542
        %v7620 = vpop.f32.mrf.mxu0
        %v7621 = vadd.f32 %v7561, %v7620
        %v7622 = vpop.f32.mrf.mxu0
        %7623 = vdwg.mxu0
        %7624 = vst [vmem:[%s382] sm:$0x3] %v7621
        %s7625 = sand.u32 %s269, 1
        %s7626 = scalar_lea.sflag [#allocation3], %s7625
        %s7627 = sand.u32 %s269, 1
        %s7628 = smul.addr %s7627, 2
        %s7629 = scalar_lea.vmem [#allocation2], %s7628
        // Predicated region
        $region65: #{cnn_cifar1_forward.1} parent=63 // pred_check
          %p7630 = pneg %p279
        $region66: #{cnn_cifar1_forward.1} parent=63 // pred_check_branch
          %7632 = sbr.rel (%p7630) target = $region68
        $region67: #{cnn_cifar1_forward.1} parent=63 // pred_region
          %7634 = vsyncadd %s7626, 0
          %s7635 = smul.addr %s25, 2
          %s7636 = scalar_lea.hbm %s11, %s7635
          %s7638 = sshll.u32 %s7629, 4
          %s7639 = int_to_ptr.vmem [resolvable:$true] %s7638
          %s7640 = sshll.u32 %s7636, 4
          %s7641 = int_to_ptr.hbm [resolvable:$true] %s7640
          %7643 = dma.vmem_to_hbm [thread:$0]  %s7639, 32, %s7641, %s7626
        $region68: #{cnn_cifar1_forward.1} parent=63 // pred_fallthru
          _
      $region64: #{cnn_cifar1_forward.1} parent=5 // pred_fallthru
        _
      %p7644 = scmp.le.s32.totalorder 2, %s20
      // Predicated region
      $region69: #{cnn_cifar1_forward.1} parent=5 // pred_check
        %p7645 = pneg %p7644
      $region70: #{cnn_cifar1_forward.1} parent=5 // pred_check_branch
        %7647 = sbr.rel (%p7645) target = $region72
      $region71: #{cnn_cifar1_forward.1} parent=5 // pred_region
        %s7648 = ssub.s32 %s20, 2
        // Predicated region
        $region73: #{cnn_cifar1_forward.1} parent=71 // pred_check
          %p7649 = pneg %p285
        $region74: #{cnn_cifar1_forward.1} parent=71 // pred_check_branch
          %7651 = sbr.rel (%p7649) target = $region76
        $region75: #{cnn_cifar1_forward.1} parent=71 // pred_region
          %s7652 = sand.u32 %s270, 1
          %s7653 = scalar_lea.sflag [#allocation3], %s7652
          %s7654 = sand.u32 %s270, 1
          %s7655 = smul.addr %s7654, 2
          %s7656 = scalar_lea.vmem [#allocation2], %s7655
          %7658 = dma.done %s7653, 32
        $region76: #{cnn_cifar1_forward.1} parent=71 // pred_fallthru
          _
      $region72: #{cnn_cifar1_forward.1} parent=5 // pred_fallthru
        _
    $region6: #{cnn_cifar1_forward.1} parent=1 // loop_footer
      %s24 = sadd.s32 1, %s20
    $region7: #{cnn_cifar1_forward.1} parent=1 // loop_footer_branch
      %19 = sbr.rel target = $region3
    $region8: #{cnn_cifar1_forward.1} parent=1 // loop_exit
      _
    %7659 = vsyncpa [#allocation3], 1
    %s7660 = scalar_lea.sflag [#allocation3], 1
    %7661 = vsyncpa %s7660, 1

</llo_original>
